<compile_context>
chip_gen: v5e
topology: v5e:2x2
jax: 0.10.0
libtpu: 0.0.40
codegen_flags: <defaults>
</compile_context>

<pallas_src>
import functools

import jax
import jax.numpy as jnp
from jax.experimental import pallas as pl
from jax.experimental.pallas import tpu as pltpu

KSIZE = 3
EPS = 1e-5


# --------------------------------- kernel ----------------------------------
def _resblock_kernel(x_ref, w1_ref, b1_ref, g1_ref, be1_ref,
                     w2_ref, b2_ref, g2_ref, be2_ref,
                     o_ref, xp_ref, s1_ref, *, w):
    n, c, hw = x_ref.shape
    pad = w + 1                          # halo: every 3x3 tap is an in-bounds lane slice
    inv_count = 1.0 / float(n * hw)

    # Column-edge masks over the flattened spatial lane axis (built once).
    col = jax.lax.broadcasted_iota(jnp.int32, (1, hw), 1) % w
    mask_l = (col >= 1).astype(jnp.float32)          # reading column (w-1) is valid
    mask_r = (col <= w - 2).astype(jnp.float32)      # reading column (w+1) is valid

    # In-kernel zero ring: vertical halo lanes stay zero, interior copied once.
    xp_ref[...] = jnp.zeros(xp_ref.shape, xp_ref.dtype)
    s1_ref[...] = jnp.zeros(s1_ref.shape, s1_ref.dtype)
    xp_ref[:, :, pad:pad + hw] = x_ref[...]

    def conv3x3(src_ref, w_ref, b_ref):
        """3x3 conv, all output channels, lane-flattened spatial grid."""
        accs = [jnp.full((n, hw), b_ref[co], dtype=jnp.float32) for co in range(c)]
        for ci in range(c):
            for dv in (-1, 0, 1):
                for dh in (-1, 0, 1):
                    off = dv * w + dh
                    # (n, hw) tap, shared across all output channels.
                    tap = src_ref[:, ci, pad + off: pad + off + hw]
                    if dh == -1:
                        tap = tap * mask_l
                    elif dh == 1:
                        tap = tap * mask_r
                    kh, kw = dv + 1, dh + 1
                    for co in range(c):
                        wgt = w_ref[((co * c + ci) * KSIZE + kh) * KSIZE + kw]
                        accs[co] = accs[co] + wgt * tap
        return accs

    def bn_train(y, gamma, beta):
        """Training-mode BatchNorm for one channel; single pass, clamped var."""
        s = jnp.sum(y)
        ss = jnp.sum(y * y)
        mean = s * inv_count
        var = jnp.maximum(ss * inv_count - mean * mean, 0.0)    # biased variance
        scale = gamma * jax.lax.rsqrt(var + EPS)
        shift = beta - mean * scale
        return y * scale + shift

    def mish(y):
        # mish(y) = y * tanh(softplus(y)); with u = (1+e^y)^2 this is
        # y * (u-1)/(u+1).  Keep PyTorch's softplus threshold at 20.
        t = jnp.exp(jnp.minimum(y, 20.0))
        u = (1.0 + t) * (1.0 + t)
        d = u + 1.0
        r = pl.reciprocal(d, approx=True)
        r = r * (2.0 - d * r)                # one Newton step -> f32 accuracy
        out = y * (u - 1.0) * r
        return jnp.where(y > 20.0, y, out)

    # stage 1: conv1 -> BN1(train) -> Mish, stored into the padded s1 scratch.
    accs = conv3x3(xp_ref, w1_ref, b1_ref)
    for co in range(c):
        s1_ref[:, co, pad:pad + hw] = mish(
            bn_train(accs[co], g1_ref[co], be1_ref[co]))

    # stage 2: conv2 -> BN2(train) -> residual add (x read unshifted, aligned).
    accs = conv3x3(s1_ref, w2_ref, b2_ref)
    for co in range(c):
        y = bn_train(accs[co], g2_ref[co], be2_ref[co])
        o_ref[:, co, :] = y + x_ref[:, co, :]            # lane-dense 256-wide store


# -------------------------------- wrapper -----------------------------------
def residual_block_mish(x, params):
    """x: (N, C, H, W) float32, PyTorch NCHW convention."""
    nb, c, h, w = x.shape
    hw = h * w
    padded = hw + 2 * (w + 1)

    # Row-major reshape only (free at the HBM level): spatial -> lane axis.
    x_flat = x.reshape(nb, c, hw).astype(jnp.float32)

    w1_flat = params["w1"].reshape(-1).astype(jnp.float32)       # [co, ci, kh, kw]
    w2_flat = params["w2"].reshape(-1).astype(jnp.float32)
    f32 = lambda a: a.astype(jnp.float32)

    vmem = pl.BlockSpec(memory_space=pltpu.MemorySpace.VMEM)
    smem = pl.BlockSpec(memory_space=pltpu.MemorySpace.SMEM)

    out_flat = pl.pallas_call(
        functools.partial(_resblock_kernel, w=w),
        out_shape=jax.ShapeDtypeStruct((nb, c, hw), jnp.float32),
        in_specs=[vmem] + [smem] * 8,
        out_specs=vmem,
        scratch_shapes=[pltpu.VMEM((nb, c, padded), jnp.float32),   # padded x
                        pltpu.VMEM((nb, c, padded), jnp.float32)],  # padded stage-1 out
        compiler_params=pltpu.CompilerParams(
            vmem_limit_bytes=4 * 1024 * 1024),    # working set < 100 KiB
    )(x_flat, w1_flat, f32(params["b1"]), f32(params["g1"]), f32(params["be1"]),
      w2_flat, f32(params["b2"]), f32(params["g2"]), f32(params["be2"]))

    return out_flat.reshape(nb, c, h, w)                         # free reshape back


# ------------------------- pure-JAX reference (check) -----------------------
def _reference(x, p):
    dn = ("NCHW", "OIHW", "NCHW")
    prec = jax.lax.Precision.HIGHEST      # keep the reference in true f32 on TPU

    def conv(v, wt, b):
        y = jax.lax.conv_general_dilated(v, wt, (1, 1), ((1, 1), (1, 1)),
                                         dimension_numbers=dn, precision=prec)
        return y + b[None, :, None, None]

    def bn(v, g, be):
        mean = jnp.mean(v, axis=(0, 2, 3), keepdims=True)
        var = jnp.mean((v - mean) ** 2, axis=(0, 2, 3), keepdims=True)
        return ((v - mean) * jax.lax.rsqrt(var + EPS)
                * g[None, :, None, None] + be[None, :, None, None])

    def mish(v):
        return v * jnp.tanh(jax.nn.softplus(v))

    h1 = mish(bn(conv(x, p["w1"], p["b1"]), p["g1"], p["be1"]))
    h2 = bn(conv(h1, p["w2"], p["b2"]), p["g2"], p["be2"])
    return h2 + x


# ---------------------------------- main ------------------------------------
if __name__ == "__main__":
    key = jax.random.PRNGKey(0)
    k_x, k_w1, k_b1, k_w2, k_b2 = jax.random.split(key, 5)

    NB, C, H, W = 2, 4, 16, 16        # in_channels == out_channels == 4
    x = jax.random.normal(k_x, (NB, C, H, W), jnp.float32)

    params = {
        "w1": 0.1 * jax.random.normal(k_w1, (C, C, KSIZE, KSIZE), jnp.float32),
        "b1": 0.1 * jax.random.normal(k_b1, (C,), jnp.float32),
        "g1": jnp.ones((C,), jnp.float32),    # BatchNorm weight init (PyTorch default)
        "be1": jnp.zeros((C,), jnp.float32),  # BatchNorm bias init
        "w2": 0.1 * jax.random.normal(k_w2, (C, C, KSIZE, KSIZE), jnp.float32),
        "b2": 0.1 * jax.random.normal(k_b2, (C,), jnp.float32),
        "g2": jnp.ones((C,), jnp.float32),
        "be2": jnp.zeros((C,), jnp.float32),
    }

    out = jax.block_until_ready(residual_block_mish(x, params))
    ref = jax.block_until_ready(_reference(x, params))

    assert out.shape == x.shape, (out.shape, x.shape)
    if not jnp.allclose(out, ref, atol=2e-3, rtol=2e-3):
        raise AssertionError(
            f"mismatch vs reference, max abs err = {jnp.max(jnp.abs(out - ref))}")

    print("KERNEL_OK")
</pallas_src>

<mosaic_0001>
module attributes {stable_mosaic.version = 11 : i64} {
  func.func @_resblock_kernel(%arg0: memref<2x4x256xf32, #tpu.memory_space<vmem>>, %arg1: memref<144xf32, #tpu.memory_space<smem>>, %arg2: memref<4xf32, #tpu.memory_space<smem>>, %arg3: memref<4xf32, #tpu.memory_space<smem>>, %arg4: memref<4xf32, #tpu.memory_space<smem>>, %arg5: memref<144xf32, #tpu.memory_space<smem>>, %arg6: memref<4xf32, #tpu.memory_space<smem>>, %arg7: memref<4xf32, #tpu.memory_space<smem>>, %arg8: memref<4xf32, #tpu.memory_space<smem>>, %arg9: memref<2x4x256xf32, #tpu.memory_space<vmem>>, %arg10: memref<2x4x290xf32, #tpu.memory_space<vmem>>, %arg11: memref<2x4x290xf32, #tpu.memory_space<vmem>>) attributes {dimension_semantics = [], scalar_prefetch = 0 : i64, scratch_operands = 2 : i64, tpu.core_type = #tpu.core_type<tc>} {
    %0 = tpu.iota {dimensions = array<i32: 1>} : vector<1x256xi32>
    %c16_i32 = arith.constant 16 : i32
    %c0_i32 = arith.constant 0 : i32
    %1 = arith.cmpi eq, %c16_i32, %c0_i32 : i32
    %c1_i32 = arith.constant 1 : i32
    %2 = arith.select %1, %c1_i32, %c16_i32 : i32
    %3 = vector.broadcast %2 : i32 to vector<1x256xi32>
    %4 = arith.remsi %0, %3 : vector<1x256xi32>
    %c0_i32_0 = arith.constant 0 : i32
    %5 = vector.broadcast %c0_i32_0 : i32 to vector<1x256xi32>
    %6 = arith.cmpi ne, %4, %5 : vector<1x256xi32>
    %c0_i32_1 = arith.constant 0 : i32
    %7 = vector.broadcast %c0_i32_1 : i32 to vector<1x256xi32>
    %8 = arith.cmpi slt, %4, %7 : vector<1x256xi32>
    %c0_i32_2 = arith.constant 0 : i32
    %9 = arith.cmpi slt, %2, %c0_i32_2 : i32
    %10 = vector.broadcast %9 : i1 to vector<1x256xi1>
    %11 = vector.broadcast %10 : vector<1x256xi1> to vector<1x256xi1>
    %12 = arith.xori %8, %11 : vector<1x256xi1>
    %13 = arith.andi %12, %6 : vector<1x256xi1>
    %14 = vector.broadcast %2 : i32 to vector<1x256xi32>
    %15 = arith.addi %4, %14 : vector<1x256xi32>
    %16 = arith.select %13, %15, %4 : vector<1x256xi1>, vector<1x256xi32>
    %c1_i32_3 = arith.constant 1 : i32
    %17 = vector.broadcast %c1_i32_3 : i32 to vector<1x256xi32>
    %18 = arith.cmpi sge, %16, %17 : vector<1x256xi32>
    %19 = arith.extui %18 : vector<1x256xi1> to vector<1x256xi32>
    %20 = arith.sitofp %19 : vector<1x256xi32> to vector<1x256xf32>
    %c14_i32 = arith.constant 14 : i32
    %21 = vector.broadcast %c14_i32 : i32 to vector<1x256xi32>
    %22 = arith.cmpi sle, %16, %21 : vector<1x256xi32>
    %23 = arith.extui %22 : vector<1x256xi1> to vector<1x256xi32>
    %24 = arith.sitofp %23 : vector<1x256xi32> to vector<1x256xf32>
    %cst = arith.constant 0.000000e+00 : f32
    %25 = vector.broadcast %cst : f32 to vector<2x4x290xf32>
    %c0 = arith.constant 0 : index
    %c0_4 = arith.constant 0 : index
    %c0_5 = arith.constant 0 : index
    %26 = vector.load %arg10[%c0, %c0_4, %c0_5] : memref<2x4x290xf32, #tpu.memory_space<vmem>>, vector<2x4x290xf32>
    tpu.vector_store %arg10[%c0, %c0_4, %c0_5], %25 {strides = array<i32>} : memref<2x4x290xf32, #tpu.memory_space<vmem>>, vector<2x4x290xf32>,
    %cst_6 = arith.constant 0.000000e+00 : f32
    %27 = vector.broadcast %cst_6 : f32 to vector<2x4x290xf32>
    %c0_7 = arith.constant 0 : index
    %c0_8 = arith.constant 0 : index
    %c0_9 = arith.constant 0 : index
    %28 = vector.load %arg11[%c0_7, %c0_8, %c0_9] : memref<2x4x290xf32, #tpu.memory_space<vmem>>, vector<2x4x290xf32>
    tpu.vector_store %arg11[%c0_7, %c0_8, %c0_9], %27 {strides = array<i32>} : memref<2x4x290xf32, #tpu.memory_space<vmem>>, vector<2x4x290xf32>,
    %c0_10 = arith.constant 0 : index
    %c0_11 = arith.constant 0 : index
    %c0_12 = arith.constant 0 : index
    %29 = vector.load %arg0[%c0_10, %c0_11, %c0_12] : memref<2x4x256xf32, #tpu.memory_space<vmem>>, vector<2x4x256xf32>
    %c0_13 = arith.constant 0 : index
    %c0_14 = arith.constant 0 : index
    %c17 = arith.constant 17 : index
    %30 = vector.load %arg10[%c0_13, %c0_14, %c17] : memref<2x4x290xf32, #tpu.memory_space<vmem>>, vector<2x4x256xf32>
    tpu.vector_store %arg10[%c0_13, %c0_14, %c17], %29 {strides = array<i32>} : memref<2x4x290xf32, #tpu.memory_space<vmem>>, vector<2x4x256xf32>,
    %c0_15 = arith.constant 0 : index
    %31 = memref.load %arg2[%c0_15] : memref<4xf32, #tpu.memory_space<smem>>
    %32 = vector.broadcast %31 : f32 to vector<2x256xf32>
    %c1 = arith.constant 1 : index
    %33 = memref.load %arg2[%c1] : memref<4xf32, #tpu.memory_space<smem>>
    %34 = vector.broadcast %33 : f32 to vector<2x256xf32>
    %c2 = arith.constant 2 : index
    %35 = memref.load %arg2[%c2] : memref<4xf32, #tpu.memory_space<smem>>
    %36 = vector.broadcast %35 : f32 to vector<2x256xf32>
    %c3 = arith.constant 3 : index
    %37 = memref.load %arg2[%c3] : memref<4xf32, #tpu.memory_space<smem>>
    %38 = vector.broadcast %37 : f32 to vector<2x256xf32>
    %c0_16 = arith.constant 0 : index
    %c0_17 = arith.constant 0 : index
    %c0_18 = arith.constant 0 : index
    %39 = vector.load %arg10[%c0_16, %c0_17, %c0_18] : memref<2x4x290xf32, #tpu.memory_space<vmem>>, vector<2x1x256xf32>
    %40 = vector.shape_cast %39 : vector<2x1x256xf32> to vector<2x256xf32>
    %41 = vector.broadcast %20 : vector<1x256xf32> to vector<2x256xf32>
    %42 = arith.mulf %40, %41 : vector<2x256xf32>
    %c0_19 = arith.constant 0 : index
    %43 = memref.load %arg1[%c0_19] : memref<144xf32, #tpu.memory_space<smem>>
    %44 = vector.broadcast %43 : f32 to vector<2x256xf32>
    %45 = arith.mulf %44, %42 : vector<2x256xf32>
    %46 = arith.addf %32, %45 : vector<2x256xf32>
    %c36 = arith.constant 36 : index
    %47 = memref.load %arg1[%c36] : memref<144xf32, #tpu.memory_space<smem>>
    %48 = vector.broadcast %47 : f32 to vector<2x256xf32>
    %49 = arith.mulf %48, %42 : vector<2x256xf32>
    %50 = arith.addf %34, %49 : vector<2x256xf32>
    %c72 = arith.constant 72 : index
    %51 = memref.load %arg1[%c72] : memref<144xf32, #tpu.memory_space<smem>>
    %52 = vector.broadcast %51 : f32 to vector<2x256xf32>
    %53 = arith.mulf %52, %42 : vector<2x256xf32>
    %54 = arith.addf %36, %53 : vector<2x256xf32>
    %c108 = arith.constant 108 : index
    %55 = memref.load %arg1[%c108] : memref<144xf32, #tpu.memory_space<smem>>
    %56 = vector.broadcast %55 : f32 to vector<2x256xf32>
    %57 = arith.mulf %56, %42 : vector<2x256xf32>
    %58 = arith.addf %38, %57 : vector<2x256xf32>
    %c0_20 = arith.constant 0 : index
    %c0_21 = arith.constant 0 : index
    %c1_22 = arith.constant 1 : index
    %59 = vector.load %arg10[%c0_20, %c0_21, %c1_22] : memref<2x4x290xf32, #tpu.memory_space<vmem>>, vector<2x1x256xf32>
    %60 = vector.shape_cast %59 : vector<2x1x256xf32> to vector<2x256xf32>
    %c1_23 = arith.constant 1 : index
    %61 = memref.load %arg1[%c1_23] : memref<144xf32, #tpu.memory_space<smem>>
    %62 = vector.broadcast %61 : f32 to vector<2x256xf32>
    %63 = arith.mulf %62, %60 : vector<2x256xf32>
    %64 = arith.addf %46, %63 : vector<2x256xf32>
    %c37 = arith.constant 37 : index
    %65 = memref.load %arg1[%c37] : memref<144xf32, #tpu.memory_space<smem>>
    %66 = vector.broadcast %65 : f32 to vector<2x256xf32>
    %67 = arith.mulf %66, %60 : vector<2x256xf32>
    %68 = arith.addf %50, %67 : vector<2x256xf32>
    %c73 = arith.constant 73 : index
    %69 = memref.load %arg1[%c73] : memref<144xf32, #tpu.memory_space<smem>>
    %70 = vector.broadcast %69 : f32 to vector<2x256xf32>
    %71 = arith.mulf %70, %60 : vector<2x256xf32>
    %72 = arith.addf %54, %71 : vector<2x256xf32>
    %c109 = arith.constant 109 : index
    %73 = memref.load %arg1[%c109] : memref<144xf32, #tpu.memory_space<smem>>
    %74 = vector.broadcast %73 : f32 to vector<2x256xf32>
    %75 = arith.mulf %74, %60 : vector<2x256xf32>
    %76 = arith.addf %58, %75 : vector<2x256xf32>
    %c0_24 = arith.constant 0 : index
    %c0_25 = arith.constant 0 : index
    %c2_26 = arith.constant 2 : index
    %77 = vector.load %arg10[%c0_24, %c0_25, %c2_26] : memref<2x4x290xf32, #tpu.memory_space<vmem>>, vector<2x1x256xf32>
    %78 = vector.shape_cast %77 : vector<2x1x256xf32> to vector<2x256xf32>
    %79 = vector.broadcast %24 : vector<1x256xf32> to vector<2x256xf32>
    %80 = arith.mulf %78, %79 : vector<2x256xf32>
    %c2_27 = arith.constant 2 : index
    %81 = memref.load %arg1[%c2_27] : memref<144xf32, #tpu.memory_space<smem>>
    %82 = vector.broadcast %81 : f32 to vector<2x256xf32>
    %83 = arith.mulf %82, %80 : vector<2x256xf32>
    %84 = arith.addf %64, %83 : vector<2x256xf32>
    %c38 = arith.constant 38 : index
    %85 = memref.load %arg1[%c38] : memref<144xf32, #tpu.memory_space<smem>>
    %86 = vector.broadcast %85 : f32 to vector<2x256xf32>
    %87 = arith.mulf %86, %80 : vector<2x256xf32>
    %88 = arith.addf %68, %87 : vector<2x256xf32>
    %c74 = arith.constant 74 : index
    %89 = memref.load %arg1[%c74] : memref<144xf32, #tpu.memory_space<smem>>
    %90 = vector.broadcast %89 : f32 to vector<2x256xf32>
    %91 = arith.mulf %90, %80 : vector<2x256xf32>
    %92 = arith.addf %72, %91 : vector<2x256xf32>
    %c110 = arith.constant 110 : index
    %93 = memref.load %arg1[%c110] : memref<144xf32, #tpu.memory_space<smem>>
    %94 = vector.broadcast %93 : f32 to vector<2x256xf32>
    %95 = arith.mulf %94, %80 : vector<2x256xf32>
    %96 = arith.addf %76, %95 : vector<2x256xf32>
    %c0_28 = arith.constant 0 : index
    %c0_29 = arith.constant 0 : index
    %c16 = arith.constant 16 : index
    %97 = vector.load %arg10[%c0_28, %c0_29, %c16] : memref<2x4x290xf32, #tpu.memory_space<vmem>>, vector<2x1x256xf32>
    %98 = vector.shape_cast %97 : vector<2x1x256xf32> to vector<2x256xf32>
    %99 = vector.broadcast %20 : vector<1x256xf32> to vector<2x256xf32>
    %100 = arith.mulf %98, %99 : vector<2x256xf32>
    %c3_30 = arith.constant 3 : index
    %101 = memref.load %arg1[%c3_30] : memref<144xf32, #tpu.memory_space<smem>>
    %102 = vector.broadcast %101 : f32 to vector<2x256xf32>
    %103 = arith.mulf %102, %100 : vector<2x256xf32>
    %104 = arith.addf %84, %103 : vector<2x256xf32>
    %c39 = arith.constant 39 : index
    %105 = memref.load %arg1[%c39] : memref<144xf32, #tpu.memory_space<smem>>
    %106 = vector.broadcast %105 : f32 to vector<2x256xf32>
    %107 = arith.mulf %106, %100 : vector<2x256xf32>
    %108 = arith.addf %88, %107 : vector<2x256xf32>
    %c75 = arith.constant 75 : index
    %109 = memref.load %arg1[%c75] : memref<144xf32, #tpu.memory_space<smem>>
    %110 = vector.broadcast %109 : f32 to vector<2x256xf32>
    %111 = arith.mulf %110, %100 : vector<2x256xf32>
    %112 = arith.addf %92, %111 : vector<2x256xf32>
    %c111 = arith.constant 111 : index
    %113 = memref.load %arg1[%c111] : memref<144xf32, #tpu.memory_space<smem>>
    %114 = vector.broadcast %113 : f32 to vector<2x256xf32>
    %115 = arith.mulf %114, %100 : vector<2x256xf32>
    %116 = arith.addf %96, %115 : vector<2x256xf32>
    %c0_31 = arith.constant 0 : index
    %c0_32 = arith.constant 0 : index
    %c17_33 = arith.constant 17 : index
    %117 = vector.load %arg10[%c0_31, %c0_32, %c17_33] : memref<2x4x290xf32, #tpu.memory_space<vmem>>, vector<2x1x256xf32>
    %118 = vector.shape_cast %117 : vector<2x1x256xf32> to vector<2x256xf32>
    %c4 = arith.constant 4 : index
    %119 = memref.load %arg1[%c4] : memref<144xf32, #tpu.memory_space<smem>>
    %120 = vector.broadcast %119 : f32 to vector<2x256xf32>
    %121 = arith.mulf %120, %118 : vector<2x256xf32>
    %122 = arith.addf %104, %121 : vector<2x256xf32>
    %c40 = arith.constant 40 : index
    %123 = memref.load %arg1[%c40] : memref<144xf32, #tpu.memory_space<smem>>
    %124 = vector.broadcast %123 : f32 to vector<2x256xf32>
    %125 = arith.mulf %124, %118 : vector<2x256xf32>
    %126 = arith.addf %108, %125 : vector<2x256xf32>
    %c76 = arith.constant 76 : index
    %127 = memref.load %arg1[%c76] : memref<144xf32, #tpu.memory_space<smem>>
    %128 = vector.broadcast %127 : f32 to vector<2x256xf32>
    %129 = arith.mulf %128, %118 : vector<2x256xf32>
    %130 = arith.addf %112, %129 : vector<2x256xf32>
    %c112 = arith.constant 112 : index
    %131 = memref.load %arg1[%c112] : memref<144xf32, #tpu.memory_space<smem>>
    %132 = vector.broadcast %131 : f32 to vector<2x256xf32>
    %133 = arith.mulf %132, %118 : vector<2x256xf32>
    %134 = arith.addf %116, %133 : vector<2x256xf32>
    %c0_34 = arith.constant 0 : index
    %c0_35 = arith.constant 0 : index
    %c18 = arith.constant 18 : index
    %135 = vector.load %arg10[%c0_34, %c0_35, %c18] : memref<2x4x290xf32, #tpu.memory_space<vmem>>, vector<2x1x256xf32>
    %136 = vector.shape_cast %135 : vector<2x1x256xf32> to vector<2x256xf32>
    %137 = vector.broadcast %24 : vector<1x256xf32> to vector<2x256xf32>
    %138 = arith.mulf %136, %137 : vector<2x256xf32>
    %c5 = arith.constant 5 : index
    %139 = memref.load %arg1[%c5] : memref<144xf32, #tpu.memory_space<smem>>
    %140 = vector.broadcast %139 : f32 to vector<2x256xf32>
    %141 = arith.mulf %140, %138 : vector<2x256xf32>
    %142 = arith.addf %122, %141 : vector<2x256xf32>
    %c41 = arith.constant 41 : index
    %143 = memref.load %arg1[%c41] : memref<144xf32, #tpu.memory_space<smem>>
    %144 = vector.broadcast %143 : f32 to vector<2x256xf32>
    %145 = arith.mulf %144, %138 : vector<2x256xf32>
    %146 = arith.addf %126, %145 : vector<2x256xf32>
    %c77 = arith.constant 77 : index
    %147 = memref.load %arg1[%c77] : memref<144xf32, #tpu.memory_space<smem>>
    %148 = vector.broadcast %147 : f32 to vector<2x256xf32>
    %149 = arith.mulf %148, %138 : vector<2x256xf32>
    %150 = arith.addf %130, %149 : vector<2x256xf32>
    %c113 = arith.constant 113 : index
    %151 = memref.load %arg1[%c113] : memref<144xf32, #tpu.memory_space<smem>>
    %152 = vector.broadcast %151 : f32 to vector<2x256xf32>
    %153 = arith.mulf %152, %138 : vector<2x256xf32>
    %154 = arith.addf %134, %153 : vector<2x256xf32>
    %c0_36 = arith.constant 0 : index
    %c0_37 = arith.constant 0 : index
    %c32 = arith.constant 32 : index
    %155 = vector.load %arg10[%c0_36, %c0_37, %c32] : memref<2x4x290xf32, #tpu.memory_space<vmem>>, vector<2x1x256xf32>
    %156 = vector.shape_cast %155 : vector<2x1x256xf32> to vector<2x256xf32>
    %157 = vector.broadcast %20 : vector<1x256xf32> to vector<2x256xf32>
    %158 = arith.mulf %156, %157 : vector<2x256xf32>
    %c6 = arith.constant 6 : index
    %159 = memref.load %arg1[%c6] : memref<144xf32, #tpu.memory_space<smem>>
    %160 = vector.broadcast %159 : f32 to vector<2x256xf32>
    %161 = arith.mulf %160, %158 : vector<2x256xf32>
    %162 = arith.addf %142, %161 : vector<2x256xf32>
    %c42 = arith.constant 42 : index
    %163 = memref.load %arg1[%c42] : memref<144xf32, #tpu.memory_space<smem>>
    %164 = vector.broadcast %163 : f32 to vector<2x256xf32>
    %165 = arith.mulf %164, %158 : vector<2x256xf32>
    %166 = arith.addf %146, %165 : vector<2x256xf32>
    %c78 = arith.constant 78 : index
    %167 = memref.load %arg1[%c78] : memref<144xf32, #tpu.memory_space<smem>>
    %168 = vector.broadcast %167 : f32 to vector<2x256xf32>
    %169 = arith.mulf %168, %158 : vector<2x256xf32>
    %170 = arith.addf %150, %169 : vector<2x256xf32>
    %c114 = arith.constant 114 : index
    %171 = memref.load %arg1[%c114] : memref<144xf32, #tpu.memory_space<smem>>
    %172 = vector.broadcast %171 : f32 to vector<2x256xf32>
    %173 = arith.mulf %172, %158 : vector<2x256xf32>
    %174 = arith.addf %154, %173 : vector<2x256xf32>
    %c0_38 = arith.constant 0 : index
    %c0_39 = arith.constant 0 : index
    %c33 = arith.constant 33 : index
    %175 = vector.load %arg10[%c0_38, %c0_39, %c33] : memref<2x4x290xf32, #tpu.memory_space<vmem>>, vector<2x1x256xf32>
    %176 = vector.shape_cast %175 : vector<2x1x256xf32> to vector<2x256xf32>
    %c7 = arith.constant 7 : index
    %177 = memref.load %arg1[%c7] : memref<144xf32, #tpu.memory_space<smem>>
    %178 = vector.broadcast %177 : f32 to vector<2x256xf32>
    %179 = arith.mulf %178, %176 : vector<2x256xf32>
    %180 = arith.addf %162, %179 : vector<2x256xf32>
    %c43 = arith.constant 43 : index
    %181 = memref.load %arg1[%c43] : memref<144xf32, #tpu.memory_space<smem>>
    %182 = vector.broadcast %181 : f32 to vector<2x256xf32>
    %183 = arith.mulf %182, %176 : vector<2x256xf32>
    %184 = arith.addf %166, %183 : vector<2x256xf32>
    %c79 = arith.constant 79 : index
    %185 = memref.load %arg1[%c79] : memref<144xf32, #tpu.memory_space<smem>>
    %186 = vector.broadcast %185 : f32 to vector<2x256xf32>
    %187 = arith.mulf %186, %176 : vector<2x256xf32>
    %188 = arith.addf %170, %187 : vector<2x256xf32>
    %c115 = arith.constant 115 : index
    %189 = memref.load %arg1[%c115] : memref<144xf32, #tpu.memory_space<smem>>
    %190 = vector.broadcast %189 : f32 to vector<2x256xf32>
    %191 = arith.mulf %190, %176 : vector<2x256xf32>
    %192 = arith.addf %174, %191 : vector<2x256xf32>
    %c0_40 = arith.constant 0 : index
    %c0_41 = arith.constant 0 : index
    %c34 = arith.constant 34 : index
    %193 = vector.load %arg10[%c0_40, %c0_41, %c34] : memref<2x4x290xf32, #tpu.memory_space<vmem>>, vector<2x1x256xf32>
    %194 = vector.shape_cast %193 : vector<2x1x256xf32> to vector<2x256xf32>
    %195 = vector.broadcast %24 : vector<1x256xf32> to vector<2x256xf32>
    %196 = arith.mulf %194, %195 : vector<2x256xf32>
    %c8 = arith.constant 8 : index
    %197 = memref.load %arg1[%c8] : memref<144xf32, #tpu.memory_space<smem>>
    %198 = vector.broadcast %197 : f32 to vector<2x256xf32>
    %199 = arith.mulf %198, %196 : vector<2x256xf32>
    %200 = arith.addf %180, %199 : vector<2x256xf32>
    %c44 = arith.constant 44 : index
    %201 = memref.load %arg1[%c44] : memref<144xf32, #tpu.memory_space<smem>>
    %202 = vector.broadcast %201 : f32 to vector<2x256xf32>
    %203 = arith.mulf %202, %196 : vector<2x256xf32>
    %204 = arith.addf %184, %203 : vector<2x256xf32>
    %c80 = arith.constant 80 : index
    %205 = memref.load %arg1[%c80] : memref<144xf32, #tpu.memory_space<smem>>
    %206 = vector.broadcast %205 : f32 to vector<2x256xf32>
    %207 = arith.mulf %206, %196 : vector<2x256xf32>
    %208 = arith.addf %188, %207 : vector<2x256xf32>
    %c116 = arith.constant 116 : index
    %209 = memref.load %arg1[%c116] : memref<144xf32, #tpu.memory_space<smem>>
    %210 = vector.broadcast %209 : f32 to vector<2x256xf32>
    %211 = arith.mulf %210, %196 : vector<2x256xf32>
    %212 = arith.addf %192, %211 : vector<2x256xf32>
    %c0_42 = arith.constant 0 : index
    %c1_43 = arith.constant 1 : index
    %c0_44 = arith.constant 0 : index
    %213 = vector.load %arg10[%c0_42, %c1_43, %c0_44] : memref<2x4x290xf32, #tpu.memory_space<vmem>>, vector<2x1x256xf32>
    %214 = vector.shape_cast %213 : vector<2x1x256xf32> to vector<2x256xf32>
    %215 = vector.broadcast %20 : vector<1x256xf32> to vector<2x256xf32>
    %216 = arith.mulf %214, %215 : vector<2x256xf32>
    %c9 = arith.constant 9 : index
    %217 = memref.load %arg1[%c9] : memref<144xf32, #tpu.memory_space<smem>>
    %218 = vector.broadcast %217 : f32 to vector<2x256xf32>
    %219 = arith.mulf %218, %216 : vector<2x256xf32>
    %220 = arith.addf %200, %219 : vector<2x256xf32>
    %c45 = arith.constant 45 : index
    %221 = memref.load %arg1[%c45] : memref<144xf32, #tpu.memory_space<smem>>
    %222 = vector.broadcast %221 : f32 to vector<2x256xf32>
    %223 = arith.mulf %222, %216 : vector<2x256xf32>
    %224 = arith.addf %204, %223 : vector<2x256xf32>
    %c81 = arith.constant 81 : index
    %225 = memref.load %arg1[%c81] : memref<144xf32, #tpu.memory_space<smem>>
    %226 = vector.broadcast %225 : f32 to vector<2x256xf32>
    %227 = arith.mulf %226, %216 : vector<2x256xf32>
    %228 = arith.addf %208, %227 : vector<2x256xf32>
    %c117 = arith.constant 117 : index
    %229 = memref.load %arg1[%c117] : memref<144xf32, #tpu.memory_space<smem>>
    %230 = vector.broadcast %229 : f32 to vector<2x256xf32>
    %231 = arith.mulf %230, %216 : vector<2x256xf32>
    %232 = arith.addf %212, %231 : vector<2x256xf32>
    %c0_45 = arith.constant 0 : index
    %c1_46 = arith.constant 1 : index
    %c1_47 = arith.constant 1 : index
    %233 = vector.load %arg10[%c0_45, %c1_46, %c1_47] : memref<2x4x290xf32, #tpu.memory_space<vmem>>, vector<2x1x256xf32>
    %234 = vector.shape_cast %233 : vector<2x1x256xf32> to vector<2x256xf32>
    %c10 = arith.constant 10 : index
    %235 = memref.load %arg1[%c10] : memref<144xf32, #tpu.memory_space<smem>>
    %236 = vector.broadcast %235 : f32 to vector<2x256xf32>
    %237 = arith.mulf %236, %234 : vector<2x256xf32>
    %238 = arith.addf %220, %237 : vector<2x256xf32>
    %c46 = arith.constant 46 : index
    %239 = memref.load %arg1[%c46] : memref<144xf32, #tpu.memory_space<smem>>
    %240 = vector.broadcast %239 : f32 to vector<2x256xf32>
    %241 = arith.mulf %240, %234 : vector<2x256xf32>
    %242 = arith.addf %224, %241 : vector<2x256xf32>
    %c82 = arith.constant 82 : index
    %243 = memref.load %arg1[%c82] : memref<144xf32, #tpu.memory_space<smem>>
    %244 = vector.broadcast %243 : f32 to vector<2x256xf32>
    %245 = arith.mulf %244, %234 : vector<2x256xf32>
    %246 = arith.addf %228, %245 : vector<2x256xf32>
    %c118 = arith.constant 118 : index
    %247 = memref.load %arg1[%c118] : memref<144xf32, #tpu.memory_space<smem>>
    %248 = vector.broadcast %247 : f32 to vector<2x256xf32>
    %249 = arith.mulf %248, %234 : vector<2x256xf32>
    %250 = arith.addf %232, %249 : vector<2x256xf32>
    %c0_48 = arith.constant 0 : index
    %c1_49 = arith.constant 1 : index
    %c2_50 = arith.constant 2 : index
    %251 = vector.load %arg10[%c0_48, %c1_49, %c2_50] : memref<2x4x290xf32, #tpu.memory_space<vmem>>, vector<2x1x256xf32>
    %252 = vector.shape_cast %251 : vector<2x1x256xf32> to vector<2x256xf32>
    %253 = vector.broadcast %24 : vector<1x256xf32> to vector<2x256xf32>
    %254 = arith.mulf %252, %253 : vector<2x256xf32>
    %c11 = arith.constant 11 : index
    %255 = memref.load %arg1[%c11] : memref<144xf32, #tpu.memory_space<smem>>
    %256 = vector.broadcast %255 : f32 to vector<2x256xf32>
    %257 = arith.mulf %256, %254 : vector<2x256xf32>
    %258 = arith.addf %238, %257 : vector<2x256xf32>
    %c47 = arith.constant 47 : index
    %259 = memref.load %arg1[%c47] : memref<144xf32, #tpu.memory_space<smem>>
    %260 = vector.broadcast %259 : f32 to vector<2x256xf32>
    %261 = arith.mulf %260, %254 : vector<2x256xf32>
    %262 = arith.addf %242, %261 : vector<2x256xf32>
    %c83 = arith.constant 83 : index
    %263 = memref.load %arg1[%c83] : memref<144xf32, #tpu.memory_space<smem>>
    %264 = vector.broadcast %263 : f32 to vector<2x256xf32>
    %265 = arith.mulf %264, %254 : vector<2x256xf32>
    %266 = arith.addf %246, %265 : vector<2x256xf32>
    %c119 = arith.constant 119 : index
    %267 = memref.load %arg1[%c119] : memref<144xf32, #tpu.memory_space<smem>>
    %268 = vector.broadcast %267 : f32 to vector<2x256xf32>
    %269 = arith.mulf %268, %254 : vector<2x256xf32>
    %270 = arith.addf %250, %269 : vector<2x256xf32>
    %c0_51 = arith.constant 0 : index
    %c1_52 = arith.constant 1 : index
    %c16_53 = arith.constant 16 : index
    %271 = vector.load %arg10[%c0_51, %c1_52, %c16_53] : memref<2x4x290xf32, #tpu.memory_space<vmem>>, vector<2x1x256xf32>
    %272 = vector.shape_cast %271 : vector<2x1x256xf32> to vector<2x256xf32>
    %273 = vector.broadcast %20 : vector<1x256xf32> to vector<2x256xf32>
    %274 = arith.mulf %272, %273 : vector<2x256xf32>
    %c12 = arith.constant 12 : index
    %275 = memref.load %arg1[%c12] : memref<144xf32, #tpu.memory_space<smem>>
    %276 = vector.broadcast %275 : f32 to vector<2x256xf32>
    %277 = arith.mulf %276, %274 : vector<2x256xf32>
    %278 = arith.addf %258, %277 : vector<2x256xf32>
    %c48 = arith.constant 48 : index
    %279 = memref.load %arg1[%c48] : memref<144xf32, #tpu.memory_space<smem>>
    %280 = vector.broadcast %279 : f32 to vector<2x256xf32>
    %281 = arith.mulf %280, %274 : vector<2x256xf32>
    %282 = arith.addf %262, %281 : vector<2x256xf32>
    %c84 = arith.constant 84 : index
    %283 = memref.load %arg1[%c84] : memref<144xf32, #tpu.memory_space<smem>>
    %284 = vector.broadcast %283 : f32 to vector<2x256xf32>
    %285 = arith.mulf %284, %274 : vector<2x256xf32>
    %286 = arith.addf %266, %285 : vector<2x256xf32>
    %c120 = arith.constant 120 : index
    %287 = memref.load %arg1[%c120] : memref<144xf32, #tpu.memory_space<smem>>
    %288 = vector.broadcast %287 : f32 to vector<2x256xf32>
    %289 = arith.mulf %288, %274 : vector<2x256xf32>
    %290 = arith.addf %270, %289 : vector<2x256xf32>
    %c0_54 = arith.constant 0 : index
    %c1_55 = arith.constant 1 : index
    %c17_56 = arith.constant 17 : index
    %291 = vector.load %arg10[%c0_54, %c1_55, %c17_56] : memref<2x4x290xf32, #tpu.memory_space<vmem>>, vector<2x1x256xf32>
    %292 = vector.shape_cast %291 : vector<2x1x256xf32> to vector<2x256xf32>
    %c13 = arith.constant 13 : index
    %293 = memref.load %arg1[%c13] : memref<144xf32, #tpu.memory_space<smem>>
    %294 = vector.broadcast %293 : f32 to vector<2x256xf32>
    %295 = arith.mulf %294, %292 : vector<2x256xf32>
    %296 = arith.addf %278, %295 : vector<2x256xf32>
    %c49 = arith.constant 49 : index
    %297 = memref.load %arg1[%c49] : memref<144xf32, #tpu.memory_space<smem>>
    %298 = vector.broadcast %297 : f32 to vector<2x256xf32>
    %299 = arith.mulf %298, %292 : vector<2x256xf32>
    %300 = arith.addf %282, %299 : vector<2x256xf32>
    %c85 = arith.constant 85 : index
    %301 = memref.load %arg1[%c85] : memref<144xf32, #tpu.memory_space<smem>>
    %302 = vector.broadcast %301 : f32 to vector<2x256xf32>
    %303 = arith.mulf %302, %292 : vector<2x256xf32>
    %304 = arith.addf %286, %303 : vector<2x256xf32>
    %c121 = arith.constant 121 : index
    %305 = memref.load %arg1[%c121] : memref<144xf32, #tpu.memory_space<smem>>
    %306 = vector.broadcast %305 : f32 to vector<2x256xf32>
    %307 = arith.mulf %306, %292 : vector<2x256xf32>
    %308 = arith.addf %290, %307 : vector<2x256xf32>
    %c0_57 = arith.constant 0 : index
    %c1_58 = arith.constant 1 : index
    %c18_59 = arith.constant 18 : index
    %309 = vector.load %arg10[%c0_57, %c1_58, %c18_59] : memref<2x4x290xf32, #tpu.memory_space<vmem>>, vector<2x1x256xf32>
    %310 = vector.shape_cast %309 : vector<2x1x256xf32> to vector<2x256xf32>
    %311 = vector.broadcast %24 : vector<1x256xf32> to vector<2x256xf32>
    %312 = arith.mulf %310, %311 : vector<2x256xf32>
    %c14 = arith.constant 14 : index
    %313 = memref.load %arg1[%c14] : memref<144xf32, #tpu.memory_space<smem>>
    %314 = vector.broadcast %313 : f32 to vector<2x256xf32>
    %315 = arith.mulf %314, %312 : vector<2x256xf32>
    %316 = arith.addf %296, %315 : vector<2x256xf32>
    %c50 = arith.constant 50 : index
    %317 = memref.load %arg1[%c50] : memref<144xf32, #tpu.memory_space<smem>>
    %318 = vector.broadcast %317 : f32 to vector<2x256xf32>
    %319 = arith.mulf %318, %312 : vector<2x256xf32>
    %320 = arith.addf %300, %319 : vector<2x256xf32>
    %c86 = arith.constant 86 : index
    %321 = memref.load %arg1[%c86] : memref<144xf32, #tpu.memory_space<smem>>
    %322 = vector.broadcast %321 : f32 to vector<2x256xf32>
    %323 = arith.mulf %322, %312 : vector<2x256xf32>
    %324 = arith.addf %304, %323 : vector<2x256xf32>
    %c122 = arith.constant 122 : index
    %325 = memref.load %arg1[%c122] : memref<144xf32, #tpu.memory_space<smem>>
    %326 = vector.broadcast %325 : f32 to vector<2x256xf32>
    %327 = arith.mulf %326, %312 : vector<2x256xf32>
    %328 = arith.addf %308, %327 : vector<2x256xf32>
    %c0_60 = arith.constant 0 : index
    %c1_61 = arith.constant 1 : index
    %c32_62 = arith.constant 32 : index
    %329 = vector.load %arg10[%c0_60, %c1_61, %c32_62] : memref<2x4x290xf32, #tpu.memory_space<vmem>>, vector<2x1x256xf32>
    %330 = vector.shape_cast %329 : vector<2x1x256xf32> to vector<2x256xf32>
    %331 = vector.broadcast %20 : vector<1x256xf32> to vector<2x256xf32>
    %332 = arith.mulf %330, %331 : vector<2x256xf32>
    %c15 = arith.constant 15 : index
    %333 = memref.load %arg1[%c15] : memref<144xf32, #tpu.memory_space<smem>>
    %334 = vector.broadcast %333 : f32 to vector<2x256xf32>
    %335 = arith.mulf %334, %332 : vector<2x256xf32>
    %336 = arith.addf %316, %335 : vector<2x256xf32>
    %c51 = arith.constant 51 : index
    %337 = memref.load %arg1[%c51] : memref<144xf32, #tpu.memory_space<smem>>
    %338 = vector.broadcast %337 : f32 to vector<2x256xf32>
    %339 = arith.mulf %338, %332 : vector<2x256xf32>
    %340 = arith.addf %320, %339 : vector<2x256xf32>
    %c87 = arith.constant 87 : index
    %341 = memref.load %arg1[%c87] : memref<144xf32, #tpu.memory_space<smem>>
    %342 = vector.broadcast %341 : f32 to vector<2x256xf32>
    %343 = arith.mulf %342, %332 : vector<2x256xf32>
    %344 = arith.addf %324, %343 : vector<2x256xf32>
    %c123 = arith.constant 123 : index
    %345 = memref.load %arg1[%c123] : memref<144xf32, #tpu.memory_space<smem>>
    %346 = vector.broadcast %345 : f32 to vector<2x256xf32>
    %347 = arith.mulf %346, %332 : vector<2x256xf32>
    %348 = arith.addf %328, %347 : vector<2x256xf32>
    %c0_63 = arith.constant 0 : index
    %c1_64 = arith.constant 1 : index
    %c33_65 = arith.constant 33 : index
    %349 = vector.load %arg10[%c0_63, %c1_64, %c33_65] : memref<2x4x290xf32, #tpu.memory_space<vmem>>, vector<2x1x256xf32>
    %350 = vector.shape_cast %349 : vector<2x1x256xf32> to vector<2x256xf32>
    %c16_66 = arith.constant 16 : index
    %351 = memref.load %arg1[%c16_66] : memref<144xf32, #tpu.memory_space<smem>>
    %352 = vector.broadcast %351 : f32 to vector<2x256xf32>
    %353 = arith.mulf %352, %350 : vector<2x256xf32>
    %354 = arith.addf %336, %353 : vector<2x256xf32>
    %c52 = arith.constant 52 : index
    %355 = memref.load %arg1[%c52] : memref<144xf32, #tpu.memory_space<smem>>
    %356 = vector.broadcast %355 : f32 to vector<2x256xf32>
    %357 = arith.mulf %356, %350 : vector<2x256xf32>
    %358 = arith.addf %340, %357 : vector<2x256xf32>
    %c88 = arith.constant 88 : index
    %359 = memref.load %arg1[%c88] : memref<144xf32, #tpu.memory_space<smem>>
    %360 = vector.broadcast %359 : f32 to vector<2x256xf32>
    %361 = arith.mulf %360, %350 : vector<2x256xf32>
    %362 = arith.addf %344, %361 : vector<2x256xf32>
    %c124 = arith.constant 124 : index
    %363 = memref.load %arg1[%c124] : memref<144xf32, #tpu.memory_space<smem>>
    %364 = vector.broadcast %363 : f32 to vector<2x256xf32>
    %365 = arith.mulf %364, %350 : vector<2x256xf32>
    %366 = arith.addf %348, %365 : vector<2x256xf32>
    %c0_67 = arith.constant 0 : index
    %c1_68 = arith.constant 1 : index
    %c34_69 = arith.constant 34 : index
    %367 = vector.load %arg10[%c0_67, %c1_68, %c34_69] : memref<2x4x290xf32, #tpu.memory_space<vmem>>, vector<2x1x256xf32>
    %368 = vector.shape_cast %367 : vector<2x1x256xf32> to vector<2x256xf32>
    %369 = vector.broadcast %24 : vector<1x256xf32> to vector<2x256xf32>
    %370 = arith.mulf %368, %369 : vector<2x256xf32>
    %c17_70 = arith.constant 17 : index
    %371 = memref.load %arg1[%c17_70] : memref<144xf32, #tpu.memory_space<smem>>
    %372 = vector.broadcast %371 : f32 to vector<2x256xf32>
    %373 = arith.mulf %372, %370 : vector<2x256xf32>
    %374 = arith.addf %354, %373 : vector<2x256xf32>
    %c53 = arith.constant 53 : index
    %375 = memref.load %arg1[%c53] : memref<144xf32, #tpu.memory_space<smem>>
    %376 = vector.broadcast %375 : f32 to vector<2x256xf32>
    %377 = arith.mulf %376, %370 : vector<2x256xf32>
    %378 = arith.addf %358, %377 : vector<2x256xf32>
    %c89 = arith.constant 89 : index
    %379 = memref.load %arg1[%c89] : memref<144xf32, #tpu.memory_space<smem>>
    %380 = vector.broadcast %379 : f32 to vector<2x256xf32>
    %381 = arith.mulf %380, %370 : vector<2x256xf32>
    %382 = arith.addf %362, %381 : vector<2x256xf32>
    %c125 = arith.constant 125 : index
    %383 = memref.load %arg1[%c125] : memref<144xf32, #tpu.memory_space<smem>>
    %384 = vector.broadcast %383 : f32 to vector<2x256xf32>
    %385 = arith.mulf %384, %370 : vector<2x256xf32>
    %386 = arith.addf %366, %385 : vector<2x256xf32>
    %c0_71 = arith.constant 0 : index
    %c2_72 = arith.constant 2 : index
    %c0_73 = arith.constant 0 : index
    %387 = vector.load %arg10[%c0_71, %c2_72, %c0_73] : memref<2x4x290xf32, #tpu.memory_space<vmem>>, vector<2x1x256xf32>
    %388 = vector.shape_cast %387 : vector<2x1x256xf32> to vector<2x256xf32>
    %389 = vector.broadcast %20 : vector<1x256xf32> to vector<2x256xf32>
    %390 = arith.mulf %388, %389 : vector<2x256xf32>
    %c18_74 = arith.constant 18 : index
    %391 = memref.load %arg1[%c18_74] : memref<144xf32, #tpu.memory_space<smem>>
    %392 = vector.broadcast %391 : f32 to vector<2x256xf32>
    %393 = arith.mulf %392, %390 : vector<2x256xf32>
    %394 = arith.addf %374, %393 : vector<2x256xf32>
    %c54 = arith.constant 54 : index
    %395 = memref.load %arg1[%c54] : memref<144xf32, #tpu.memory_space<smem>>
    %396 = vector.broadcast %395 : f32 to vector<2x256xf32>
    %397 = arith.mulf %396, %390 : vector<2x256xf32>
    %398 = arith.addf %378, %397 : vector<2x256xf32>
    %c90 = arith.constant 90 : index
    %399 = memref.load %arg1[%c90] : memref<144xf32, #tpu.memory_space<smem>>
    %400 = vector.broadcast %399 : f32 to vector<2x256xf32>
    %401 = arith.mulf %400, %390 : vector<2x256xf32>
    %402 = arith.addf %382, %401 : vector<2x256xf32>
    %c126 = arith.constant 126 : index
    %403 = memref.load %arg1[%c126] : memref<144xf32, #tpu.memory_space<smem>>
    %404 = vector.broadcast %403 : f32 to vector<2x256xf32>
    %405 = arith.mulf %404, %390 : vector<2x256xf32>
    %406 = arith.addf %386, %405 : vector<2x256xf32>
    %c0_75 = arith.constant 0 : index
    %c2_76 = arith.constant 2 : index
    %c1_77 = arith.constant 1 : index
    %407 = vector.load %arg10[%c0_75, %c2_76, %c1_77] : memref<2x4x290xf32, #tpu.memory_space<vmem>>, vector<2x1x256xf32>
    %408 = vector.shape_cast %407 : vector<2x1x256xf32> to vector<2x256xf32>
    %c19 = arith.constant 19 : index
    %409 = memref.load %arg1[%c19] : memref<144xf32, #tpu.memory_space<smem>>
    %410 = vector.broadcast %409 : f32 to vector<2x256xf32>
    %411 = arith.mulf %410, %408 : vector<2x256xf32>
    %412 = arith.addf %394, %411 : vector<2x256xf32>
    %c55 = arith.constant 55 : index
    %413 = memref.load %arg1[%c55] : memref<144xf32, #tpu.memory_space<smem>>
    %414 = vector.broadcast %413 : f32 to vector<2x256xf32>
    %415 = arith.mulf %414, %408 : vector<2x256xf32>
    %416 = arith.addf %398, %415 : vector<2x256xf32>
    %c91 = arith.constant 91 : index
    %417 = memref.load %arg1[%c91] : memref<144xf32, #tpu.memory_space<smem>>
    %418 = vector.broadcast %417 : f32 to vector<2x256xf32>
    %419 = arith.mulf %418, %408 : vector<2x256xf32>
    %420 = arith.addf %402, %419 : vector<2x256xf32>
    %c127 = arith.constant 127 : index
    %421 = memref.load %arg1[%c127] : memref<144xf32, #tpu.memory_space<smem>>
    %422 = vector.broadcast %421 : f32 to vector<2x256xf32>
    %423 = arith.mulf %422, %408 : vector<2x256xf32>
    %424 = arith.addf %406, %423 : vector<2x256xf32>
    %c0_78 = arith.constant 0 : index
    %c2_79 = arith.constant 2 : index
    %c2_80 = arith.constant 2 : index
    %425 = vector.load %arg10[%c0_78, %c2_79, %c2_80] : memref<2x4x290xf32, #tpu.memory_space<vmem>>, vector<2x1x256xf32>
    %426 = vector.shape_cast %425 : vector<2x1x256xf32> to vector<2x256xf32>
    %427 = vector.broadcast %24 : vector<1x256xf32> to vector<2x256xf32>
    %428 = arith.mulf %426, %427 : vector<2x256xf32>
    %c20 = arith.constant 20 : index
    %429 = memref.load %arg1[%c20] : memref<144xf32, #tpu.memory_space<smem>>
    %430 = vector.broadcast %429 : f32 to vector<2x256xf32>
    %431 = arith.mulf %430, %428 : vector<2x256xf32>
    %432 = arith.addf %412, %431 : vector<2x256xf32>
    %c56 = arith.constant 56 : index
    %433 = memref.load %arg1[%c56] : memref<144xf32, #tpu.memory_space<smem>>
    %434 = vector.broadcast %433 : f32 to vector<2x256xf32>
    %435 = arith.mulf %434, %428 : vector<2x256xf32>
    %436 = arith.addf %416, %435 : vector<2x256xf32>
    %c92 = arith.constant 92 : index
    %437 = memref.load %arg1[%c92] : memref<144xf32, #tpu.memory_space<smem>>
    %438 = vector.broadcast %437 : f32 to vector<2x256xf32>
    %439 = arith.mulf %438, %428 : vector<2x256xf32>
    %440 = arith.addf %420, %439 : vector<2x256xf32>
    %c128 = arith.constant 128 : index
    %441 = memref.load %arg1[%c128] : memref<144xf32, #tpu.memory_space<smem>>
    %442 = vector.broadcast %441 : f32 to vector<2x256xf32>
    %443 = arith.mulf %442, %428 : vector<2x256xf32>
    %444 = arith.addf %424, %443 : vector<2x256xf32>
    %c0_81 = arith.constant 0 : index
    %c2_82 = arith.constant 2 : index
    %c16_83 = arith.constant 16 : index
    %445 = vector.load %arg10[%c0_81, %c2_82, %c16_83] : memref<2x4x290xf32, #tpu.memory_space<vmem>>, vector<2x1x256xf32>
    %446 = vector.shape_cast %445 : vector<2x1x256xf32> to vector<2x256xf32>
    %447 = vector.broadcast %20 : vector<1x256xf32> to vector<2x256xf32>
    %448 = arith.mulf %446, %447 : vector<2x256xf32>
    %c21 = arith.constant 21 : index
    %449 = memref.load %arg1[%c21] : memref<144xf32, #tpu.memory_space<smem>>
    %450 = vector.broadcast %449 : f32 to vector<2x256xf32>
    %451 = arith.mulf %450, %448 : vector<2x256xf32>
    %452 = arith.addf %432, %451 : vector<2x256xf32>
    %c57 = arith.constant 57 : index
    %453 = memref.load %arg1[%c57] : memref<144xf32, #tpu.memory_space<smem>>
    %454 = vector.broadcast %453 : f32 to vector<2x256xf32>
    %455 = arith.mulf %454, %448 : vector<2x256xf32>
    %456 = arith.addf %436, %455 : vector<2x256xf32>
    %c93 = arith.constant 93 : index
    %457 = memref.load %arg1[%c93] : memref<144xf32, #tpu.memory_space<smem>>
    %458 = vector.broadcast %457 : f32 to vector<2x256xf32>
    %459 = arith.mulf %458, %448 : vector<2x256xf32>
    %460 = arith.addf %440, %459 : vector<2x256xf32>
    %c129 = arith.constant 129 : index
    %461 = memref.load %arg1[%c129] : memref<144xf32, #tpu.memory_space<smem>>
    %462 = vector.broadcast %461 : f32 to vector<2x256xf32>
    %463 = arith.mulf %462, %448 : vector<2x256xf32>
    %464 = arith.addf %444, %463 : vector<2x256xf32>
    %c0_84 = arith.constant 0 : index
    %c2_85 = arith.constant 2 : index
    %c17_86 = arith.constant 17 : index
    %465 = vector.load %arg10[%c0_84, %c2_85, %c17_86] : memref<2x4x290xf32, #tpu.memory_space<vmem>>, vector<2x1x256xf32>
    %466 = vector.shape_cast %465 : vector<2x1x256xf32> to vector<2x256xf32>
    %c22 = arith.constant 22 : index
    %467 = memref.load %arg1[%c22] : memref<144xf32, #tpu.memory_space<smem>>
    %468 = vector.broadcast %467 : f32 to vector<2x256xf32>
    %469 = arith.mulf %468, %466 : vector<2x256xf32>
    %470 = arith.addf %452, %469 : vector<2x256xf32>
    %c58 = arith.constant 58 : index
    %471 = memref.load %arg1[%c58] : memref<144xf32, #tpu.memory_space<smem>>
    %472 = vector.broadcast %471 : f32 to vector<2x256xf32>
    %473 = arith.mulf %472, %466 : vector<2x256xf32>
    %474 = arith.addf %456, %473 : vector<2x256xf32>
    %c94 = arith.constant 94 : index
    %475 = memref.load %arg1[%c94] : memref<144xf32, #tpu.memory_space<smem>>
    %476 = vector.broadcast %475 : f32 to vector<2x256xf32>
    %477 = arith.mulf %476, %466 : vector<2x256xf32>
    %478 = arith.addf %460, %477 : vector<2x256xf32>
    %c130 = arith.constant 130 : index
    %479 = memref.load %arg1[%c130] : memref<144xf32, #tpu.memory_space<smem>>
    %480 = vector.broadcast %479 : f32 to vector<2x256xf32>
    %481 = arith.mulf %480, %466 : vector<2x256xf32>
    %482 = arith.addf %464, %481 : vector<2x256xf32>
    %c0_87 = arith.constant 0 : index
    %c2_88 = arith.constant 2 : index
    %c18_89 = arith.constant 18 : index
    %483 = vector.load %arg10[%c0_87, %c2_88, %c18_89] : memref<2x4x290xf32, #tpu.memory_space<vmem>>, vector<2x1x256xf32>
    %484 = vector.shape_cast %483 : vector<2x1x256xf32> to vector<2x256xf32>
    %485 = vector.broadcast %24 : vector<1x256xf32> to vector<2x256xf32>
    %486 = arith.mulf %484, %485 : vector<2x256xf32>
    %c23 = arith.constant 23 : index
    %487 = memref.load %arg1[%c23] : memref<144xf32, #tpu.memory_space<smem>>
    %488 = vector.broadcast %487 : f32 to vector<2x256xf32>
    %489 = arith.mulf %488, %486 : vector<2x256xf32>
    %490 = arith.addf %470, %489 : vector<2x256xf32>
    %c59 = arith.constant 59 : index
    %491 = memref.load %arg1[%c59] : memref<144xf32, #tpu.memory_space<smem>>
    %492 = vector.broadcast %491 : f32 to vector<2x256xf32>
    %493 = arith.mulf %492, %486 : vector<2x256xf32>
    %494 = arith.addf %474, %493 : vector<2x256xf32>
    %c95 = arith.constant 95 : index
    %495 = memref.load %arg1[%c95] : memref<144xf32, #tpu.memory_space<smem>>
    %496 = vector.broadcast %495 : f32 to vector<2x256xf32>
    %497 = arith.mulf %496, %486 : vector<2x256xf32>
    %498 = arith.addf %478, %497 : vector<2x256xf32>
    %c131 = arith.constant 131 : index
    %499 = memref.load %arg1[%c131] : memref<144xf32, #tpu.memory_space<smem>>
    %500 = vector.broadcast %499 : f32 to vector<2x256xf32>
    %501 = arith.mulf %500, %486 : vector<2x256xf32>
    %502 = arith.addf %482, %501 : vector<2x256xf32>
    %c0_90 = arith.constant 0 : index
    %c2_91 = arith.constant 2 : index
    %c32_92 = arith.constant 32 : index
    %503 = vector.load %arg10[%c0_90, %c2_91, %c32_92] : memref<2x4x290xf32, #tpu.memory_space<vmem>>, vector<2x1x256xf32>
    %504 = vector.shape_cast %503 : vector<2x1x256xf32> to vector<2x256xf32>
    %505 = vector.broadcast %20 : vector<1x256xf32> to vector<2x256xf32>
    %506 = arith.mulf %504, %505 : vector<2x256xf32>
    %c24 = arith.constant 24 : index
    %507 = memref.load %arg1[%c24] : memref<144xf32, #tpu.memory_space<smem>>
    %508 = vector.broadcast %507 : f32 to vector<2x256xf32>
    %509 = arith.mulf %508, %506 : vector<2x256xf32>
    %510 = arith.addf %490, %509 : vector<2x256xf32>
    %c60 = arith.constant 60 : index
    %511 = memref.load %arg1[%c60] : memref<144xf32, #tpu.memory_space<smem>>
    %512 = vector.broadcast %511 : f32 to vector<2x256xf32>
    %513 = arith.mulf %512, %506 : vector<2x256xf32>
    %514 = arith.addf %494, %513 : vector<2x256xf32>
    %c96 = arith.constant 96 : index
    %515 = memref.load %arg1[%c96] : memref<144xf32, #tpu.memory_space<smem>>
    %516 = vector.broadcast %515 : f32 to vector<2x256xf32>
    %517 = arith.mulf %516, %506 : vector<2x256xf32>
    %518 = arith.addf %498, %517 : vector<2x256xf32>
    %c132 = arith.constant 132 : index
    %519 = memref.load %arg1[%c132] : memref<144xf32, #tpu.memory_space<smem>>
    %520 = vector.broadcast %519 : f32 to vector<2x256xf32>
    %521 = arith.mulf %520, %506 : vector<2x256xf32>
    %522 = arith.addf %502, %521 : vector<2x256xf32>
    %c0_93 = arith.constant 0 : index
    %c2_94 = arith.constant 2 : index
    %c33_95 = arith.constant 33 : index
    %523 = vector.load %arg10[%c0_93, %c2_94, %c33_95] : memref<2x4x290xf32, #tpu.memory_space<vmem>>, vector<2x1x256xf32>
    %524 = vector.shape_cast %523 : vector<2x1x256xf32> to vector<2x256xf32>
    %c25 = arith.constant 25 : index
    %525 = memref.load %arg1[%c25] : memref<144xf32, #tpu.memory_space<smem>>
    %526 = vector.broadcast %525 : f32 to vector<2x256xf32>
    %527 = arith.mulf %526, %524 : vector<2x256xf32>
    %528 = arith.addf %510, %527 : vector<2x256xf32>
    %c61 = arith.constant 61 : index
    %529 = memref.load %arg1[%c61] : memref<144xf32, #tpu.memory_space<smem>>
    %530 = vector.broadcast %529 : f32 to vector<2x256xf32>
    %531 = arith.mulf %530, %524 : vector<2x256xf32>
    %532 = arith.addf %514, %531 : vector<2x256xf32>
    %c97 = arith.constant 97 : index
    %533 = memref.load %arg1[%c97] : memref<144xf32, #tpu.memory_space<smem>>
    %534 = vector.broadcast %533 : f32 to vector<2x256xf32>
    %535 = arith.mulf %534, %524 : vector<2x256xf32>
    %536 = arith.addf %518, %535 : vector<2x256xf32>
    %c133 = arith.constant 133 : index
    %537 = memref.load %arg1[%c133] : memref<144xf32, #tpu.memory_space<smem>>
    %538 = vector.broadcast %537 : f32 to vector<2x256xf32>
    %539 = arith.mulf %538, %524 : vector<2x256xf32>
    %540 = arith.addf %522, %539 : vector<2x256xf32>
    %c0_96 = arith.constant 0 : index
    %c2_97 = arith.constant 2 : index
    %c34_98 = arith.constant 34 : index
    %541 = vector.load %arg10[%c0_96, %c2_97, %c34_98] : memref<2x4x290xf32, #tpu.memory_space<vmem>>, vector<2x1x256xf32>
    %542 = vector.shape_cast %541 : vector<2x1x256xf32> to vector<2x256xf32>
    %543 = vector.broadcast %24 : vector<1x256xf32> to vector<2x256xf32>
    %544 = arith.mulf %542, %543 : vector<2x256xf32>
    %c26 = arith.constant 26 : index
    %545 = memref.load %arg1[%c26] : memref<144xf32, #tpu.memory_space<smem>>
    %546 = vector.broadcast %545 : f32 to vector<2x256xf32>
    %547 = arith.mulf %546, %544 : vector<2x256xf32>
    %548 = arith.addf %528, %547 : vector<2x256xf32>
    %c62 = arith.constant 62 : index
    %549 = memref.load %arg1[%c62] : memref<144xf32, #tpu.memory_space<smem>>
    %550 = vector.broadcast %549 : f32 to vector<2x256xf32>
    %551 = arith.mulf %550, %544 : vector<2x256xf32>
    %552 = arith.addf %532, %551 : vector<2x256xf32>
    %c98 = arith.constant 98 : index
    %553 = memref.load %arg1[%c98] : memref<144xf32, #tpu.memory_space<smem>>
    %554 = vector.broadcast %553 : f32 to vector<2x256xf32>
    %555 = arith.mulf %554, %544 : vector<2x256xf32>
    %556 = arith.addf %536, %555 : vector<2x256xf32>
    %c134 = arith.constant 134 : index
    %557 = memref.load %arg1[%c134] : memref<144xf32, #tpu.memory_space<smem>>
    %558 = vector.broadcast %557 : f32 to vector<2x256xf32>
    %559 = arith.mulf %558, %544 : vector<2x256xf32>
    %560 = arith.addf %540, %559 : vector<2x256xf32>
    %c0_99 = arith.constant 0 : index
    %c3_100 = arith.constant 3 : index
    %c0_101 = arith.constant 0 : index
    %561 = vector.load %arg10[%c0_99, %c3_100, %c0_101] : memref<2x4x290xf32, #tpu.memory_space<vmem>>, vector<2x1x256xf32>
    %562 = vector.shape_cast %561 : vector<2x1x256xf32> to vector<2x256xf32>
    %563 = vector.broadcast %20 : vector<1x256xf32> to vector<2x256xf32>
    %564 = arith.mulf %562, %563 : vector<2x256xf32>
    %c27 = arith.constant 27 : index
    %565 = memref.load %arg1[%c27] : memref<144xf32, #tpu.memory_space<smem>>
    %566 = vector.broadcast %565 : f32 to vector<2x256xf32>
    %567 = arith.mulf %566, %564 : vector<2x256xf32>
    %568 = arith.addf %548, %567 : vector<2x256xf32>
    %c63 = arith.constant 63 : index
    %569 = memref.load %arg1[%c63] : memref<144xf32, #tpu.memory_space<smem>>
    %570 = vector.broadcast %569 : f32 to vector<2x256xf32>
    %571 = arith.mulf %570, %564 : vector<2x256xf32>
    %572 = arith.addf %552, %571 : vector<2x256xf32>
    %c99 = arith.constant 99 : index
    %573 = memref.load %arg1[%c99] : memref<144xf32, #tpu.memory_space<smem>>
    %574 = vector.broadcast %573 : f32 to vector<2x256xf32>
    %575 = arith.mulf %574, %564 : vector<2x256xf32>
    %576 = arith.addf %556, %575 : vector<2x256xf32>
    %c135 = arith.constant 135 : index
    %577 = memref.load %arg1[%c135] : memref<144xf32, #tpu.memory_space<smem>>
    %578 = vector.broadcast %577 : f32 to vector<2x256xf32>
    %579 = arith.mulf %578, %564 : vector<2x256xf32>
    %580 = arith.addf %560, %579 : vector<2x256xf32>
    %c0_102 = arith.constant 0 : index
    %c3_103 = arith.constant 3 : index
    %c1_104 = arith.constant 1 : index
    %581 = vector.load %arg10[%c0_102, %c3_103, %c1_104] : memref<2x4x290xf32, #tpu.memory_space<vmem>>, vector<2x1x256xf32>
    %582 = vector.shape_cast %581 : vector<2x1x256xf32> to vector<2x256xf32>
    %c28 = arith.constant 28 : index
    %583 = memref.load %arg1[%c28] : memref<144xf32, #tpu.memory_space<smem>>
    %584 = vector.broadcast %583 : f32 to vector<2x256xf32>
    %585 = arith.mulf %584, %582 : vector<2x256xf32>
    %586 = arith.addf %568, %585 : vector<2x256xf32>
    %c64 = arith.constant 64 : index
    %587 = memref.load %arg1[%c64] : memref<144xf32, #tpu.memory_space<smem>>
    %588 = vector.broadcast %587 : f32 to vector<2x256xf32>
    %589 = arith.mulf %588, %582 : vector<2x256xf32>
    %590 = arith.addf %572, %589 : vector<2x256xf32>
    %c100 = arith.constant 100 : index
    %591 = memref.load %arg1[%c100] : memref<144xf32, #tpu.memory_space<smem>>
    %592 = vector.broadcast %591 : f32 to vector<2x256xf32>
    %593 = arith.mulf %592, %582 : vector<2x256xf32>
    %594 = arith.addf %576, %593 : vector<2x256xf32>
    %c136 = arith.constant 136 : index
    %595 = memref.load %arg1[%c136] : memref<144xf32, #tpu.memory_space<smem>>
    %596 = vector.broadcast %595 : f32 to vector<2x256xf32>
    %597 = arith.mulf %596, %582 : vector<2x256xf32>
    %598 = arith.addf %580, %597 : vector<2x256xf32>
    %c0_105 = arith.constant 0 : index
    %c3_106 = arith.constant 3 : index
    %c2_107 = arith.constant 2 : index
    %599 = vector.load %arg10[%c0_105, %c3_106, %c2_107] : memref<2x4x290xf32, #tpu.memory_space<vmem>>, vector<2x1x256xf32>
    %600 = vector.shape_cast %599 : vector<2x1x256xf32> to vector<2x256xf32>
    %601 = vector.broadcast %24 : vector<1x256xf32> to vector<2x256xf32>
    %602 = arith.mulf %600, %601 : vector<2x256xf32>
    %c29 = arith.constant 29 : index
    %603 = memref.load %arg1[%c29] : memref<144xf32, #tpu.memory_space<smem>>
    %604 = vector.broadcast %603 : f32 to vector<2x256xf32>
    %605 = arith.mulf %604, %602 : vector<2x256xf32>
    %606 = arith.addf %586, %605 : vector<2x256xf32>
    %c65 = arith.constant 65 : index
    %607 = memref.load %arg1[%c65] : memref<144xf32, #tpu.memory_space<smem>>
    %608 = vector.broadcast %607 : f32 to vector<2x256xf32>
    %609 = arith.mulf %608, %602 : vector<2x256xf32>
    %610 = arith.addf %590, %609 : vector<2x256xf32>
    %c101 = arith.constant 101 : index
    %611 = memref.load %arg1[%c101] : memref<144xf32, #tpu.memory_space<smem>>
    %612 = vector.broadcast %611 : f32 to vector<2x256xf32>
    %613 = arith.mulf %612, %602 : vector<2x256xf32>
    %614 = arith.addf %594, %613 : vector<2x256xf32>
    %c137 = arith.constant 137 : index
    %615 = memref.load %arg1[%c137] : memref<144xf32, #tpu.memory_space<smem>>
    %616 = vector.broadcast %615 : f32 to vector<2x256xf32>
    %617 = arith.mulf %616, %602 : vector<2x256xf32>
    %618 = arith.addf %598, %617 : vector<2x256xf32>
    %c0_108 = arith.constant 0 : index
    %c3_109 = arith.constant 3 : index
    %c16_110 = arith.constant 16 : index
    %619 = vector.load %arg10[%c0_108, %c3_109, %c16_110] : memref<2x4x290xf32, #tpu.memory_space<vmem>>, vector<2x1x256xf32>
    %620 = vector.shape_cast %619 : vector<2x1x256xf32> to vector<2x256xf32>
    %621 = vector.broadcast %20 : vector<1x256xf32> to vector<2x256xf32>
    %622 = arith.mulf %620, %621 : vector<2x256xf32>
    %c30 = arith.constant 30 : index
    %623 = memref.load %arg1[%c30] : memref<144xf32, #tpu.memory_space<smem>>
    %624 = vector.broadcast %623 : f32 to vector<2x256xf32>
    %625 = arith.mulf %624, %622 : vector<2x256xf32>
    %626 = arith.addf %606, %625 : vector<2x256xf32>
    %c66 = arith.constant 66 : index
    %627 = memref.load %arg1[%c66] : memref<144xf32, #tpu.memory_space<smem>>
    %628 = vector.broadcast %627 : f32 to vector<2x256xf32>
    %629 = arith.mulf %628, %622 : vector<2x256xf32>
    %630 = arith.addf %610, %629 : vector<2x256xf32>
    %c102 = arith.constant 102 : index
    %631 = memref.load %arg1[%c102] : memref<144xf32, #tpu.memory_space<smem>>
    %632 = vector.broadcast %631 : f32 to vector<2x256xf32>
    %633 = arith.mulf %632, %622 : vector<2x256xf32>
    %634 = arith.addf %614, %633 : vector<2x256xf32>
    %c138 = arith.constant 138 : index
    %635 = memref.load %arg1[%c138] : memref<144xf32, #tpu.memory_space<smem>>
    %636 = vector.broadcast %635 : f32 to vector<2x256xf32>
    %637 = arith.mulf %636, %622 : vector<2x256xf32>
    %638 = arith.addf %618, %637 : vector<2x256xf32>
    %c0_111 = arith.constant 0 : index
    %c3_112 = arith.constant 3 : index
    %c17_113 = arith.constant 17 : index
    %639 = vector.load %arg10[%c0_111, %c3_112, %c17_113] : memref<2x4x290xf32, #tpu.memory_space<vmem>>, vector<2x1x256xf32>
    %640 = vector.shape_cast %639 : vector<2x1x256xf32> to vector<2x256xf32>
    %c31 = arith.constant 31 : index
    %641 = memref.load %arg1[%c31] : memref<144xf32, #tpu.memory_space<smem>>
    %642 = vector.broadcast %641 : f32 to vector<2x256xf32>
    %643 = arith.mulf %642, %640 : vector<2x256xf32>
    %644 = arith.addf %626, %643 : vector<2x256xf32>
    %c67 = arith.constant 67 : index
    %645 = memref.load %arg1[%c67] : memref<144xf32, #tpu.memory_space<smem>>
    %646 = vector.broadcast %645 : f32 to vector<2x256xf32>
    %647 = arith.mulf %646, %640 : vector<2x256xf32>
    %648 = arith.addf %630, %647 : vector<2x256xf32>
    %c103 = arith.constant 103 : index
    %649 = memref.load %arg1[%c103] : memref<144xf32, #tpu.memory_space<smem>>
    %650 = vector.broadcast %649 : f32 to vector<2x256xf32>
    %651 = arith.mulf %650, %640 : vector<2x256xf32>
    %652 = arith.addf %634, %651 : vector<2x256xf32>
    %c139 = arith.constant 139 : index
    %653 = memref.load %arg1[%c139] : memref<144xf32, #tpu.memory_space<smem>>
    %654 = vector.broadcast %653 : f32 to vector<2x256xf32>
    %655 = arith.mulf %654, %640 : vector<2x256xf32>
    %656 = arith.addf %638, %655 : vector<2x256xf32>
    %c0_114 = arith.constant 0 : index
    %c3_115 = arith.constant 3 : index
    %c18_116 = arith.constant 18 : index
    %657 = vector.load %arg10[%c0_114, %c3_115, %c18_116] : memref<2x4x290xf32, #tpu.memory_space<vmem>>, vector<2x1x256xf32>
    %658 = vector.shape_cast %657 : vector<2x1x256xf32> to vector<2x256xf32>
    %659 = vector.broadcast %24 : vector<1x256xf32> to vector<2x256xf32>
    %660 = arith.mulf %658, %659 : vector<2x256xf32>
    %c32_117 = arith.constant 32 : index
    %661 = memref.load %arg1[%c32_117] : memref<144xf32, #tpu.memory_space<smem>>
    %662 = vector.broadcast %661 : f32 to vector<2x256xf32>
    %663 = arith.mulf %662, %660 : vector<2x256xf32>
    %664 = arith.addf %644, %663 : vector<2x256xf32>
    %c68 = arith.constant 68 : index
    %665 = memref.load %arg1[%c68] : memref<144xf32, #tpu.memory_space<smem>>
    %666 = vector.broadcast %665 : f32 to vector<2x256xf32>
    %667 = arith.mulf %666, %660 : vector<2x256xf32>
    %668 = arith.addf %648, %667 : vector<2x256xf32>
    %c104 = arith.constant 104 : index
    %669 = memref.load %arg1[%c104] : memref<144xf32, #tpu.memory_space<smem>>
    %670 = vector.broadcast %669 : f32 to vector<2x256xf32>
    %671 = arith.mulf %670, %660 : vector<2x256xf32>
    %672 = arith.addf %652, %671 : vector<2x256xf32>
    %c140 = arith.constant 140 : index
    %673 = memref.load %arg1[%c140] : memref<144xf32, #tpu.memory_space<smem>>
    %674 = vector.broadcast %673 : f32 to vector<2x256xf32>
    %675 = arith.mulf %674, %660 : vector<2x256xf32>
    %676 = arith.addf %656, %675 : vector<2x256xf32>
    %c0_118 = arith.constant 0 : index
    %c3_119 = arith.constant 3 : index
    %c32_120 = arith.constant 32 : index
    %677 = vector.load %arg10[%c0_118, %c3_119, %c32_120] : memref<2x4x290xf32, #tpu.memory_space<vmem>>, vector<2x1x256xf32>
    %678 = vector.shape_cast %677 : vector<2x1x256xf32> to vector<2x256xf32>
    %679 = vector.broadcast %20 : vector<1x256xf32> to vector<2x256xf32>
    %680 = arith.mulf %678, %679 : vector<2x256xf32>
    %c33_121 = arith.constant 33 : index
    %681 = memref.load %arg1[%c33_121] : memref<144xf32, #tpu.memory_space<smem>>
    %682 = vector.broadcast %681 : f32 to vector<2x256xf32>
    %683 = arith.mulf %682, %680 : vector<2x256xf32>
    %684 = arith.addf %664, %683 : vector<2x256xf32>
    %c69 = arith.constant 69 : index
    %685 = memref.load %arg1[%c69] : memref<144xf32, #tpu.memory_space<smem>>
    %686 = vector.broadcast %685 : f32 to vector<2x256xf32>
    %687 = arith.mulf %686, %680 : vector<2x256xf32>
    %688 = arith.addf %668, %687 : vector<2x256xf32>
    %c105 = arith.constant 105 : index
    %689 = memref.load %arg1[%c105] : memref<144xf32, #tpu.memory_space<smem>>
    %690 = vector.broadcast %689 : f32 to vector<2x256xf32>
    %691 = arith.mulf %690, %680 : vector<2x256xf32>
    %692 = arith.addf %672, %691 : vector<2x256xf32>
    %c141 = arith.constant 141 : index
    %693 = memref.load %arg1[%c141] : memref<144xf32, #tpu.memory_space<smem>>
    %694 = vector.broadcast %693 : f32 to vector<2x256xf32>
    %695 = arith.mulf %694, %680 : vector<2x256xf32>
    %696 = arith.addf %676, %695 : vector<2x256xf32>
    %c0_122 = arith.constant 0 : index
    %c3_123 = arith.constant 3 : index
    %c33_124 = arith.constant 33 : index
    %697 = vector.load %arg10[%c0_122, %c3_123, %c33_124] : memref<2x4x290xf32, #tpu.memory_space<vmem>>, vector<2x1x256xf32>
    %698 = vector.shape_cast %697 : vector<2x1x256xf32> to vector<2x256xf32>
    %c34_125 = arith.constant 34 : index
    %699 = memref.load %arg1[%c34_125] : memref<144xf32, #tpu.memory_space<smem>>
    %700 = vector.broadcast %699 : f32 to vector<2x256xf32>
    %701 = arith.mulf %700, %698 : vector<2x256xf32>
    %702 = arith.addf %684, %701 : vector<2x256xf32>
    %c70 = arith.constant 70 : index
    %703 = memref.load %arg1[%c70] : memref<144xf32, #tpu.memory_space<smem>>
    %704 = vector.broadcast %703 : f32 to vector<2x256xf32>
    %705 = arith.mulf %704, %698 : vector<2x256xf32>
    %706 = arith.addf %688, %705 : vector<2x256xf32>
    %c106 = arith.constant 106 : index
    %707 = memref.load %arg1[%c106] : memref<144xf32, #tpu.memory_space<smem>>
    %708 = vector.broadcast %707 : f32 to vector<2x256xf32>
    %709 = arith.mulf %708, %698 : vector<2x256xf32>
    %710 = arith.addf %692, %709 : vector<2x256xf32>
    %c142 = arith.constant 142 : index
    %711 = memref.load %arg1[%c142] : memref<144xf32, #tpu.memory_space<smem>>
    %712 = vector.broadcast %711 : f32 to vector<2x256xf32>
    %713 = arith.mulf %712, %698 : vector<2x256xf32>
    %714 = arith.addf %696, %713 : vector<2x256xf32>
    %c0_126 = arith.constant 0 : index
    %c3_127 = arith.constant 3 : index
    %c34_128 = arith.constant 34 : index
    %715 = vector.load %arg10[%c0_126, %c3_127, %c34_128] : memref<2x4x290xf32, #tpu.memory_space<vmem>>, vector<2x1x256xf32>
    %716 = vector.shape_cast %715 : vector<2x1x256xf32> to vector<2x256xf32>
    %717 = vector.broadcast %24 : vector<1x256xf32> to vector<2x256xf32>
    %718 = arith.mulf %716, %717 : vector<2x256xf32>
    %c35 = arith.constant 35 : index
    %719 = memref.load %arg1[%c35] : memref<144xf32, #tpu.memory_space<smem>>
    %720 = vector.broadcast %719 : f32 to vector<2x256xf32>
    %721 = arith.mulf %720, %718 : vector<2x256xf32>
    %722 = arith.addf %702, %721 : vector<2x256xf32>
    %c71 = arith.constant 71 : index
    %723 = memref.load %arg1[%c71] : memref<144xf32, #tpu.memory_space<smem>>
    %724 = vector.broadcast %723 : f32 to vector<2x256xf32>
    %725 = arith.mulf %724, %718 : vector<2x256xf32>
    %726 = arith.addf %706, %725 : vector<2x256xf32>
    %c107 = arith.constant 107 : index
    %727 = memref.load %arg1[%c107] : memref<144xf32, #tpu.memory_space<smem>>
    %728 = vector.broadcast %727 : f32 to vector<2x256xf32>
    %729 = arith.mulf %728, %718 : vector<2x256xf32>
    %730 = arith.addf %710, %729 : vector<2x256xf32>
    %c143 = arith.constant 143 : index
    %731 = memref.load %arg1[%c143] : memref<144xf32, #tpu.memory_space<smem>>
    %732 = vector.broadcast %731 : f32 to vector<2x256xf32>
    %733 = arith.mulf %732, %718 : vector<2x256xf32>
    %734 = arith.addf %714, %733 : vector<2x256xf32>
    %c0_129 = arith.constant 0 : index
    %735 = memref.load %arg3[%c0_129] : memref<4xf32, #tpu.memory_space<smem>>
    %c0_130 = arith.constant 0 : index
    %736 = memref.load %arg4[%c0_130] : memref<4xf32, #tpu.memory_space<smem>>
    %737 = vector.shape_cast %722 : vector<2x256xf32> to vector<1x2x256xf32>
    %cst_131 = arith.constant dense<0.000000e+00> : vector<1xf32>
    %738 = vector.multi_reduction <add>, %737, %cst_131 [1, 2] : vector<1x2x256xf32> to vector<1xf32>
    %739 = vector.shape_cast %738 : vector<1xf32> to vector<1x1x1xf32>
    %740 = vector.extract %739[0, 0, 0] : f32 from vector<1x1x1xf32>
    %741 = arith.mulf %722, %722 : vector<2x256xf32>
    %742 = vector.shape_cast %741 : vector<2x256xf32> to vector<1x2x256xf32>
    %cst_132 = arith.constant dense<0.000000e+00> : vector<1xf32>
    %743 = vector.multi_reduction <add>, %742, %cst_132 [1, 2] : vector<1x2x256xf32> to vector<1xf32>
    %744 = vector.shape_cast %743 : vector<1xf32> to vector<1x1x1xf32>
    %745 = vector.extract %744[0, 0, 0] : f32 from vector<1x1x1xf32>
    %cst_133 = arith.constant 0.001953125 : f32
    %746 = arith.mulf %740, %cst_133 : f32
    %cst_134 = arith.constant 0.001953125 : f32
    %747 = arith.mulf %745, %cst_134 : f32
    %748 = arith.mulf %746, %746 : f32
    %749 = arith.subf %747, %748 : f32
    %cst_135 = arith.constant 0.000000e+00 : f32
    %750 = arith.maximumf %749, %cst_135 : f32
    %cst_136 = arith.constant 9.99999974E-6 : f32
    %751 = arith.addf %750, %cst_136 : f32
    %752 = math.rsqrt %751 : f32
    %753 = arith.mulf %735, %752 : f32
    %754 = arith.mulf %746, %753 : f32
    %755 = arith.subf %736, %754 : f32
    %756 = vector.broadcast %753 : f32 to vector<2x256xf32>
    %757 = arith.mulf %722, %756 : vector<2x256xf32>
    %758 = vector.broadcast %755 : f32 to vector<2x256xf32>
    %759 = arith.addf %757, %758 : vector<2x256xf32>
    %cst_137 = arith.constant 2.000000e+01 : f32
    %760 = vector.broadcast %cst_137 : f32 to vector<2x256xf32>
    %761 = arith.minimumf %759, %760 : vector<2x256xf32>
    %762 = math.exp %761 : vector<2x256xf32>
    %cst_138 = arith.constant 1.000000e+00 : f32
    %763 = vector.broadcast %cst_138 : f32 to vector<2x256xf32>
    %764 = arith.addf %763, %762 : vector<2x256xf32>
    %cst_139 = arith.constant 1.000000e+00 : f32
    %765 = vector.broadcast %cst_139 : f32 to vector<2x256xf32>
    %766 = arith.addf %765, %762 : vector<2x256xf32>
    %767 = arith.mulf %764, %766 : vector<2x256xf32>
    %cst_140 = arith.constant 1.000000e+00 : f32
    %768 = vector.broadcast %cst_140 : f32 to vector<2x256xf32>
    %769 = arith.addf %767, %768 : vector<2x256xf32>
    %770 = tpu.reciprocal %769 {approx = true} : vector<2x256xf32> -> vector<2x256xf32>
    %771 = arith.mulf %769, %770 : vector<2x256xf32>
    %cst_141 = arith.constant 2.000000e+00 : f32
    %772 = vector.broadcast %cst_141 : f32 to vector<2x256xf32>
    %773 = arith.subf %772, %771 : vector<2x256xf32>
    %774 = arith.mulf %770, %773 : vector<2x256xf32>
    %cst_142 = arith.constant 1.000000e+00 : f32
    %775 = vector.broadcast %cst_142 : f32 to vector<2x256xf32>
    %776 = arith.subf %767, %775 : vector<2x256xf32>
    %777 = arith.mulf %759, %776 : vector<2x256xf32>
    %778 = arith.mulf %777, %774 : vector<2x256xf32>
    %cst_143 = arith.constant 2.000000e+01 : f32
    %779 = vector.broadcast %cst_143 : f32 to vector<2x256xf32>
    %780 = arith.cmpf ogt, %759, %779 : vector<2x256xf32>
    %781 = arith.select %780, %759, %778 : vector<2x256xi1>, vector<2x256xf32>
    %c0_144 = arith.constant 0 : index
    %c0_145 = arith.constant 0 : index
    %c17_146 = arith.constant 17 : index
    %782 = vector.load %arg11[%c0_144, %c0_145, %c17_146] : memref<2x4x290xf32, #tpu.memory_space<vmem>>, vector<2x1x256xf32>
    %783 = vector.shape_cast %782 : vector<2x1x256xf32> to vector<2x256xf32>
    %784 = vector.shape_cast %781 : vector<2x256xf32> to vector<2x1x256xf32>
    tpu.vector_store %arg11[%c0_144, %c0_145, %c17_146], %784 {strides = array<i32>} : memref<2x4x290xf32, #tpu.memory_space<vmem>>, vector<2x1x256xf32>,
    %c1_147 = arith.constant 1 : index
    %785 = memref.load %arg3[%c1_147] : memref<4xf32, #tpu.memory_space<smem>>
    %c1_148 = arith.constant 1 : index
    %786 = memref.load %arg4[%c1_148] : memref<4xf32, #tpu.memory_space<smem>>
    %787 = vector.shape_cast %726 : vector<2x256xf32> to vector<1x2x256xf32>
    %cst_149 = arith.constant dense<0.000000e+00> : vector<1xf32>
    %788 = vector.multi_reduction <add>, %787, %cst_149 [1, 2] : vector<1x2x256xf32> to vector<1xf32>
    %789 = vector.shape_cast %788 : vector<1xf32> to vector<1x1x1xf32>
    %790 = vector.extract %789[0, 0, 0] : f32 from vector<1x1x1xf32>
    %791 = arith.mulf %726, %726 : vector<2x256xf32>
    %792 = vector.shape_cast %791 : vector<2x256xf32> to vector<1x2x256xf32>
    %cst_150 = arith.constant dense<0.000000e+00> : vector<1xf32>
    %793 = vector.multi_reduction <add>, %792, %cst_150 [1, 2] : vector<1x2x256xf32> to vector<1xf32>
    %794 = vector.shape_cast %793 : vector<1xf32> to vector<1x1x1xf32>
    %795 = vector.extract %794[0, 0, 0] : f32 from vector<1x1x1xf32>
    %cst_151 = arith.constant 0.001953125 : f32
    %796 = arith.mulf %790, %cst_151 : f32
    %cst_152 = arith.constant 0.001953125 : f32
    %797 = arith.mulf %795, %cst_152 : f32
    %798 = arith.mulf %796, %796 : f32
    %799 = arith.subf %797, %798 : f32
    %cst_153 = arith.constant 0.000000e+00 : f32
    %800 = arith.maximumf %799, %cst_153 : f32
    %cst_154 = arith.constant 9.99999974E-6 : f32
    %801 = arith.addf %800, %cst_154 : f32
    %802 = math.rsqrt %801 : f32
    %803 = arith.mulf %785, %802 : f32
    %804 = arith.mulf %796, %803 : f32
    %805 = arith.subf %786, %804 : f32
    %806 = vector.broadcast %803 : f32 to vector<2x256xf32>
    %807 = arith.mulf %726, %806 : vector<2x256xf32>
    %808 = vector.broadcast %805 : f32 to vector<2x256xf32>
    %809 = arith.addf %807, %808 : vector<2x256xf32>
    %cst_155 = arith.constant 2.000000e+01 : f32
    %810 = vector.broadcast %cst_155 : f32 to vector<2x256xf32>
    %811 = arith.minimumf %809, %810 : vector<2x256xf32>
    %812 = math.exp %811 : vector<2x256xf32>
    %cst_156 = arith.constant 1.000000e+00 : f32
    %813 = vector.broadcast %cst_156 : f32 to vector<2x256xf32>
    %814 = arith.addf %813, %812 : vector<2x256xf32>
    %cst_157 = arith.constant 1.000000e+00 : f32
    %815 = vector.broadcast %cst_157 : f32 to vector<2x256xf32>
    %816 = arith.addf %815, %812 : vector<2x256xf32>
    %817 = arith.mulf %814, %816 : vector<2x256xf32>
    %cst_158 = arith.constant 1.000000e+00 : f32
    %818 = vector.broadcast %cst_158 : f32 to vector<2x256xf32>
    %819 = arith.addf %817, %818 : vector<2x256xf32>
    %820 = tpu.reciprocal %819 {approx = true} : vector<2x256xf32> -> vector<2x256xf32>
    %821 = arith.mulf %819, %820 : vector<2x256xf32>
    %cst_159 = arith.constant 2.000000e+00 : f32
    %822 = vector.broadcast %cst_159 : f32 to vector<2x256xf32>
    %823 = arith.subf %822, %821 : vector<2x256xf32>
    %824 = arith.mulf %820, %823 : vector<2x256xf32>
    %cst_160 = arith.constant 1.000000e+00 : f32
    %825 = vector.broadcast %cst_160 : f32 to vector<2x256xf32>
    %826 = arith.subf %817, %825 : vector<2x256xf32>
    %827 = arith.mulf %809, %826 : vector<2x256xf32>
    %828 = arith.mulf %827, %824 : vector<2x256xf32>
    %cst_161 = arith.constant 2.000000e+01 : f32
    %829 = vector.broadcast %cst_161 : f32 to vector<2x256xf32>
    %830 = arith.cmpf ogt, %809, %829 : vector<2x256xf32>
    %831 = arith.select %830, %809, %828 : vector<2x256xi1>, vector<2x256xf32>
    %c0_162 = arith.constant 0 : index
    %c1_163 = arith.constant 1 : index
    %c17_164 = arith.constant 17 : index
    %832 = vector.load %arg11[%c0_162, %c1_163, %c17_164] : memref<2x4x290xf32, #tpu.memory_space<vmem>>, vector<2x1x256xf32>
    %833 = vector.shape_cast %832 : vector<2x1x256xf32> to vector<2x256xf32>
    %834 = vector.shape_cast %831 : vector<2x256xf32> to vector<2x1x256xf32>
    tpu.vector_store %arg11[%c0_162, %c1_163, %c17_164], %834 {strides = array<i32>} : memref<2x4x290xf32, #tpu.memory_space<vmem>>, vector<2x1x256xf32>,
    %c2_165 = arith.constant 2 : index
    %835 = memref.load %arg3[%c2_165] : memref<4xf32, #tpu.memory_space<smem>>
    %c2_166 = arith.constant 2 : index
    %836 = memref.load %arg4[%c2_166] : memref<4xf32, #tpu.memory_space<smem>>
    %837 = vector.shape_cast %730 : vector<2x256xf32> to vector<1x2x256xf32>
    %cst_167 = arith.constant dense<0.000000e+00> : vector<1xf32>
    %838 = vector.multi_reduction <add>, %837, %cst_167 [1, 2] : vector<1x2x256xf32> to vector<1xf32>
    %839 = vector.shape_cast %838 : vector<1xf32> to vector<1x1x1xf32>
    %840 = vector.extract %839[0, 0, 0] : f32 from vector<1x1x1xf32>
    %841 = arith.mulf %730, %730 : vector<2x256xf32>
    %842 = vector.shape_cast %841 : vector<2x256xf32> to vector<1x2x256xf32>
    %cst_168 = arith.constant dense<0.000000e+00> : vector<1xf32>
    %843 = vector.multi_reduction <add>, %842, %cst_168 [1, 2] : vector<1x2x256xf32> to vector<1xf32>
    %844 = vector.shape_cast %843 : vector<1xf32> to vector<1x1x1xf32>
    %845 = vector.extract %844[0, 0, 0] : f32 from vector<1x1x1xf32>
    %cst_169 = arith.constant 0.001953125 : f32
    %846 = arith.mulf %840, %cst_169 : f32
    %cst_170 = arith.constant 0.001953125 : f32
    %847 = arith.mulf %845, %cst_170 : f32
    %848 = arith.mulf %846, %846 : f32
    %849 = arith.subf %847, %848 : f32
    %cst_171 = arith.constant 0.000000e+00 : f32
    %850 = arith.maximumf %849, %cst_171 : f32
    %cst_172 = arith.constant 9.99999974E-6 : f32
    %851 = arith.addf %850, %cst_172 : f32
    %852 = math.rsqrt %851 : f32
    %853 = arith.mulf %835, %852 : f32
    %854 = arith.mulf %846, %853 : f32
    %855 = arith.subf %836, %854 : f32
    %856 = vector.broadcast %853 : f32 to vector<2x256xf32>
    %857 = arith.mulf %730, %856 : vector<2x256xf32>
    %858 = vector.broadcast %855 : f32 to vector<2x256xf32>
    %859 = arith.addf %857, %858 : vector<2x256xf32>
    %cst_173 = arith.constant 2.000000e+01 : f32
    %860 = vector.broadcast %cst_173 : f32 to vector<2x256xf32>
    %861 = arith.minimumf %859, %860 : vector<2x256xf32>
    %862 = math.exp %861 : vector<2x256xf32>
    %cst_174 = arith.constant 1.000000e+00 : f32
    %863 = vector.broadcast %cst_174 : f32 to vector<2x256xf32>
    %864 = arith.addf %863, %862 : vector<2x256xf32>
    %cst_175 = arith.constant 1.000000e+00 : f32
    %865 = vector.broadcast %cst_175 : f32 to vector<2x256xf32>
    %866 = arith.addf %865, %862 : vector<2x256xf32>
    %867 = arith.mulf %864, %866 : vector<2x256xf32>
    %cst_176 = arith.constant 1.000000e+00 : f32
    %868 = vector.broadcast %cst_176 : f32 to vector<2x256xf32>
    %869 = arith.addf %867, %868 : vector<2x256xf32>
    %870 = tpu.reciprocal %869 {approx = true} : vector<2x256xf32> -> vector<2x256xf32>
    %871 = arith.mulf %869, %870 : vector<2x256xf32>
    %cst_177 = arith.constant 2.000000e+00 : f32
    %872 = vector.broadcast %cst_177 : f32 to vector<2x256xf32>
    %873 = arith.subf %872, %871 : vector<2x256xf32>
    %874 = arith.mulf %870, %873 : vector<2x256xf32>
    %cst_178 = arith.constant 1.000000e+00 : f32
    %875 = vector.broadcast %cst_178 : f32 to vector<2x256xf32>
    %876 = arith.subf %867, %875 : vector<2x256xf32>
    %877 = arith.mulf %859, %876 : vector<2x256xf32>
    %878 = arith.mulf %877, %874 : vector<2x256xf32>
    %cst_179 = arith.constant 2.000000e+01 : f32
    %879 = vector.broadcast %cst_179 : f32 to vector<2x256xf32>
    %880 = arith.cmpf ogt, %859, %879 : vector<2x256xf32>
    %881 = arith.select %880, %859, %878 : vector<2x256xi1>, vector<2x256xf32>
    %c0_180 = arith.constant 0 : index
    %c2_181 = arith.constant 2 : index
    %c17_182 = arith.constant 17 : index
    %882 = vector.load %arg11[%c0_180, %c2_181, %c17_182] : memref<2x4x290xf32, #tpu.memory_space<vmem>>, vector<2x1x256xf32>
    %883 = vector.shape_cast %882 : vector<2x1x256xf32> to vector<2x256xf32>
    %884 = vector.shape_cast %881 : vector<2x256xf32> to vector<2x1x256xf32>
    tpu.vector_store %arg11[%c0_180, %c2_181, %c17_182], %884 {strides = array<i32>} : memref<2x4x290xf32, #tpu.memory_space<vmem>>, vector<2x1x256xf32>,
    %c3_183 = arith.constant 3 : index
    %885 = memref.load %arg3[%c3_183] : memref<4xf32, #tpu.memory_space<smem>>
    %c3_184 = arith.constant 3 : index
    %886 = memref.load %arg4[%c3_184] : memref<4xf32, #tpu.memory_space<smem>>
    %887 = vector.shape_cast %734 : vector<2x256xf32> to vector<1x2x256xf32>
    %cst_185 = arith.constant dense<0.000000e+00> : vector<1xf32>
    %888 = vector.multi_reduction <add>, %887, %cst_185 [1, 2] : vector<1x2x256xf32> to vector<1xf32>
    %889 = vector.shape_cast %888 : vector<1xf32> to vector<1x1x1xf32>
    %890 = vector.extract %889[0, 0, 0] : f32 from vector<1x1x1xf32>
    %891 = arith.mulf %734, %734 : vector<2x256xf32>
    %892 = vector.shape_cast %891 : vector<2x256xf32> to vector<1x2x256xf32>
    %cst_186 = arith.constant dense<0.000000e+00> : vector<1xf32>
    %893 = vector.multi_reduction <add>, %892, %cst_186 [1, 2] : vector<1x2x256xf32> to vector<1xf32>
    %894 = vector.shape_cast %893 : vector<1xf32> to vector<1x1x1xf32>
    %895 = vector.extract %894[0, 0, 0] : f32 from vector<1x1x1xf32>
    %cst_187 = arith.constant 0.001953125 : f32
    %896 = arith.mulf %890, %cst_187 : f32
    %cst_188 = arith.constant 0.001953125 : f32
    %897 = arith.mulf %895, %cst_188 : f32
    %898 = arith.mulf %896, %896 : f32
    %899 = arith.subf %897, %898 : f32
    %cst_189 = arith.constant 0.000000e+00 : f32
    %900 = arith.maximumf %899, %cst_189 : f32
    %cst_190 = arith.constant 9.99999974E-6 : f32
    %901 = arith.addf %900, %cst_190 : f32
    %902 = math.rsqrt %901 : f32
    %903 = arith.mulf %885, %902 : f32
    %904 = arith.mulf %896, %903 : f32
    %905 = arith.subf %886, %904 : f32
    %906 = vector.broadcast %903 : f32 to vector<2x256xf32>
    %907 = arith.mulf %734, %906 : vector<2x256xf32>
    %908 = vector.broadcast %905 : f32 to vector<2x256xf32>
    %909 = arith.addf %907, %908 : vector<2x256xf32>
    %cst_191 = arith.constant 2.000000e+01 : f32
    %910 = vector.broadcast %cst_191 : f32 to vector<2x256xf32>
    %911 = arith.minimumf %909, %910 : vector<2x256xf32>
    %912 = math.exp %911 : vector<2x256xf32>
    %cst_192 = arith.constant 1.000000e+00 : f32
    %913 = vector.broadcast %cst_192 : f32 to vector<2x256xf32>
    %914 = arith.addf %913, %912 : vector<2x256xf32>
    %cst_193 = arith.constant 1.000000e+00 : f32
    %915 = vector.broadcast %cst_193 : f32 to vector<2x256xf32>
    %916 = arith.addf %915, %912 : vector<2x256xf32>
    %917 = arith.mulf %914, %916 : vector<2x256xf32>
    %cst_194 = arith.constant 1.000000e+00 : f32
    %918 = vector.broadcast %cst_194 : f32 to vector<2x256xf32>
    %919 = arith.addf %917, %918 : vector<2x256xf32>
    %920 = tpu.reciprocal %919 {approx = true} : vector<2x256xf32> -> vector<2x256xf32>
    %921 = arith.mulf %919, %920 : vector<2x256xf32>
    %cst_195 = arith.constant 2.000000e+00 : f32
    %922 = vector.broadcast %cst_195 : f32 to vector<2x256xf32>
    %923 = arith.subf %922, %921 : vector<2x256xf32>
    %924 = arith.mulf %920, %923 : vector<2x256xf32>
    %cst_196 = arith.constant 1.000000e+00 : f32
    %925 = vector.broadcast %cst_196 : f32 to vector<2x256xf32>
    %926 = arith.subf %917, %925 : vector<2x256xf32>
    %927 = arith.mulf %909, %926 : vector<2x256xf32>
    %928 = arith.mulf %927, %924 : vector<2x256xf32>
    %cst_197 = arith.constant 2.000000e+01 : f32
    %929 = vector.broadcast %cst_197 : f32 to vector<2x256xf32>
    %930 = arith.cmpf ogt, %909, %929 : vector<2x256xf32>
    %931 = arith.select %930, %909, %928 : vector<2x256xi1>, vector<2x256xf32>
    %c0_198 = arith.constant 0 : index
    %c3_199 = arith.constant 3 : index
    %c17_200 = arith.constant 17 : index
    %932 = vector.load %arg11[%c0_198, %c3_199, %c17_200] : memref<2x4x290xf32, #tpu.memory_space<vmem>>, vector<2x1x256xf32>
    %933 = vector.shape_cast %932 : vector<2x1x256xf32> to vector<2x256xf32>
    %934 = vector.shape_cast %931 : vector<2x256xf32> to vector<2x1x256xf32>
    tpu.vector_store %arg11[%c0_198, %c3_199, %c17_200], %934 {strides = array<i32>} : memref<2x4x290xf32, #tpu.memory_space<vmem>>, vector<2x1x256xf32>,
    %c0_201 = arith.constant 0 : index
    %935 = memref.load %arg6[%c0_201] : memref<4xf32, #tpu.memory_space<smem>>
    %936 = vector.broadcast %935 : f32 to vector<2x256xf32>
    %c1_202 = arith.constant 1 : index
    %937 = memref.load %arg6[%c1_202] : memref<4xf32, #tpu.memory_space<smem>>
    %938 = vector.broadcast %937 : f32 to vector<2x256xf32>
    %c2_203 = arith.constant 2 : index
    %939 = memref.load %arg6[%c2_203] : memref<4xf32, #tpu.memory_space<smem>>
    %940 = vector.broadcast %939 : f32 to vector<2x256xf32>
    %c3_204 = arith.constant 3 : index
    %941 = memref.load %arg6[%c3_204] : memref<4xf32, #tpu.memory_space<smem>>
    %942 = vector.broadcast %941 : f32 to vector<2x256xf32>
    %c0_205 = arith.constant 0 : index
    %c0_206 = arith.constant 0 : index
    %c0_207 = arith.constant 0 : index
    %943 = vector.load %arg11[%c0_205, %c0_206, %c0_207] : memref<2x4x290xf32, #tpu.memory_space<vmem>>, vector<2x1x256xf32>
    %944 = vector.shape_cast %943 : vector<2x1x256xf32> to vector<2x256xf32>
    %945 = vector.broadcast %20 : vector<1x256xf32> to vector<2x256xf32>
    %946 = arith.mulf %944, %945 : vector<2x256xf32>
    %c0_208 = arith.constant 0 : index
    %947 = memref.load %arg5[%c0_208] : memref<144xf32, #tpu.memory_space<smem>>
    %948 = vector.broadcast %947 : f32 to vector<2x256xf32>
    %949 = arith.mulf %948, %946 : vector<2x256xf32>
    %950 = arith.addf %936, %949 : vector<2x256xf32>
    %c36_209 = arith.constant 36 : index
    %951 = memref.load %arg5[%c36_209] : memref<144xf32, #tpu.memory_space<smem>>
    %952 = vector.broadcast %951 : f32 to vector<2x256xf32>
    %953 = arith.mulf %952, %946 : vector<2x256xf32>
    %954 = arith.addf %938, %953 : vector<2x256xf32>
    %c72_210 = arith.constant 72 : index
    %955 = memref.load %arg5[%c72_210] : memref<144xf32, #tpu.memory_space<smem>>
    %956 = vector.broadcast %955 : f32 to vector<2x256xf32>
    %957 = arith.mulf %956, %946 : vector<2x256xf32>
    %958 = arith.addf %940, %957 : vector<2x256xf32>
    %c108_211 = arith.constant 108 : index
    %959 = memref.load %arg5[%c108_211] : memref<144xf32, #tpu.memory_space<smem>>
    %960 = vector.broadcast %959 : f32 to vector<2x256xf32>
    %961 = arith.mulf %960, %946 : vector<2x256xf32>
    %962 = arith.addf %942, %961 : vector<2x256xf32>
    %c0_212 = arith.constant 0 : index
    %c0_213 = arith.constant 0 : index
    %c1_214 = arith.constant 1 : index
    %963 = vector.load %arg11[%c0_212, %c0_213, %c1_214] : memref<2x4x290xf32, #tpu.memory_space<vmem>>, vector<2x1x256xf32>
    %964 = vector.shape_cast %963 : vector<2x1x256xf32> to vector<2x256xf32>
    %c1_215 = arith.constant 1 : index
    %965 = memref.load %arg5[%c1_215] : memref<144xf32, #tpu.memory_space<smem>>
    %966 = vector.broadcast %965 : f32 to vector<2x256xf32>
    %967 = arith.mulf %966, %964 : vector<2x256xf32>
    %968 = arith.addf %950, %967 : vector<2x256xf32>
    %c37_216 = arith.constant 37 : index
    %969 = memref.load %arg5[%c37_216] : memref<144xf32, #tpu.memory_space<smem>>
    %970 = vector.broadcast %969 : f32 to vector<2x256xf32>
    %971 = arith.mulf %970, %964 : vector<2x256xf32>
    %972 = arith.addf %954, %971 : vector<2x256xf32>
    %c73_217 = arith.constant 73 : index
    %973 = memref.load %arg5[%c73_217] : memref<144xf32, #tpu.memory_space<smem>>
    %974 = vector.broadcast %973 : f32 to vector<2x256xf32>
    %975 = arith.mulf %974, %964 : vector<2x256xf32>
    %976 = arith.addf %958, %975 : vector<2x256xf32>
    %c109_218 = arith.constant 109 : index
    %977 = memref.load %arg5[%c109_218] : memref<144xf32, #tpu.memory_space<smem>>
    %978 = vector.broadcast %977 : f32 to vector<2x256xf32>
    %979 = arith.mulf %978, %964 : vector<2x256xf32>
    %980 = arith.addf %962, %979 : vector<2x256xf32>
    %c0_219 = arith.constant 0 : index
    %c0_220 = arith.constant 0 : index
    %c2_221 = arith.constant 2 : index
    %981 = vector.load %arg11[%c0_219, %c0_220, %c2_221] : memref<2x4x290xf32, #tpu.memory_space<vmem>>, vector<2x1x256xf32>
    %982 = vector.shape_cast %981 : vector<2x1x256xf32> to vector<2x256xf32>
    %983 = vector.broadcast %24 : vector<1x256xf32> to vector<2x256xf32>
    %984 = arith.mulf %982, %983 : vector<2x256xf32>
    %c2_222 = arith.constant 2 : index
    %985 = memref.load %arg5[%c2_222] : memref<144xf32, #tpu.memory_space<smem>>
    %986 = vector.broadcast %985 : f32 to vector<2x256xf32>
    %987 = arith.mulf %986, %984 : vector<2x256xf32>
    %988 = arith.addf %968, %987 : vector<2x256xf32>
    %c38_223 = arith.constant 38 : index
    %989 = memref.load %arg5[%c38_223] : memref<144xf32, #tpu.memory_space<smem>>
    %990 = vector.broadcast %989 : f32 to vector<2x256xf32>
    %991 = arith.mulf %990, %984 : vector<2x256xf32>
    %992 = arith.addf %972, %991 : vector<2x256xf32>
    %c74_224 = arith.constant 74 : index
    %993 = memref.load %arg5[%c74_224] : memref<144xf32, #tpu.memory_space<smem>>
    %994 = vector.broadcast %993 : f32 to vector<2x256xf32>
    %995 = arith.mulf %994, %984 : vector<2x256xf32>
    %996 = arith.addf %976, %995 : vector<2x256xf32>
    %c110_225 = arith.constant 110 : index
    %997 = memref.load %arg5[%c110_225] : memref<144xf32, #tpu.memory_space<smem>>
    %998 = vector.broadcast %997 : f32 to vector<2x256xf32>
    %999 = arith.mulf %998, %984 : vector<2x256xf32>
    %1000 = arith.addf %980, %999 : vector<2x256xf32>
    %c0_226 = arith.constant 0 : index
    %c0_227 = arith.constant 0 : index
    %c16_228 = arith.constant 16 : index
    %1001 = vector.load %arg11[%c0_226, %c0_227, %c16_228] : memref<2x4x290xf32, #tpu.memory_space<vmem>>, vector<2x1x256xf32>
    %1002 = vector.shape_cast %1001 : vector<2x1x256xf32> to vector<2x256xf32>
    %1003 = vector.broadcast %20 : vector<1x256xf32> to vector<2x256xf32>
    %1004 = arith.mulf %1002, %1003 : vector<2x256xf32>
    %c3_229 = arith.constant 3 : index
    %1005 = memref.load %arg5[%c3_229] : memref<144xf32, #tpu.memory_space<smem>>
    %1006 = vector.broadcast %1005 : f32 to vector<2x256xf32>
    %1007 = arith.mulf %1006, %1004 : vector<2x256xf32>
    %1008 = arith.addf %988, %1007 : vector<2x256xf32>
    %c39_230 = arith.constant 39 : index
    %1009 = memref.load %arg5[%c39_230] : memref<144xf32, #tpu.memory_space<smem>>
    %1010 = vector.broadcast %1009 : f32 to vector<2x256xf32>
    %1011 = arith.mulf %1010, %1004 : vector<2x256xf32>
    %1012 = arith.addf %992, %1011 : vector<2x256xf32>
    %c75_231 = arith.constant 75 : index
    %1013 = memref.load %arg5[%c75_231] : memref<144xf32, #tpu.memory_space<smem>>
    %1014 = vector.broadcast %1013 : f32 to vector<2x256xf32>
    %1015 = arith.mulf %1014, %1004 : vector<2x256xf32>
    %1016 = arith.addf %996, %1015 : vector<2x256xf32>
    %c111_232 = arith.constant 111 : index
    %1017 = memref.load %arg5[%c111_232] : memref<144xf32, #tpu.memory_space<smem>>
    %1018 = vector.broadcast %1017 : f32 to vector<2x256xf32>
    %1019 = arith.mulf %1018, %1004 : vector<2x256xf32>
    %1020 = arith.addf %1000, %1019 : vector<2x256xf32>
    %c0_233 = arith.constant 0 : index
    %c0_234 = arith.constant 0 : index
    %c17_235 = arith.constant 17 : index
    %1021 = vector.load %arg11[%c0_233, %c0_234, %c17_235] : memref<2x4x290xf32, #tpu.memory_space<vmem>>, vector<2x1x256xf32>
    %1022 = vector.shape_cast %1021 : vector<2x1x256xf32> to vector<2x256xf32>
    %c4_236 = arith.constant 4 : index
    %1023 = memref.load %arg5[%c4_236] : memref<144xf32, #tpu.memory_space<smem>>
    %1024 = vector.broadcast %1023 : f32 to vector<2x256xf32>
    %1025 = arith.mulf %1024, %1022 : vector<2x256xf32>
    %1026 = arith.addf %1008, %1025 : vector<2x256xf32>
    %c40_237 = arith.constant 40 : index
    %1027 = memref.load %arg5[%c40_237] : memref<144xf32, #tpu.memory_space<smem>>
    %1028 = vector.broadcast %1027 : f32 to vector<2x256xf32>
    %1029 = arith.mulf %1028, %1022 : vector<2x256xf32>
    %1030 = arith.addf %1012, %1029 : vector<2x256xf32>
    %c76_238 = arith.constant 76 : index
    %1031 = memref.load %arg5[%c76_238] : memref<144xf32, #tpu.memory_space<smem>>
    %1032 = vector.broadcast %1031 : f32 to vector<2x256xf32>
    %1033 = arith.mulf %1032, %1022 : vector<2x256xf32>
    %1034 = arith.addf %1016, %1033 : vector<2x256xf32>
    %c112_239 = arith.constant 112 : index
    %1035 = memref.load %arg5[%c112_239] : memref<144xf32, #tpu.memory_space<smem>>
    %1036 = vector.broadcast %1035 : f32 to vector<2x256xf32>
    %1037 = arith.mulf %1036, %1022 : vector<2x256xf32>
    %1038 = arith.addf %1020, %1037 : vector<2x256xf32>
    %c0_240 = arith.constant 0 : index
    %c0_241 = arith.constant 0 : index
    %c18_242 = arith.constant 18 : index
    %1039 = vector.load %arg11[%c0_240, %c0_241, %c18_242] : memref<2x4x290xf32, #tpu.memory_space<vmem>>, vector<2x1x256xf32>
    %1040 = vector.shape_cast %1039 : vector<2x1x256xf32> to vector<2x256xf32>
    %1041 = vector.broadcast %24 : vector<1x256xf32> to vector<2x256xf32>
    %1042 = arith.mulf %1040, %1041 : vector<2x256xf32>
    %c5_243 = arith.constant 5 : index
    %1043 = memref.load %arg5[%c5_243] : memref<144xf32, #tpu.memory_space<smem>>
    %1044 = vector.broadcast %1043 : f32 to vector<2x256xf32>
    %1045 = arith.mulf %1044, %1042 : vector<2x256xf32>
    %1046 = arith.addf %1026, %1045 : vector<2x256xf32>
    %c41_244 = arith.constant 41 : index
    %1047 = memref.load %arg5[%c41_244] : memref<144xf32, #tpu.memory_space<smem>>
    %1048 = vector.broadcast %1047 : f32 to vector<2x256xf32>
    %1049 = arith.mulf %1048, %1042 : vector<2x256xf32>
    %1050 = arith.addf %1030, %1049 : vector<2x256xf32>
    %c77_245 = arith.constant 77 : index
    %1051 = memref.load %arg5[%c77_245] : memref<144xf32, #tpu.memory_space<smem>>
    %1052 = vector.broadcast %1051 : f32 to vector<2x256xf32>
    %1053 = arith.mulf %1052, %1042 : vector<2x256xf32>
    %1054 = arith.addf %1034, %1053 : vector<2x256xf32>
    %c113_246 = arith.constant 113 : index
    %1055 = memref.load %arg5[%c113_246] : memref<144xf32, #tpu.memory_space<smem>>
    %1056 = vector.broadcast %1055 : f32 to vector<2x256xf32>
    %1057 = arith.mulf %1056, %1042 : vector<2x256xf32>
    %1058 = arith.addf %1038, %1057 : vector<2x256xf32>
    %c0_247 = arith.constant 0 : index
    %c0_248 = arith.constant 0 : index
    %c32_249 = arith.constant 32 : index
    %1059 = vector.load %arg11[%c0_247, %c0_248, %c32_249] : memref<2x4x290xf32, #tpu.memory_space<vmem>>, vector<2x1x256xf32>
    %1060 = vector.shape_cast %1059 : vector<2x1x256xf32> to vector<2x256xf32>
    %1061 = vector.broadcast %20 : vector<1x256xf32> to vector<2x256xf32>
    %1062 = arith.mulf %1060, %1061 : vector<2x256xf32>
    %c6_250 = arith.constant 6 : index
    %1063 = memref.load %arg5[%c6_250] : memref<144xf32, #tpu.memory_space<smem>>
    %1064 = vector.broadcast %1063 : f32 to vector<2x256xf32>
    %1065 = arith.mulf %1064, %1062 : vector<2x256xf32>
    %1066 = arith.addf %1046, %1065 : vector<2x256xf32>
    %c42_251 = arith.constant 42 : index
    %1067 = memref.load %arg5[%c42_251] : memref<144xf32, #tpu.memory_space<smem>>
    %1068 = vector.broadcast %1067 : f32 to vector<2x256xf32>
    %1069 = arith.mulf %1068, %1062 : vector<2x256xf32>
    %1070 = arith.addf %1050, %1069 : vector<2x256xf32>
    %c78_252 = arith.constant 78 : index
    %1071 = memref.load %arg5[%c78_252] : memref<144xf32, #tpu.memory_space<smem>>
    %1072 = vector.broadcast %1071 : f32 to vector<2x256xf32>
    %1073 = arith.mulf %1072, %1062 : vector<2x256xf32>
    %1074 = arith.addf %1054, %1073 : vector<2x256xf32>
    %c114_253 = arith.constant 114 : index
    %1075 = memref.load %arg5[%c114_253] : memref<144xf32, #tpu.memory_space<smem>>
    %1076 = vector.broadcast %1075 : f32 to vector<2x256xf32>
    %1077 = arith.mulf %1076, %1062 : vector<2x256xf32>
    %1078 = arith.addf %1058, %1077 : vector<2x256xf32>
    %c0_254 = arith.constant 0 : index
    %c0_255 = arith.constant 0 : index
    %c33_256 = arith.constant 33 : index
    %1079 = vector.load %arg11[%c0_254, %c0_255, %c33_256] : memref<2x4x290xf32, #tpu.memory_space<vmem>>, vector<2x1x256xf32>
    %1080 = vector.shape_cast %1079 : vector<2x1x256xf32> to vector<2x256xf32>
    %c7_257 = arith.constant 7 : index
    %1081 = memref.load %arg5[%c7_257] : memref<144xf32, #tpu.memory_space<smem>>
    %1082 = vector.broadcast %1081 : f32 to vector<2x256xf32>
    %1083 = arith.mulf %1082, %1080 : vector<2x256xf32>
    %1084 = arith.addf %1066, %1083 : vector<2x256xf32>
    %c43_258 = arith.constant 43 : index
    %1085 = memref.load %arg5[%c43_258] : memref<144xf32, #tpu.memory_space<smem>>
    %1086 = vector.broadcast %1085 : f32 to vector<2x256xf32>
    %1087 = arith.mulf %1086, %1080 : vector<2x256xf32>
    %1088 = arith.addf %1070, %1087 : vector<2x256xf32>
    %c79_259 = arith.constant 79 : index
    %1089 = memref.load %arg5[%c79_259] : memref<144xf32, #tpu.memory_space<smem>>
    %1090 = vector.broadcast %1089 : f32 to vector<2x256xf32>
    %1091 = arith.mulf %1090, %1080 : vector<2x256xf32>
    %1092 = arith.addf %1074, %1091 : vector<2x256xf32>
    %c115_260 = arith.constant 115 : index
    %1093 = memref.load %arg5[%c115_260] : memref<144xf32, #tpu.memory_space<smem>>
    %1094 = vector.broadcast %1093 : f32 to vector<2x256xf32>
    %1095 = arith.mulf %1094, %1080 : vector<2x256xf32>
    %1096 = arith.addf %1078, %1095 : vector<2x256xf32>
    %c0_261 = arith.constant 0 : index
    %c0_262 = arith.constant 0 : index
    %c34_263 = arith.constant 34 : index
    %1097 = vector.load %arg11[%c0_261, %c0_262, %c34_263] : memref<2x4x290xf32, #tpu.memory_space<vmem>>, vector<2x1x256xf32>
    %1098 = vector.shape_cast %1097 : vector<2x1x256xf32> to vector<2x256xf32>
    %1099 = vector.broadcast %24 : vector<1x256xf32> to vector<2x256xf32>
    %1100 = arith.mulf %1098, %1099 : vector<2x256xf32>
    %c8_264 = arith.constant 8 : index
    %1101 = memref.load %arg5[%c8_264] : memref<144xf32, #tpu.memory_space<smem>>
    %1102 = vector.broadcast %1101 : f32 to vector<2x256xf32>
    %1103 = arith.mulf %1102, %1100 : vector<2x256xf32>
    %1104 = arith.addf %1084, %1103 : vector<2x256xf32>
    %c44_265 = arith.constant 44 : index
    %1105 = memref.load %arg5[%c44_265] : memref<144xf32, #tpu.memory_space<smem>>
    %1106 = vector.broadcast %1105 : f32 to vector<2x256xf32>
    %1107 = arith.mulf %1106, %1100 : vector<2x256xf32>
    %1108 = arith.addf %1088, %1107 : vector<2x256xf32>
    %c80_266 = arith.constant 80 : index
    %1109 = memref.load %arg5[%c80_266] : memref<144xf32, #tpu.memory_space<smem>>
    %1110 = vector.broadcast %1109 : f32 to vector<2x256xf32>
    %1111 = arith.mulf %1110, %1100 : vector<2x256xf32>
    %1112 = arith.addf %1092, %1111 : vector<2x256xf32>
    %c116_267 = arith.constant 116 : index
    %1113 = memref.load %arg5[%c116_267] : memref<144xf32, #tpu.memory_space<smem>>
    %1114 = vector.broadcast %1113 : f32 to vector<2x256xf32>
    %1115 = arith.mulf %1114, %1100 : vector<2x256xf32>
    %1116 = arith.addf %1096, %1115 : vector<2x256xf32>
    %c0_268 = arith.constant 0 : index
    %c1_269 = arith.constant 1 : index
    %c0_270 = arith.constant 0 : index
    %1117 = vector.load %arg11[%c0_268, %c1_269, %c0_270] : memref<2x4x290xf32, #tpu.memory_space<vmem>>, vector<2x1x256xf32>
    %1118 = vector.shape_cast %1117 : vector<2x1x256xf32> to vector<2x256xf32>
    %1119 = vector.broadcast %20 : vector<1x256xf32> to vector<2x256xf32>
    %1120 = arith.mulf %1118, %1119 : vector<2x256xf32>
    %c9_271 = arith.constant 9 : index
    %1121 = memref.load %arg5[%c9_271] : memref<144xf32, #tpu.memory_space<smem>>
    %1122 = vector.broadcast %1121 : f32 to vector<2x256xf32>
    %1123 = arith.mulf %1122, %1120 : vector<2x256xf32>
    %1124 = arith.addf %1104, %1123 : vector<2x256xf32>
    %c45_272 = arith.constant 45 : index
    %1125 = memref.load %arg5[%c45_272] : memref<144xf32, #tpu.memory_space<smem>>
    %1126 = vector.broadcast %1125 : f32 to vector<2x256xf32>
    %1127 = arith.mulf %1126, %1120 : vector<2x256xf32>
    %1128 = arith.addf %1108, %1127 : vector<2x256xf32>
    %c81_273 = arith.constant 81 : index
    %1129 = memref.load %arg5[%c81_273] : memref<144xf32, #tpu.memory_space<smem>>
    %1130 = vector.broadcast %1129 : f32 to vector<2x256xf32>
    %1131 = arith.mulf %1130, %1120 : vector<2x256xf32>
    %1132 = arith.addf %1112, %1131 : vector<2x256xf32>
    %c117_274 = arith.constant 117 : index
    %1133 = memref.load %arg5[%c117_274] : memref<144xf32, #tpu.memory_space<smem>>
    %1134 = vector.broadcast %1133 : f32 to vector<2x256xf32>
    %1135 = arith.mulf %1134, %1120 : vector<2x256xf32>
    %1136 = arith.addf %1116, %1135 : vector<2x256xf32>
    %c0_275 = arith.constant 0 : index
    %c1_276 = arith.constant 1 : index
    %c1_277 = arith.constant 1 : index
    %1137 = vector.load %arg11[%c0_275, %c1_276, %c1_277] : memref<2x4x290xf32, #tpu.memory_space<vmem>>, vector<2x1x256xf32>
    %1138 = vector.shape_cast %1137 : vector<2x1x256xf32> to vector<2x256xf32>
    %c10_278 = arith.constant 10 : index
    %1139 = memref.load %arg5[%c10_278] : memref<144xf32, #tpu.memory_space<smem>>
    %1140 = vector.broadcast %1139 : f32 to vector<2x256xf32>
    %1141 = arith.mulf %1140, %1138 : vector<2x256xf32>
    %1142 = arith.addf %1124, %1141 : vector<2x256xf32>
    %c46_279 = arith.constant 46 : index
    %1143 = memref.load %arg5[%c46_279] : memref<144xf32, #tpu.memory_space<smem>>
    %1144 = vector.broadcast %1143 : f32 to vector<2x256xf32>
    %1145 = arith.mulf %1144, %1138 : vector<2x256xf32>
    %1146 = arith.addf %1128, %1145 : vector<2x256xf32>
    %c82_280 = arith.constant 82 : index
    %1147 = memref.load %arg5[%c82_280] : memref<144xf32, #tpu.memory_space<smem>>
    %1148 = vector.broadcast %1147 : f32 to vector<2x256xf32>
    %1149 = arith.mulf %1148, %1138 : vector<2x256xf32>
    %1150 = arith.addf %1132, %1149 : vector<2x256xf32>
    %c118_281 = arith.constant 118 : index
    %1151 = memref.load %arg5[%c118_281] : memref<144xf32, #tpu.memory_space<smem>>
    %1152 = vector.broadcast %1151 : f32 to vector<2x256xf32>
    %1153 = arith.mulf %1152, %1138 : vector<2x256xf32>
    %1154 = arith.addf %1136, %1153 : vector<2x256xf32>
    %c0_282 = arith.constant 0 : index
    %c1_283 = arith.constant 1 : index
    %c2_284 = arith.constant 2 : index
    %1155 = vector.load %arg11[%c0_282, %c1_283, %c2_284] : memref<2x4x290xf32, #tpu.memory_space<vmem>>, vector<2x1x256xf32>
    %1156 = vector.shape_cast %1155 : vector<2x1x256xf32> to vector<2x256xf32>
    %1157 = vector.broadcast %24 : vector<1x256xf32> to vector<2x256xf32>
    %1158 = arith.mulf %1156, %1157 : vector<2x256xf32>
    %c11_285 = arith.constant 11 : index
    %1159 = memref.load %arg5[%c11_285] : memref<144xf32, #tpu.memory_space<smem>>
    %1160 = vector.broadcast %1159 : f32 to vector<2x256xf32>
    %1161 = arith.mulf %1160, %1158 : vector<2x256xf32>
    %1162 = arith.addf %1142, %1161 : vector<2x256xf32>
    %c47_286 = arith.constant 47 : index
    %1163 = memref.load %arg5[%c47_286] : memref<144xf32, #tpu.memory_space<smem>>
    %1164 = vector.broadcast %1163 : f32 to vector<2x256xf32>
    %1165 = arith.mulf %1164, %1158 : vector<2x256xf32>
    %1166 = arith.addf %1146, %1165 : vector<2x256xf32>
    %c83_287 = arith.constant 83 : index
    %1167 = memref.load %arg5[%c83_287] : memref<144xf32, #tpu.memory_space<smem>>
    %1168 = vector.broadcast %1167 : f32 to vector<2x256xf32>
    %1169 = arith.mulf %1168, %1158 : vector<2x256xf32>
    %1170 = arith.addf %1150, %1169 : vector<2x256xf32>
    %c119_288 = arith.constant 119 : index
    %1171 = memref.load %arg5[%c119_288] : memref<144xf32, #tpu.memory_space<smem>>
    %1172 = vector.broadcast %1171 : f32 to vector<2x256xf32>
    %1173 = arith.mulf %1172, %1158 : vector<2x256xf32>
    %1174 = arith.addf %1154, %1173 : vector<2x256xf32>
    %c0_289 = arith.constant 0 : index
    %c1_290 = arith.constant 1 : index
    %c16_291 = arith.constant 16 : index
    %1175 = vector.load %arg11[%c0_289, %c1_290, %c16_291] : memref<2x4x290xf32, #tpu.memory_space<vmem>>, vector<2x1x256xf32>
    %1176 = vector.shape_cast %1175 : vector<2x1x256xf32> to vector<2x256xf32>
    %1177 = vector.broadcast %20 : vector<1x256xf32> to vector<2x256xf32>
    %1178 = arith.mulf %1176, %1177 : vector<2x256xf32>
    %c12_292 = arith.constant 12 : index
    %1179 = memref.load %arg5[%c12_292] : memref<144xf32, #tpu.memory_space<smem>>
    %1180 = vector.broadcast %1179 : f32 to vector<2x256xf32>
    %1181 = arith.mulf %1180, %1178 : vector<2x256xf32>
    %1182 = arith.addf %1162, %1181 : vector<2x256xf32>
    %c48_293 = arith.constant 48 : index
    %1183 = memref.load %arg5[%c48_293] : memref<144xf32, #tpu.memory_space<smem>>
    %1184 = vector.broadcast %1183 : f32 to vector<2x256xf32>
    %1185 = arith.mulf %1184, %1178 : vector<2x256xf32>
    %1186 = arith.addf %1166, %1185 : vector<2x256xf32>
    %c84_294 = arith.constant 84 : index
    %1187 = memref.load %arg5[%c84_294] : memref<144xf32, #tpu.memory_space<smem>>
    %1188 = vector.broadcast %1187 : f32 to vector<2x256xf32>
    %1189 = arith.mulf %1188, %1178 : vector<2x256xf32>
    %1190 = arith.addf %1170, %1189 : vector<2x256xf32>
    %c120_295 = arith.constant 120 : index
    %1191 = memref.load %arg5[%c120_295] : memref<144xf32, #tpu.memory_space<smem>>
    %1192 = vector.broadcast %1191 : f32 to vector<2x256xf32>
    %1193 = arith.mulf %1192, %1178 : vector<2x256xf32>
    %1194 = arith.addf %1174, %1193 : vector<2x256xf32>
    %c0_296 = arith.constant 0 : index
    %c1_297 = arith.constant 1 : index
    %c17_298 = arith.constant 17 : index
    %1195 = vector.load %arg11[%c0_296, %c1_297, %c17_298] : memref<2x4x290xf32, #tpu.memory_space<vmem>>, vector<2x1x256xf32>
    %1196 = vector.shape_cast %1195 : vector<2x1x256xf32> to vector<2x256xf32>
    %c13_299 = arith.constant 13 : index
    %1197 = memref.load %arg5[%c13_299] : memref<144xf32, #tpu.memory_space<smem>>
    %1198 = vector.broadcast %1197 : f32 to vector<2x256xf32>
    %1199 = arith.mulf %1198, %1196 : vector<2x256xf32>
    %1200 = arith.addf %1182, %1199 : vector<2x256xf32>
    %c49_300 = arith.constant 49 : index
    %1201 = memref.load %arg5[%c49_300] : memref<144xf32, #tpu.memory_space<smem>>
    %1202 = vector.broadcast %1201 : f32 to vector<2x256xf32>
    %1203 = arith.mulf %1202, %1196 : vector<2x256xf32>
    %1204 = arith.addf %1186, %1203 : vector<2x256xf32>
    %c85_301 = arith.constant 85 : index
    %1205 = memref.load %arg5[%c85_301] : memref<144xf32, #tpu.memory_space<smem>>
    %1206 = vector.broadcast %1205 : f32 to vector<2x256xf32>
    %1207 = arith.mulf %1206, %1196 : vector<2x256xf32>
    %1208 = arith.addf %1190, %1207 : vector<2x256xf32>
    %c121_302 = arith.constant 121 : index
    %1209 = memref.load %arg5[%c121_302] : memref<144xf32, #tpu.memory_space<smem>>
    %1210 = vector.broadcast %1209 : f32 to vector<2x256xf32>
    %1211 = arith.mulf %1210, %1196 : vector<2x256xf32>
    %1212 = arith.addf %1194, %1211 : vector<2x256xf32>
    %c0_303 = arith.constant 0 : index
    %c1_304 = arith.constant 1 : index
    %c18_305 = arith.constant 18 : index
    %1213 = vector.load %arg11[%c0_303, %c1_304, %c18_305] : memref<2x4x290xf32, #tpu.memory_space<vmem>>, vector<2x1x256xf32>
    %1214 = vector.shape_cast %1213 : vector<2x1x256xf32> to vector<2x256xf32>
    %1215 = vector.broadcast %24 : vector<1x256xf32> to vector<2x256xf32>
    %1216 = arith.mulf %1214, %1215 : vector<2x256xf32>
    %c14_306 = arith.constant 14 : index
    %1217 = memref.load %arg5[%c14_306] : memref<144xf32, #tpu.memory_space<smem>>
    %1218 = vector.broadcast %1217 : f32 to vector<2x256xf32>
    %1219 = arith.mulf %1218, %1216 : vector<2x256xf32>
    %1220 = arith.addf %1200, %1219 : vector<2x256xf32>
    %c50_307 = arith.constant 50 : index
    %1221 = memref.load %arg5[%c50_307] : memref<144xf32, #tpu.memory_space<smem>>
    %1222 = vector.broadcast %1221 : f32 to vector<2x256xf32>
    %1223 = arith.mulf %1222, %1216 : vector<2x256xf32>
    %1224 = arith.addf %1204, %1223 : vector<2x256xf32>
    %c86_308 = arith.constant 86 : index
    %1225 = memref.load %arg5[%c86_308] : memref<144xf32, #tpu.memory_space<smem>>
    %1226 = vector.broadcast %1225 : f32 to vector<2x256xf32>
    %1227 = arith.mulf %1226, %1216 : vector<2x256xf32>
    %1228 = arith.addf %1208, %1227 : vector<2x256xf32>
    %c122_309 = arith.constant 122 : index
    %1229 = memref.load %arg5[%c122_309] : memref<144xf32, #tpu.memory_space<smem>>
    %1230 = vector.broadcast %1229 : f32 to vector<2x256xf32>
    %1231 = arith.mulf %1230, %1216 : vector<2x256xf32>
    %1232 = arith.addf %1212, %1231 : vector<2x256xf32>
    %c0_310 = arith.constant 0 : index
    %c1_311 = arith.constant 1 : index
    %c32_312 = arith.constant 32 : index
    %1233 = vector.load %arg11[%c0_310, %c1_311, %c32_312] : memref<2x4x290xf32, #tpu.memory_space<vmem>>, vector<2x1x256xf32>
    %1234 = vector.shape_cast %1233 : vector<2x1x256xf32> to vector<2x256xf32>
    %1235 = vector.broadcast %20 : vector<1x256xf32> to vector<2x256xf32>
    %1236 = arith.mulf %1234, %1235 : vector<2x256xf32>
    %c15_313 = arith.constant 15 : index
    %1237 = memref.load %arg5[%c15_313] : memref<144xf32, #tpu.memory_space<smem>>
    %1238 = vector.broadcast %1237 : f32 to vector<2x256xf32>
    %1239 = arith.mulf %1238, %1236 : vector<2x256xf32>
    %1240 = arith.addf %1220, %1239 : vector<2x256xf32>
    %c51_314 = arith.constant 51 : index
    %1241 = memref.load %arg5[%c51_314] : memref<144xf32, #tpu.memory_space<smem>>
    %1242 = vector.broadcast %1241 : f32 to vector<2x256xf32>
    %1243 = arith.mulf %1242, %1236 : vector<2x256xf32>
    %1244 = arith.addf %1224, %1243 : vector<2x256xf32>
    %c87_315 = arith.constant 87 : index
    %1245 = memref.load %arg5[%c87_315] : memref<144xf32, #tpu.memory_space<smem>>
    %1246 = vector.broadcast %1245 : f32 to vector<2x256xf32>
    %1247 = arith.mulf %1246, %1236 : vector<2x256xf32>
    %1248 = arith.addf %1228, %1247 : vector<2x256xf32>
    %c123_316 = arith.constant 123 : index
    %1249 = memref.load %arg5[%c123_316] : memref<144xf32, #tpu.memory_space<smem>>
    %1250 = vector.broadcast %1249 : f32 to vector<2x256xf32>
    %1251 = arith.mulf %1250, %1236 : vector<2x256xf32>
    %1252 = arith.addf %1232, %1251 : vector<2x256xf32>
    %c0_317 = arith.constant 0 : index
    %c1_318 = arith.constant 1 : index
    %c33_319 = arith.constant 33 : index
    %1253 = vector.load %arg11[%c0_317, %c1_318, %c33_319] : memref<2x4x290xf32, #tpu.memory_space<vmem>>, vector<2x1x256xf32>
    %1254 = vector.shape_cast %1253 : vector<2x1x256xf32> to vector<2x256xf32>
    %c16_320 = arith.constant 16 : index
    %1255 = memref.load %arg5[%c16_320] : memref<144xf32, #tpu.memory_space<smem>>
    %1256 = vector.broadcast %1255 : f32 to vector<2x256xf32>
    %1257 = arith.mulf %1256, %1254 : vector<2x256xf32>
    %1258 = arith.addf %1240, %1257 : vector<2x256xf32>
    %c52_321 = arith.constant 52 : index
    %1259 = memref.load %arg5[%c52_321] : memref<144xf32, #tpu.memory_space<smem>>
    %1260 = vector.broadcast %1259 : f32 to vector<2x256xf32>
    %1261 = arith.mulf %1260, %1254 : vector<2x256xf32>
    %1262 = arith.addf %1244, %1261 : vector<2x256xf32>
    %c88_322 = arith.constant 88 : index
    %1263 = memref.load %arg5[%c88_322] : memref<144xf32, #tpu.memory_space<smem>>
    %1264 = vector.broadcast %1263 : f32 to vector<2x256xf32>
    %1265 = arith.mulf %1264, %1254 : vector<2x256xf32>
    %1266 = arith.addf %1248, %1265 : vector<2x256xf32>
    %c124_323 = arith.constant 124 : index
    %1267 = memref.load %arg5[%c124_323] : memref<144xf32, #tpu.memory_space<smem>>
    %1268 = vector.broadcast %1267 : f32 to vector<2x256xf32>
    %1269 = arith.mulf %1268, %1254 : vector<2x256xf32>
    %1270 = arith.addf %1252, %1269 : vector<2x256xf32>
    %c0_324 = arith.constant 0 : index
    %c1_325 = arith.constant 1 : index
    %c34_326 = arith.constant 34 : index
    %1271 = vector.load %arg11[%c0_324, %c1_325, %c34_326] : memref<2x4x290xf32, #tpu.memory_space<vmem>>, vector<2x1x256xf32>
    %1272 = vector.shape_cast %1271 : vector<2x1x256xf32> to vector<2x256xf32>
    %1273 = vector.broadcast %24 : vector<1x256xf32> to vector<2x256xf32>
    %1274 = arith.mulf %1272, %1273 : vector<2x256xf32>
    %c17_327 = arith.constant 17 : index
    %1275 = memref.load %arg5[%c17_327] : memref<144xf32, #tpu.memory_space<smem>>
    %1276 = vector.broadcast %1275 : f32 to vector<2x256xf32>
    %1277 = arith.mulf %1276, %1274 : vector<2x256xf32>
    %1278 = arith.addf %1258, %1277 : vector<2x256xf32>
    %c53_328 = arith.constant 53 : index
    %1279 = memref.load %arg5[%c53_328] : memref<144xf32, #tpu.memory_space<smem>>
    %1280 = vector.broadcast %1279 : f32 to vector<2x256xf32>
    %1281 = arith.mulf %1280, %1274 : vector<2x256xf32>
    %1282 = arith.addf %1262, %1281 : vector<2x256xf32>
    %c89_329 = arith.constant 89 : index
    %1283 = memref.load %arg5[%c89_329] : memref<144xf32, #tpu.memory_space<smem>>
    %1284 = vector.broadcast %1283 : f32 to vector<2x256xf32>
    %1285 = arith.mulf %1284, %1274 : vector<2x256xf32>
    %1286 = arith.addf %1266, %1285 : vector<2x256xf32>
    %c125_330 = arith.constant 125 : index
    %1287 = memref.load %arg5[%c125_330] : memref<144xf32, #tpu.memory_space<smem>>
    %1288 = vector.broadcast %1287 : f32 to vector<2x256xf32>
    %1289 = arith.mulf %1288, %1274 : vector<2x256xf32>
    %1290 = arith.addf %1270, %1289 : vector<2x256xf32>
    %c0_331 = arith.constant 0 : index
    %c2_332 = arith.constant 2 : index
    %c0_333 = arith.constant 0 : index
    %1291 = vector.load %arg11[%c0_331, %c2_332, %c0_333] : memref<2x4x290xf32, #tpu.memory_space<vmem>>, vector<2x1x256xf32>
    %1292 = vector.shape_cast %1291 : vector<2x1x256xf32> to vector<2x256xf32>
    %1293 = vector.broadcast %20 : vector<1x256xf32> to vector<2x256xf32>
    %1294 = arith.mulf %1292, %1293 : vector<2x256xf32>
    %c18_334 = arith.constant 18 : index
    %1295 = memref.load %arg5[%c18_334] : memref<144xf32, #tpu.memory_space<smem>>
    %1296 = vector.broadcast %1295 : f32 to vector<2x256xf32>
    %1297 = arith.mulf %1296, %1294 : vector<2x256xf32>
    %1298 = arith.addf %1278, %1297 : vector<2x256xf32>
    %c54_335 = arith.constant 54 : index
    %1299 = memref.load %arg5[%c54_335] : memref<144xf32, #tpu.memory_space<smem>>
    %1300 = vector.broadcast %1299 : f32 to vector<2x256xf32>
    %1301 = arith.mulf %1300, %1294 : vector<2x256xf32>
    %1302 = arith.addf %1282, %1301 : vector<2x256xf32>
    %c90_336 = arith.constant 90 : index
    %1303 = memref.load %arg5[%c90_336] : memref<144xf32, #tpu.memory_space<smem>>
    %1304 = vector.broadcast %1303 : f32 to vector<2x256xf32>
    %1305 = arith.mulf %1304, %1294 : vector<2x256xf32>
    %1306 = arith.addf %1286, %1305 : vector<2x256xf32>
    %c126_337 = arith.constant 126 : index
    %1307 = memref.load %arg5[%c126_337] : memref<144xf32, #tpu.memory_space<smem>>
    %1308 = vector.broadcast %1307 : f32 to vector<2x256xf32>
    %1309 = arith.mulf %1308, %1294 : vector<2x256xf32>
    %1310 = arith.addf %1290, %1309 : vector<2x256xf32>
    %c0_338 = arith.constant 0 : index
    %c2_339 = arith.constant 2 : index
    %c1_340 = arith.constant 1 : index
    %1311 = vector.load %arg11[%c0_338, %c2_339, %c1_340] : memref<2x4x290xf32, #tpu.memory_space<vmem>>, vector<2x1x256xf32>
    %1312 = vector.shape_cast %1311 : vector<2x1x256xf32> to vector<2x256xf32>
    %c19_341 = arith.constant 19 : index
    %1313 = memref.load %arg5[%c19_341] : memref<144xf32, #tpu.memory_space<smem>>
    %1314 = vector.broadcast %1313 : f32 to vector<2x256xf32>
    %1315 = arith.mulf %1314, %1312 : vector<2x256xf32>
    %1316 = arith.addf %1298, %1315 : vector<2x256xf32>
    %c55_342 = arith.constant 55 : index
    %1317 = memref.load %arg5[%c55_342] : memref<144xf32, #tpu.memory_space<smem>>
    %1318 = vector.broadcast %1317 : f32 to vector<2x256xf32>
    %1319 = arith.mulf %1318, %1312 : vector<2x256xf32>
    %1320 = arith.addf %1302, %1319 : vector<2x256xf32>
    %c91_343 = arith.constant 91 : index
    %1321 = memref.load %arg5[%c91_343] : memref<144xf32, #tpu.memory_space<smem>>
    %1322 = vector.broadcast %1321 : f32 to vector<2x256xf32>
    %1323 = arith.mulf %1322, %1312 : vector<2x256xf32>
    %1324 = arith.addf %1306, %1323 : vector<2x256xf32>
    %c127_344 = arith.constant 127 : index
    %1325 = memref.load %arg5[%c127_344] : memref<144xf32, #tpu.memory_space<smem>>
    %1326 = vector.broadcast %1325 : f32 to vector<2x256xf32>
    %1327 = arith.mulf %1326, %1312 : vector<2x256xf32>
    %1328 = arith.addf %1310, %1327 : vector<2x256xf32>
    %c0_345 = arith.constant 0 : index
    %c2_346 = arith.constant 2 : index
    %c2_347 = arith.constant 2 : index
    %1329 = vector.load %arg11[%c0_345, %c2_346, %c2_347] : memref<2x4x290xf32, #tpu.memory_space<vmem>>, vector<2x1x256xf32>
    %1330 = vector.shape_cast %1329 : vector<2x1x256xf32> to vector<2x256xf32>
    %1331 = vector.broadcast %24 : vector<1x256xf32> to vector<2x256xf32>
    %1332 = arith.mulf %1330, %1331 : vector<2x256xf32>
    %c20_348 = arith.constant 20 : index
    %1333 = memref.load %arg5[%c20_348] : memref<144xf32, #tpu.memory_space<smem>>
    %1334 = vector.broadcast %1333 : f32 to vector<2x256xf32>
    %1335 = arith.mulf %1334, %1332 : vector<2x256xf32>
    %1336 = arith.addf %1316, %1335 : vector<2x256xf32>
    %c56_349 = arith.constant 56 : index
    %1337 = memref.load %arg5[%c56_349] : memref<144xf32, #tpu.memory_space<smem>>
    %1338 = vector.broadcast %1337 : f32 to vector<2x256xf32>
    %1339 = arith.mulf %1338, %1332 : vector<2x256xf32>
    %1340 = arith.addf %1320, %1339 : vector<2x256xf32>
    %c92_350 = arith.constant 92 : index
    %1341 = memref.load %arg5[%c92_350] : memref<144xf32, #tpu.memory_space<smem>>
    %1342 = vector.broadcast %1341 : f32 to vector<2x256xf32>
    %1343 = arith.mulf %1342, %1332 : vector<2x256xf32>
    %1344 = arith.addf %1324, %1343 : vector<2x256xf32>
    %c128_351 = arith.constant 128 : index
    %1345 = memref.load %arg5[%c128_351] : memref<144xf32, #tpu.memory_space<smem>>
    %1346 = vector.broadcast %1345 : f32 to vector<2x256xf32>
    %1347 = arith.mulf %1346, %1332 : vector<2x256xf32>
    %1348 = arith.addf %1328, %1347 : vector<2x256xf32>
    %c0_352 = arith.constant 0 : index
    %c2_353 = arith.constant 2 : index
    %c16_354 = arith.constant 16 : index
    %1349 = vector.load %arg11[%c0_352, %c2_353, %c16_354] : memref<2x4x290xf32, #tpu.memory_space<vmem>>, vector<2x1x256xf32>
    %1350 = vector.shape_cast %1349 : vector<2x1x256xf32> to vector<2x256xf32>
    %1351 = vector.broadcast %20 : vector<1x256xf32> to vector<2x256xf32>
    %1352 = arith.mulf %1350, %1351 : vector<2x256xf32>
    %c21_355 = arith.constant 21 : index
    %1353 = memref.load %arg5[%c21_355] : memref<144xf32, #tpu.memory_space<smem>>
    %1354 = vector.broadcast %1353 : f32 to vector<2x256xf32>
    %1355 = arith.mulf %1354, %1352 : vector<2x256xf32>
    %1356 = arith.addf %1336, %1355 : vector<2x256xf32>
    %c57_356 = arith.constant 57 : index
    %1357 = memref.load %arg5[%c57_356] : memref<144xf32, #tpu.memory_space<smem>>
    %1358 = vector.broadcast %1357 : f32 to vector<2x256xf32>
    %1359 = arith.mulf %1358, %1352 : vector<2x256xf32>
    %1360 = arith.addf %1340, %1359 : vector<2x256xf32>
    %c93_357 = arith.constant 93 : index
    %1361 = memref.load %arg5[%c93_357] : memref<144xf32, #tpu.memory_space<smem>>
    %1362 = vector.broadcast %1361 : f32 to vector<2x256xf32>
    %1363 = arith.mulf %1362, %1352 : vector<2x256xf32>
    %1364 = arith.addf %1344, %1363 : vector<2x256xf32>
    %c129_358 = arith.constant 129 : index
    %1365 = memref.load %arg5[%c129_358] : memref<144xf32, #tpu.memory_space<smem>>
    %1366 = vector.broadcast %1365 : f32 to vector<2x256xf32>
    %1367 = arith.mulf %1366, %1352 : vector<2x256xf32>
    %1368 = arith.addf %1348, %1367 : vector<2x256xf32>
    %c0_359 = arith.constant 0 : index
    %c2_360 = arith.constant 2 : index
    %c17_361 = arith.constant 17 : index
    %1369 = vector.load %arg11[%c0_359, %c2_360, %c17_361] : memref<2x4x290xf32, #tpu.memory_space<vmem>>, vector<2x1x256xf32>
    %1370 = vector.shape_cast %1369 : vector<2x1x256xf32> to vector<2x256xf32>
    %c22_362 = arith.constant 22 : index
    %1371 = memref.load %arg5[%c22_362] : memref<144xf32, #tpu.memory_space<smem>>
    %1372 = vector.broadcast %1371 : f32 to vector<2x256xf32>
    %1373 = arith.mulf %1372, %1370 : vector<2x256xf32>
    %1374 = arith.addf %1356, %1373 : vector<2x256xf32>
    %c58_363 = arith.constant 58 : index
    %1375 = memref.load %arg5[%c58_363] : memref<144xf32, #tpu.memory_space<smem>>
    %1376 = vector.broadcast %1375 : f32 to vector<2x256xf32>
    %1377 = arith.mulf %1376, %1370 : vector<2x256xf32>
    %1378 = arith.addf %1360, %1377 : vector<2x256xf32>
    %c94_364 = arith.constant 94 : index
    %1379 = memref.load %arg5[%c94_364] : memref<144xf32, #tpu.memory_space<smem>>
    %1380 = vector.broadcast %1379 : f32 to vector<2x256xf32>
    %1381 = arith.mulf %1380, %1370 : vector<2x256xf32>
    %1382 = arith.addf %1364, %1381 : vector<2x256xf32>
    %c130_365 = arith.constant 130 : index
    %1383 = memref.load %arg5[%c130_365] : memref<144xf32, #tpu.memory_space<smem>>
    %1384 = vector.broadcast %1383 : f32 to vector<2x256xf32>
    %1385 = arith.mulf %1384, %1370 : vector<2x256xf32>
    %1386 = arith.addf %1368, %1385 : vector<2x256xf32>
    %c0_366 = arith.constant 0 : index
    %c2_367 = arith.constant 2 : index
    %c18_368 = arith.constant 18 : index
    %1387 = vector.load %arg11[%c0_366, %c2_367, %c18_368] : memref<2x4x290xf32, #tpu.memory_space<vmem>>, vector<2x1x256xf32>
    %1388 = vector.shape_cast %1387 : vector<2x1x256xf32> to vector<2x256xf32>
    %1389 = vector.broadcast %24 : vector<1x256xf32> to vector<2x256xf32>
    %1390 = arith.mulf %1388, %1389 : vector<2x256xf32>
    %c23_369 = arith.constant 23 : index
    %1391 = memref.load %arg5[%c23_369] : memref<144xf32, #tpu.memory_space<smem>>
    %1392 = vector.broadcast %1391 : f32 to vector<2x256xf32>
    %1393 = arith.mulf %1392, %1390 : vector<2x256xf32>
    %1394 = arith.addf %1374, %1393 : vector<2x256xf32>
    %c59_370 = arith.constant 59 : index
    %1395 = memref.load %arg5[%c59_370] : memref<144xf32, #tpu.memory_space<smem>>
    %1396 = vector.broadcast %1395 : f32 to vector<2x256xf32>
    %1397 = arith.mulf %1396, %1390 : vector<2x256xf32>
    %1398 = arith.addf %1378, %1397 : vector<2x256xf32>
    %c95_371 = arith.constant 95 : index
    %1399 = memref.load %arg5[%c95_371] : memref<144xf32, #tpu.memory_space<smem>>
    %1400 = vector.broadcast %1399 : f32 to vector<2x256xf32>
    %1401 = arith.mulf %1400, %1390 : vector<2x256xf32>
    %1402 = arith.addf %1382, %1401 : vector<2x256xf32>
    %c131_372 = arith.constant 131 : index
    %1403 = memref.load %arg5[%c131_372] : memref<144xf32, #tpu.memory_space<smem>>
    %1404 = vector.broadcast %1403 : f32 to vector<2x256xf32>
    %1405 = arith.mulf %1404, %1390 : vector<2x256xf32>
    %1406 = arith.addf %1386, %1405 : vector<2x256xf32>
    %c0_373 = arith.constant 0 : index
    %c2_374 = arith.constant 2 : index
    %c32_375 = arith.constant 32 : index
    %1407 = vector.load %arg11[%c0_373, %c2_374, %c32_375] : memref<2x4x290xf32, #tpu.memory_space<vmem>>, vector<2x1x256xf32>
    %1408 = vector.shape_cast %1407 : vector<2x1x256xf32> to vector<2x256xf32>
    %1409 = vector.broadcast %20 : vector<1x256xf32> to vector<2x256xf32>
    %1410 = arith.mulf %1408, %1409 : vector<2x256xf32>
    %c24_376 = arith.constant 24 : index
    %1411 = memref.load %arg5[%c24_376] : memref<144xf32, #tpu.memory_space<smem>>
    %1412 = vector.broadcast %1411 : f32 to vector<2x256xf32>
    %1413 = arith.mulf %1412, %1410 : vector<2x256xf32>
    %1414 = arith.addf %1394, %1413 : vector<2x256xf32>
    %c60_377 = arith.constant 60 : index
    %1415 = memref.load %arg5[%c60_377] : memref<144xf32, #tpu.memory_space<smem>>
    %1416 = vector.broadcast %1415 : f32 to vector<2x256xf32>
    %1417 = arith.mulf %1416, %1410 : vector<2x256xf32>
    %1418 = arith.addf %1398, %1417 : vector<2x256xf32>
    %c96_378 = arith.constant 96 : index
    %1419 = memref.load %arg5[%c96_378] : memref<144xf32, #tpu.memory_space<smem>>
    %1420 = vector.broadcast %1419 : f32 to vector<2x256xf32>
    %1421 = arith.mulf %1420, %1410 : vector<2x256xf32>
    %1422 = arith.addf %1402, %1421 : vector<2x256xf32>
    %c132_379 = arith.constant 132 : index
    %1423 = memref.load %arg5[%c132_379] : memref<144xf32, #tpu.memory_space<smem>>
    %1424 = vector.broadcast %1423 : f32 to vector<2x256xf32>
    %1425 = arith.mulf %1424, %1410 : vector<2x256xf32>
    %1426 = arith.addf %1406, %1425 : vector<2x256xf32>
    %c0_380 = arith.constant 0 : index
    %c2_381 = arith.constant 2 : index
    %c33_382 = arith.constant 33 : index
    %1427 = vector.load %arg11[%c0_380, %c2_381, %c33_382] : memref<2x4x290xf32, #tpu.memory_space<vmem>>, vector<2x1x256xf32>
    %1428 = vector.shape_cast %1427 : vector<2x1x256xf32> to vector<2x256xf32>
    %c25_383 = arith.constant 25 : index
    %1429 = memref.load %arg5[%c25_383] : memref<144xf32, #tpu.memory_space<smem>>
    %1430 = vector.broadcast %1429 : f32 to vector<2x256xf32>
    %1431 = arith.mulf %1430, %1428 : vector<2x256xf32>
    %1432 = arith.addf %1414, %1431 : vector<2x256xf32>
    %c61_384 = arith.constant 61 : index
    %1433 = memref.load %arg5[%c61_384] : memref<144xf32, #tpu.memory_space<smem>>
    %1434 = vector.broadcast %1433 : f32 to vector<2x256xf32>
    %1435 = arith.mulf %1434, %1428 : vector<2x256xf32>
    %1436 = arith.addf %1418, %1435 : vector<2x256xf32>
    %c97_385 = arith.constant 97 : index
    %1437 = memref.load %arg5[%c97_385] : memref<144xf32, #tpu.memory_space<smem>>
    %1438 = vector.broadcast %1437 : f32 to vector<2x256xf32>
    %1439 = arith.mulf %1438, %1428 : vector<2x256xf32>
    %1440 = arith.addf %1422, %1439 : vector<2x256xf32>
    %c133_386 = arith.constant 133 : index
    %1441 = memref.load %arg5[%c133_386] : memref<144xf32, #tpu.memory_space<smem>>
    %1442 = vector.broadcast %1441 : f32 to vector<2x256xf32>
    %1443 = arith.mulf %1442, %1428 : vector<2x256xf32>
    %1444 = arith.addf %1426, %1443 : vector<2x256xf32>
    %c0_387 = arith.constant 0 : index
    %c2_388 = arith.constant 2 : index
    %c34_389 = arith.constant 34 : index
    %1445 = vector.load %arg11[%c0_387, %c2_388, %c34_389] : memref<2x4x290xf32, #tpu.memory_space<vmem>>, vector<2x1x256xf32>
    %1446 = vector.shape_cast %1445 : vector<2x1x256xf32> to vector<2x256xf32>
    %1447 = vector.broadcast %24 : vector<1x256xf32> to vector<2x256xf32>
    %1448 = arith.mulf %1446, %1447 : vector<2x256xf32>
    %c26_390 = arith.constant 26 : index
    %1449 = memref.load %arg5[%c26_390] : memref<144xf32, #tpu.memory_space<smem>>
    %1450 = vector.broadcast %1449 : f32 to vector<2x256xf32>
    %1451 = arith.mulf %1450, %1448 : vector<2x256xf32>
    %1452 = arith.addf %1432, %1451 : vector<2x256xf32>
    %c62_391 = arith.constant 62 : index
    %1453 = memref.load %arg5[%c62_391] : memref<144xf32, #tpu.memory_space<smem>>
    %1454 = vector.broadcast %1453 : f32 to vector<2x256xf32>
    %1455 = arith.mulf %1454, %1448 : vector<2x256xf32>
    %1456 = arith.addf %1436, %1455 : vector<2x256xf32>
    %c98_392 = arith.constant 98 : index
    %1457 = memref.load %arg5[%c98_392] : memref<144xf32, #tpu.memory_space<smem>>
    %1458 = vector.broadcast %1457 : f32 to vector<2x256xf32>
    %1459 = arith.mulf %1458, %1448 : vector<2x256xf32>
    %1460 = arith.addf %1440, %1459 : vector<2x256xf32>
    %c134_393 = arith.constant 134 : index
    %1461 = memref.load %arg5[%c134_393] : memref<144xf32, #tpu.memory_space<smem>>
    %1462 = vector.broadcast %1461 : f32 to vector<2x256xf32>
    %1463 = arith.mulf %1462, %1448 : vector<2x256xf32>
    %1464 = arith.addf %1444, %1463 : vector<2x256xf32>
    %c0_394 = arith.constant 0 : index
    %c3_395 = arith.constant 3 : index
    %c0_396 = arith.constant 0 : index
    %1465 = vector.load %arg11[%c0_394, %c3_395, %c0_396] : memref<2x4x290xf32, #tpu.memory_space<vmem>>, vector<2x1x256xf32>
    %1466 = vector.shape_cast %1465 : vector<2x1x256xf32> to vector<2x256xf32>
    %1467 = vector.broadcast %20 : vector<1x256xf32> to vector<2x256xf32>
    %1468 = arith.mulf %1466, %1467 : vector<2x256xf32>
    %c27_397 = arith.constant 27 : index
    %1469 = memref.load %arg5[%c27_397] : memref<144xf32, #tpu.memory_space<smem>>
    %1470 = vector.broadcast %1469 : f32 to vector<2x256xf32>
    %1471 = arith.mulf %1470, %1468 : vector<2x256xf32>
    %1472 = arith.addf %1452, %1471 : vector<2x256xf32>
    %c63_398 = arith.constant 63 : index
    %1473 = memref.load %arg5[%c63_398] : memref<144xf32, #tpu.memory_space<smem>>
    %1474 = vector.broadcast %1473 : f32 to vector<2x256xf32>
    %1475 = arith.mulf %1474, %1468 : vector<2x256xf32>
    %1476 = arith.addf %1456, %1475 : vector<2x256xf32>
    %c99_399 = arith.constant 99 : index
    %1477 = memref.load %arg5[%c99_399] : memref<144xf32, #tpu.memory_space<smem>>
    %1478 = vector.broadcast %1477 : f32 to vector<2x256xf32>
    %1479 = arith.mulf %1478, %1468 : vector<2x256xf32>
    %1480 = arith.addf %1460, %1479 : vector<2x256xf32>
    %c135_400 = arith.constant 135 : index
    %1481 = memref.load %arg5[%c135_400] : memref<144xf32, #tpu.memory_space<smem>>
    %1482 = vector.broadcast %1481 : f32 to vector<2x256xf32>
    %1483 = arith.mulf %1482, %1468 : vector<2x256xf32>
    %1484 = arith.addf %1464, %1483 : vector<2x256xf32>
    %c0_401 = arith.constant 0 : index
    %c3_402 = arith.constant 3 : index
    %c1_403 = arith.constant 1 : index
    %1485 = vector.load %arg11[%c0_401, %c3_402, %c1_403] : memref<2x4x290xf32, #tpu.memory_space<vmem>>, vector<2x1x256xf32>
    %1486 = vector.shape_cast %1485 : vector<2x1x256xf32> to vector<2x256xf32>
    %c28_404 = arith.constant 28 : index
    %1487 = memref.load %arg5[%c28_404] : memref<144xf32, #tpu.memory_space<smem>>
    %1488 = vector.broadcast %1487 : f32 to vector<2x256xf32>
    %1489 = arith.mulf %1488, %1486 : vector<2x256xf32>
    %1490 = arith.addf %1472, %1489 : vector<2x256xf32>
    %c64_405 = arith.constant 64 : index
    %1491 = memref.load %arg5[%c64_405] : memref<144xf32, #tpu.memory_space<smem>>
    %1492 = vector.broadcast %1491 : f32 to vector<2x256xf32>
    %1493 = arith.mulf %1492, %1486 : vector<2x256xf32>
    %1494 = arith.addf %1476, %1493 : vector<2x256xf32>
    %c100_406 = arith.constant 100 : index
    %1495 = memref.load %arg5[%c100_406] : memref<144xf32, #tpu.memory_space<smem>>
    %1496 = vector.broadcast %1495 : f32 to vector<2x256xf32>
    %1497 = arith.mulf %1496, %1486 : vector<2x256xf32>
    %1498 = arith.addf %1480, %1497 : vector<2x256xf32>
    %c136_407 = arith.constant 136 : index
    %1499 = memref.load %arg5[%c136_407] : memref<144xf32, #tpu.memory_space<smem>>
    %1500 = vector.broadcast %1499 : f32 to vector<2x256xf32>
    %1501 = arith.mulf %1500, %1486 : vector<2x256xf32>
    %1502 = arith.addf %1484, %1501 : vector<2x256xf32>
    %c0_408 = arith.constant 0 : index
    %c3_409 = arith.constant 3 : index
    %c2_410 = arith.constant 2 : index
    %1503 = vector.load %arg11[%c0_408, %c3_409, %c2_410] : memref<2x4x290xf32, #tpu.memory_space<vmem>>, vector<2x1x256xf32>
    %1504 = vector.shape_cast %1503 : vector<2x1x256xf32> to vector<2x256xf32>
    %1505 = vector.broadcast %24 : vector<1x256xf32> to vector<2x256xf32>
    %1506 = arith.mulf %1504, %1505 : vector<2x256xf32>
    %c29_411 = arith.constant 29 : index
    %1507 = memref.load %arg5[%c29_411] : memref<144xf32, #tpu.memory_space<smem>>
    %1508 = vector.broadcast %1507 : f32 to vector<2x256xf32>
    %1509 = arith.mulf %1508, %1506 : vector<2x256xf32>
    %1510 = arith.addf %1490, %1509 : vector<2x256xf32>
    %c65_412 = arith.constant 65 : index
    %1511 = memref.load %arg5[%c65_412] : memref<144xf32, #tpu.memory_space<smem>>
    %1512 = vector.broadcast %1511 : f32 to vector<2x256xf32>
    %1513 = arith.mulf %1512, %1506 : vector<2x256xf32>
    %1514 = arith.addf %1494, %1513 : vector<2x256xf32>
    %c101_413 = arith.constant 101 : index
    %1515 = memref.load %arg5[%c101_413] : memref<144xf32, #tpu.memory_space<smem>>
    %1516 = vector.broadcast %1515 : f32 to vector<2x256xf32>
    %1517 = arith.mulf %1516, %1506 : vector<2x256xf32>
    %1518 = arith.addf %1498, %1517 : vector<2x256xf32>
    %c137_414 = arith.constant 137 : index
    %1519 = memref.load %arg5[%c137_414] : memref<144xf32, #tpu.memory_space<smem>>
    %1520 = vector.broadcast %1519 : f32 to vector<2x256xf32>
    %1521 = arith.mulf %1520, %1506 : vector<2x256xf32>
    %1522 = arith.addf %1502, %1521 : vector<2x256xf32>
    %c0_415 = arith.constant 0 : index
    %c3_416 = arith.constant 3 : index
    %c16_417 = arith.constant 16 : index
    %1523 = vector.load %arg11[%c0_415, %c3_416, %c16_417] : memref<2x4x290xf32, #tpu.memory_space<vmem>>, vector<2x1x256xf32>
    %1524 = vector.shape_cast %1523 : vector<2x1x256xf32> to vector<2x256xf32>
    %1525 = vector.broadcast %20 : vector<1x256xf32> to vector<2x256xf32>
    %1526 = arith.mulf %1524, %1525 : vector<2x256xf32>
    %c30_418 = arith.constant 30 : index
    %1527 = memref.load %arg5[%c30_418] : memref<144xf32, #tpu.memory_space<smem>>
    %1528 = vector.broadcast %1527 : f32 to vector<2x256xf32>
    %1529 = arith.mulf %1528, %1526 : vector<2x256xf32>
    %1530 = arith.addf %1510, %1529 : vector<2x256xf32>
    %c66_419 = arith.constant 66 : index
    %1531 = memref.load %arg5[%c66_419] : memref<144xf32, #tpu.memory_space<smem>>
    %1532 = vector.broadcast %1531 : f32 to vector<2x256xf32>
    %1533 = arith.mulf %1532, %1526 : vector<2x256xf32>
    %1534 = arith.addf %1514, %1533 : vector<2x256xf32>
    %c102_420 = arith.constant 102 : index
    %1535 = memref.load %arg5[%c102_420] : memref<144xf32, #tpu.memory_space<smem>>
    %1536 = vector.broadcast %1535 : f32 to vector<2x256xf32>
    %1537 = arith.mulf %1536, %1526 : vector<2x256xf32>
    %1538 = arith.addf %1518, %1537 : vector<2x256xf32>
    %c138_421 = arith.constant 138 : index
    %1539 = memref.load %arg5[%c138_421] : memref<144xf32, #tpu.memory_space<smem>>
    %1540 = vector.broadcast %1539 : f32 to vector<2x256xf32>
    %1541 = arith.mulf %1540, %1526 : vector<2x256xf32>
    %1542 = arith.addf %1522, %1541 : vector<2x256xf32>
    %c0_422 = arith.constant 0 : index
    %c3_423 = arith.constant 3 : index
    %c17_424 = arith.constant 17 : index
    %1543 = vector.load %arg11[%c0_422, %c3_423, %c17_424] : memref<2x4x290xf32, #tpu.memory_space<vmem>>, vector<2x1x256xf32>
    %1544 = vector.shape_cast %1543 : vector<2x1x256xf32> to vector<2x256xf32>
    %c31_425 = arith.constant 31 : index
    %1545 = memref.load %arg5[%c31_425] : memref<144xf32, #tpu.memory_space<smem>>
    %1546 = vector.broadcast %1545 : f32 to vector<2x256xf32>
    %1547 = arith.mulf %1546, %1544 : vector<2x256xf32>
    %1548 = arith.addf %1530, %1547 : vector<2x256xf32>
    %c67_426 = arith.constant 67 : index
    %1549 = memref.load %arg5[%c67_426] : memref<144xf32, #tpu.memory_space<smem>>
    %1550 = vector.broadcast %1549 : f32 to vector<2x256xf32>
    %1551 = arith.mulf %1550, %1544 : vector<2x256xf32>
    %1552 = arith.addf %1534, %1551 : vector<2x256xf32>
    %c103_427 = arith.constant 103 : index
    %1553 = memref.load %arg5[%c103_427] : memref<144xf32, #tpu.memory_space<smem>>
    %1554 = vector.broadcast %1553 : f32 to vector<2x256xf32>
    %1555 = arith.mulf %1554, %1544 : vector<2x256xf32>
    %1556 = arith.addf %1538, %1555 : vector<2x256xf32>
    %c139_428 = arith.constant 139 : index
    %1557 = memref.load %arg5[%c139_428] : memref<144xf32, #tpu.memory_space<smem>>
    %1558 = vector.broadcast %1557 : f32 to vector<2x256xf32>
    %1559 = arith.mulf %1558, %1544 : vector<2x256xf32>
    %1560 = arith.addf %1542, %1559 : vector<2x256xf32>
    %c0_429 = arith.constant 0 : index
    %c3_430 = arith.constant 3 : index
    %c18_431 = arith.constant 18 : index
    %1561 = vector.load %arg11[%c0_429, %c3_430, %c18_431] : memref<2x4x290xf32, #tpu.memory_space<vmem>>, vector<2x1x256xf32>
    %1562 = vector.shape_cast %1561 : vector<2x1x256xf32> to vector<2x256xf32>
    %1563 = vector.broadcast %24 : vector<1x256xf32> to vector<2x256xf32>
    %1564 = arith.mulf %1562, %1563 : vector<2x256xf32>
    %c32_432 = arith.constant 32 : index
    %1565 = memref.load %arg5[%c32_432] : memref<144xf32, #tpu.memory_space<smem>>
    %1566 = vector.broadcast %1565 : f32 to vector<2x256xf32>
    %1567 = arith.mulf %1566, %1564 : vector<2x256xf32>
    %1568 = arith.addf %1548, %1567 : vector<2x256xf32>
    %c68_433 = arith.constant 68 : index
    %1569 = memref.load %arg5[%c68_433] : memref<144xf32, #tpu.memory_space<smem>>
    %1570 = vector.broadcast %1569 : f32 to vector<2x256xf32>
    %1571 = arith.mulf %1570, %1564 : vector<2x256xf32>
    %1572 = arith.addf %1552, %1571 : vector<2x256xf32>
    %c104_434 = arith.constant 104 : index
    %1573 = memref.load %arg5[%c104_434] : memref<144xf32, #tpu.memory_space<smem>>
    %1574 = vector.broadcast %1573 : f32 to vector<2x256xf32>
    %1575 = arith.mulf %1574, %1564 : vector<2x256xf32>
    %1576 = arith.addf %1556, %1575 : vector<2x256xf32>
    %c140_435 = arith.constant 140 : index
    %1577 = memref.load %arg5[%c140_435] : memref<144xf32, #tpu.memory_space<smem>>
    %1578 = vector.broadcast %1577 : f32 to vector<2x256xf32>
    %1579 = arith.mulf %1578, %1564 : vector<2x256xf32>
    %1580 = arith.addf %1560, %1579 : vector<2x256xf32>
    %c0_436 = arith.constant 0 : index
    %c3_437 = arith.constant 3 : index
    %c32_438 = arith.constant 32 : index
    %1581 = vector.load %arg11[%c0_436, %c3_437, %c32_438] : memref<2x4x290xf32, #tpu.memory_space<vmem>>, vector<2x1x256xf32>
    %1582 = vector.shape_cast %1581 : vector<2x1x256xf32> to vector<2x256xf32>
    %1583 = vector.broadcast %20 : vector<1x256xf32> to vector<2x256xf32>
    %1584 = arith.mulf %1582, %1583 : vector<2x256xf32>
    %c33_439 = arith.constant 33 : index
    %1585 = memref.load %arg5[%c33_439] : memref<144xf32, #tpu.memory_space<smem>>
    %1586 = vector.broadcast %1585 : f32 to vector<2x256xf32>
    %1587 = arith.mulf %1586, %1584 : vector<2x256xf32>
    %1588 = arith.addf %1568, %1587 : vector<2x256xf32>
    %c69_440 = arith.constant 69 : index
    %1589 = memref.load %arg5[%c69_440] : memref<144xf32, #tpu.memory_space<smem>>
    %1590 = vector.broadcast %1589 : f32 to vector<2x256xf32>
    %1591 = arith.mulf %1590, %1584 : vector<2x256xf32>
    %1592 = arith.addf %1572, %1591 : vector<2x256xf32>
    %c105_441 = arith.constant 105 : index
    %1593 = memref.load %arg5[%c105_441] : memref<144xf32, #tpu.memory_space<smem>>
    %1594 = vector.broadcast %1593 : f32 to vector<2x256xf32>
    %1595 = arith.mulf %1594, %1584 : vector<2x256xf32>
    %1596 = arith.addf %1576, %1595 : vector<2x256xf32>
    %c141_442 = arith.constant 141 : index
    %1597 = memref.load %arg5[%c141_442] : memref<144xf32, #tpu.memory_space<smem>>
    %1598 = vector.broadcast %1597 : f32 to vector<2x256xf32>
    %1599 = arith.mulf %1598, %1584 : vector<2x256xf32>
    %1600 = arith.addf %1580, %1599 : vector<2x256xf32>
    %c0_443 = arith.constant 0 : index
    %c3_444 = arith.constant 3 : index
    %c33_445 = arith.constant 33 : index
    %1601 = vector.load %arg11[%c0_443, %c3_444, %c33_445] : memref<2x4x290xf32, #tpu.memory_space<vmem>>, vector<2x1x256xf32>
    %1602 = vector.shape_cast %1601 : vector<2x1x256xf32> to vector<2x256xf32>
    %c34_446 = arith.constant 34 : index
    %1603 = memref.load %arg5[%c34_446] : memref<144xf32, #tpu.memory_space<smem>>
    %1604 = vector.broadcast %1603 : f32 to vector<2x256xf32>
    %1605 = arith.mulf %1604, %1602 : vector<2x256xf32>
    %1606 = arith.addf %1588, %1605 : vector<2x256xf32>
    %c70_447 = arith.constant 70 : index
    %1607 = memref.load %arg5[%c70_447] : memref<144xf32, #tpu.memory_space<smem>>
    %1608 = vector.broadcast %1607 : f32 to vector<2x256xf32>
    %1609 = arith.mulf %1608, %1602 : vector<2x256xf32>
    %1610 = arith.addf %1592, %1609 : vector<2x256xf32>
    %c106_448 = arith.constant 106 : index
    %1611 = memref.load %arg5[%c106_448] : memref<144xf32, #tpu.memory_space<smem>>
    %1612 = vector.broadcast %1611 : f32 to vector<2x256xf32>
    %1613 = arith.mulf %1612, %1602 : vector<2x256xf32>
    %1614 = arith.addf %1596, %1613 : vector<2x256xf32>
    %c142_449 = arith.constant 142 : index
    %1615 = memref.load %arg5[%c142_449] : memref<144xf32, #tpu.memory_space<smem>>
    %1616 = vector.broadcast %1615 : f32 to vector<2x256xf32>
    %1617 = arith.mulf %1616, %1602 : vector<2x256xf32>
    %1618 = arith.addf %1600, %1617 : vector<2x256xf32>
    %c0_450 = arith.constant 0 : index
    %c3_451 = arith.constant 3 : index
    %c34_452 = arith.constant 34 : index
    %1619 = vector.load %arg11[%c0_450, %c3_451, %c34_452] : memref<2x4x290xf32, #tpu.memory_space<vmem>>, vector<2x1x256xf32>
    %1620 = vector.shape_cast %1619 : vector<2x1x256xf32> to vector<2x256xf32>
    %1621 = vector.broadcast %24 : vector<1x256xf32> to vector<2x256xf32>
    %1622 = arith.mulf %1620, %1621 : vector<2x256xf32>
    %c35_453 = arith.constant 35 : index
    %1623 = memref.load %arg5[%c35_453] : memref<144xf32, #tpu.memory_space<smem>>
    %1624 = vector.broadcast %1623 : f32 to vector<2x256xf32>
    %1625 = arith.mulf %1624, %1622 : vector<2x256xf32>
    %1626 = arith.addf %1606, %1625 : vector<2x256xf32>
    %c71_454 = arith.constant 71 : index
    %1627 = memref.load %arg5[%c71_454] : memref<144xf32, #tpu.memory_space<smem>>
    %1628 = vector.broadcast %1627 : f32 to vector<2x256xf32>
    %1629 = arith.mulf %1628, %1622 : vector<2x256xf32>
    %1630 = arith.addf %1610, %1629 : vector<2x256xf32>
    %c107_455 = arith.constant 107 : index
    %1631 = memref.load %arg5[%c107_455] : memref<144xf32, #tpu.memory_space<smem>>
    %1632 = vector.broadcast %1631 : f32 to vector<2x256xf32>
    %1633 = arith.mulf %1632, %1622 : vector<2x256xf32>
    %1634 = arith.addf %1614, %1633 : vector<2x256xf32>
    %c143_456 = arith.constant 143 : index
    %1635 = memref.load %arg5[%c143_456] : memref<144xf32, #tpu.memory_space<smem>>
    %1636 = vector.broadcast %1635 : f32 to vector<2x256xf32>
    %1637 = arith.mulf %1636, %1622 : vector<2x256xf32>
    %1638 = arith.addf %1618, %1637 : vector<2x256xf32>
    %c0_457 = arith.constant 0 : index
    %1639 = memref.load %arg7[%c0_457] : memref<4xf32, #tpu.memory_space<smem>>
    %c0_458 = arith.constant 0 : index
    %1640 = memref.load %arg8[%c0_458] : memref<4xf32, #tpu.memory_space<smem>>
    %1641 = vector.shape_cast %1626 : vector<2x256xf32> to vector<1x2x256xf32>
    %cst_459 = arith.constant dense<0.000000e+00> : vector<1xf32>
    %1642 = vector.multi_reduction <add>, %1641, %cst_459 [1, 2] : vector<1x2x256xf32> to vector<1xf32>
    %1643 = vector.shape_cast %1642 : vector<1xf32> to vector<1x1x1xf32>
    %1644 = vector.extract %1643[0, 0, 0] : f32 from vector<1x1x1xf32>
    %1645 = arith.mulf %1626, %1626 : vector<2x256xf32>
    %1646 = vector.shape_cast %1645 : vector<2x256xf32> to vector<1x2x256xf32>
    %cst_460 = arith.constant dense<0.000000e+00> : vector<1xf32>
    %1647 = vector.multi_reduction <add>, %1646, %cst_460 [1, 2] : vector<1x2x256xf32> to vector<1xf32>
    %1648 = vector.shape_cast %1647 : vector<1xf32> to vector<1x1x1xf32>
    %1649 = vector.extract %1648[0, 0, 0] : f32 from vector<1x1x1xf32>
    %cst_461 = arith.constant 0.001953125 : f32
    %1650 = arith.mulf %1644, %cst_461 : f32
    %cst_462 = arith.constant 0.001953125 : f32
    %1651 = arith.mulf %1649, %cst_462 : f32
    %1652 = arith.mulf %1650, %1650 : f32
    %1653 = arith.subf %1651, %1652 : f32
    %cst_463 = arith.constant 0.000000e+00 : f32
    %1654 = arith.maximumf %1653, %cst_463 : f32
    %cst_464 = arith.constant 9.99999974E-6 : f32
    %1655 = arith.addf %1654, %cst_464 : f32
    %1656 = math.rsqrt %1655 : f32
    %1657 = arith.mulf %1639, %1656 : f32
    %1658 = arith.mulf %1650, %1657 : f32
    %1659 = arith.subf %1640, %1658 : f32
    %1660 = vector.broadcast %1657 : f32 to vector<2x256xf32>
    %1661 = arith.mulf %1626, %1660 : vector<2x256xf32>
    %1662 = vector.broadcast %1659 : f32 to vector<2x256xf32>
    %1663 = arith.addf %1661, %1662 : vector<2x256xf32>
    %c0_465 = arith.constant 0 : index
    %c0_466 = arith.constant 0 : index
    %c0_467 = arith.constant 0 : index
    %1664 = vector.load %arg0[%c0_465, %c0_466, %c0_467] : memref<2x4x256xf32, #tpu.memory_space<vmem>>, vector<2x1x256xf32>
    %1665 = vector.shape_cast %1664 : vector<2x1x256xf32> to vector<2x256xf32>
    %1666 = arith.addf %1663, %1665 : vector<2x256xf32>
    %c0_468 = arith.constant 0 : index
    %c0_469 = arith.constant 0 : index
    %c0_470 = arith.constant 0 : index
    %1667 = vector.load %arg9[%c0_468, %c0_469, %c0_470] : memref<2x4x256xf32, #tpu.memory_space<vmem>>, vector<2x1x256xf32>
    %1668 = vector.shape_cast %1667 : vector<2x1x256xf32> to vector<2x256xf32>
    %1669 = vector.shape_cast %1666 : vector<2x256xf32> to vector<2x1x256xf32>
    tpu.vector_store %arg9[%c0_468, %c0_469, %c0_470], %1669 {strides = array<i32>} : memref<2x4x256xf32, #tpu.memory_space<vmem>>, vector<2x1x256xf32>,
    %c1_471 = arith.constant 1 : index
    %1670 = memref.load %arg7[%c1_471] : memref<4xf32, #tpu.memory_space<smem>>
    %c1_472 = arith.constant 1 : index
    %1671 = memref.load %arg8[%c1_472] : memref<4xf32, #tpu.memory_space<smem>>
    %1672 = vector.shape_cast %1630 : vector<2x256xf32> to vector<1x2x256xf32>
    %cst_473 = arith.constant dense<0.000000e+00> : vector<1xf32>
    %1673 = vector.multi_reduction <add>, %1672, %cst_473 [1, 2] : vector<1x2x256xf32> to vector<1xf32>
    %1674 = vector.shape_cast %1673 : vector<1xf32> to vector<1x1x1xf32>
    %1675 = vector.extract %1674[0, 0, 0] : f32 from vector<1x1x1xf32>
    %1676 = arith.mulf %1630, %1630 : vector<2x256xf32>
    %1677 = vector.shape_cast %1676 : vector<2x256xf32> to vector<1x2x256xf32>
    %cst_474 = arith.constant dense<0.000000e+00> : vector<1xf32>
    %1678 = vector.multi_reduction <add>, %1677, %cst_474 [1, 2] : vector<1x2x256xf32> to vector<1xf32>
    %1679 = vector.shape_cast %1678 : vector<1xf32> to vector<1x1x1xf32>
    %1680 = vector.extract %1679[0, 0, 0] : f32 from vector<1x1x1xf32>
    %cst_475 = arith.constant 0.001953125 : f32
    %1681 = arith.mulf %1675, %cst_475 : f32
    %cst_476 = arith.constant 0.001953125 : f32
    %1682 = arith.mulf %1680, %cst_476 : f32
    %1683 = arith.mulf %1681, %1681 : f32
    %1684 = arith.subf %1682, %1683 : f32
    %cst_477 = arith.constant 0.000000e+00 : f32
    %1685 = arith.maximumf %1684, %cst_477 : f32
    %cst_478 = arith.constant 9.99999974E-6 : f32
    %1686 = arith.addf %1685, %cst_478 : f32
    %1687 = math.rsqrt %1686 : f32
    %1688 = arith.mulf %1670, %1687 : f32
    %1689 = arith.mulf %1681, %1688 : f32
    %1690 = arith.subf %1671, %1689 : f32
    %1691 = vector.broadcast %1688 : f32 to vector<2x256xf32>
    %1692 = arith.mulf %1630, %1691 : vector<2x256xf32>
    %1693 = vector.broadcast %1690 : f32 to vector<2x256xf32>
    %1694 = arith.addf %1692, %1693 : vector<2x256xf32>
    %c0_479 = arith.constant 0 : index
    %c1_480 = arith.constant 1 : index
    %c0_481 = arith.constant 0 : index
    %1695 = vector.load %arg0[%c0_479, %c1_480, %c0_481] : memref<2x4x256xf32, #tpu.memory_space<vmem>>, vector<2x1x256xf32>
    %1696 = vector.shape_cast %1695 : vector<2x1x256xf32> to vector<2x256xf32>
    %1697 = arith.addf %1694, %1696 : vector<2x256xf32>
    %c0_482 = arith.constant 0 : index
    %c1_483 = arith.constant 1 : index
    %c0_484 = arith.constant 0 : index
    %1698 = vector.load %arg9[%c0_482, %c1_483, %c0_484] : memref<2x4x256xf32, #tpu.memory_space<vmem>>, vector<2x1x256xf32>
    %1699 = vector.shape_cast %1698 : vector<2x1x256xf32> to vector<2x256xf32>
    %1700 = vector.shape_cast %1697 : vector<2x256xf32> to vector<2x1x256xf32>
    tpu.vector_store %arg9[%c0_482, %c1_483, %c0_484], %1700 {strides = array<i32>} : memref<2x4x256xf32, #tpu.memory_space<vmem>>, vector<2x1x256xf32>,
    %c2_485 = arith.constant 2 : index
    %1701 = memref.load %arg7[%c2_485] : memref<4xf32, #tpu.memory_space<smem>>
    %c2_486 = arith.constant 2 : index
    %1702 = memref.load %arg8[%c2_486] : memref<4xf32, #tpu.memory_space<smem>>
    %1703 = vector.shape_cast %1634 : vector<2x256xf32> to vector<1x2x256xf32>
    %cst_487 = arith.constant dense<0.000000e+00> : vector<1xf32>
    %1704 = vector.multi_reduction <add>, %1703, %cst_487 [1, 2] : vector<1x2x256xf32> to vector<1xf32>
    %1705 = vector.shape_cast %1704 : vector<1xf32> to vector<1x1x1xf32>
    %1706 = vector.extract %1705[0, 0, 0] : f32 from vector<1x1x1xf32>
    %1707 = arith.mulf %1634, %1634 : vector<2x256xf32>
    %1708 = vector.shape_cast %1707 : vector<2x256xf32> to vector<1x2x256xf32>
    %cst_488 = arith.constant dense<0.000000e+00> : vector<1xf32>
    %1709 = vector.multi_reduction <add>, %1708, %cst_488 [1, 2] : vector<1x2x256xf32> to vector<1xf32>
    %1710 = vector.shape_cast %1709 : vector<1xf32> to vector<1x1x1xf32>
    %1711 = vector.extract %1710[0, 0, 0] : f32 from vector<1x1x1xf32>
    %cst_489 = arith.constant 0.001953125 : f32
    %1712 = arith.mulf %1706, %cst_489 : f32
    %cst_490 = arith.constant 0.001953125 : f32
    %1713 = arith.mulf %1711, %cst_490 : f32
    %1714 = arith.mulf %1712, %1712 : f32
    %1715 = arith.subf %1713, %1714 : f32
    %cst_491 = arith.constant 0.000000e+00 : f32
    %1716 = arith.maximumf %1715, %cst_491 : f32
    %cst_492 = arith.constant 9.99999974E-6 : f32
    %1717 = arith.addf %1716, %cst_492 : f32
    %1718 = math.rsqrt %1717 : f32
    %1719 = arith.mulf %1701, %1718 : f32
    %1720 = arith.mulf %1712, %1719 : f32
    %1721 = arith.subf %1702, %1720 : f32
    %1722 = vector.broadcast %1719 : f32 to vector<2x256xf32>
    %1723 = arith.mulf %1634, %1722 : vector<2x256xf32>
    %1724 = vector.broadcast %1721 : f32 to vector<2x256xf32>
    %1725 = arith.addf %1723, %1724 : vector<2x256xf32>
    %c0_493 = arith.constant 0 : index
    %c2_494 = arith.constant 2 : index
    %c0_495 = arith.constant 0 : index
    %1726 = vector.load %arg0[%c0_493, %c2_494, %c0_495] : memref<2x4x256xf32, #tpu.memory_space<vmem>>, vector<2x1x256xf32>
    %1727 = vector.shape_cast %1726 : vector<2x1x256xf32> to vector<2x256xf32>
    %1728 = arith.addf %1725, %1727 : vector<2x256xf32>
    %c0_496 = arith.constant 0 : index
    %c2_497 = arith.constant 2 : index
    %c0_498 = arith.constant 0 : index
    %1729 = vector.load %arg9[%c0_496, %c2_497, %c0_498] : memref<2x4x256xf32, #tpu.memory_space<vmem>>, vector<2x1x256xf32>
    %1730 = vector.shape_cast %1729 : vector<2x1x256xf32> to vector<2x256xf32>
    %1731 = vector.shape_cast %1728 : vector<2x256xf32> to vector<2x1x256xf32>
    tpu.vector_store %arg9[%c0_496, %c2_497, %c0_498], %1731 {strides = array<i32>} : memref<2x4x256xf32, #tpu.memory_space<vmem>>, vector<2x1x256xf32>,
    %c3_499 = arith.constant 3 : index
    %1732 = memref.load %arg7[%c3_499] : memref<4xf32, #tpu.memory_space<smem>>
    %c3_500 = arith.constant 3 : index
    %1733 = memref.load %arg8[%c3_500] : memref<4xf32, #tpu.memory_space<smem>>
    %1734 = vector.shape_cast %1638 : vector<2x256xf32> to vector<1x2x256xf32>
    %cst_501 = arith.constant dense<0.000000e+00> : vector<1xf32>
    %1735 = vector.multi_reduction <add>, %1734, %cst_501 [1, 2] : vector<1x2x256xf32> to vector<1xf32>
    %1736 = vector.shape_cast %1735 : vector<1xf32> to vector<1x1x1xf32>
    %1737 = vector.extract %1736[0, 0, 0] : f32 from vector<1x1x1xf32>
    %1738 = arith.mulf %1638, %1638 : vector<2x256xf32>
    %1739 = vector.shape_cast %1738 : vector<2x256xf32> to vector<1x2x256xf32>
    %cst_502 = arith.constant dense<0.000000e+00> : vector<1xf32>
    %1740 = vector.multi_reduction <add>, %1739, %cst_502 [1, 2] : vector<1x2x256xf32> to vector<1xf32>
    %1741 = vector.shape_cast %1740 : vector<1xf32> to vector<1x1x1xf32>
    %1742 = vector.extract %1741[0, 0, 0] : f32 from vector<1x1x1xf32>
    %cst_503 = arith.constant 0.001953125 : f32
    %1743 = arith.mulf %1737, %cst_503 : f32
    %cst_504 = arith.constant 0.001953125 : f32
    %1744 = arith.mulf %1742, %cst_504 : f32
    %1745 = arith.mulf %1743, %1743 : f32
    %1746 = arith.subf %1744, %1745 : f32
    %cst_505 = arith.constant 0.000000e+00 : f32
    %1747 = arith.maximumf %1746, %cst_505 : f32
    %cst_506 = arith.constant 9.99999974E-6 : f32
    %1748 = arith.addf %1747, %cst_506 : f32
    %1749 = math.rsqrt %1748 : f32
    %1750 = arith.mulf %1732, %1749 : f32
    %1751 = arith.mulf %1743, %1750 : f32
    %1752 = arith.subf %1733, %1751 : f32
    %1753 = vector.broadcast %1750 : f32 to vector<2x256xf32>
    %1754 = arith.mulf %1638, %1753 : vector<2x256xf32>
    %1755 = vector.broadcast %1752 : f32 to vector<2x256xf32>
    %1756 = arith.addf %1754, %1755 : vector<2x256xf32>
    %c0_507 = arith.constant 0 : index
    %c3_508 = arith.constant 3 : index
    %c0_509 = arith.constant 0 : index
    %1757 = vector.load %arg0[%c0_507, %c3_508, %c0_509] : memref<2x4x256xf32, #tpu.memory_space<vmem>>, vector<2x1x256xf32>
    %1758 = vector.shape_cast %1757 : vector<2x1x256xf32> to vector<2x256xf32>
    %1759 = arith.addf %1756, %1758 : vector<2x256xf32>
    %c0_510 = arith.constant 0 : index
    %c3_511 = arith.constant 3 : index
    %c0_512 = arith.constant 0 : index
    %1760 = vector.load %arg9[%c0_510, %c3_511, %c0_512] : memref<2x4x256xf32, #tpu.memory_space<vmem>>, vector<2x1x256xf32>
    %1761 = vector.shape_cast %1760 : vector<2x1x256xf32> to vector<2x256xf32>
    %1762 = vector.shape_cast %1759 : vector<2x256xf32> to vector<2x1x256xf32>
    tpu.vector_store %arg9[%c0_510, %c3_511, %c0_512], %1762 {strides = array<i32>} : memref<2x4x256xf32, #tpu.memory_space<vmem>>, vector<2x1x256xf32>,
    return
  }
}

</mosaic_0001>

<llo_original>
// kernel: tpu_custom_call.1
$region0: #{tpu_custom_call.1}
  #allocation0 [shape = 'u32[]', space=smem, size = 0x4, offset = 0x4, fixed_abs, tag = 'smem constant byte address 0x4 - core index']
  #allocation1 [shape = 'u32[72,128]{1,0:T(1,128)}', space=vmem, size = 0x9000, scoped, tag = 'internal scratch']
  #allocation2 [shape = 'f32[2,4,290]{2,1,0:T(4,128)}', space=vmem, size = 0x3000, scoped, tag = 'scratch operand']
  #allocation3 [shape = 'f32[2,4,290]{2,1,0:T(4,128)}', space=vmem, size = 0x3000, scoped, tag = 'scratch operand']
  %s0 = inlined_call_operand.hbm [shape: f32[2,4,256], index: 0, kind: input, shape index: {}]
  %s1 = inlined_call_operand.hbm [shape: f32[144], index: 1, kind: input, shape index: {}]
  %s2 = inlined_call_operand.vmem [shape: f32[4], index: 2, kind: input, shape index: {}]
  %s3 = inlined_call_operand.hbm [shape: f32[4], index: 3, kind: input, shape index: {}]
  %s4 = inlined_call_operand.hbm [shape: f32[4], index: 4, kind: input, shape index: {}]
  %s5 = inlined_call_operand.vmem [shape: f32[144], index: 5, kind: input, shape index: {}]
  %s6 = inlined_call_operand.vmem [shape: f32[4], index: 6, kind: input, shape index: {}]
  %s7 = inlined_call_operand.vmem [shape: f32[4], index: 7, kind: input, shape index: {}]
  %s8 = inlined_call_operand.vmem [shape: f32[4], index: 8, kind: input, shape index: {}]
  %s9 = inlined_call_operand.hbm [shape: f32[2,4,256], index: 9, kind: output, shape index: {}]
  %s10 = sld [smem:[#allocation0]]
  $region82: #{tpu_custom_call.1} parent=0
    _
  %s12 = ssub.s32 1, %s10
  %s13 = scalar_select 0, %s12, %s10
  $region1: #{tpu_custom_call.1} parent=0
    #allocation4 [shape = 'u8[8192]{0}', space=vmem, size = 0x2000, scoped, tag = 'input window, operand 0, single buffered']
    #allocation5 [shape = 's32[1]{0}', space=sflag, size = 0x4, scoped, tag = 'scoped memory for tpu_custom_call.1']
    #allocation6 [shape = 's32[1]{0}', space=sflag, size = 0x4, scoped, tag = 'scoped memory for tpu_custom_call.1']
    #allocation7 [shape = 's32[1]{0}', space=sflag, size = 0x4, scoped, tag = 'scoped memory for tpu_custom_call.1']
    #allocation8 [shape = 's32[1]{0}', space=sflag, size = 0x4, scoped, tag = 'scoped memory for tpu_custom_call.1']
    #allocation9 [shape = 'u8[1024]{0}', space=smem, size = 0x400, scoped, tag = 'input window, operand 1, single buffered']
    #allocation10 [shape = 'u8[512]{0}', space=smem, size = 0x200, scoped, tag = 'input window, operand 2, single buffered']
    #allocation11 [shape = 'u8[512]{0}', space=smem, size = 0x200, scoped, tag = 'input window, operand 3, single buffered']
    #allocation12 [shape = 's32[1]{0}', space=sflag, size = 0x4, scoped, tag = 'scoped memory for tpu_custom_call.1']
    #allocation13 [shape = 'u8[512]{0}', space=smem, size = 0x200, scoped, tag = 'input window, operand 4, single buffered']
    #allocation14 [shape = 'u8[1024]{0}', space=smem, size = 0x400, scoped, tag = 'input window, operand 5, single buffered']
    #allocation15 [shape = 's32[1]{0}', space=sflag, size = 0x4, scoped, tag = 'scoped memory for tpu_custom_call.1']
    #allocation16 [shape = 'u8[512]{0}', space=smem, size = 0x200, scoped, tag = 'input window, operand 6, single buffered']
    #allocation17 [shape = 'u8[512]{0}', space=smem, size = 0x200, scoped, tag = 'input window, operand 7, single buffered']
    #allocation18 [shape = 's32[1]{0}', space=sflag, size = 0x4, scoped, tag = 'scoped memory for tpu_custom_call.1']
    #allocation19 [shape = 'u8[512]{0}', space=smem, size = 0x200, scoped, tag = 'input window, operand 8, single buffered']
    #allocation20 [shape = 'u8[8192]{0}', space=vmem, size = 0x2000, scoped, tag = 'output window, operand 0, single buffered']
    %14 = vsyncpa [#allocation5], 0
    %15 = vsyncpa [#allocation7], 0
    %16 = vsyncpa [#allocation8], 0
    %17 = vsyncpa [#allocation12], 0
    %18 = vsyncpa [#allocation15], 0
    %19 = vsyncpa [#allocation18], 0
    %20 = vsyncpa [#allocation6], 0
    // Predicated region
    $region2: #{tpu_custom_call.1} parent=1 // pred_check
      _
    $region3: #{tpu_custom_call.1} parent=1 // pred_check_branch
      %22 = sbr.rel (0) target = $region5
    $region4: #{tpu_custom_call.1} parent=1 // pred_region
      %24 = vsyncadd [#allocation5], 0
      %s25 = sshll.u32 %s0, 4
      %s26 = int_to_ptr.hbm [resolvable:$true] %s25
      %s27 = sshll.u32 [#allocation4], 4
      %s28 = int_to_ptr.vmem [resolvable:$true] %s27
      %33 = dma.hbm_to_vmem [thread:$0]  %s26, 256, %s28, [#allocation5], 128, 128, 8
    $region5: #{tpu_custom_call.1} parent=1 // pred_fallthru
      _
    // Predicated region
    $region6: #{tpu_custom_call.1} parent=1 // pred_check
      _
    $region7: #{tpu_custom_call.1} parent=1 // pred_check_branch
      %35 = sbr.rel (0) target = $region9
    $region8: #{tpu_custom_call.1} parent=1 // pred_region
      %37 = vsyncadd [#allocation7], 0
      %s39 = sshll.u32 %s1, 4
      %s40 = int_to_ptr.hbm [resolvable:$true] %s39
      %42 = dma.hbm_to_smem %s40, 32, [#allocation9], [#allocation7]
    $region9: #{tpu_custom_call.1} parent=1 // pred_fallthru
      _
    // Predicated region
    $region10: #{tpu_custom_call.1} parent=1 // pred_check
      _
    $region11: #{tpu_custom_call.1} parent=1 // pred_check_branch
      %44 = sbr.rel (0) target = $region13
    $region12: #{tpu_custom_call.1} parent=1 // pred_region
      %46 = vsyncadd [#allocation8], 0
      %s48 = sshll.u32 %s2, 4
      %s49 = int_to_ptr.vmem [resolvable:$true] %s48
      %51 = dma.vmem_to_smem %s49, 16, [#allocation10], [#allocation8]
    $region13: #{tpu_custom_call.1} parent=1 // pred_fallthru
      _
    // Predicated region
    $region14: #{tpu_custom_call.1} parent=1 // pred_check
      _
    $region15: #{tpu_custom_call.1} parent=1 // pred_check_branch
      %53 = sbr.rel (0) target = $region17
    $region16: #{tpu_custom_call.1} parent=1 // pred_region
      %55 = vsyncadd [#allocation12], 0
      %s57 = sshll.u32 %s3, 4
      %s58 = int_to_ptr.hbm [resolvable:$true] %s57
      %60 = dma.hbm_to_smem %s58, 16, [#allocation11], [#allocation12]
    $region17: #{tpu_custom_call.1} parent=1 // pred_fallthru
      _
    // Predicated region
    $region18: #{tpu_custom_call.1} parent=1 // pred_check
      _
    $region19: #{tpu_custom_call.1} parent=1 // pred_check_branch
      %62 = sbr.rel (0) target = $region21
    $region20: #{tpu_custom_call.1} parent=1 // pred_region
      %64 = vsyncadd [#allocation12], 0
      %s66 = sshll.u32 %s4, 4
      %s67 = int_to_ptr.hbm [resolvable:$true] %s66
      %69 = dma.hbm_to_smem %s67, 16, [#allocation13], [#allocation12]
    $region21: #{tpu_custom_call.1} parent=1 // pred_fallthru
      _
    // Predicated region
    $region22: #{tpu_custom_call.1} parent=1 // pred_check
      _
    $region23: #{tpu_custom_call.1} parent=1 // pred_check_branch
      %71 = sbr.rel (0) target = $region25
    $region24: #{tpu_custom_call.1} parent=1 // pred_region
      %73 = vsyncadd [#allocation15], 0
      %s75 = sshll.u32 %s5, 4
      %s76 = int_to_ptr.vmem [resolvable:$true] %s75
      %78 = dma.vmem_to_smem %s76, 32, [#allocation14], [#allocation15]
    $region25: #{tpu_custom_call.1} parent=1 // pred_fallthru
      _
    // Predicated region
    $region26: #{tpu_custom_call.1} parent=1 // pred_check
      _
    $region27: #{tpu_custom_call.1} parent=1 // pred_check_branch
      %80 = sbr.rel (0) target = $region29
    $region28: #{tpu_custom_call.1} parent=1 // pred_region
      %82 = vsyncadd [#allocation15], 0
      %s84 = sshll.u32 %s6, 4
      %s85 = int_to_ptr.vmem [resolvable:$true] %s84
      %87 = dma.vmem_to_smem %s85, 16, [#allocation16], [#allocation15]
    $region29: #{tpu_custom_call.1} parent=1 // pred_fallthru
      _
    // Predicated region
    $region30: #{tpu_custom_call.1} parent=1 // pred_check
      _
    $region31: #{tpu_custom_call.1} parent=1 // pred_check_branch
      %89 = sbr.rel (0) target = $region33
    $region32: #{tpu_custom_call.1} parent=1 // pred_region
      %91 = vsyncadd [#allocation18], 0
      %s93 = sshll.u32 %s7, 4
      %s94 = int_to_ptr.vmem [resolvable:$true] %s93
      %96 = dma.vmem_to_smem %s94, 16, [#allocation17], [#allocation18]
    $region33: #{tpu_custom_call.1} parent=1 // pred_fallthru
      _
    // Predicated region
    $region34: #{tpu_custom_call.1} parent=1 // pred_check
      _
    $region35: #{tpu_custom_call.1} parent=1 // pred_check_branch
      %98 = sbr.rel (0) target = $region37
    $region36: #{tpu_custom_call.1} parent=1 // pred_region
      %100 = vsyncadd [#allocation18], 0
      %s102 = sshll.u32 %s8, 4
      %s103 = int_to_ptr.vmem [resolvable:$true] %s102
      %105 = dma.vmem_to_smem %s103, 16, [#allocation19], [#allocation18]
    $region37: #{tpu_custom_call.1} parent=1 // pred_fallthru
      _
    // Predicated region
    $region38: #{tpu_custom_call.1} parent=1 // pred_check
      _
    $region39: #{tpu_custom_call.1} parent=1 // pred_check_branch
      %107 = sbr.rel (0) target = $region41
    $region40: #{tpu_custom_call.1} parent=1 // pred_region
      %109 = dma.done [#allocation5], 256
    $region41: #{tpu_custom_call.1} parent=1 // pred_fallthru
      _
    // Predicated region
    $region42: #{tpu_custom_call.1} parent=1 // pred_check
      _
    $region43: #{tpu_custom_call.1} parent=1 // pred_check_branch
      %111 = sbr.rel (0) target = $region45
    $region44: #{tpu_custom_call.1} parent=1 // pred_region
      %113 = dma.done [#allocation7], 32
    $region45: #{tpu_custom_call.1} parent=1 // pred_fallthru
      _
    // Predicated region
    $region46: #{tpu_custom_call.1} parent=1 // pred_check
      _
    $region47: #{tpu_custom_call.1} parent=1 // pred_check_branch
      %115 = sbr.rel (0) target = $region49
    $region48: #{tpu_custom_call.1} parent=1 // pred_region
      %117 = dma.done [#allocation8], 16
    $region49: #{tpu_custom_call.1} parent=1 // pred_fallthru
      _
    // Predicated region
    $region50: #{tpu_custom_call.1} parent=1 // pred_check
      _
    $region51: #{tpu_custom_call.1} parent=1 // pred_check_branch
      %119 = sbr.rel (0) target = $region53
    $region52: #{tpu_custom_call.1} parent=1 // pred_region
      %121 = dma.done [#allocation12], 16
    $region53: #{tpu_custom_call.1} parent=1 // pred_fallthru
      _
    // Predicated region
    $region54: #{tpu_custom_call.1} parent=1 // pred_check
      _
    $region55: #{tpu_custom_call.1} parent=1 // pred_check_branch
      %123 = sbr.rel (0) target = $region57
    $region56: #{tpu_custom_call.1} parent=1 // pred_region
      %125 = dma.done [#allocation12], 16
    $region57: #{tpu_custom_call.1} parent=1 // pred_fallthru
      _
    // Predicated region
    $region58: #{tpu_custom_call.1} parent=1 // pred_check
      _
    $region59: #{tpu_custom_call.1} parent=1 // pred_check_branch
      %127 = sbr.rel (0) target = $region61
    $region60: #{tpu_custom_call.1} parent=1 // pred_region
      %129 = dma.done [#allocation15], 32
    $region61: #{tpu_custom_call.1} parent=1 // pred_fallthru
      _
    // Predicated region
    $region62: #{tpu_custom_call.1} parent=1 // pred_check
      _
    $region63: #{tpu_custom_call.1} parent=1 // pred_check_branch
      %131 = sbr.rel (0) target = $region65
    $region64: #{tpu_custom_call.1} parent=1 // pred_region
      %133 = dma.done [#allocation15], 16
    $region65: #{tpu_custom_call.1} parent=1 // pred_fallthru
      _
    // Predicated region
    $region66: #{tpu_custom_call.1} parent=1 // pred_check
      _
    $region67: #{tpu_custom_call.1} parent=1 // pred_check_branch
      %135 = sbr.rel (0) target = $region69
    $region68: #{tpu_custom_call.1} parent=1 // pred_region
      %137 = dma.done [#allocation18], 16
    $region69: #{tpu_custom_call.1} parent=1 // pred_fallthru
      _
    // Predicated region
    $region70: #{tpu_custom_call.1} parent=1 // pred_check
      _
    $region71: #{tpu_custom_call.1} parent=1 // pred_check_branch
      %139 = sbr.rel (0) target = $region73
    $region72: #{tpu_custom_call.1} parent=1 // pred_region
      %141 = dma.done [#allocation18], 16
    $region73: #{tpu_custom_call.1} parent=1 // pred_fallthru
      _
    %142 = sfence
    %v143 = vlaneseq
    %v144 = vand.u32 %v143, 127
    %v145 = vadd.s32 %v144, 128
    %vm146 = vcmp.lt.s32.totalorder %v144, 0
    %v147 = vsub.s32 0, %v144
    %v148 = vsel %vm146, %v147, %v144
    %v149 = vshrl.u32 %v148, 4
    %v150 = vand.u32 %v148, 15
    %v151 = vsub.s32 0, %v150
    %v152 = vsel %vm146, %v151, %v150
    %vm153 = vcmp.lt.s32.totalorder %v145, 0
    %v154 = vsub.s32 0, %v145
    %v155 = vsel %vm153, %v154, %v145
    %v156 = vshrl.u32 %v155, 4
    %v157 = vand.u32 %v155, 15
    %v158 = vsub.s32 0, %v157
    %v159 = vsel %vm153, %v158, %v157
    %vm160 = vcmp.ne.s32.totalorder %v152, 0
    %vm161 = vcmp.ne.s32.totalorder %v159, 0
    %vm162 = vcmp.lt.s32.totalorder %v152, 0
    %vm163 = vcmp.lt.s32.totalorder %v159, 0
    %vm164 = vmand %vm162, %vm160
    %vm165 = vmand %vm163, %vm161
    %v166 = vadd.s32 %v152, 16
    %v167 = vadd.s32 %v159, 16
    %v168 = vsel %vm164, %v166, %v152
    %v169 = vsel %vm165, %v167, %v159
    %vm170 = vcmp.ge.s32.totalorder %v168, 1
    %vm171 = vcmp.ge.s32.totalorder %v169, 1
    %v172 = vsel %vm170, 1, 0
    %v173 = vsel %vm171, 1, 0
    %v174 = vcvt.s32.f32 %v172
    %v175 = vcvt.s32.f32 %v173
    %vm176 = vcmp.le.s32.totalorder %v168, 14
    %vm177 = vcmp.le.s32.totalorder %v169, 14
    %v178 = vsel %vm176, 1, 0
    %v179 = vsel %vm177, 1, 0
    %v180 = vcvt.s32.f32 %v178
    %v181 = vcvt.s32.f32 %v179
    %182 = vst [vmem:[#allocation2] sm:$0xff] 0.0
    %vm183 = vcmask 273408
    %184 = vst.msk [vmem:[#allocation2 + $0x8] sm:$0xf] %vm183, 0.0
    %185 = vst [vmem:[#allocation2 + $0xc] sm:$0xff] 0.0
    %186 = vst.msk [vmem:[#allocation2 + $0x14] sm:$0xf] %vm183, 0.0
    %187 = vst [vmem:[#allocation3] sm:$0xff] 0.0
    %188 = vst.msk [vmem:[#allocation3 + $0x8] sm:$0xf] %vm183, 0.0
    %189 = vst [vmem:[#allocation3 + $0xc] sm:$0xff] 0.0
    %190 = vst.msk [vmem:[#allocation3 + $0x14] sm:$0xf] %vm183, 0.0
    %v191 = vld [vmem:[#allocation4] sm:$0xff]
    %v192 = vld [vmem:[#allocation4 + $0x8] sm:$0xff]
    %195 = vrot.lane.b32.xlu0 %v191, 17
    %v196 = vpop.permute.xlu0 %195
    %197 = vrot.lane.b32.xlu0 %v192, 17
    %v198 = vpop.permute.xlu0 %197
    %v199 = vrot.slane %v196, 4
    %v200 = vrot.slane %v198, 4
    %vm201 = vcmask 138240
    %v202 = vsel %vm201, %v199, %v196
    %v203 = vsel %vm201, %v200, %v198
    %vm208 = vcmask 1043592
    %vm209 = vcmask 1047556
    %vm210 = vmor %vm209, %vm208
    %211 = vst.msk [vmem:[#allocation2] sm:$0xff] %vm210, %v202
    %vm212 = vcmask 134144
    %213 = vst.msk [vmem:[#allocation2 + $0x8] sm:$0xf] %vm212, %v199
    %214 = vst.msk [vmem:[#allocation2 + $0xc] sm:$0xff] %vm210, %v203
    %215 = vst.msk [vmem:[#allocation2 + $0x14] sm:$0xf] %vm212, %v200
    %s216 = sld [smem:[#allocation10]]
    %v217 = vstv %s216
    %s218 = sld [smem:[#allocation10 + $0x1]]
    %v219 = vstv %s218
    %s220 = sld [smem:[#allocation10 + $0x2]]
    %v221 = vstv %s220
    %s222 = sld [smem:[#allocation10 + $0x3]]
    %v223 = vstv %s222
    %v224 = vld [vmem:[#allocation2] ss:$4 sm:$0x3]
    %s225 = scalar_lea.vmem [#allocation2], 12
    %v226 = vld [vmem:[%s225] ss:$4 sm:$0x3]
    %v229 = vrot.slane %v175, 7
    %vm230 = vcmask 1040384
    %v231 = vsel %vm230, %v174, %v229
    %vm232 = vcmask 1041409
    %v233 = vsel %vm232, %v174, %v229
    %v234 = vrot.slane %v233, 1
    %v237 = vmul.f32 %v224, %v231
    %v238 = vmul.f32 %v226, %v234
    %s239 = sld [smem:[#allocation9]]
    %v240 = vstv %s239
    %v241 = vmul.f32 %v240, %v237
    %v242 = vmul.f32 %v240, %v238
    %v243 = vadd.f32 %v217, %v241
    %v244 = vadd.f32 %v217, %v242
    %s245 = sld [smem:[#allocation9 + $0x24]]
    %v246 = vstv %s245
    %v247 = vmul.f32 %v246, %v237
    %v248 = vmul.f32 %v246, %v238
    %v249 = vadd.f32 %v219, %v247
    %v250 = vadd.f32 %v219, %v248
    %s251 = sld [smem:[#allocation9 + $0x48]]
    %v252 = vstv %s251
    %v253 = vmul.f32 %v252, %v237
    %v254 = vmul.f32 %v252, %v238
    %v255 = vadd.f32 %v221, %v253
    %v256 = vadd.f32 %v221, %v254
    %s257 = sld [smem:[#allocation9 + $0x6c]]
    %v258 = vstv %s257
    %v259 = vmul.f32 %v258, %v237
    %v260 = vmul.f32 %v258, %v238
    %v261 = vadd.f32 %v223, %v259
    %v262 = vadd.f32 %v223, %v260
    %v263 = vld [vmem:[#allocation2] ss:$4 sm:$0x7]
    %v264 = vld [vmem:[%s225] ss:$4 sm:$0x7]
    %s265 = sld [smem:[#allocation9 + $0x1]]
    %v266 = vstv %s265
    %v267 = vmul.f32 %v266, %v263
    %v268 = vmul.f32 %v266, %v264
    %271 = vrot.lane.b32.xlu0 %v267, 127
    %v272 = vpop.permute.xlu0 %271
    %273 = vrot.lane.b32.xlu0 %v268, 127
    %v274 = vpop.permute.xlu0 %273
    %v275 = vrot.slane %v272, 1
    %v276 = vrot.slane %v274, 1
    %vm277 = vcmask 1039360
    %v278 = vsel %vm277, %v272, %v275
    %v279 = vsel %vm277, %v274, %v276
    %v282 = vadd.f32 %v243, %v278
    %v283 = vadd.f32 %v244, %v279
    %s284 = sld [smem:[#allocation9 + $0x25]]
    %v285 = vstv %s284
    %v286 = vmul.f32 %v285, %v263
    %v287 = vmul.f32 %v285, %v264
    %290 = vrot.lane.b32.xlu0 %v286, 127
    %v291 = vpop.permute.xlu0 %290
    %292 = vrot.lane.b32.xlu0 %v287, 127
    %v293 = vpop.permute.xlu0 %292
    %v294 = vrot.slane %v291, 1
    %v295 = vrot.slane %v293, 1
    %v296 = vsel %vm277, %v291, %v294
    %v297 = vsel %vm277, %v293, %v295
    %v300 = vadd.f32 %v249, %v296
    %v301 = vadd.f32 %v250, %v297
    %s302 = sld [smem:[#allocation9 + $0x49]]
    %v303 = vstv %s302
    %v304 = vmul.f32 %v303, %v263
    %v305 = vmul.f32 %v303, %v264
    %308 = vrot.lane.b32.xlu0 %v304, 127
    %v309 = vpop.permute.xlu0 %308
    %310 = vrot.lane.b32.xlu0 %v305, 127
    %v311 = vpop.permute.xlu0 %310
    %v312 = vrot.slane %v309, 1
    %v313 = vrot.slane %v311, 1
    %v314 = vsel %vm277, %v309, %v312
    %v315 = vsel %vm277, %v311, %v313
    %v318 = vadd.f32 %v255, %v314
    %v319 = vadd.f32 %v256, %v315
    %s320 = sld [smem:[#allocation9 + $0x6d]]
    %v321 = vstv %s320
    %v322 = vmul.f32 %v321, %v263
    %v323 = vmul.f32 %v321, %v264
    %326 = vrot.lane.b32.xlu0 %v322, 127
    %v327 = vpop.permute.xlu0 %326
    %328 = vrot.lane.b32.xlu0 %v323, 127
    %v329 = vpop.permute.xlu0 %328
    %v330 = vrot.slane %v327, 1
    %v331 = vrot.slane %v329, 1
    %v332 = vsel %vm277, %v327, %v330
    %v333 = vsel %vm277, %v329, %v331
    %v336 = vadd.f32 %v261, %v332
    %v337 = vadd.f32 %v262, %v333
    %v340 = vrot.slane %v181, 7
    %v341 = vsel %vm230, %v180, %v340
    %v342 = vsel %vm232, %v180, %v340
    %v343 = vrot.slane %v342, 1
    %344 = vrot.lane.b32.xlu0 %v341, 2
    %v345 = vpop.permute.xlu0 %344
    %346 = vrot.lane.b32.xlu0 %v343, 2
    %v347 = vpop.permute.xlu0 %346
    %v348 = vrot.slane %v345, 7
    %v349 = vrot.slane %v347, 7
    %vm350 = vcmask 15360
    %v351 = vsel %vm350, %v348, %v345
    %v352 = vsel %vm350, %v349, %v347
    %v355 = vmul.f32 %v263, %v351
    %v356 = vmul.f32 %v264, %v352
    %s357 = sld [smem:[#allocation9 + $0x2]]
    %v358 = vstv %s357
    %v359 = vmul.f32 %v358, %v355
    %v360 = vmul.f32 %v358, %v356
    %363 = vrot.lane.b32.xlu0 %v359, 126
    %v364 = vpop.permute.xlu0 %363
    %365 = vrot.lane.b32.xlu0 %v360, 126
    %v366 = vpop.permute.xlu0 %365
    %v367 = vrot.slane %v364, 1
    %v368 = vrot.slane %v366, 1
    %vm369 = vcmask 1031168
    %v370 = vsel %vm369, %v364, %v367
    %v371 = vsel %vm369, %v366, %v368
    %v374 = vadd.f32 %v282, %v370
    %v375 = vadd.f32 %v283, %v371
    %s376 = sld [smem:[#allocation9 + $0x26]]
    %v377 = vstv %s376
    %v378 = vmul.f32 %v377, %v355
    %v379 = vmul.f32 %v377, %v356
    %382 = vrot.lane.b32.xlu0 %v378, 126
    %v383 = vpop.permute.xlu0 %382
    %384 = vrot.lane.b32.xlu0 %v379, 126
    %v385 = vpop.permute.xlu0 %384
    %v386 = vrot.slane %v383, 1
    %v387 = vrot.slane %v385, 1
    %v388 = vsel %vm369, %v383, %v386
    %v389 = vsel %vm369, %v385, %v387
    %v392 = vadd.f32 %v300, %v388
    %v393 = vadd.f32 %v301, %v389
    %s394 = sld [smem:[#allocation9 + $0x4a]]
    %v395 = vstv %s394
    %v396 = vmul.f32 %v395, %v355
    %v397 = vmul.f32 %v395, %v356
    %400 = vrot.lane.b32.xlu0 %v396, 126
    %v401 = vpop.permute.xlu0 %400
    %402 = vrot.lane.b32.xlu0 %v397, 126
    %v403 = vpop.permute.xlu0 %402
    %v404 = vrot.slane %v401, 1
    %v405 = vrot.slane %v403, 1
    %v406 = vsel %vm369, %v401, %v404
    %v407 = vsel %vm369, %v403, %v405
    %v410 = vadd.f32 %v318, %v406
    %v411 = vadd.f32 %v319, %v407
    %s412 = sld [smem:[#allocation9 + $0x6e]]
    %v413 = vstv %s412
    %v414 = vmul.f32 %v413, %v355
    %v415 = vmul.f32 %v413, %v356
    %418 = vrot.lane.b32.xlu0 %v414, 126
    %v419 = vpop.permute.xlu0 %418
    %420 = vrot.lane.b32.xlu0 %v415, 126
    %v421 = vpop.permute.xlu0 %420
    %v422 = vrot.slane %v419, 1
    %v423 = vrot.slane %v421, 1
    %v424 = vsel %vm369, %v419, %v422
    %v425 = vsel %vm369, %v421, %v423
    %v428 = vadd.f32 %v336, %v424
    %v429 = vadd.f32 %v337, %v425
    %430 = vrot.lane.b32.xlu0 %v231, 16
    %v431 = vpop.permute.xlu0 %430
    %432 = vrot.lane.b32.xlu0 %v234, 16
    %v433 = vpop.permute.xlu0 %432
    %v434 = vrot.slane %v431, 7
    %v435 = vrot.slane %v433, 7
    %vm436 = vcmask 130048
    %v437 = vsel %vm436, %v434, %v431
    %v438 = vsel %vm436, %v435, %v433
    %v441 = vmul.f32 %v263, %v437
    %v442 = vmul.f32 %v264, %v438
    %s443 = sld [smem:[#allocation9 + $0x3]]
    %v444 = vstv %s443
    %v445 = vmul.f32 %v444, %v441
    %v446 = vmul.f32 %v444, %v442
    %449 = vrot.lane.b32.xlu0 %v445, 112
    %v450 = vpop.permute.xlu0 %449
    %451 = vrot.lane.b32.xlu0 %v446, 112
    %v452 = vpop.permute.xlu0 %451
    %v453 = vrot.slane %v450, 1
    %v454 = vrot.slane %v452, 1
    %vm455 = vcmask 916480
    %v456 = vsel %vm455, %v450, %v453
    %v457 = vsel %vm455, %v452, %v454
    %v460 = vadd.f32 %v374, %v456
    %v461 = vadd.f32 %v375, %v457
    %s462 = sld [smem:[#allocation9 + $0x27]]
    %v463 = vstv %s462
    %v464 = vmul.f32 %v463, %v441
    %v465 = vmul.f32 %v463, %v442
    %468 = vrot.lane.b32.xlu0 %v464, 112
    %v469 = vpop.permute.xlu0 %468
    %470 = vrot.lane.b32.xlu0 %v465, 112
    %v471 = vpop.permute.xlu0 %470
    %v472 = vrot.slane %v469, 1
    %v473 = vrot.slane %v471, 1
    %v474 = vsel %vm455, %v469, %v472
    %v475 = vsel %vm455, %v471, %v473
    %v478 = vadd.f32 %v392, %v474
    %v479 = vadd.f32 %v393, %v475
    %s480 = sld [smem:[#allocation9 + $0x4b]]
    %v481 = vstv %s480
    %v482 = vmul.f32 %v481, %v441
    %v483 = vmul.f32 %v481, %v442
    %486 = vrot.lane.b32.xlu0 %v482, 112
    %v487 = vpop.permute.xlu0 %486
    %488 = vrot.lane.b32.xlu0 %v483, 112
    %v489 = vpop.permute.xlu0 %488
    %v490 = vrot.slane %v487, 1
    %v491 = vrot.slane %v489, 1
    %v492 = vsel %vm455, %v487, %v490
    %v493 = vsel %vm455, %v489, %v491
    %v496 = vadd.f32 %v410, %v492
    %v497 = vadd.f32 %v411, %v493
    %s498 = sld [smem:[#allocation9 + $0x6f]]
    %v499 = vstv %s498
    %v500 = vmul.f32 %v499, %v441
    %v501 = vmul.f32 %v499, %v442
    %504 = vrot.lane.b32.xlu0 %v500, 112
    %v505 = vpop.permute.xlu0 %504
    %506 = vrot.lane.b32.xlu0 %v501, 112
    %v507 = vpop.permute.xlu0 %506
    %v508 = vrot.slane %v505, 1
    %v509 = vrot.slane %v507, 1
    %v510 = vsel %vm455, %v505, %v508
    %v511 = vsel %vm455, %v507, %v509
    %v514 = vadd.f32 %v428, %v510
    %v515 = vadd.f32 %v429, %v511
    %s516 = sld [smem:[#allocation9 + $0x4]]
    %v517 = vstv %s516
    %v518 = vmul.f32 %v517, %v263
    %v519 = vmul.f32 %v517, %v264
    %522 = vrot.lane.b32.xlu0 %v518, 111
    %v523 = vpop.permute.xlu0 %522
    %524 = vrot.lane.b32.xlu0 %v519, 111
    %v525 = vpop.permute.xlu0 %524
    %v526 = vrot.slane %v523, 1
    %v527 = vrot.slane %v525, 1
    %vm528 = vcmask 908288
    %v529 = vsel %vm528, %v523, %v526
    %v530 = vsel %vm528, %v525, %v527
    %v533 = vadd.f32 %v460, %v529
    %v534 = vadd.f32 %v461, %v530
    %s535 = sld [smem:[#allocation9 + $0x28]]
    %v536 = vstv %s535
    %v537 = vmul.f32 %v536, %v263
    %v538 = vmul.f32 %v536, %v264
    %541 = vrot.lane.b32.xlu0 %v537, 111
    %v542 = vpop.permute.xlu0 %541
    %543 = vrot.lane.b32.xlu0 %v538, 111
    %v544 = vpop.permute.xlu0 %543
    %v545 = vrot.slane %v542, 1
    %v546 = vrot.slane %v544, 1
    %v547 = vsel %vm528, %v542, %v545
    %v548 = vsel %vm528, %v544, %v546
    %v551 = vadd.f32 %v478, %v547
    %v552 = vadd.f32 %v479, %v548
    %s553 = sld [smem:[#allocation9 + $0x4c]]
    %v554 = vstv %s553
    %v555 = vmul.f32 %v554, %v263
    %v556 = vmul.f32 %v554, %v264
    %559 = vrot.lane.b32.xlu0 %v555, 111
    %v560 = vpop.permute.xlu0 %559
    %561 = vrot.lane.b32.xlu0 %v556, 111
    %v562 = vpop.permute.xlu0 %561
    %v563 = vrot.slane %v560, 1
    %v564 = vrot.slane %v562, 1
    %v565 = vsel %vm528, %v560, %v563
    %v566 = vsel %vm528, %v562, %v564
    %v569 = vadd.f32 %v496, %v565
    %v570 = vadd.f32 %v497, %v566
    %s571 = sld [smem:[#allocation9 + $0x70]]
    %v572 = vstv %s571
    %v573 = vmul.f32 %v572, %v263
    %v574 = vmul.f32 %v572, %v264
    %577 = vrot.lane.b32.xlu0 %v573, 111
    %v578 = vpop.permute.xlu0 %577
    %579 = vrot.lane.b32.xlu0 %v574, 111
    %v580 = vpop.permute.xlu0 %579
    %v581 = vrot.slane %v578, 1
    %v582 = vrot.slane %v580, 1
    %v583 = vsel %vm528, %v578, %v581
    %v584 = vsel %vm528, %v580, %v582
    %v587 = vadd.f32 %v514, %v583
    %v588 = vadd.f32 %v515, %v584
    %589 = vrot.lane.b32.xlu0 %v341, 18
    %v590 = vpop.permute.xlu0 %589
    %591 = vrot.lane.b32.xlu0 %v343, 18
    %v592 = vpop.permute.xlu0 %591
    %v593 = vrot.slane %v590, 7
    %v594 = vrot.slane %v592, 7
    %vm595 = vcmask 146432
    %v596 = vsel %vm595, %v593, %v590
    %v597 = vsel %vm595, %v594, %v592
    %v600 = vmul.f32 %v263, %v596
    %v601 = vmul.f32 %v264, %v597
    %s602 = sld [smem:[#allocation9 + $0x5]]
    %v603 = vstv %s602
    %v604 = vmul.f32 %v603, %v600
    %v605 = vmul.f32 %v603, %v601
    %608 = vrot.lane.b32.xlu0 %v604, 110
    %v609 = vpop.permute.xlu0 %608
    %610 = vrot.lane.b32.xlu0 %v605, 110
    %v611 = vpop.permute.xlu0 %610
    %v612 = vrot.slane %v609, 1
    %v613 = vrot.slane %v611, 1
    %vm614 = vcmask 900096
    %v615 = vsel %vm614, %v609, %v612
    %v616 = vsel %vm614, %v611, %v613
    %v619 = vadd.f32 %v533, %v615
    %v620 = vadd.f32 %v534, %v616
    %s621 = sld [smem:[#allocation9 + $0x29]]
    %v622 = vstv %s621
    %v623 = vmul.f32 %v622, %v600
    %v624 = vmul.f32 %v622, %v601
    %627 = vrot.lane.b32.xlu0 %v623, 110
    %v628 = vpop.permute.xlu0 %627
    %629 = vrot.lane.b32.xlu0 %v624, 110
    %v630 = vpop.permute.xlu0 %629
    %v631 = vrot.slane %v628, 1
    %v632 = vrot.slane %v630, 1
    %v633 = vsel %vm614, %v628, %v631
    %v634 = vsel %vm614, %v630, %v632
    %v637 = vadd.f32 %v551, %v633
    %v638 = vadd.f32 %v552, %v634
    %s639 = sld [smem:[#allocation9 + $0x4d]]
    %v640 = vstv %s639
    %v641 = vmul.f32 %v640, %v600
    %v642 = vmul.f32 %v640, %v601
    %645 = vrot.lane.b32.xlu0 %v641, 110
    %v646 = vpop.permute.xlu0 %645
    %647 = vrot.lane.b32.xlu0 %v642, 110
    %v648 = vpop.permute.xlu0 %647
    %v649 = vrot.slane %v646, 1
    %v650 = vrot.slane %v648, 1
    %v651 = vsel %vm614, %v646, %v649
    %v652 = vsel %vm614, %v648, %v650
    %v655 = vadd.f32 %v569, %v651
    %v656 = vadd.f32 %v570, %v652
    %s657 = sld [smem:[#allocation9 + $0x71]]
    %v658 = vstv %s657
    %v659 = vmul.f32 %v658, %v600
    %v660 = vmul.f32 %v658, %v601
    %663 = vrot.lane.b32.xlu0 %v659, 110
    %v664 = vpop.permute.xlu0 %663
    %665 = vrot.lane.b32.xlu0 %v660, 110
    %v666 = vpop.permute.xlu0 %665
    %v667 = vrot.slane %v664, 1
    %v668 = vrot.slane %v666, 1
    %v669 = vsel %vm614, %v664, %v667
    %v670 = vsel %vm614, %v666, %v668
    %v673 = vadd.f32 %v587, %v669
    %v674 = vadd.f32 %v588, %v670
    %675 = vrot.lane.b32.xlu0 %v231, 32
    %v676 = vpop.permute.xlu0 %675
    %677 = vrot.lane.b32.xlu0 %v234, 32
    %v678 = vpop.permute.xlu0 %677
    %v679 = vrot.slane %v676, 7
    %v680 = vrot.slane %v678, 7
    %vm681 = vcmask 261120
    %v682 = vsel %vm681, %v679, %v676
    %v683 = vsel %vm681, %v680, %v678
    %v686 = vmul.f32 %v263, %v682
    %v687 = vmul.f32 %v264, %v683
    %s688 = sld [smem:[#allocation9 + $0x6]]
    %v689 = vstv %s688
    %v690 = vmul.f32 %v689, %v686
    %v691 = vmul.f32 %v689, %v687
    %694 = vrot.lane.b32.xlu0 %v690, 96
    %v695 = vpop.permute.xlu0 %694
    %696 = vrot.lane.b32.xlu0 %v691, 96
    %v697 = vpop.permute.xlu0 %696
    %v698 = vrot.slane %v695, 1
    %v699 = vrot.slane %v697, 1
    %vm700 = vcmask 785408
    %v701 = vsel %vm700, %v695, %v698
    %v702 = vsel %vm700, %v697, %v699
    %v705 = vadd.f32 %v619, %v701
    %v706 = vadd.f32 %v620, %v702
    %s707 = sld [smem:[#allocation9 + $0x2a]]
    %v708 = vstv %s707
    %v709 = vmul.f32 %v708, %v686
    %v710 = vmul.f32 %v708, %v687
    %713 = vrot.lane.b32.xlu0 %v709, 96
    %v714 = vpop.permute.xlu0 %713
    %715 = vrot.lane.b32.xlu0 %v710, 96
    %v716 = vpop.permute.xlu0 %715
    %v717 = vrot.slane %v714, 1
    %v718 = vrot.slane %v716, 1
    %v719 = vsel %vm700, %v714, %v717
    %v720 = vsel %vm700, %v716, %v718
    %v723 = vadd.f32 %v637, %v719
    %v724 = vadd.f32 %v638, %v720
    %s725 = sld [smem:[#allocation9 + $0x4e]]
    %v726 = vstv %s725
    %v727 = vmul.f32 %v726, %v686
    %v728 = vmul.f32 %v726, %v687
    %731 = vrot.lane.b32.xlu0 %v727, 96
    %v732 = vpop.permute.xlu0 %731
    %733 = vrot.lane.b32.xlu0 %v728, 96
    %v734 = vpop.permute.xlu0 %733
    %v735 = vrot.slane %v732, 1
    %v736 = vrot.slane %v734, 1
    %v737 = vsel %vm700, %v732, %v735
    %v738 = vsel %vm700, %v734, %v736
    %v741 = vadd.f32 %v655, %v737
    %v742 = vadd.f32 %v656, %v738
    %s743 = sld [smem:[#allocation9 + $0x72]]
    %v744 = vstv %s743
    %v745 = vmul.f32 %v744, %v686
    %v746 = vmul.f32 %v744, %v687
    %749 = vrot.lane.b32.xlu0 %v745, 96
    %v750 = vpop.permute.xlu0 %749
    %751 = vrot.lane.b32.xlu0 %v746, 96
    %v752 = vpop.permute.xlu0 %751
    %v753 = vrot.slane %v750, 1
    %v754 = vrot.slane %v752, 1
    %v755 = vsel %vm700, %v750, %v753
    %v756 = vsel %vm700, %v752, %v754
    %v759 = vadd.f32 %v673, %v755
    %v760 = vadd.f32 %v674, %v756
    %s761 = sld [smem:[#allocation9 + $0x7]]
    %v762 = vstv %s761
    %v763 = vmul.f32 %v762, %v263
    %v764 = vmul.f32 %v762, %v264
    %767 = vrot.lane.b32.xlu0 %v763, 95
    %v768 = vpop.permute.xlu0 %767
    %769 = vrot.lane.b32.xlu0 %v764, 95
    %v770 = vpop.permute.xlu0 %769
    %v771 = vrot.slane %v768, 1
    %v772 = vrot.slane %v770, 1
    %vm773 = vcmask 777216
    %v774 = vsel %vm773, %v768, %v771
    %v775 = vsel %vm773, %v770, %v772
    %v778 = vadd.f32 %v705, %v774
    %v779 = vadd.f32 %v706, %v775
    %s780 = sld [smem:[#allocation9 + $0x2b]]
    %v781 = vstv %s780
    %v782 = vmul.f32 %v781, %v263
    %v783 = vmul.f32 %v781, %v264
    %786 = vrot.lane.b32.xlu0 %v782, 95
    %v787 = vpop.permute.xlu0 %786
    %788 = vrot.lane.b32.xlu0 %v783, 95
    %v789 = vpop.permute.xlu0 %788
    %v790 = vrot.slane %v787, 1
    %v791 = vrot.slane %v789, 1
    %v792 = vsel %vm773, %v787, %v790
    %v793 = vsel %vm773, %v789, %v791
    %v796 = vadd.f32 %v723, %v792
    %v797 = vadd.f32 %v724, %v793
    %s798 = sld [smem:[#allocation9 + $0x4f]]
    %v799 = vstv %s798
    %v800 = vmul.f32 %v799, %v263
    %v801 = vmul.f32 %v799, %v264
    %804 = vrot.lane.b32.xlu0 %v800, 95
    %v805 = vpop.permute.xlu0 %804
    %806 = vrot.lane.b32.xlu0 %v801, 95
    %v807 = vpop.permute.xlu0 %806
    %v808 = vrot.slane %v805, 1
    %v809 = vrot.slane %v807, 1
    %v810 = vsel %vm773, %v805, %v808
    %v811 = vsel %vm773, %v807, %v809
    %v814 = vadd.f32 %v741, %v810
    %v815 = vadd.f32 %v742, %v811
    %s816 = sld [smem:[#allocation9 + $0x73]]
    %v817 = vstv %s816
    %v818 = vmul.f32 %v817, %v263
    %v819 = vmul.f32 %v817, %v264
    %822 = vrot.lane.b32.xlu0 %v818, 95
    %v823 = vpop.permute.xlu0 %822
    %824 = vrot.lane.b32.xlu0 %v819, 95
    %v825 = vpop.permute.xlu0 %824
    %v826 = vrot.slane %v823, 1
    %v827 = vrot.slane %v825, 1
    %v828 = vsel %vm773, %v823, %v826
    %v829 = vsel %vm773, %v825, %v827
    %v832 = vadd.f32 %v759, %v828
    %v833 = vadd.f32 %v760, %v829
    %834 = vrot.lane.b32.xlu0 %v341, 34
    %v835 = vpop.permute.xlu0 %834
    %836 = vrot.lane.b32.xlu0 %v343, 34
    %v837 = vpop.permute.xlu0 %836
    %v838 = vrot.slane %v835, 7
    %v839 = vrot.slane %v837, 7
    %vm840 = vcmask 277504
    %v841 = vsel %vm840, %v838, %v835
    %v842 = vsel %vm840, %v839, %v837
    %v845 = vmul.f32 %v263, %v841
    %v846 = vmul.f32 %v264, %v842
    %s847 = sld [smem:[#allocation9 + $0x8]]
    %v848 = vstv %s847
    %v849 = vmul.f32 %v848, %v845
    %v850 = vmul.f32 %v848, %v846
    %853 = vrot.lane.b32.xlu0 %v849, 94
    %v854 = vpop.permute.xlu0 %853
    %855 = vrot.lane.b32.xlu0 %v850, 94
    %v856 = vpop.permute.xlu0 %855
    %v857 = vrot.slane %v854, 1
    %v858 = vrot.slane %v856, 1
    %vm859 = vcmask 769024
    %v860 = vsel %vm859, %v854, %v857
    %v861 = vsel %vm859, %v856, %v858
    %v864 = vadd.f32 %v778, %v860
    %v865 = vadd.f32 %v779, %v861
    %s866 = sld [smem:[#allocation9 + $0x2c]]
    %v867 = vstv %s866
    %v868 = vmul.f32 %v867, %v845
    %v869 = vmul.f32 %v867, %v846
    %872 = vrot.lane.b32.xlu0 %v868, 94
    %v873 = vpop.permute.xlu0 %872
    %874 = vrot.lane.b32.xlu0 %v869, 94
    %v875 = vpop.permute.xlu0 %874
    %v876 = vrot.slane %v873, 1
    %v877 = vrot.slane %v875, 1
    %v878 = vsel %vm859, %v873, %v876
    %v879 = vsel %vm859, %v875, %v877
    %v882 = vadd.f32 %v796, %v878
    %v883 = vadd.f32 %v797, %v879
    %s884 = sld [smem:[#allocation9 + $0x50]]
    %v885 = vstv %s884
    %v886 = vmul.f32 %v885, %v845
    %v887 = vmul.f32 %v885, %v846
    %890 = vrot.lane.b32.xlu0 %v886, 94
    %v891 = vpop.permute.xlu0 %890
    %892 = vrot.lane.b32.xlu0 %v887, 94
    %v893 = vpop.permute.xlu0 %892
    %v894 = vrot.slane %v891, 1
    %v895 = vrot.slane %v893, 1
    %v896 = vsel %vm859, %v891, %v894
    %v897 = vsel %vm859, %v893, %v895
    %v900 = vadd.f32 %v814, %v896
    %v901 = vadd.f32 %v815, %v897
    %s902 = sld [smem:[#allocation9 + $0x74]]
    %v903 = vstv %s902
    %v904 = vmul.f32 %v903, %v845
    %v905 = vmul.f32 %v903, %v846
    %908 = vrot.lane.b32.xlu0 %v904, 94
    %v909 = vpop.permute.xlu0 %908
    %910 = vrot.lane.b32.xlu0 %v905, 94
    %v911 = vpop.permute.xlu0 %910
    %v912 = vrot.slane %v909, 1
    %v913 = vrot.slane %v911, 1
    %v914 = vsel %vm859, %v909, %v912
    %v915 = vsel %vm859, %v911, %v913
    %v918 = vadd.f32 %v832, %v914
    %v919 = vadd.f32 %v833, %v915
    %s920 = scalar_lea.vmem [#allocation2], 1
    %v921 = vld [vmem:[%s920] ss:$4 sm:$0x3]
    %s922 = scalar_lea.vmem [#allocation2], 13
    %v923 = vld [vmem:[%s922] ss:$4 sm:$0x3]
    %v924 = vmul.f32 %v921, %v231
    %v925 = vmul.f32 %v923, %v234
    %s926 = sld [smem:[#allocation9 + $0x9]]
    %v927 = vstv %s926
    %v928 = vmul.f32 %v927, %v924
    %v929 = vmul.f32 %v927, %v925
    %v930 = vadd.f32 %v864, %v928
    %v931 = vadd.f32 %v865, %v929
    %s932 = sld [smem:[#allocation9 + $0x2d]]
    %v933 = vstv %s932
    %v934 = vmul.f32 %v933, %v924
    %v935 = vmul.f32 %v933, %v925
    %v936 = vadd.f32 %v882, %v934
    %v937 = vadd.f32 %v883, %v935
    %s938 = sld [smem:[#allocation9 + $0x51]]
    %v939 = vstv %s938
    %v940 = vmul.f32 %v939, %v924
    %v941 = vmul.f32 %v939, %v925
    %v942 = vadd.f32 %v900, %v940
    %v943 = vadd.f32 %v901, %v941
    %s944 = sld [smem:[#allocation9 + $0x75]]
    %v945 = vstv %s944
    %v946 = vmul.f32 %v945, %v924
    %v947 = vmul.f32 %v945, %v925
    %v948 = vadd.f32 %v918, %v946
    %v949 = vadd.f32 %v919, %v947
    %v950 = vld [vmem:[%s920] ss:$4 sm:$0x7]
    %v951 = vld [vmem:[%s922] ss:$4 sm:$0x7]
    %s952 = sld [smem:[#allocation9 + $0xa]]
    %v953 = vstv %s952
    %v954 = vmul.f32 %v953, %v950
    %v955 = vmul.f32 %v953, %v951
    %958 = vrot.lane.b32.xlu0 %v954, 127
    %v959 = vpop.permute.xlu0 %958
    %960 = vrot.lane.b32.xlu0 %v955, 127
    %v961 = vpop.permute.xlu0 %960
    %v962 = vrot.slane %v959, 1
    %v963 = vrot.slane %v961, 1
    %v964 = vsel %vm277, %v959, %v962
    %v965 = vsel %vm277, %v961, %v963
    %v968 = vadd.f32 %v930, %v964
    %v969 = vadd.f32 %v931, %v965
    %s970 = sld [smem:[#allocation9 + $0x2e]]
    %v971 = vstv %s970
    %v972 = vmul.f32 %v971, %v950
    %v973 = vmul.f32 %v971, %v951
    %976 = vrot.lane.b32.xlu0 %v972, 127
    %v977 = vpop.permute.xlu0 %976
    %978 = vrot.lane.b32.xlu0 %v973, 127
    %v979 = vpop.permute.xlu0 %978
    %v980 = vrot.slane %v977, 1
    %v981 = vrot.slane %v979, 1
    %v982 = vsel %vm277, %v977, %v980
    %v983 = vsel %vm277, %v979, %v981
    %v986 = vadd.f32 %v936, %v982
    %v987 = vadd.f32 %v937, %v983
    %s988 = sld [smem:[#allocation9 + $0x52]]
    %v989 = vstv %s988
    %v990 = vmul.f32 %v989, %v950
    %v991 = vmul.f32 %v989, %v951
    %994 = vrot.lane.b32.xlu0 %v990, 127
    %v995 = vpop.permute.xlu0 %994
    %996 = vrot.lane.b32.xlu0 %v991, 127
    %v997 = vpop.permute.xlu0 %996
    %v998 = vrot.slane %v995, 1
    %v999 = vrot.slane %v997, 1
    %v1000 = vsel %vm277, %v995, %v998
    %v1001 = vsel %vm277, %v997, %v999
    %v1004 = vadd.f32 %v942, %v1000
    %v1005 = vadd.f32 %v943, %v1001
    %s1006 = sld [smem:[#allocation9 + $0x76]]
    %v1007 = vstv %s1006
    %v1008 = vmul.f32 %v1007, %v950
    %v1009 = vmul.f32 %v1007, %v951
    %1012 = vrot.lane.b32.xlu0 %v1008, 127
    %v1013 = vpop.permute.xlu0 %1012
    %1014 = vrot.lane.b32.xlu0 %v1009, 127
    %v1015 = vpop.permute.xlu0 %1014
    %v1016 = vrot.slane %v1013, 1
    %v1017 = vrot.slane %v1015, 1
    %v1018 = vsel %vm277, %v1013, %v1016
    %v1019 = vsel %vm277, %v1015, %v1017
    %v1022 = vadd.f32 %v948, %v1018
    %v1023 = vadd.f32 %v949, %v1019
    %v1024 = vmul.f32 %v950, %v351
    %v1025 = vmul.f32 %v951, %v352
    %s1026 = sld [smem:[#allocation9 + $0xb]]
    %v1027 = vstv %s1026
    %v1028 = vmul.f32 %v1027, %v1024
    %v1029 = vmul.f32 %v1027, %v1025
    %1032 = vrot.lane.b32.xlu0 %v1028, 126
    %v1033 = vpop.permute.xlu0 %1032
    %1034 = vrot.lane.b32.xlu0 %v1029, 126
    %v1035 = vpop.permute.xlu0 %1034
    %v1036 = vrot.slane %v1033, 1
    %v1037 = vrot.slane %v1035, 1
    %v1038 = vsel %vm369, %v1033, %v1036
    %v1039 = vsel %vm369, %v1035, %v1037
    %v1042 = vadd.f32 %v968, %v1038
    %v1043 = vadd.f32 %v969, %v1039
    %s1044 = sld [smem:[#allocation9 + $0x2f]]
    %v1045 = vstv %s1044
    %v1046 = vmul.f32 %v1045, %v1024
    %v1047 = vmul.f32 %v1045, %v1025
    %1050 = vrot.lane.b32.xlu0 %v1046, 126
    %v1051 = vpop.permute.xlu0 %1050
    %1052 = vrot.lane.b32.xlu0 %v1047, 126
    %v1053 = vpop.permute.xlu0 %1052
    %v1054 = vrot.slane %v1051, 1
    %v1055 = vrot.slane %v1053, 1
    %v1056 = vsel %vm369, %v1051, %v1054
    %v1057 = vsel %vm369, %v1053, %v1055
    %v1060 = vadd.f32 %v986, %v1056
    %v1061 = vadd.f32 %v987, %v1057
    %s1062 = sld [smem:[#allocation9 + $0x53]]
    %v1063 = vstv %s1062
    %v1064 = vmul.f32 %v1063, %v1024
    %v1065 = vmul.f32 %v1063, %v1025
    %1068 = vrot.lane.b32.xlu0 %v1064, 126
    %v1069 = vpop.permute.xlu0 %1068
    %1070 = vrot.lane.b32.xlu0 %v1065, 126
    %v1071 = vpop.permute.xlu0 %1070
    %v1072 = vrot.slane %v1069, 1
    %v1073 = vrot.slane %v1071, 1
    %v1074 = vsel %vm369, %v1069, %v1072
    %v1075 = vsel %vm369, %v1071, %v1073
    %v1078 = vadd.f32 %v1004, %v1074
    %v1079 = vadd.f32 %v1005, %v1075
    %s1080 = sld [smem:[#allocation9 + $0x77]]
    %v1081 = vstv %s1080
    %v1082 = vmul.f32 %v1081, %v1024
    %v1083 = vmul.f32 %v1081, %v1025
    %1086 = vrot.lane.b32.xlu0 %v1082, 126
    %v1087 = vpop.permute.xlu0 %1086
    %1088 = vrot.lane.b32.xlu0 %v1083, 126
    %v1089 = vpop.permute.xlu0 %1088
    %v1090 = vrot.slane %v1087, 1
    %v1091 = vrot.slane %v1089, 1
    %v1092 = vsel %vm369, %v1087, %v1090
    %v1093 = vsel %vm369, %v1089, %v1091
    %v1096 = vadd.f32 %v1022, %v1092
    %v1097 = vadd.f32 %v1023, %v1093
    %v1098 = vmul.f32 %v950, %v437
    %v1099 = vmul.f32 %v951, %v438
    %s1100 = sld [smem:[#allocation9 + $0xc]]
    %v1101 = vstv %s1100
    %v1102 = vmul.f32 %v1101, %v1098
    %v1103 = vmul.f32 %v1101, %v1099
    %1106 = vrot.lane.b32.xlu0 %v1102, 112
    %v1107 = vpop.permute.xlu0 %1106
    %1108 = vrot.lane.b32.xlu0 %v1103, 112
    %v1109 = vpop.permute.xlu0 %1108
    %v1110 = vrot.slane %v1107, 1
    %v1111 = vrot.slane %v1109, 1
    %v1112 = vsel %vm455, %v1107, %v1110
    %v1113 = vsel %vm455, %v1109, %v1111
    %v1116 = vadd.f32 %v1042, %v1112
    %v1117 = vadd.f32 %v1043, %v1113
    %s1118 = sld [smem:[#allocation9 + $0x30]]
    %v1119 = vstv %s1118
    %v1120 = vmul.f32 %v1119, %v1098
    %v1121 = vmul.f32 %v1119, %v1099
    %1124 = vrot.lane.b32.xlu0 %v1120, 112
    %v1125 = vpop.permute.xlu0 %1124
    %1126 = vrot.lane.b32.xlu0 %v1121, 112
    %v1127 = vpop.permute.xlu0 %1126
    %v1128 = vrot.slane %v1125, 1
    %v1129 = vrot.slane %v1127, 1
    %v1130 = vsel %vm455, %v1125, %v1128
    %v1131 = vsel %vm455, %v1127, %v1129
    %v1134 = vadd.f32 %v1060, %v1130
    %v1135 = vadd.f32 %v1061, %v1131
    %s1136 = sld [smem:[#allocation9 + $0x54]]
    %v1137 = vstv %s1136
    %v1138 = vmul.f32 %v1137, %v1098
    %v1139 = vmul.f32 %v1137, %v1099
    %1142 = vrot.lane.b32.xlu0 %v1138, 112
    %v1143 = vpop.permute.xlu0 %1142
    %1144 = vrot.lane.b32.xlu0 %v1139, 112
    %v1145 = vpop.permute.xlu0 %1144
    %v1146 = vrot.slane %v1143, 1
    %v1147 = vrot.slane %v1145, 1
    %v1148 = vsel %vm455, %v1143, %v1146
    %v1149 = vsel %vm455, %v1145, %v1147
    %v1152 = vadd.f32 %v1078, %v1148
    %v1153 = vadd.f32 %v1079, %v1149
    %s1154 = sld [smem:[#allocation9 + $0x78]]
    %v1155 = vstv %s1154
    %v1156 = vmul.f32 %v1155, %v1098
    %v1157 = vmul.f32 %v1155, %v1099
    %1160 = vrot.lane.b32.xlu0 %v1156, 112
    %v1161 = vpop.permute.xlu0 %1160
    %1162 = vrot.lane.b32.xlu0 %v1157, 112
    %v1163 = vpop.permute.xlu0 %1162
    %v1164 = vrot.slane %v1161, 1
    %v1165 = vrot.slane %v1163, 1
    %v1166 = vsel %vm455, %v1161, %v1164
    %v1167 = vsel %vm455, %v1163, %v1165
    %v1170 = vadd.f32 %v1096, %v1166
    %v1171 = vadd.f32 %v1097, %v1167
    %s1172 = sld [smem:[#allocation9 + $0xd]]
    %v1173 = vstv %s1172
    %v1174 = vmul.f32 %v1173, %v950
    %v1175 = vmul.f32 %v1173, %v951
    %1178 = vrot.lane.b32.xlu0 %v1174, 111
    %v1179 = vpop.permute.xlu0 %1178
    %1180 = vrot.lane.b32.xlu0 %v1175, 111
    %v1181 = vpop.permute.xlu0 %1180
    %v1182 = vrot.slane %v1179, 1
    %v1183 = vrot.slane %v1181, 1
    %v1184 = vsel %vm528, %v1179, %v1182
    %v1185 = vsel %vm528, %v1181, %v1183
    %v1188 = vadd.f32 %v1116, %v1184
    %v1189 = vadd.f32 %v1117, %v1185
    %s1190 = sld [smem:[#allocation9 + $0x31]]
    %v1191 = vstv %s1190
    %v1192 = vmul.f32 %v1191, %v950
    %v1193 = vmul.f32 %v1191, %v951
    %1196 = vrot.lane.b32.xlu0 %v1192, 111
    %v1197 = vpop.permute.xlu0 %1196
    %1198 = vrot.lane.b32.xlu0 %v1193, 111
    %v1199 = vpop.permute.xlu0 %1198
    %v1200 = vrot.slane %v1197, 1
    %v1201 = vrot.slane %v1199, 1
    %v1202 = vsel %vm528, %v1197, %v1200
    %v1203 = vsel %vm528, %v1199, %v1201
    %v1206 = vadd.f32 %v1134, %v1202
    %v1207 = vadd.f32 %v1135, %v1203
    %s1208 = sld [smem:[#allocation9 + $0x55]]
    %v1209 = vstv %s1208
    %v1210 = vmul.f32 %v1209, %v950
    %v1211 = vmul.f32 %v1209, %v951
    %1214 = vrot.lane.b32.xlu0 %v1210, 111
    %v1215 = vpop.permute.xlu0 %1214
    %1216 = vrot.lane.b32.xlu0 %v1211, 111
    %v1217 = vpop.permute.xlu0 %1216
    %v1218 = vrot.slane %v1215, 1
    %v1219 = vrot.slane %v1217, 1
    %v1220 = vsel %vm528, %v1215, %v1218
    %v1221 = vsel %vm528, %v1217, %v1219
    %v1224 = vadd.f32 %v1152, %v1220
    %v1225 = vadd.f32 %v1153, %v1221
    %s1226 = sld [smem:[#allocation9 + $0x79]]
    %v1227 = vstv %s1226
    %v1228 = vmul.f32 %v1227, %v950
    %v1229 = vmul.f32 %v1227, %v951
    %1232 = vrot.lane.b32.xlu0 %v1228, 111
    %v1233 = vpop.permute.xlu0 %1232
    %1234 = vrot.lane.b32.xlu0 %v1229, 111
    %v1235 = vpop.permute.xlu0 %1234
    %v1236 = vrot.slane %v1233, 1
    %v1237 = vrot.slane %v1235, 1
    %v1238 = vsel %vm528, %v1233, %v1236
    %v1239 = vsel %vm528, %v1235, %v1237
    %v1242 = vadd.f32 %v1170, %v1238
    %v1243 = vadd.f32 %v1171, %v1239
    %v1244 = vmul.f32 %v950, %v596
    %v1245 = vmul.f32 %v951, %v597
    %s1246 = sld [smem:[#allocation9 + $0xe]]
    %v1247 = vstv %s1246
    %v1248 = vmul.f32 %v1247, %v1244
    %v1249 = vmul.f32 %v1247, %v1245
    %1252 = vrot.lane.b32.xlu0 %v1248, 110
    %v1253 = vpop.permute.xlu0 %1252
    %1254 = vrot.lane.b32.xlu0 %v1249, 110
    %v1255 = vpop.permute.xlu0 %1254
    %v1256 = vrot.slane %v1253, 1
    %v1257 = vrot.slane %v1255, 1
    %v1258 = vsel %vm614, %v1253, %v1256
    %v1259 = vsel %vm614, %v1255, %v1257
    %v1262 = vadd.f32 %v1188, %v1258
    %v1263 = vadd.f32 %v1189, %v1259
    %s1264 = sld [smem:[#allocation9 + $0x32]]
    %v1265 = vstv %s1264
    %v1266 = vmul.f32 %v1265, %v1244
    %v1267 = vmul.f32 %v1265, %v1245
    %1270 = vrot.lane.b32.xlu0 %v1266, 110
    %v1271 = vpop.permute.xlu0 %1270
    %1272 = vrot.lane.b32.xlu0 %v1267, 110
    %v1273 = vpop.permute.xlu0 %1272
    %v1274 = vrot.slane %v1271, 1
    %v1275 = vrot.slane %v1273, 1
    %v1276 = vsel %vm614, %v1271, %v1274
    %v1277 = vsel %vm614, %v1273, %v1275
    %v1280 = vadd.f32 %v1206, %v1276
    %v1281 = vadd.f32 %v1207, %v1277
    %s1282 = sld [smem:[#allocation9 + $0x56]]
    %v1283 = vstv %s1282
    %v1284 = vmul.f32 %v1283, %v1244
    %v1285 = vmul.f32 %v1283, %v1245
    %1288 = vrot.lane.b32.xlu0 %v1284, 110
    %v1289 = vpop.permute.xlu0 %1288
    %1290 = vrot.lane.b32.xlu0 %v1285, 110
    %v1291 = vpop.permute.xlu0 %1290
    %v1292 = vrot.slane %v1289, 1
    %v1293 = vrot.slane %v1291, 1
    %v1294 = vsel %vm614, %v1289, %v1292
    %v1295 = vsel %vm614, %v1291, %v1293
    %v1298 = vadd.f32 %v1224, %v1294
    %v1299 = vadd.f32 %v1225, %v1295
    %s1300 = sld [smem:[#allocation9 + $0x7a]]
    %v1301 = vstv %s1300
    %v1302 = vmul.f32 %v1301, %v1244
    %v1303 = vmul.f32 %v1301, %v1245
    %1306 = vrot.lane.b32.xlu0 %v1302, 110
    %v1307 = vpop.permute.xlu0 %1306
    %1308 = vrot.lane.b32.xlu0 %v1303, 110
    %v1309 = vpop.permute.xlu0 %1308
    %v1310 = vrot.slane %v1307, 1
    %v1311 = vrot.slane %v1309, 1
    %v1312 = vsel %vm614, %v1307, %v1310
    %v1313 = vsel %vm614, %v1309, %v1311
    %v1316 = vadd.f32 %v1242, %v1312
    %v1317 = vadd.f32 %v1243, %v1313
    %v1318 = vmul.f32 %v950, %v682
    %v1319 = vmul.f32 %v951, %v683
    %s1320 = sld [smem:[#allocation9 + $0xf]]
    %v1321 = vstv %s1320
    %v1322 = vmul.f32 %v1321, %v1318
    %v1323 = vmul.f32 %v1321, %v1319
    %1326 = vrot.lane.b32.xlu0 %v1322, 96
    %v1327 = vpop.permute.xlu0 %1326
    %1328 = vrot.lane.b32.xlu0 %v1323, 96
    %v1329 = vpop.permute.xlu0 %1328
    %v1330 = vrot.slane %v1327, 1
    %v1331 = vrot.slane %v1329, 1
    %v1332 = vsel %vm700, %v1327, %v1330
    %v1333 = vsel %vm700, %v1329, %v1331
    %v1336 = vadd.f32 %v1262, %v1332
    %v1337 = vadd.f32 %v1263, %v1333
    %s1338 = sld [smem:[#allocation9 + $0x33]]
    %v1339 = vstv %s1338
    %v1340 = vmul.f32 %v1339, %v1318
    %v1341 = vmul.f32 %v1339, %v1319
    %1344 = vrot.lane.b32.xlu0 %v1340, 96
    %v1345 = vpop.permute.xlu0 %1344
    %1346 = vrot.lane.b32.xlu0 %v1341, 96
    %v1347 = vpop.permute.xlu0 %1346
    %v1348 = vrot.slane %v1345, 1
    %v1349 = vrot.slane %v1347, 1
    %v1350 = vsel %vm700, %v1345, %v1348
    %v1351 = vsel %vm700, %v1347, %v1349
    %v1354 = vadd.f32 %v1280, %v1350
    %v1355 = vadd.f32 %v1281, %v1351
    %s1356 = sld [smem:[#allocation9 + $0x57]]
    %v1357 = vstv %s1356
    %v1358 = vmul.f32 %v1357, %v1318
    %v1359 = vmul.f32 %v1357, %v1319
    %1362 = vrot.lane.b32.xlu0 %v1358, 96
    %v1363 = vpop.permute.xlu0 %1362
    %1364 = vrot.lane.b32.xlu0 %v1359, 96
    %v1365 = vpop.permute.xlu0 %1364
    %v1366 = vrot.slane %v1363, 1
    %v1367 = vrot.slane %v1365, 1
    %v1368 = vsel %vm700, %v1363, %v1366
    %v1369 = vsel %vm700, %v1365, %v1367
    %v1372 = vadd.f32 %v1298, %v1368
    %v1373 = vadd.f32 %v1299, %v1369
    %s1374 = sld [smem:[#allocation9 + $0x7b]]
    %v1375 = vstv %s1374
    %v1376 = vmul.f32 %v1375, %v1318
    %v1377 = vmul.f32 %v1375, %v1319
    %1380 = vrot.lane.b32.xlu0 %v1376, 96
    %v1381 = vpop.permute.xlu0 %1380
    %1382 = vrot.lane.b32.xlu0 %v1377, 96
    %v1383 = vpop.permute.xlu0 %1382
    %v1384 = vrot.slane %v1381, 1
    %v1385 = vrot.slane %v1383, 1
    %v1386 = vsel %vm700, %v1381, %v1384
    %v1387 = vsel %vm700, %v1383, %v1385
    %v1390 = vadd.f32 %v1316, %v1386
    %v1391 = vadd.f32 %v1317, %v1387
    %s1392 = sld [smem:[#allocation9 + $0x10]]
    %v1393 = vstv %s1392
    %v1394 = vmul.f32 %v1393, %v950
    %v1395 = vmul.f32 %v1393, %v951
    %1398 = vrot.lane.b32.xlu0 %v1394, 95
    %v1399 = vpop.permute.xlu0 %1398
    %1400 = vrot.lane.b32.xlu0 %v1395, 95
    %v1401 = vpop.permute.xlu0 %1400
    %v1402 = vrot.slane %v1399, 1
    %v1403 = vrot.slane %v1401, 1
    %v1404 = vsel %vm773, %v1399, %v1402
    %v1405 = vsel %vm773, %v1401, %v1403
    %v1408 = vadd.f32 %v1336, %v1404
    %v1409 = vadd.f32 %v1337, %v1405
    %s1410 = sld [smem:[#allocation9 + $0x34]]
    %v1411 = vstv %s1410
    %v1412 = vmul.f32 %v1411, %v950
    %v1413 = vmul.f32 %v1411, %v951
    %1416 = vrot.lane.b32.xlu0 %v1412, 95
    %v1417 = vpop.permute.xlu0 %1416
    %1418 = vrot.lane.b32.xlu0 %v1413, 95
    %v1419 = vpop.permute.xlu0 %1418
    %v1420 = vrot.slane %v1417, 1
    %v1421 = vrot.slane %v1419, 1
    %v1422 = vsel %vm773, %v1417, %v1420
    %v1423 = vsel %vm773, %v1419, %v1421
    %v1426 = vadd.f32 %v1354, %v1422
    %v1427 = vadd.f32 %v1355, %v1423
    %s1428 = sld [smem:[#allocation9 + $0x58]]
    %v1429 = vstv %s1428
    %v1430 = vmul.f32 %v1429, %v950
    %v1431 = vmul.f32 %v1429, %v951
    %1434 = vrot.lane.b32.xlu0 %v1430, 95
    %v1435 = vpop.permute.xlu0 %1434
    %1436 = vrot.lane.b32.xlu0 %v1431, 95
    %v1437 = vpop.permute.xlu0 %1436
    %v1438 = vrot.slane %v1435, 1
    %v1439 = vrot.slane %v1437, 1
    %v1440 = vsel %vm773, %v1435, %v1438
    %v1441 = vsel %vm773, %v1437, %v1439
    %v1444 = vadd.f32 %v1372, %v1440
    %v1445 = vadd.f32 %v1373, %v1441
    %s1446 = sld [smem:[#allocation9 + $0x7c]]
    %v1447 = vstv %s1446
    %v1448 = vmul.f32 %v1447, %v950
    %v1449 = vmul.f32 %v1447, %v951
    %1452 = vrot.lane.b32.xlu0 %v1448, 95
    %v1453 = vpop.permute.xlu0 %1452
    %1454 = vrot.lane.b32.xlu0 %v1449, 95
    %v1455 = vpop.permute.xlu0 %1454
    %v1456 = vrot.slane %v1453, 1
    %v1457 = vrot.slane %v1455, 1
    %v1458 = vsel %vm773, %v1453, %v1456
    %v1459 = vsel %vm773, %v1455, %v1457
    %v1462 = vadd.f32 %v1390, %v1458
    %v1463 = vadd.f32 %v1391, %v1459
    %v1464 = vmul.f32 %v950, %v841
    %v1465 = vmul.f32 %v951, %v842
    %s1466 = sld [smem:[#allocation9 + $0x11]]
    %v1467 = vstv %s1466
    %v1468 = vmul.f32 %v1467, %v1464
    %v1469 = vmul.f32 %v1467, %v1465
    %1472 = vrot.lane.b32.xlu0 %v1468, 94
    %v1473 = vpop.permute.xlu0 %1472
    %1474 = vrot.lane.b32.xlu0 %v1469, 94
    %v1475 = vpop.permute.xlu0 %1474
    %v1476 = vrot.slane %v1473, 1
    %v1477 = vrot.slane %v1475, 1
    %v1478 = vsel %vm859, %v1473, %v1476
    %v1479 = vsel %vm859, %v1475, %v1477
    %v1482 = vadd.f32 %v1408, %v1478
    %v1483 = vadd.f32 %v1409, %v1479
    %s1484 = sld [smem:[#allocation9 + $0x35]]
    %v1485 = vstv %s1484
    %v1486 = vmul.f32 %v1485, %v1464
    %v1487 = vmul.f32 %v1485, %v1465
    %1490 = vrot.lane.b32.xlu0 %v1486, 94
    %v1491 = vpop.permute.xlu0 %1490
    %1492 = vrot.lane.b32.xlu0 %v1487, 94
    %v1493 = vpop.permute.xlu0 %1492
    %v1494 = vrot.slane %v1491, 1
    %v1495 = vrot.slane %v1493, 1
    %v1496 = vsel %vm859, %v1491, %v1494
    %v1497 = vsel %vm859, %v1493, %v1495
    %v1500 = vadd.f32 %v1426, %v1496
    %v1501 = vadd.f32 %v1427, %v1497
    %s1502 = sld [smem:[#allocation9 + $0x59]]
    %v1503 = vstv %s1502
    %v1504 = vmul.f32 %v1503, %v1464
    %v1505 = vmul.f32 %v1503, %v1465
    %1508 = vrot.lane.b32.xlu0 %v1504, 94
    %v1509 = vpop.permute.xlu0 %1508
    %1510 = vrot.lane.b32.xlu0 %v1505, 94
    %v1511 = vpop.permute.xlu0 %1510
    %v1512 = vrot.slane %v1509, 1
    %v1513 = vrot.slane %v1511, 1
    %v1514 = vsel %vm859, %v1509, %v1512
    %v1515 = vsel %vm859, %v1511, %v1513
    %v1518 = vadd.f32 %v1444, %v1514
    %v1519 = vadd.f32 %v1445, %v1515
    %s1520 = sld [smem:[#allocation9 + $0x7d]]
    %v1521 = vstv %s1520
    %v1522 = vmul.f32 %v1521, %v1464
    %v1523 = vmul.f32 %v1521, %v1465
    %1526 = vrot.lane.b32.xlu0 %v1522, 94
    %v1527 = vpop.permute.xlu0 %1526
    %1528 = vrot.lane.b32.xlu0 %v1523, 94
    %v1529 = vpop.permute.xlu0 %1528
    %v1530 = vrot.slane %v1527, 1
    %v1531 = vrot.slane %v1529, 1
    %v1532 = vsel %vm859, %v1527, %v1530
    %v1533 = vsel %vm859, %v1529, %v1531
    %v1536 = vadd.f32 %v1462, %v1532
    %v1537 = vadd.f32 %v1463, %v1533
    %s1538 = scalar_lea.vmem [#allocation2], 2
    %v1539 = vld [vmem:[%s1538] ss:$4 sm:$0x3]
    %s1540 = scalar_lea.vmem [#allocation2], 14
    %v1541 = vld [vmem:[%s1540] ss:$4 sm:$0x3]
    %v1542 = vmul.f32 %v1539, %v231
    %v1543 = vmul.f32 %v1541, %v234
    %s1544 = sld [smem:[#allocation9 + $0x12]]
    %v1545 = vstv %s1544
    %v1546 = vmul.f32 %v1545, %v1542
    %v1547 = vmul.f32 %v1545, %v1543
    %v1548 = vadd.f32 %v1482, %v1546
    %v1549 = vadd.f32 %v1483, %v1547
    %s1550 = sld [smem:[#allocation9 + $0x36]]
    %v1551 = vstv %s1550
    %v1552 = vmul.f32 %v1551, %v1542
    %v1553 = vmul.f32 %v1551, %v1543
    %v1554 = vadd.f32 %v1500, %v1552
    %v1555 = vadd.f32 %v1501, %v1553
    %s1556 = sld [smem:[#allocation9 + $0x5a]]
    %v1557 = vstv %s1556
    %v1558 = vmul.f32 %v1557, %v1542
    %v1559 = vmul.f32 %v1557, %v1543
    %v1560 = vadd.f32 %v1518, %v1558
    %v1561 = vadd.f32 %v1519, %v1559
    %s1562 = sld [smem:[#allocation9 + $0x7e]]
    %v1563 = vstv %s1562
    %v1564 = vmul.f32 %v1563, %v1542
    %v1565 = vmul.f32 %v1563, %v1543
    %v1566 = vadd.f32 %v1536, %v1564
    %v1567 = vadd.f32 %v1537, %v1565
    %v1568 = vld [vmem:[%s1538] ss:$4 sm:$0x7]
    %v1569 = vld [vmem:[%s1540] ss:$4 sm:$0x7]
    %s1570 = sld [smem:[#allocation9 + $0x13]]
    %v1571 = vstv %s1570
    %v1572 = vmul.f32 %v1571, %v1568
    %v1573 = vmul.f32 %v1571, %v1569
    %1576 = vrot.lane.b32.xlu0 %v1572, 127
    %v1577 = vpop.permute.xlu0 %1576
    %1578 = vrot.lane.b32.xlu0 %v1573, 127
    %v1579 = vpop.permute.xlu0 %1578
    %v1580 = vrot.slane %v1577, 1
    %v1581 = vrot.slane %v1579, 1
    %v1582 = vsel %vm277, %v1577, %v1580
    %v1583 = vsel %vm277, %v1579, %v1581
    %v1586 = vadd.f32 %v1548, %v1582
    %v1587 = vadd.f32 %v1549, %v1583
    %s1588 = sld [smem:[#allocation9 + $0x37]]
    %v1589 = vstv %s1588
    %v1590 = vmul.f32 %v1589, %v1568
    %v1591 = vmul.f32 %v1589, %v1569
    %1594 = vrot.lane.b32.xlu0 %v1590, 127
    %v1595 = vpop.permute.xlu0 %1594
    %1596 = vrot.lane.b32.xlu0 %v1591, 127
    %v1597 = vpop.permute.xlu0 %1596
    %v1598 = vrot.slane %v1595, 1
    %v1599 = vrot.slane %v1597, 1
    %v1600 = vsel %vm277, %v1595, %v1598
    %v1601 = vsel %vm277, %v1597, %v1599
    %v1604 = vadd.f32 %v1554, %v1600
    %v1605 = vadd.f32 %v1555, %v1601
    %s1606 = sld [smem:[#allocation9 + $0x5b]]
    %v1607 = vstv %s1606
    %v1608 = vmul.f32 %v1607, %v1568
    %v1609 = vmul.f32 %v1607, %v1569
    %1612 = vrot.lane.b32.xlu0 %v1608, 127
    %v1613 = vpop.permute.xlu0 %1612
    %1614 = vrot.lane.b32.xlu0 %v1609, 127
    %v1615 = vpop.permute.xlu0 %1614
    %v1616 = vrot.slane %v1613, 1
    %v1617 = vrot.slane %v1615, 1
    %v1618 = vsel %vm277, %v1613, %v1616
    %v1619 = vsel %vm277, %v1615, %v1617
    %v1622 = vadd.f32 %v1560, %v1618
    %v1623 = vadd.f32 %v1561, %v1619
    %s1624 = sld [smem:[#allocation9 + $0x7f]]
    %v1625 = vstv %s1624
    %v1626 = vmul.f32 %v1625, %v1568
    %v1627 = vmul.f32 %v1625, %v1569
    %1630 = vrot.lane.b32.xlu0 %v1626, 127
    %v1631 = vpop.permute.xlu0 %1630
    %1632 = vrot.lane.b32.xlu0 %v1627, 127
    %v1633 = vpop.permute.xlu0 %1632
    %v1634 = vrot.slane %v1631, 1
    %v1635 = vrot.slane %v1633, 1
    %v1636 = vsel %vm277, %v1631, %v1634
    %v1637 = vsel %vm277, %v1633, %v1635
    %v1640 = vadd.f32 %v1566, %v1636
    %v1641 = vadd.f32 %v1567, %v1637
    %v1642 = vmul.f32 %v1568, %v351
    %v1643 = vmul.f32 %v1569, %v352
    %s1644 = sld [smem:[#allocation9 + $0x14]]
    %v1645 = vstv %s1644
    %v1646 = vmul.f32 %v1645, %v1642
    %v1647 = vmul.f32 %v1645, %v1643
    %1650 = vrot.lane.b32.xlu0 %v1646, 126
    %v1651 = vpop.permute.xlu0 %1650
    %1652 = vrot.lane.b32.xlu0 %v1647, 126
    %v1653 = vpop.permute.xlu0 %1652
    %v1654 = vrot.slane %v1651, 1
    %v1655 = vrot.slane %v1653, 1
    %v1656 = vsel %vm369, %v1651, %v1654
    %v1657 = vsel %vm369, %v1653, %v1655
    %v1660 = vadd.f32 %v1586, %v1656
    %v1661 = vadd.f32 %v1587, %v1657
    %s1662 = sld [smem:[#allocation9 + $0x38]]
    %v1663 = vstv %s1662
    %v1664 = vmul.f32 %v1663, %v1642
    %v1665 = vmul.f32 %v1663, %v1643
    %1668 = vrot.lane.b32.xlu0 %v1664, 126
    %v1669 = vpop.permute.xlu0 %1668
    %1670 = vrot.lane.b32.xlu0 %v1665, 126
    %v1671 = vpop.permute.xlu0 %1670
    %v1672 = vrot.slane %v1669, 1
    %v1673 = vrot.slane %v1671, 1
    %v1674 = vsel %vm369, %v1669, %v1672
    %v1675 = vsel %vm369, %v1671, %v1673
    %v1678 = vadd.f32 %v1604, %v1674
    %v1679 = vadd.f32 %v1605, %v1675
    %s1680 = sld [smem:[#allocation9 + $0x5c]]
    %v1681 = vstv %s1680
    %v1682 = vmul.f32 %v1681, %v1642
    %v1683 = vmul.f32 %v1681, %v1643
    %1686 = vrot.lane.b32.xlu0 %v1682, 126
    %v1687 = vpop.permute.xlu0 %1686
    %1688 = vrot.lane.b32.xlu0 %v1683, 126
    %v1689 = vpop.permute.xlu0 %1688
    %v1690 = vrot.slane %v1687, 1
    %v1691 = vrot.slane %v1689, 1
    %v1692 = vsel %vm369, %v1687, %v1690
    %v1693 = vsel %vm369, %v1689, %v1691
    %v1696 = vadd.f32 %v1622, %v1692
    %v1697 = vadd.f32 %v1623, %v1693
    %s1698 = sld [smem:[#allocation9 + $0x80]]
    %v1699 = vstv %s1698
    %v1700 = vmul.f32 %v1699, %v1642
    %v1701 = vmul.f32 %v1699, %v1643
    %1704 = vrot.lane.b32.xlu0 %v1700, 126
    %v1705 = vpop.permute.xlu0 %1704
    %1706 = vrot.lane.b32.xlu0 %v1701, 126
    %v1707 = vpop.permute.xlu0 %1706
    %v1708 = vrot.slane %v1705, 1
    %v1709 = vrot.slane %v1707, 1
    %v1710 = vsel %vm369, %v1705, %v1708
    %v1711 = vsel %vm369, %v1707, %v1709
    %v1714 = vadd.f32 %v1640, %v1710
    %v1715 = vadd.f32 %v1641, %v1711
    %v1716 = vmul.f32 %v1568, %v437
    %v1717 = vmul.f32 %v1569, %v438
    %s1718 = sld [smem:[#allocation9 + $0x15]]
    %v1719 = vstv %s1718
    %v1720 = vmul.f32 %v1719, %v1716
    %v1721 = vmul.f32 %v1719, %v1717
    %1724 = vrot.lane.b32.xlu0 %v1720, 112
    %v1725 = vpop.permute.xlu0 %1724
    %1726 = vrot.lane.b32.xlu0 %v1721, 112
    %v1727 = vpop.permute.xlu0 %1726
    %v1728 = vrot.slane %v1725, 1
    %v1729 = vrot.slane %v1727, 1
    %v1730 = vsel %vm455, %v1725, %v1728
    %v1731 = vsel %vm455, %v1727, %v1729
    %v1734 = vadd.f32 %v1660, %v1730
    %v1735 = vadd.f32 %v1661, %v1731
    %s1736 = sld [smem:[#allocation9 + $0x39]]
    %v1737 = vstv %s1736
    %v1738 = vmul.f32 %v1737, %v1716
    %v1739 = vmul.f32 %v1737, %v1717
    %1742 = vrot.lane.b32.xlu0 %v1738, 112
    %v1743 = vpop.permute.xlu0 %1742
    %1744 = vrot.lane.b32.xlu0 %v1739, 112
    %v1745 = vpop.permute.xlu0 %1744
    %v1746 = vrot.slane %v1743, 1
    %v1747 = vrot.slane %v1745, 1
    %v1748 = vsel %vm455, %v1743, %v1746
    %v1749 = vsel %vm455, %v1745, %v1747
    %v1752 = vadd.f32 %v1678, %v1748
    %v1753 = vadd.f32 %v1679, %v1749
    %s1754 = sld [smem:[#allocation9 + $0x5d]]
    %v1755 = vstv %s1754
    %v1756 = vmul.f32 %v1755, %v1716
    %v1757 = vmul.f32 %v1755, %v1717
    %1760 = vrot.lane.b32.xlu0 %v1756, 112
    %v1761 = vpop.permute.xlu0 %1760
    %1762 = vrot.lane.b32.xlu0 %v1757, 112
    %v1763 = vpop.permute.xlu0 %1762
    %v1764 = vrot.slane %v1761, 1
    %v1765 = vrot.slane %v1763, 1
    %v1766 = vsel %vm455, %v1761, %v1764
    %v1767 = vsel %vm455, %v1763, %v1765
    %v1770 = vadd.f32 %v1696, %v1766
    %v1771 = vadd.f32 %v1697, %v1767
    %s1772 = sld [smem:[#allocation9 + $0x81]]
    %v1773 = vstv %s1772
    %v1774 = vmul.f32 %v1773, %v1716
    %v1775 = vmul.f32 %v1773, %v1717
    %1778 = vrot.lane.b32.xlu0 %v1774, 112
    %v1779 = vpop.permute.xlu0 %1778
    %1780 = vrot.lane.b32.xlu0 %v1775, 112
    %v1781 = vpop.permute.xlu0 %1780
    %v1782 = vrot.slane %v1779, 1
    %v1783 = vrot.slane %v1781, 1
    %v1784 = vsel %vm455, %v1779, %v1782
    %v1785 = vsel %vm455, %v1781, %v1783
    %v1788 = vadd.f32 %v1714, %v1784
    %v1789 = vadd.f32 %v1715, %v1785
    %s1790 = sld [smem:[#allocation9 + $0x16]]
    %v1791 = vstv %s1790
    %v1792 = vmul.f32 %v1791, %v1568
    %v1793 = vmul.f32 %v1791, %v1569
    %1796 = vrot.lane.b32.xlu0 %v1792, 111
    %v1797 = vpop.permute.xlu0 %1796
    %1798 = vrot.lane.b32.xlu0 %v1793, 111
    %v1799 = vpop.permute.xlu0 %1798
    %v1800 = vrot.slane %v1797, 1
    %v1801 = vrot.slane %v1799, 1
    %v1802 = vsel %vm528, %v1797, %v1800
    %v1803 = vsel %vm528, %v1799, %v1801
    %v1806 = vadd.f32 %v1734, %v1802
    %v1807 = vadd.f32 %v1735, %v1803
    %s1808 = sld [smem:[#allocation9 + $0x3a]]
    %v1809 = vstv %s1808
    %v1810 = vmul.f32 %v1809, %v1568
    %v1811 = vmul.f32 %v1809, %v1569
    %1814 = vrot.lane.b32.xlu0 %v1810, 111
    %v1815 = vpop.permute.xlu0 %1814
    %1816 = vrot.lane.b32.xlu0 %v1811, 111
    %v1817 = vpop.permute.xlu0 %1816
    %v1818 = vrot.slane %v1815, 1
    %v1819 = vrot.slane %v1817, 1
    %v1820 = vsel %vm528, %v1815, %v1818
    %v1821 = vsel %vm528, %v1817, %v1819
    %v1824 = vadd.f32 %v1752, %v1820
    %v1825 = vadd.f32 %v1753, %v1821
    %s1826 = sld [smem:[#allocation9 + $0x5e]]
    %v1827 = vstv %s1826
    %v1828 = vmul.f32 %v1827, %v1568
    %v1829 = vmul.f32 %v1827, %v1569
    %1832 = vrot.lane.b32.xlu0 %v1828, 111
    %v1833 = vpop.permute.xlu0 %1832
    %1834 = vrot.lane.b32.xlu0 %v1829, 111
    %v1835 = vpop.permute.xlu0 %1834
    %v1836 = vrot.slane %v1833, 1
    %v1837 = vrot.slane %v1835, 1
    %v1838 = vsel %vm528, %v1833, %v1836
    %v1839 = vsel %vm528, %v1835, %v1837
    %v1842 = vadd.f32 %v1770, %v1838
    %v1843 = vadd.f32 %v1771, %v1839
    %s1844 = sld [smem:[#allocation9 + $0x82]]
    %v1845 = vstv %s1844
    %v1846 = vmul.f32 %v1845, %v1568
    %v1847 = vmul.f32 %v1845, %v1569
    %1850 = vrot.lane.b32.xlu0 %v1846, 111
    %v1851 = vpop.permute.xlu0 %1850
    %1852 = vrot.lane.b32.xlu0 %v1847, 111
    %v1853 = vpop.permute.xlu0 %1852
    %v1854 = vrot.slane %v1851, 1
    %v1855 = vrot.slane %v1853, 1
    %v1856 = vsel %vm528, %v1851, %v1854
    %v1857 = vsel %vm528, %v1853, %v1855
    %v1860 = vadd.f32 %v1788, %v1856
    %v1861 = vadd.f32 %v1789, %v1857
    %v1862 = vmul.f32 %v1568, %v596
    %v1863 = vmul.f32 %v1569, %v597
    %s1864 = sld [smem:[#allocation9 + $0x17]]
    %v1865 = vstv %s1864
    %v1866 = vmul.f32 %v1865, %v1862
    %v1867 = vmul.f32 %v1865, %v1863
    %1870 = vrot.lane.b32.xlu0 %v1866, 110
    %v1871 = vpop.permute.xlu0 %1870
    %1872 = vrot.lane.b32.xlu0 %v1867, 110
    %v1873 = vpop.permute.xlu0 %1872
    %v1874 = vrot.slane %v1871, 1
    %v1875 = vrot.slane %v1873, 1
    %v1876 = vsel %vm614, %v1871, %v1874
    %v1877 = vsel %vm614, %v1873, %v1875
    %v1880 = vadd.f32 %v1806, %v1876
    %v1881 = vadd.f32 %v1807, %v1877
    %s1882 = sld [smem:[#allocation9 + $0x3b]]
    %v1883 = vstv %s1882
    %v1884 = vmul.f32 %v1883, %v1862
    %v1885 = vmul.f32 %v1883, %v1863
    %1888 = vrot.lane.b32.xlu0 %v1884, 110
    %v1889 = vpop.permute.xlu0 %1888
    %1890 = vrot.lane.b32.xlu0 %v1885, 110
    %v1891 = vpop.permute.xlu0 %1890
    %v1892 = vrot.slane %v1889, 1
    %v1893 = vrot.slane %v1891, 1
    %v1894 = vsel %vm614, %v1889, %v1892
    %v1895 = vsel %vm614, %v1891, %v1893
    %v1898 = vadd.f32 %v1824, %v1894
    %v1899 = vadd.f32 %v1825, %v1895
    %s1900 = sld [smem:[#allocation9 + $0x5f]]
    %v1901 = vstv %s1900
    %v1902 = vmul.f32 %v1901, %v1862
    %v1903 = vmul.f32 %v1901, %v1863
    %1906 = vrot.lane.b32.xlu0 %v1902, 110
    %v1907 = vpop.permute.xlu0 %1906
    %1908 = vrot.lane.b32.xlu0 %v1903, 110
    %v1909 = vpop.permute.xlu0 %1908
    %v1910 = vrot.slane %v1907, 1
    %v1911 = vrot.slane %v1909, 1
    %v1912 = vsel %vm614, %v1907, %v1910
    %v1913 = vsel %vm614, %v1909, %v1911
    %v1916 = vadd.f32 %v1842, %v1912
    %v1917 = vadd.f32 %v1843, %v1913
    %s1918 = sld [smem:[#allocation9 + $0x83]]
    %v1919 = vstv %s1918
    %v1920 = vmul.f32 %v1919, %v1862
    %v1921 = vmul.f32 %v1919, %v1863
    %1924 = vrot.lane.b32.xlu0 %v1920, 110
    %v1925 = vpop.permute.xlu0 %1924
    %1926 = vrot.lane.b32.xlu0 %v1921, 110
    %v1927 = vpop.permute.xlu0 %1926
    %v1928 = vrot.slane %v1925, 1
    %v1929 = vrot.slane %v1927, 1
    %v1930 = vsel %vm614, %v1925, %v1928
    %v1931 = vsel %vm614, %v1927, %v1929
    %v1934 = vadd.f32 %v1860, %v1930
    %v1935 = vadd.f32 %v1861, %v1931
    %v1936 = vmul.f32 %v1568, %v682
    %v1937 = vmul.f32 %v1569, %v683
    %s1938 = sld [smem:[#allocation9 + $0x18]]
    %v1939 = vstv %s1938
    %v1940 = vmul.f32 %v1939, %v1936
    %v1941 = vmul.f32 %v1939, %v1937
    %1944 = vrot.lane.b32.xlu0 %v1940, 96
    %v1945 = vpop.permute.xlu0 %1944
    %1946 = vrot.lane.b32.xlu0 %v1941, 96
    %v1947 = vpop.permute.xlu0 %1946
    %v1948 = vrot.slane %v1945, 1
    %v1949 = vrot.slane %v1947, 1
    %v1950 = vsel %vm700, %v1945, %v1948
    %v1951 = vsel %vm700, %v1947, %v1949
    %v1954 = vadd.f32 %v1880, %v1950
    %v1955 = vadd.f32 %v1881, %v1951
    %s1956 = sld [smem:[#allocation9 + $0x3c]]
    %v1957 = vstv %s1956
    %v1958 = vmul.f32 %v1957, %v1936
    %v1959 = vmul.f32 %v1957, %v1937
    %1962 = vrot.lane.b32.xlu0 %v1958, 96
    %v1963 = vpop.permute.xlu0 %1962
    %1964 = vrot.lane.b32.xlu0 %v1959, 96
    %v1965 = vpop.permute.xlu0 %1964
    %v1966 = vrot.slane %v1963, 1
    %v1967 = vrot.slane %v1965, 1
    %v1968 = vsel %vm700, %v1963, %v1966
    %v1969 = vsel %vm700, %v1965, %v1967
    %v1972 = vadd.f32 %v1898, %v1968
    %v1973 = vadd.f32 %v1899, %v1969
    %s1974 = sld [smem:[#allocation9 + $0x60]]
    %v1975 = vstv %s1974
    %v1976 = vmul.f32 %v1975, %v1936
    %v1977 = vmul.f32 %v1975, %v1937
    %1980 = vrot.lane.b32.xlu0 %v1976, 96
    %v1981 = vpop.permute.xlu0 %1980
    %1982 = vrot.lane.b32.xlu0 %v1977, 96
    %v1983 = vpop.permute.xlu0 %1982
    %v1984 = vrot.slane %v1981, 1
    %v1985 = vrot.slane %v1983, 1
    %v1986 = vsel %vm700, %v1981, %v1984
    %v1987 = vsel %vm700, %v1983, %v1985
    %v1990 = vadd.f32 %v1916, %v1986
    %v1991 = vadd.f32 %v1917, %v1987
    %s1992 = sld [smem:[#allocation9 + $0x84]]
    %v1993 = vstv %s1992
    %v1994 = vmul.f32 %v1993, %v1936
    %v1995 = vmul.f32 %v1993, %v1937
    %1998 = vrot.lane.b32.xlu0 %v1994, 96
    %v1999 = vpop.permute.xlu0 %1998
    %2000 = vrot.lane.b32.xlu0 %v1995, 96
    %v2001 = vpop.permute.xlu0 %2000
    %v2002 = vrot.slane %v1999, 1
    %v2003 = vrot.slane %v2001, 1
    %v2004 = vsel %vm700, %v1999, %v2002
    %v2005 = vsel %vm700, %v2001, %v2003
    %v2008 = vadd.f32 %v1934, %v2004
    %v2009 = vadd.f32 %v1935, %v2005
    %s2010 = sld [smem:[#allocation9 + $0x19]]
    %v2011 = vstv %s2010
    %v2012 = vmul.f32 %v2011, %v1568
    %v2013 = vmul.f32 %v2011, %v1569
    %2016 = vrot.lane.b32.xlu0 %v2012, 95
    %v2017 = vpop.permute.xlu0 %2016
    %2018 = vrot.lane.b32.xlu0 %v2013, 95
    %v2019 = vpop.permute.xlu0 %2018
    %v2020 = vrot.slane %v2017, 1
    %v2021 = vrot.slane %v2019, 1
    %v2022 = vsel %vm773, %v2017, %v2020
    %v2023 = vsel %vm773, %v2019, %v2021
    %v2026 = vadd.f32 %v1954, %v2022
    %v2027 = vadd.f32 %v1955, %v2023
    %s2028 = sld [smem:[#allocation9 + $0x3d]]
    %v2029 = vstv %s2028
    %v2030 = vmul.f32 %v2029, %v1568
    %v2031 = vmul.f32 %v2029, %v1569
    %2034 = vrot.lane.b32.xlu0 %v2030, 95
    %v2035 = vpop.permute.xlu0 %2034
    %2036 = vrot.lane.b32.xlu0 %v2031, 95
    %v2037 = vpop.permute.xlu0 %2036
    %v2038 = vrot.slane %v2035, 1
    %v2039 = vrot.slane %v2037, 1
    %v2040 = vsel %vm773, %v2035, %v2038
    %v2041 = vsel %vm773, %v2037, %v2039
    %v2044 = vadd.f32 %v1972, %v2040
    %v2045 = vadd.f32 %v1973, %v2041
    %s2046 = sld [smem:[#allocation9 + $0x61]]
    %v2047 = vstv %s2046
    %v2048 = vmul.f32 %v2047, %v1568
    %v2049 = vmul.f32 %v2047, %v1569
    %2052 = vrot.lane.b32.xlu0 %v2048, 95
    %v2053 = vpop.permute.xlu0 %2052
    %2054 = vrot.lane.b32.xlu0 %v2049, 95
    %v2055 = vpop.permute.xlu0 %2054
    %v2056 = vrot.slane %v2053, 1
    %v2057 = vrot.slane %v2055, 1
    %v2058 = vsel %vm773, %v2053, %v2056
    %v2059 = vsel %vm773, %v2055, %v2057
    %v2062 = vadd.f32 %v1990, %v2058
    %v2063 = vadd.f32 %v1991, %v2059
    %s2064 = sld [smem:[#allocation9 + $0x85]]
    %v2065 = vstv %s2064
    %v2066 = vmul.f32 %v2065, %v1568
    %v2067 = vmul.f32 %v2065, %v1569
    %2070 = vrot.lane.b32.xlu0 %v2066, 95
    %v2071 = vpop.permute.xlu0 %2070
    %2072 = vrot.lane.b32.xlu0 %v2067, 95
    %v2073 = vpop.permute.xlu0 %2072
    %v2074 = vrot.slane %v2071, 1
    %v2075 = vrot.slane %v2073, 1
    %v2076 = vsel %vm773, %v2071, %v2074
    %v2077 = vsel %vm773, %v2073, %v2075
    %v2080 = vadd.f32 %v2008, %v2076
    %v2081 = vadd.f32 %v2009, %v2077
    %v2082 = vmul.f32 %v1568, %v841
    %v2083 = vmul.f32 %v1569, %v842
    %s2084 = sld [smem:[#allocation9 + $0x1a]]
    %v2085 = vstv %s2084
    %v2086 = vmul.f32 %v2085, %v2082
    %v2087 = vmul.f32 %v2085, %v2083
    %2090 = vrot.lane.b32.xlu0 %v2086, 94
    %v2091 = vpop.permute.xlu0 %2090
    %2092 = vrot.lane.b32.xlu0 %v2087, 94
    %v2093 = vpop.permute.xlu0 %2092
    %v2094 = vrot.slane %v2091, 1
    %v2095 = vrot.slane %v2093, 1
    %v2096 = vsel %vm859, %v2091, %v2094
    %v2097 = vsel %vm859, %v2093, %v2095
    %v2100 = vadd.f32 %v2026, %v2096
    %v2101 = vadd.f32 %v2027, %v2097
    %s2102 = sld [smem:[#allocation9 + $0x3e]]
    %v2103 = vstv %s2102
    %v2104 = vmul.f32 %v2103, %v2082
    %v2105 = vmul.f32 %v2103, %v2083
    %2108 = vrot.lane.b32.xlu0 %v2104, 94
    %v2109 = vpop.permute.xlu0 %2108
    %2110 = vrot.lane.b32.xlu0 %v2105, 94
    %v2111 = vpop.permute.xlu0 %2110
    %v2112 = vrot.slane %v2109, 1
    %v2113 = vrot.slane %v2111, 1
    %v2114 = vsel %vm859, %v2109, %v2112
    %v2115 = vsel %vm859, %v2111, %v2113
    %v2118 = vadd.f32 %v2044, %v2114
    %v2119 = vadd.f32 %v2045, %v2115
    %s2120 = sld [smem:[#allocation9 + $0x62]]
    %v2121 = vstv %s2120
    %v2122 = vmul.f32 %v2121, %v2082
    %v2123 = vmul.f32 %v2121, %v2083
    %2126 = vrot.lane.b32.xlu0 %v2122, 94
    %v2127 = vpop.permute.xlu0 %2126
    %2128 = vrot.lane.b32.xlu0 %v2123, 94
    %v2129 = vpop.permute.xlu0 %2128
    %v2130 = vrot.slane %v2127, 1
    %v2131 = vrot.slane %v2129, 1
    %v2132 = vsel %vm859, %v2127, %v2130
    %v2133 = vsel %vm859, %v2129, %v2131
    %v2136 = vadd.f32 %v2062, %v2132
    %v2137 = vadd.f32 %v2063, %v2133
    %s2138 = sld [smem:[#allocation9 + $0x86]]
    %v2139 = vstv %s2138
    %v2140 = vmul.f32 %v2139, %v2082
    %v2141 = vmul.f32 %v2139, %v2083
    %2144 = vrot.lane.b32.xlu0 %v2140, 94
    %v2145 = vpop.permute.xlu0 %2144
    %2146 = vrot.lane.b32.xlu0 %v2141, 94
    %v2147 = vpop.permute.xlu0 %2146
    %v2148 = vrot.slane %v2145, 1
    %v2149 = vrot.slane %v2147, 1
    %v2150 = vsel %vm859, %v2145, %v2148
    %v2151 = vsel %vm859, %v2147, %v2149
    %v2154 = vadd.f32 %v2080, %v2150
    %v2155 = vadd.f32 %v2081, %v2151
    %s2156 = scalar_lea.vmem [#allocation2], 3
    %v2157 = vld [vmem:[%s2156] ss:$4 sm:$0x3]
    %s2158 = scalar_lea.vmem [#allocation2], 15
    %v2159 = vld [vmem:[%s2158] ss:$4 sm:$0x3]
    %v2160 = vmul.f32 %v2157, %v231
    %v2161 = vmul.f32 %v2159, %v234
    %s2162 = sld [smem:[#allocation9 + $0x1b]]
    %v2163 = vstv %s2162
    %v2164 = vmul.f32 %v2163, %v2160
    %v2165 = vmul.f32 %v2163, %v2161
    %v2166 = vadd.f32 %v2100, %v2164
    %v2167 = vadd.f32 %v2101, %v2165
    %s2168 = sld [smem:[#allocation9 + $0x3f]]
    %v2169 = vstv %s2168
    %v2170 = vmul.f32 %v2169, %v2160
    %v2171 = vmul.f32 %v2169, %v2161
    %v2172 = vadd.f32 %v2118, %v2170
    %v2173 = vadd.f32 %v2119, %v2171
    %s2174 = sld [smem:[#allocation9 + $0x63]]
    %v2175 = vstv %s2174
    %v2176 = vmul.f32 %v2175, %v2160
    %v2177 = vmul.f32 %v2175, %v2161
    %v2178 = vadd.f32 %v2136, %v2176
    %v2179 = vadd.f32 %v2137, %v2177
    %s2180 = sld [smem:[#allocation9 + $0x87]]
    %v2181 = vstv %s2180
    %v2182 = vmul.f32 %v2181, %v2160
    %v2183 = vmul.f32 %v2181, %v2161
    %v2184 = vadd.f32 %v2154, %v2182
    %v2185 = vadd.f32 %v2155, %v2183
    %v2186 = vld [vmem:[%s2156] ss:$4 sm:$0x7]
    %v2187 = vld [vmem:[%s2158] ss:$4 sm:$0x7]
    %s2188 = sld [smem:[#allocation9 + $0x1c]]
    %v2189 = vstv %s2188
    %v2190 = vmul.f32 %v2189, %v2186
    %v2191 = vmul.f32 %v2189, %v2187
    %2194 = vrot.lane.b32.xlu0 %v2190, 127
    %v2195 = vpop.permute.xlu0 %2194
    %2196 = vrot.lane.b32.xlu0 %v2191, 127
    %v2197 = vpop.permute.xlu0 %2196
    %v2198 = vrot.slane %v2195, 1
    %v2199 = vrot.slane %v2197, 1
    %v2200 = vsel %vm277, %v2195, %v2198
    %v2201 = vsel %vm277, %v2197, %v2199
    %v2204 = vadd.f32 %v2166, %v2200
    %v2205 = vadd.f32 %v2167, %v2201
    %s2206 = sld [smem:[#allocation9 + $0x40]]
    %v2207 = vstv %s2206
    %v2208 = vmul.f32 %v2207, %v2186
    %v2209 = vmul.f32 %v2207, %v2187
    %2212 = vrot.lane.b32.xlu0 %v2208, 127
    %v2213 = vpop.permute.xlu0 %2212
    %2214 = vrot.lane.b32.xlu0 %v2209, 127
    %v2215 = vpop.permute.xlu0 %2214
    %v2216 = vrot.slane %v2213, 1
    %v2217 = vrot.slane %v2215, 1
    %v2218 = vsel %vm277, %v2213, %v2216
    %v2219 = vsel %vm277, %v2215, %v2217
    %v2222 = vadd.f32 %v2172, %v2218
    %v2223 = vadd.f32 %v2173, %v2219
    %s2224 = sld [smem:[#allocation9 + $0x64]]
    %v2225 = vstv %s2224
    %v2226 = vmul.f32 %v2225, %v2186
    %v2227 = vmul.f32 %v2225, %v2187
    %2230 = vrot.lane.b32.xlu0 %v2226, 127
    %v2231 = vpop.permute.xlu0 %2230
    %2232 = vrot.lane.b32.xlu0 %v2227, 127
    %v2233 = vpop.permute.xlu0 %2232
    %v2234 = vrot.slane %v2231, 1
    %v2235 = vrot.slane %v2233, 1
    %v2236 = vsel %vm277, %v2231, %v2234
    %v2237 = vsel %vm277, %v2233, %v2235
    %v2240 = vadd.f32 %v2178, %v2236
    %v2241 = vadd.f32 %v2179, %v2237
    %s2242 = sld [smem:[#allocation9 + $0x88]]
    %v2243 = vstv %s2242
    %v2244 = vmul.f32 %v2243, %v2186
    %v2245 = vmul.f32 %v2243, %v2187
    %2248 = vrot.lane.b32.xlu0 %v2244, 127
    %v2249 = vpop.permute.xlu0 %2248
    %2250 = vrot.lane.b32.xlu0 %v2245, 127
    %v2251 = vpop.permute.xlu0 %2250
    %v2252 = vrot.slane %v2249, 1
    %v2253 = vrot.slane %v2251, 1
    %v2254 = vsel %vm277, %v2249, %v2252
    %v2255 = vsel %vm277, %v2251, %v2253
    %v2258 = vadd.f32 %v2184, %v2254
    %v2259 = vadd.f32 %v2185, %v2255
    %v2260 = vmul.f32 %v2186, %v351
    %v2261 = vmul.f32 %v2187, %v352
    %s2262 = sld [smem:[#allocation9 + $0x1d]]
    %v2263 = vstv %s2262
    %v2264 = vmul.f32 %v2263, %v2260
    %v2265 = vmul.f32 %v2263, %v2261
    %2268 = vrot.lane.b32.xlu0 %v2264, 126
    %v2269 = vpop.permute.xlu0 %2268
    %2270 = vrot.lane.b32.xlu0 %v2265, 126
    %v2271 = vpop.permute.xlu0 %2270
    %v2272 = vrot.slane %v2269, 1
    %v2273 = vrot.slane %v2271, 1
    %v2274 = vsel %vm369, %v2269, %v2272
    %v2275 = vsel %vm369, %v2271, %v2273
    %v2278 = vadd.f32 %v2204, %v2274
    %v2279 = vadd.f32 %v2205, %v2275
    %s2280 = sld [smem:[#allocation9 + $0x41]]
    %v2281 = vstv %s2280
    %v2282 = vmul.f32 %v2281, %v2260
    %v2283 = vmul.f32 %v2281, %v2261
    %2286 = vrot.lane.b32.xlu0 %v2282, 126
    %v2287 = vpop.permute.xlu0 %2286
    %2288 = vrot.lane.b32.xlu0 %v2283, 126
    %v2289 = vpop.permute.xlu0 %2288
    %v2290 = vrot.slane %v2287, 1
    %v2291 = vrot.slane %v2289, 1
    %v2292 = vsel %vm369, %v2287, %v2290
    %v2293 = vsel %vm369, %v2289, %v2291
    %v2296 = vadd.f32 %v2222, %v2292
    %v2297 = vadd.f32 %v2223, %v2293
    %s2298 = sld [smem:[#allocation9 + $0x65]]
    %v2299 = vstv %s2298
    %v2300 = vmul.f32 %v2299, %v2260
    %v2301 = vmul.f32 %v2299, %v2261
    %2304 = vrot.lane.b32.xlu0 %v2300, 126
    %v2305 = vpop.permute.xlu0 %2304
    %2306 = vrot.lane.b32.xlu0 %v2301, 126
    %v2307 = vpop.permute.xlu0 %2306
    %v2308 = vrot.slane %v2305, 1
    %v2309 = vrot.slane %v2307, 1
    %v2310 = vsel %vm369, %v2305, %v2308
    %v2311 = vsel %vm369, %v2307, %v2309
    %v2314 = vadd.f32 %v2240, %v2310
    %v2315 = vadd.f32 %v2241, %v2311
    %s2316 = sld [smem:[#allocation9 + $0x89]]
    %v2317 = vstv %s2316
    %v2318 = vmul.f32 %v2317, %v2260
    %v2319 = vmul.f32 %v2317, %v2261
    %2322 = vrot.lane.b32.xlu0 %v2318, 126
    %v2323 = vpop.permute.xlu0 %2322
    %2324 = vrot.lane.b32.xlu0 %v2319, 126
    %v2325 = vpop.permute.xlu0 %2324
    %v2326 = vrot.slane %v2323, 1
    %v2327 = vrot.slane %v2325, 1
    %v2328 = vsel %vm369, %v2323, %v2326
    %v2329 = vsel %vm369, %v2325, %v2327
    %v2332 = vadd.f32 %v2258, %v2328
    %v2333 = vadd.f32 %v2259, %v2329
    %v2334 = vmul.f32 %v2186, %v437
    %v2335 = vmul.f32 %v2187, %v438
    %s2336 = sld [smem:[#allocation9 + $0x1e]]
    %v2337 = vstv %s2336
    %v2338 = vmul.f32 %v2337, %v2334
    %v2339 = vmul.f32 %v2337, %v2335
    %2342 = vrot.lane.b32.xlu0 %v2338, 112
    %v2343 = vpop.permute.xlu0 %2342
    %2344 = vrot.lane.b32.xlu0 %v2339, 112
    %v2345 = vpop.permute.xlu0 %2344
    %v2346 = vrot.slane %v2343, 1
    %v2347 = vrot.slane %v2345, 1
    %v2348 = vsel %vm455, %v2343, %v2346
    %v2349 = vsel %vm455, %v2345, %v2347
    %v2352 = vadd.f32 %v2278, %v2348
    %v2353 = vadd.f32 %v2279, %v2349
    %s2354 = sld [smem:[#allocation9 + $0x42]]
    %v2355 = vstv %s2354
    %v2356 = vmul.f32 %v2355, %v2334
    %v2357 = vmul.f32 %v2355, %v2335
    %2360 = vrot.lane.b32.xlu0 %v2356, 112
    %v2361 = vpop.permute.xlu0 %2360
    %2362 = vrot.lane.b32.xlu0 %v2357, 112
    %v2363 = vpop.permute.xlu0 %2362
    %v2364 = vrot.slane %v2361, 1
    %v2365 = vrot.slane %v2363, 1
    %v2366 = vsel %vm455, %v2361, %v2364
    %v2367 = vsel %vm455, %v2363, %v2365
    %v2370 = vadd.f32 %v2296, %v2366
    %v2371 = vadd.f32 %v2297, %v2367
    %s2372 = sld [smem:[#allocation9 + $0x66]]
    %v2373 = vstv %s2372
    %v2374 = vmul.f32 %v2373, %v2334
    %v2375 = vmul.f32 %v2373, %v2335
    %2378 = vrot.lane.b32.xlu0 %v2374, 112
    %v2379 = vpop.permute.xlu0 %2378
    %2380 = vrot.lane.b32.xlu0 %v2375, 112
    %v2381 = vpop.permute.xlu0 %2380
    %v2382 = vrot.slane %v2379, 1
    %v2383 = vrot.slane %v2381, 1
    %v2384 = vsel %vm455, %v2379, %v2382
    %v2385 = vsel %vm455, %v2381, %v2383
    %v2388 = vadd.f32 %v2314, %v2384
    %v2389 = vadd.f32 %v2315, %v2385
    %s2390 = sld [smem:[#allocation9 + $0x8a]]
    %v2391 = vstv %s2390
    %v2392 = vmul.f32 %v2391, %v2334
    %v2393 = vmul.f32 %v2391, %v2335
    %2396 = vrot.lane.b32.xlu0 %v2392, 112
    %v2397 = vpop.permute.xlu0 %2396
    %2398 = vrot.lane.b32.xlu0 %v2393, 112
    %v2399 = vpop.permute.xlu0 %2398
    %v2400 = vrot.slane %v2397, 1
    %v2401 = vrot.slane %v2399, 1
    %v2402 = vsel %vm455, %v2397, %v2400
    %v2403 = vsel %vm455, %v2399, %v2401
    %v2406 = vadd.f32 %v2332, %v2402
    %v2407 = vadd.f32 %v2333, %v2403
    %s2408 = sld [smem:[#allocation9 + $0x1f]]
    %v2409 = vstv %s2408
    %v2410 = vmul.f32 %v2409, %v2186
    %v2411 = vmul.f32 %v2409, %v2187
    %2414 = vrot.lane.b32.xlu0 %v2410, 111
    %v2415 = vpop.permute.xlu0 %2414
    %2416 = vrot.lane.b32.xlu0 %v2411, 111
    %v2417 = vpop.permute.xlu0 %2416
    %v2418 = vrot.slane %v2415, 1
    %v2419 = vrot.slane %v2417, 1
    %v2420 = vsel %vm528, %v2415, %v2418
    %v2421 = vsel %vm528, %v2417, %v2419
    %v2424 = vadd.f32 %v2352, %v2420
    %v2425 = vadd.f32 %v2353, %v2421
    %s2426 = sld [smem:[#allocation9 + $0x43]]
    %v2427 = vstv %s2426
    %v2428 = vmul.f32 %v2427, %v2186
    %v2429 = vmul.f32 %v2427, %v2187
    %2432 = vrot.lane.b32.xlu0 %v2428, 111
    %v2433 = vpop.permute.xlu0 %2432
    %2434 = vrot.lane.b32.xlu0 %v2429, 111
    %v2435 = vpop.permute.xlu0 %2434
    %v2436 = vrot.slane %v2433, 1
    %v2437 = vrot.slane %v2435, 1
    %v2438 = vsel %vm528, %v2433, %v2436
    %v2439 = vsel %vm528, %v2435, %v2437
    %v2442 = vadd.f32 %v2370, %v2438
    %v2443 = vadd.f32 %v2371, %v2439
    %s2444 = sld [smem:[#allocation9 + $0x67]]
    %v2445 = vstv %s2444
    %v2446 = vmul.f32 %v2445, %v2186
    %v2447 = vmul.f32 %v2445, %v2187
    %2450 = vrot.lane.b32.xlu0 %v2446, 111
    %v2451 = vpop.permute.xlu0 %2450
    %2452 = vrot.lane.b32.xlu0 %v2447, 111
    %v2453 = vpop.permute.xlu0 %2452
    %v2454 = vrot.slane %v2451, 1
    %v2455 = vrot.slane %v2453, 1
    %v2456 = vsel %vm528, %v2451, %v2454
    %v2457 = vsel %vm528, %v2453, %v2455
    %v2460 = vadd.f32 %v2388, %v2456
    %v2461 = vadd.f32 %v2389, %v2457
    %s2462 = sld [smem:[#allocation9 + $0x8b]]
    %v2463 = vstv %s2462
    %v2464 = vmul.f32 %v2463, %v2186
    %v2465 = vmul.f32 %v2463, %v2187
    %2468 = vrot.lane.b32.xlu0 %v2464, 111
    %v2469 = vpop.permute.xlu0 %2468
    %2470 = vrot.lane.b32.xlu0 %v2465, 111
    %v2471 = vpop.permute.xlu0 %2470
    %v2472 = vrot.slane %v2469, 1
    %v2473 = vrot.slane %v2471, 1
    %v2474 = vsel %vm528, %v2469, %v2472
    %v2475 = vsel %vm528, %v2471, %v2473
    %v2478 = vadd.f32 %v2406, %v2474
    %v2479 = vadd.f32 %v2407, %v2475
    %v2480 = vmul.f32 %v2186, %v596
    %v2481 = vmul.f32 %v2187, %v597
    %s2482 = sld [smem:[#allocation9 + $0x20]]
    %v2483 = vstv %s2482
    %v2484 = vmul.f32 %v2483, %v2480
    %v2485 = vmul.f32 %v2483, %v2481
    %2488 = vrot.lane.b32.xlu0 %v2484, 110
    %v2489 = vpop.permute.xlu0 %2488
    %2490 = vrot.lane.b32.xlu0 %v2485, 110
    %v2491 = vpop.permute.xlu0 %2490
    %v2492 = vrot.slane %v2489, 1
    %v2493 = vrot.slane %v2491, 1
    %v2494 = vsel %vm614, %v2489, %v2492
    %v2495 = vsel %vm614, %v2491, %v2493
    %v2498 = vadd.f32 %v2424, %v2494
    %v2499 = vadd.f32 %v2425, %v2495
    %s2500 = sld [smem:[#allocation9 + $0x44]]
    %v2501 = vstv %s2500
    %v2502 = vmul.f32 %v2501, %v2480
    %v2503 = vmul.f32 %v2501, %v2481
    %2506 = vrot.lane.b32.xlu0 %v2502, 110
    %v2507 = vpop.permute.xlu0 %2506
    %2508 = vrot.lane.b32.xlu0 %v2503, 110
    %v2509 = vpop.permute.xlu0 %2508
    %v2510 = vrot.slane %v2507, 1
    %v2511 = vrot.slane %v2509, 1
    %v2512 = vsel %vm614, %v2507, %v2510
    %v2513 = vsel %vm614, %v2509, %v2511
    %v2516 = vadd.f32 %v2442, %v2512
    %v2517 = vadd.f32 %v2443, %v2513
    %s2518 = sld [smem:[#allocation9 + $0x68]]
    %v2519 = vstv %s2518
    %v2520 = vmul.f32 %v2519, %v2480
    %v2521 = vmul.f32 %v2519, %v2481
    %2524 = vrot.lane.b32.xlu0 %v2520, 110
    %v2525 = vpop.permute.xlu0 %2524
    %2526 = vrot.lane.b32.xlu0 %v2521, 110
    %v2527 = vpop.permute.xlu0 %2526
    %v2528 = vrot.slane %v2525, 1
    %v2529 = vrot.slane %v2527, 1
    %v2530 = vsel %vm614, %v2525, %v2528
    %v2531 = vsel %vm614, %v2527, %v2529
    %v2534 = vadd.f32 %v2460, %v2530
    %v2535 = vadd.f32 %v2461, %v2531
    %s2536 = sld [smem:[#allocation9 + $0x8c]]
    %v2537 = vstv %s2536
    %v2538 = vmul.f32 %v2537, %v2480
    %v2539 = vmul.f32 %v2537, %v2481
    %2542 = vrot.lane.b32.xlu0 %v2538, 110
    %v2543 = vpop.permute.xlu0 %2542
    %2544 = vrot.lane.b32.xlu0 %v2539, 110
    %v2545 = vpop.permute.xlu0 %2544
    %v2546 = vrot.slane %v2543, 1
    %v2547 = vrot.slane %v2545, 1
    %v2548 = vsel %vm614, %v2543, %v2546
    %v2549 = vsel %vm614, %v2545, %v2547
    %v2552 = vadd.f32 %v2478, %v2548
    %v2553 = vadd.f32 %v2479, %v2549
    %v2554 = vmul.f32 %v2186, %v682
    %v2555 = vmul.f32 %v2187, %v683
    %s2556 = sld [smem:[#allocation9 + $0x21]]
    %v2557 = vstv %s2556
    %v2558 = vmul.f32 %v2557, %v2554
    %v2559 = vmul.f32 %v2557, %v2555
    %2562 = vrot.lane.b32.xlu0 %v2558, 96
    %v2563 = vpop.permute.xlu0 %2562
    %2564 = vrot.lane.b32.xlu0 %v2559, 96
    %v2565 = vpop.permute.xlu0 %2564
    %v2566 = vrot.slane %v2563, 1
    %v2567 = vrot.slane %v2565, 1
    %v2568 = vsel %vm700, %v2563, %v2566
    %v2569 = vsel %vm700, %v2565, %v2567
    %v2572 = vadd.f32 %v2498, %v2568
    %v2573 = vadd.f32 %v2499, %v2569
    %s2574 = sld [smem:[#allocation9 + $0x45]]
    %v2575 = vstv %s2574
    %v2576 = vmul.f32 %v2575, %v2554
    %v2577 = vmul.f32 %v2575, %v2555
    %2580 = vrot.lane.b32.xlu0 %v2576, 96
    %v2581 = vpop.permute.xlu0 %2580
    %2582 = vrot.lane.b32.xlu0 %v2577, 96
    %v2583 = vpop.permute.xlu0 %2582
    %v2584 = vrot.slane %v2581, 1
    %v2585 = vrot.slane %v2583, 1
    %v2586 = vsel %vm700, %v2581, %v2584
    %v2587 = vsel %vm700, %v2583, %v2585
    %v2590 = vadd.f32 %v2516, %v2586
    %v2591 = vadd.f32 %v2517, %v2587
    %s2592 = sld [smem:[#allocation9 + $0x69]]
    %v2593 = vstv %s2592
    %v2594 = vmul.f32 %v2593, %v2554
    %v2595 = vmul.f32 %v2593, %v2555
    %2598 = vrot.lane.b32.xlu0 %v2594, 96
    %v2599 = vpop.permute.xlu0 %2598
    %2600 = vrot.lane.b32.xlu0 %v2595, 96
    %v2601 = vpop.permute.xlu0 %2600
    %v2602 = vrot.slane %v2599, 1
    %v2603 = vrot.slane %v2601, 1
    %v2604 = vsel %vm700, %v2599, %v2602
    %v2605 = vsel %vm700, %v2601, %v2603
    %v2608 = vadd.f32 %v2534, %v2604
    %v2609 = vadd.f32 %v2535, %v2605
    %s2610 = sld [smem:[#allocation9 + $0x8d]]
    %v2611 = vstv %s2610
    %v2612 = vmul.f32 %v2611, %v2554
    %v2613 = vmul.f32 %v2611, %v2555
    %2616 = vrot.lane.b32.xlu0 %v2612, 96
    %v2617 = vpop.permute.xlu0 %2616
    %2618 = vrot.lane.b32.xlu0 %v2613, 96
    %v2619 = vpop.permute.xlu0 %2618
    %v2620 = vrot.slane %v2617, 1
    %v2621 = vrot.slane %v2619, 1
    %v2622 = vsel %vm700, %v2617, %v2620
    %v2623 = vsel %vm700, %v2619, %v2621
    %v2626 = vadd.f32 %v2552, %v2622
    %v2627 = vadd.f32 %v2553, %v2623
    %s2628 = sld [smem:[#allocation9 + $0x22]]
    %v2629 = vstv %s2628
    %v2630 = vmul.f32 %v2629, %v2186
    %v2631 = vmul.f32 %v2629, %v2187
    %2634 = vrot.lane.b32.xlu0 %v2630, 95
    %v2635 = vpop.permute.xlu0 %2634
    %2636 = vrot.lane.b32.xlu0 %v2631, 95
    %v2637 = vpop.permute.xlu0 %2636
    %v2638 = vrot.slane %v2635, 1
    %v2639 = vrot.slane %v2637, 1
    %v2640 = vsel %vm773, %v2635, %v2638
    %v2641 = vsel %vm773, %v2637, %v2639
    %v2644 = vadd.f32 %v2572, %v2640
    %v2645 = vadd.f32 %v2573, %v2641
    %s2646 = sld [smem:[#allocation9 + $0x46]]
    %v2647 = vstv %s2646
    %v2648 = vmul.f32 %v2647, %v2186
    %v2649 = vmul.f32 %v2647, %v2187
    %2652 = vrot.lane.b32.xlu0 %v2648, 95
    %v2653 = vpop.permute.xlu0 %2652
    %2654 = vrot.lane.b32.xlu0 %v2649, 95
    %v2655 = vpop.permute.xlu0 %2654
    %v2656 = vrot.slane %v2653, 1
    %v2657 = vrot.slane %v2655, 1
    %v2658 = vsel %vm773, %v2653, %v2656
    %v2659 = vsel %vm773, %v2655, %v2657
    %v2662 = vadd.f32 %v2590, %v2658
    %v2663 = vadd.f32 %v2591, %v2659
    %s2664 = sld [smem:[#allocation9 + $0x6a]]
    %v2665 = vstv %s2664
    %v2666 = vmul.f32 %v2665, %v2186
    %v2667 = vmul.f32 %v2665, %v2187
    %2670 = vrot.lane.b32.xlu0 %v2666, 95
    %v2671 = vpop.permute.xlu0 %2670
    %2672 = vrot.lane.b32.xlu0 %v2667, 95
    %v2673 = vpop.permute.xlu0 %2672
    %v2674 = vrot.slane %v2671, 1
    %v2675 = vrot.slane %v2673, 1
    %v2676 = vsel %vm773, %v2671, %v2674
    %v2677 = vsel %vm773, %v2673, %v2675
    %v2680 = vadd.f32 %v2608, %v2676
    %v2681 = vadd.f32 %v2609, %v2677
    %s2682 = sld [smem:[#allocation9 + $0x8e]]
    %v2683 = vstv %s2682
    %v2684 = vmul.f32 %v2683, %v2186
    %v2685 = vmul.f32 %v2683, %v2187
    %2688 = vrot.lane.b32.xlu0 %v2684, 95
    %v2689 = vpop.permute.xlu0 %2688
    %2690 = vrot.lane.b32.xlu0 %v2685, 95
    %v2691 = vpop.permute.xlu0 %2690
    %v2692 = vrot.slane %v2689, 1
    %v2693 = vrot.slane %v2691, 1
    %v2694 = vsel %vm773, %v2689, %v2692
    %v2695 = vsel %vm773, %v2691, %v2693
    %v2698 = vadd.f32 %v2626, %v2694
    %v2699 = vadd.f32 %v2627, %v2695
    %v2700 = vmul.f32 %v2186, %v841
    %v2701 = vmul.f32 %v2187, %v842
    %s2702 = sld [smem:[#allocation9 + $0x23]]
    %v2703 = vstv %s2702
    %v2704 = vmul.f32 %v2703, %v2700
    %v2705 = vmul.f32 %v2703, %v2701
    %2708 = vrot.lane.b32.xlu0 %v2704, 94
    %v2709 = vpop.permute.xlu0 %2708
    %2710 = vrot.lane.b32.xlu0 %v2705, 94
    %v2711 = vpop.permute.xlu0 %2710
    %v2712 = vrot.slane %v2709, 1
    %v2713 = vrot.slane %v2711, 1
    %v2714 = vsel %vm859, %v2709, %v2712
    %v2715 = vsel %vm859, %v2711, %v2713
    %v2718 = vadd.f32 %v2644, %v2714
    %v2719 = vadd.f32 %v2645, %v2715
    %s2720 = sld [smem:[#allocation9 + $0x47]]
    %v2721 = vstv %s2720
    %v2722 = vmul.f32 %v2721, %v2700
    %v2723 = vmul.f32 %v2721, %v2701
    %2726 = vrot.lane.b32.xlu0 %v2722, 94
    %v2727 = vpop.permute.xlu0 %2726
    %2728 = vrot.lane.b32.xlu0 %v2723, 94
    %v2729 = vpop.permute.xlu0 %2728
    %v2730 = vrot.slane %v2727, 1
    %v2731 = vrot.slane %v2729, 1
    %v2732 = vsel %vm859, %v2727, %v2730
    %v2733 = vsel %vm859, %v2729, %v2731
    %v2736 = vadd.f32 %v2662, %v2732
    %v2737 = vadd.f32 %v2663, %v2733
    %s2738 = sld [smem:[#allocation9 + $0x6b]]
    %v2739 = vstv %s2738
    %v2740 = vmul.f32 %v2739, %v2700
    %v2741 = vmul.f32 %v2739, %v2701
    %2744 = vrot.lane.b32.xlu0 %v2740, 94
    %v2745 = vpop.permute.xlu0 %2744
    %2746 = vrot.lane.b32.xlu0 %v2741, 94
    %v2747 = vpop.permute.xlu0 %2746
    %v2748 = vrot.slane %v2745, 1
    %v2749 = vrot.slane %v2747, 1
    %v2750 = vsel %vm859, %v2745, %v2748
    %v2751 = vsel %vm859, %v2747, %v2749
    %v2754 = vadd.f32 %v2680, %v2750
    %v2755 = vadd.f32 %v2681, %v2751
    %s2756 = sld [smem:[#allocation9 + $0x8f]]
    %v2757 = vstv %s2756
    %v2758 = vmul.f32 %v2757, %v2700
    %v2759 = vmul.f32 %v2757, %v2701
    %2762 = vrot.lane.b32.xlu0 %v2758, 94
    %v2763 = vpop.permute.xlu0 %2762
    %2764 = vrot.lane.b32.xlu0 %v2759, 94
    %v2765 = vpop.permute.xlu0 %2764
    %v2766 = vrot.slane %v2763, 1
    %v2767 = vrot.slane %v2765, 1
    %v2768 = vsel %vm859, %v2763, %v2766
    %v2769 = vsel %vm859, %v2765, %v2767
    %v2772 = vadd.f32 %v2698, %v2768
    %v2773 = vadd.f32 %v2699, %v2769
    %s2774 = sld [smem:[#allocation11]]
    %s2775 = sld [smem:[#allocation13]]
    %2778 = vst [vmem:[#allocation1] ss:$9 sm:$0xff] %v2718
    %s2779 = scalar_lea.vmem [#allocation1], 1
    %2780 = vst [vmem:[%s2779] ss:$9 sm:$0xff] %v2719
    %v2781 = vld [vmem:[#allocation1] sm:$0xff]
    %v2782 = vld [vmem:[#allocation1 + $0x9] sm:$0xff]
    %vm2785 = vcmask 1041408
    %v2786 = vsel %vm2785, %v2781, 0.0
    %v2787 = vsel %vm2785, %v2782, 0.0
    %v2788 = vadd.f32 %v2786, %v2787
    %2789 = vadd.xlane.f32.xlu0 %v2788
    %v2790 = vpop.xlane.xlu0 %2789
    %v2791 = vrot.slane %v2790, 4
    %v2792 = vadd.f32 %v2790, %v2791
    %v2793 = vrot.slane %v2792, 2
    %v2794 = vadd.f32 %v2792, %v2793
    %v2795 = vrot.slane %v2794, 1
    %v2796 = vadd.f32 %v2794, %v2795
    %s2797 = vtos %v2796
    %v2798 = vmul.f32 %v2718, %v2718
    %v2799 = vmul.f32 %v2719, %v2719
    %2802 = vst [vmem:[#allocation1] ss:$9 sm:$0xff] %v2798
    %s2803 = scalar_lea.vmem [#allocation1], 1
    %2804 = vst [vmem:[%s2803] ss:$9 sm:$0xff] %v2799
    %v2805 = vld [vmem:[#allocation1] sm:$0xff]
    %v2806 = vld [vmem:[#allocation1 + $0x9] sm:$0xff]
    %v2809 = vsel %vm2785, %v2805, 0.0
    %v2810 = vsel %vm2785, %v2806, 0.0
    %v2811 = vadd.f32 %v2809, %v2810
    %2812 = vadd.xlane.f32.xlu0 %v2811
    %v2813 = vpop.xlane.xlu0 %2812
    %v2814 = vrot.slane %v2813, 4
    %v2815 = vadd.f32 %v2813, %v2814
    %v2816 = vrot.slane %v2815, 2
    %v2817 = vadd.f32 %v2815, %v2816
    %v2818 = vrot.slane %v2817, 1
    %v2819 = vadd.f32 %v2817, %v2818
    %s2820 = vtos %v2819
    %s2821 = smul.f32 %s2797, 0.001953125
    %s2822 = smul.f32 %s2820, 0.001953125
    %s2823 = smul.f32 %s2821, %s2821
    %s2824 = ssub.f32 %s2822, %s2823
    %s2825 = smax.f32 %s2824, 0.0
    %s2826 = sadd.f32 %s2825, 1e-05
    %v2827 = vstv %s2826
    %v2828 = vrsqrt.pop %v2827
    %v2829 = vmul.f32 %v2828, %v2827
    %v2830 = vmul.f32 %v2829, %v2828
    %v2831 = vmul.f32 0.5, %v2830
    %v2832 = vsub.f32 1.5, %v2831
    %v2833 = vmul.f32 %v2828, %v2832
    %vm2834 = vweird.f32 %v2827
    %vm2835 = vweird.f32 %v2828
    %vm2836 = vmor %vm2834, %vm2835
    %v2837 = vsel %vm2836, %v2828, %v2833
    %s2838 = vtos %v2837
    %s2839 = smul.f32 %s2774, %s2838
    %s2840 = smul.f32 %s2821, %s2839
    %s2841 = ssub.f32 %s2775, %s2840
    %v2842 = vstv %s2839
    %v2843 = vmul.f32 %v2718, %v2842
    %v2844 = vmul.f32 %v2719, %v2842
    %v2845 = vstv %s2841
    %v2846 = vadd.f32 %v2843, %v2845
    %v2847 = vadd.f32 %v2844, %v2845
    %v2848 = vmin.f32 %v2846, 20.0
    %v2849 = vmin.f32 %v2847, 20.0
    %v2850 = vmul.f32 %v2848, 1.442695
    %v2851 = vpow.pop %v2850
    %v2852 = vmul.f32 %v2849, 1.442695
    %v2853 = vpow.pop %v2852
    %v2854 = vadd.f32 %v2851, 1.0
    %v2855 = vadd.f32 %v2853, 1.0
    %v2856 = vmul.f32 %v2854, %v2854
    %v2857 = vmul.f32 %v2855, %v2855
    %v2858 = vadd.f32 %v2856, 1.0
    %v2859 = vadd.f32 %v2857, 1.0
    %v2860 = vrcp.pop %v2858
    %v2861 = vrcp.pop %v2859
    %v2862 = vmul.f32 %v2858, %v2860
    %v2863 = vmul.f32 %v2859, %v2861
    %v2864 = vsub.f32 2.0, %v2862
    %v2865 = vsub.f32 2.0, %v2863
    %v2866 = vmul.f32 %v2860, %v2864
    %v2867 = vmul.f32 %v2861, %v2865
    %v2868 = vsub.f32 %v2856, 1.0
    %v2869 = vsub.f32 %v2857, 1.0
    %v2870 = vmul.f32 %v2846, %v2868
    %v2871 = vmul.f32 %v2847, %v2869
    %v2872 = vmul.f32 %v2870, %v2866
    %v2873 = vmul.f32 %v2871, %v2867
    %vm2874 = vcmp.gt.f32.partialorder %v2846, 20.0
    %vm2875 = vcmp.gt.f32.partialorder %v2847, 20.0
    %v2876 = vsel %vm2874, %v2846, %v2872
    %v2877 = vsel %vm2875, %v2847, %v2873
    %2880 = vrot.lane.b32.xlu0 %v2876, 17
    %v2881 = vpop.permute.xlu0 %2880
    %2882 = vrot.lane.b32.xlu0 %v2877, 17
    %v2883 = vpop.permute.xlu0 %2882
    %v2884 = vrot.slane %v2881, 7
    %v2885 = vrot.slane %v2883, 7
    %v2886 = vsel %vm201, %v2884, %v2881
    %v2887 = vsel %vm201, %v2885, %v2883
    %v2890 = vlaneseq
    %vm2891 = vcmp.ge.s32.totalorder %v2890, 17
    %vm2892 = vcmp.lt.s32.totalorder %v2890, 273
    %vm2893 = vmand %vm2891, %vm2892
    %2894 = vst.msk [vmem:[#allocation3] ss:$4 sm:$0x7] %vm2893, %v2886
    %s2895 = scalar_lea.vmem [#allocation3], 12
    %2896 = vst.msk [vmem:[%s2895] ss:$4 sm:$0x7] %vm2893, %v2887
    %s2897 = sld [smem:[#allocation11 + $0x1]]
    %s2898 = sld [smem:[#allocation13 + $0x1]]
    %2901 = vst [vmem:[#allocation1] ss:$9 sm:$0xff] %v2736
    %s2902 = scalar_lea.vmem [#allocation1], 1
    %2903 = vst [vmem:[%s2902] ss:$9 sm:$0xff] %v2737
    %v2904 = vld [vmem:[#allocation1] sm:$0xff]
    %v2905 = vld [vmem:[#allocation1 + $0x9] sm:$0xff]
    %v2908 = vsel %vm2785, %v2904, 0.0
    %v2909 = vsel %vm2785, %v2905, 0.0
    %v2910 = vadd.f32 %v2908, %v2909
    %2911 = vadd.xlane.f32.xlu0 %v2910
    %v2912 = vpop.xlane.xlu0 %2911
    %v2913 = vrot.slane %v2912, 4
    %v2914 = vadd.f32 %v2912, %v2913
    %v2915 = vrot.slane %v2914, 2
    %v2916 = vadd.f32 %v2914, %v2915
    %v2917 = vrot.slane %v2916, 1
    %v2918 = vadd.f32 %v2916, %v2917
    %s2919 = vtos %v2918
    %v2920 = vmul.f32 %v2736, %v2736
    %v2921 = vmul.f32 %v2737, %v2737
    %2924 = vst [vmem:[#allocation1] ss:$9 sm:$0xff] %v2920
    %s2925 = scalar_lea.vmem [#allocation1], 1
    %2926 = vst [vmem:[%s2925] ss:$9 sm:$0xff] %v2921
    %v2927 = vld [vmem:[#allocation1] sm:$0xff]
    %v2928 = vld [vmem:[#allocation1 + $0x9] sm:$0xff]
    %v2931 = vsel %vm2785, %v2927, 0.0
    %v2932 = vsel %vm2785, %v2928, 0.0
    %v2933 = vadd.f32 %v2931, %v2932
    %2934 = vadd.xlane.f32.xlu0 %v2933
    %v2935 = vpop.xlane.xlu0 %2934
    %v2936 = vrot.slane %v2935, 4
    %v2937 = vadd.f32 %v2935, %v2936
    %v2938 = vrot.slane %v2937, 2
    %v2939 = vadd.f32 %v2937, %v2938
    %v2940 = vrot.slane %v2939, 1
    %v2941 = vadd.f32 %v2939, %v2940
    %s2942 = vtos %v2941
    %s2943 = smul.f32 %s2919, 0.001953125
    %s2944 = smul.f32 %s2942, 0.001953125
    %s2945 = smul.f32 %s2943, %s2943
    %s2946 = ssub.f32 %s2944, %s2945
    %s2947 = smax.f32 %s2946, 0.0
    %s2948 = sadd.f32 %s2947, 1e-05
    %v2949 = vstv %s2948
    %v2950 = vrsqrt.pop %v2949
    %v2951 = vmul.f32 %v2950, %v2949
    %v2952 = vmul.f32 %v2951, %v2950
    %v2953 = vmul.f32 0.5, %v2952
    %v2954 = vsub.f32 1.5, %v2953
    %v2955 = vmul.f32 %v2950, %v2954
    %vm2956 = vweird.f32 %v2949
    %vm2957 = vweird.f32 %v2950
    %vm2958 = vmor %vm2956, %vm2957
    %v2959 = vsel %vm2958, %v2950, %v2955
    %s2960 = vtos %v2959
    %s2961 = smul.f32 %s2897, %s2960
    %s2962 = smul.f32 %s2943, %s2961
    %s2963 = ssub.f32 %s2898, %s2962
    %v2964 = vstv %s2961
    %v2965 = vmul.f32 %v2736, %v2964
    %v2966 = vmul.f32 %v2737, %v2964
    %v2967 = vstv %s2963
    %v2968 = vadd.f32 %v2965, %v2967
    %v2969 = vadd.f32 %v2966, %v2967
    %v2970 = vmin.f32 %v2968, 20.0
    %v2971 = vmin.f32 %v2969, 20.0
    %v2972 = vmul.f32 %v2970, 1.442695
    %v2973 = vpow.pop %v2972
    %v2974 = vmul.f32 %v2971, 1.442695
    %v2975 = vpow.pop %v2974
    %v2976 = vadd.f32 %v2973, 1.0
    %v2977 = vadd.f32 %v2975, 1.0
    %v2978 = vmul.f32 %v2976, %v2976
    %v2979 = vmul.f32 %v2977, %v2977
    %v2980 = vadd.f32 %v2978, 1.0
    %v2981 = vadd.f32 %v2979, 1.0
    %v2982 = vrcp.pop %v2980
    %v2983 = vrcp.pop %v2981
    %v2984 = vmul.f32 %v2980, %v2982
    %v2985 = vmul.f32 %v2981, %v2983
    %v2986 = vsub.f32 2.0, %v2984
    %v2987 = vsub.f32 2.0, %v2985
    %v2988 = vmul.f32 %v2982, %v2986
    %v2989 = vmul.f32 %v2983, %v2987
    %v2990 = vsub.f32 %v2978, 1.0
    %v2991 = vsub.f32 %v2979, 1.0
    %v2992 = vmul.f32 %v2968, %v2990
    %v2993 = vmul.f32 %v2969, %v2991
    %v2994 = vmul.f32 %v2992, %v2988
    %v2995 = vmul.f32 %v2993, %v2989
    %vm2996 = vcmp.gt.f32.partialorder %v2968, 20.0
    %vm2997 = vcmp.gt.f32.partialorder %v2969, 20.0
    %v2998 = vsel %vm2996, %v2968, %v2994
    %v2999 = vsel %vm2997, %v2969, %v2995
    %3002 = vrot.lane.b32.xlu0 %v2998, 17
    %v3003 = vpop.permute.xlu0 %3002
    %3004 = vrot.lane.b32.xlu0 %v2999, 17
    %v3005 = vpop.permute.xlu0 %3004
    %v3006 = vrot.slane %v3003, 7
    %v3007 = vrot.slane %v3005, 7
    %v3008 = vsel %vm201, %v3006, %v3003
    %v3009 = vsel %vm201, %v3007, %v3005
    %s3012 = scalar_lea.vmem [#allocation3], 1
    %3013 = vst.msk [vmem:[%s3012] ss:$4 sm:$0x7] %vm2893, %v3008
    %s3014 = scalar_lea.vmem [#allocation3], 13
    %3015 = vst.msk [vmem:[%s3014] ss:$4 sm:$0x7] %vm2893, %v3009
    %s3016 = sld [smem:[#allocation11 + $0x2]]
    %s3017 = sld [smem:[#allocation13 + $0x2]]
    %3020 = vst [vmem:[#allocation1] ss:$9 sm:$0xff] %v2754
    %s3021 = scalar_lea.vmem [#allocation1], 1
    %3022 = vst [vmem:[%s3021] ss:$9 sm:$0xff] %v2755
    %v3023 = vld [vmem:[#allocation1] sm:$0xff]
    %v3024 = vld [vmem:[#allocation1 + $0x9] sm:$0xff]
    %v3027 = vsel %vm2785, %v3023, 0.0
    %v3028 = vsel %vm2785, %v3024, 0.0
    %v3029 = vadd.f32 %v3027, %v3028
    %3030 = vadd.xlane.f32.xlu0 %v3029
    %v3031 = vpop.xlane.xlu0 %3030
    %v3032 = vrot.slane %v3031, 4
    %v3033 = vadd.f32 %v3031, %v3032
    %v3034 = vrot.slane %v3033, 2
    %v3035 = vadd.f32 %v3033, %v3034
    %v3036 = vrot.slane %v3035, 1
    %v3037 = vadd.f32 %v3035, %v3036
    %s3038 = vtos %v3037
    %v3039 = vmul.f32 %v2754, %v2754
    %v3040 = vmul.f32 %v2755, %v2755
    %3043 = vst [vmem:[#allocation1] ss:$9 sm:$0xff] %v3039
    %s3044 = scalar_lea.vmem [#allocation1], 1
    %3045 = vst [vmem:[%s3044] ss:$9 sm:$0xff] %v3040
    %v3046 = vld [vmem:[#allocation1] sm:$0xff]
    %v3047 = vld [vmem:[#allocation1 + $0x9] sm:$0xff]
    %v3050 = vsel %vm2785, %v3046, 0.0
    %v3051 = vsel %vm2785, %v3047, 0.0
    %v3052 = vadd.f32 %v3050, %v3051
    %3053 = vadd.xlane.f32.xlu0 %v3052
    %v3054 = vpop.xlane.xlu0 %3053
    %v3055 = vrot.slane %v3054, 4
    %v3056 = vadd.f32 %v3054, %v3055
    %v3057 = vrot.slane %v3056, 2
    %v3058 = vadd.f32 %v3056, %v3057
    %v3059 = vrot.slane %v3058, 1
    %v3060 = vadd.f32 %v3058, %v3059
    %s3061 = vtos %v3060
    %s3062 = smul.f32 %s3038, 0.001953125
    %s3063 = smul.f32 %s3061, 0.001953125
    %s3064 = smul.f32 %s3062, %s3062
    %s3065 = ssub.f32 %s3063, %s3064
    %s3066 = smax.f32 %s3065, 0.0
    %s3067 = sadd.f32 %s3066, 1e-05
    %v3068 = vstv %s3067
    %v3069 = vrsqrt.pop %v3068
    %v3070 = vmul.f32 %v3069, %v3068
    %v3071 = vmul.f32 %v3070, %v3069
    %v3072 = vmul.f32 0.5, %v3071
    %v3073 = vsub.f32 1.5, %v3072
    %v3074 = vmul.f32 %v3069, %v3073
    %vm3075 = vweird.f32 %v3068
    %vm3076 = vweird.f32 %v3069
    %vm3077 = vmor %vm3075, %vm3076
    %v3078 = vsel %vm3077, %v3069, %v3074
    %s3079 = vtos %v3078
    %s3080 = smul.f32 %s3016, %s3079
    %s3081 = smul.f32 %s3062, %s3080
    %s3082 = ssub.f32 %s3017, %s3081
    %v3083 = vstv %s3080
    %v3084 = vmul.f32 %v2754, %v3083
    %v3085 = vmul.f32 %v2755, %v3083
    %v3086 = vstv %s3082
    %v3087 = vadd.f32 %v3084, %v3086
    %v3088 = vadd.f32 %v3085, %v3086
    %v3089 = vmin.f32 %v3087, 20.0
    %v3090 = vmin.f32 %v3088, 20.0
    %v3091 = vmul.f32 %v3089, 1.442695
    %v3092 = vpow.pop %v3091
    %v3093 = vmul.f32 %v3090, 1.442695
    %v3094 = vpow.pop %v3093
    %v3095 = vadd.f32 %v3092, 1.0
    %v3096 = vadd.f32 %v3094, 1.0
    %v3097 = vmul.f32 %v3095, %v3095
    %v3098 = vmul.f32 %v3096, %v3096
    %v3099 = vadd.f32 %v3097, 1.0
    %v3100 = vadd.f32 %v3098, 1.0
    %v3101 = vrcp.pop %v3099
    %v3102 = vrcp.pop %v3100
    %v3103 = vmul.f32 %v3099, %v3101
    %v3104 = vmul.f32 %v3100, %v3102
    %v3105 = vsub.f32 2.0, %v3103
    %v3106 = vsub.f32 2.0, %v3104
    %v3107 = vmul.f32 %v3101, %v3105
    %v3108 = vmul.f32 %v3102, %v3106
    %v3109 = vsub.f32 %v3097, 1.0
    %v3110 = vsub.f32 %v3098, 1.0
    %v3111 = vmul.f32 %v3087, %v3109
    %v3112 = vmul.f32 %v3088, %v3110
    %v3113 = vmul.f32 %v3111, %v3107
    %v3114 = vmul.f32 %v3112, %v3108
    %vm3115 = vcmp.gt.f32.partialorder %v3087, 20.0
    %vm3116 = vcmp.gt.f32.partialorder %v3088, 20.0
    %v3117 = vsel %vm3115, %v3087, %v3113
    %v3118 = vsel %vm3116, %v3088, %v3114
    %3121 = vrot.lane.b32.xlu0 %v3117, 17
    %v3122 = vpop.permute.xlu0 %3121
    %3123 = vrot.lane.b32.xlu0 %v3118, 17
    %v3124 = vpop.permute.xlu0 %3123
    %v3125 = vrot.slane %v3122, 7
    %v3126 = vrot.slane %v3124, 7
    %v3127 = vsel %vm201, %v3125, %v3122
    %v3128 = vsel %vm201, %v3126, %v3124
    %s3131 = scalar_lea.vmem [#allocation3], 2
    %3132 = vst.msk [vmem:[%s3131] ss:$4 sm:$0x7] %vm2893, %v3127
    %s3133 = scalar_lea.vmem [#allocation3], 14
    %3134 = vst.msk [vmem:[%s3133] ss:$4 sm:$0x7] %vm2893, %v3128
    %s3135 = sld [smem:[#allocation11 + $0x3]]
    %s3136 = sld [smem:[#allocation13 + $0x3]]
    %3139 = vst [vmem:[#allocation1] ss:$9 sm:$0xff] %v2772
    %s3140 = scalar_lea.vmem [#allocation1], 1
    %3141 = vst [vmem:[%s3140] ss:$9 sm:$0xff] %v2773
    %v3142 = vld [vmem:[#allocation1] sm:$0xff]
    %v3143 = vld [vmem:[#allocation1 + $0x9] sm:$0xff]
    %v3146 = vsel %vm2785, %v3142, 0.0
    %v3147 = vsel %vm2785, %v3143, 0.0
    %v3148 = vadd.f32 %v3146, %v3147
    %3149 = vadd.xlane.f32.xlu0 %v3148
    %v3150 = vpop.xlane.xlu0 %3149
    %v3151 = vrot.slane %v3150, 4
    %v3152 = vadd.f32 %v3150, %v3151
    %v3153 = vrot.slane %v3152, 2
    %v3154 = vadd.f32 %v3152, %v3153
    %v3155 = vrot.slane %v3154, 1
    %v3156 = vadd.f32 %v3154, %v3155
    %s3157 = vtos %v3156
    %v3158 = vmul.f32 %v2772, %v2772
    %v3159 = vmul.f32 %v2773, %v2773
    %3162 = vst [vmem:[#allocation1] ss:$9 sm:$0xff] %v3158
    %s3163 = scalar_lea.vmem [#allocation1], 1
    %3164 = vst [vmem:[%s3163] ss:$9 sm:$0xff] %v3159
    %v3165 = vld [vmem:[#allocation1] sm:$0xff]
    %v3166 = vld [vmem:[#allocation1 + $0x9] sm:$0xff]
    %v3169 = vsel %vm2785, %v3165, 0.0
    %v3170 = vsel %vm2785, %v3166, 0.0
    %v3171 = vadd.f32 %v3169, %v3170
    %3172 = vadd.xlane.f32.xlu0 %v3171
    %v3173 = vpop.xlane.xlu0 %3172
    %v3174 = vrot.slane %v3173, 4
    %v3175 = vadd.f32 %v3173, %v3174
    %v3176 = vrot.slane %v3175, 2
    %v3177 = vadd.f32 %v3175, %v3176
    %v3178 = vrot.slane %v3177, 1
    %v3179 = vadd.f32 %v3177, %v3178
    %s3180 = vtos %v3179
    %s3181 = smul.f32 %s3157, 0.001953125
    %s3182 = smul.f32 %s3180, 0.001953125
    %s3183 = smul.f32 %s3181, %s3181
    %s3184 = ssub.f32 %s3182, %s3183
    %s3185 = smax.f32 %s3184, 0.0
    %s3186 = sadd.f32 %s3185, 1e-05
    %v3187 = vstv %s3186
    %v3188 = vrsqrt.pop %v3187
    %v3189 = vmul.f32 %v3188, %v3187
    %v3190 = vmul.f32 %v3189, %v3188
    %v3191 = vmul.f32 0.5, %v3190
    %v3192 = vsub.f32 1.5, %v3191
    %v3193 = vmul.f32 %v3188, %v3192
    %vm3194 = vweird.f32 %v3187
    %vm3195 = vweird.f32 %v3188
    %vm3196 = vmor %vm3194, %vm3195
    %v3197 = vsel %vm3196, %v3188, %v3193
    %s3198 = vtos %v3197
    %s3199 = smul.f32 %s3135, %s3198
    %s3200 = smul.f32 %s3181, %s3199
    %s3201 = ssub.f32 %s3136, %s3200
    %v3202 = vstv %s3199
    %v3203 = vmul.f32 %v2772, %v3202
    %v3204 = vmul.f32 %v2773, %v3202
    %v3205 = vstv %s3201
    %v3206 = vadd.f32 %v3203, %v3205
    %v3207 = vadd.f32 %v3204, %v3205
    %v3208 = vmin.f32 %v3206, 20.0
    %v3209 = vmin.f32 %v3207, 20.0
    %v3210 = vmul.f32 %v3208, 1.442695
    %v3211 = vpow.pop %v3210
    %v3212 = vmul.f32 %v3209, 1.442695
    %v3213 = vpow.pop %v3212
    %v3214 = vadd.f32 %v3211, 1.0
    %v3215 = vadd.f32 %v3213, 1.0
    %v3216 = vmul.f32 %v3214, %v3214
    %v3217 = vmul.f32 %v3215, %v3215
    %v3218 = vadd.f32 %v3216, 1.0
    %v3219 = vadd.f32 %v3217, 1.0
    %v3220 = vrcp.pop %v3218
    %v3221 = vrcp.pop %v3219
    %v3222 = vmul.f32 %v3218, %v3220
    %v3223 = vmul.f32 %v3219, %v3221
    %v3224 = vsub.f32 2.0, %v3222
    %v3225 = vsub.f32 2.0, %v3223
    %v3226 = vmul.f32 %v3220, %v3224
    %v3227 = vmul.f32 %v3221, %v3225
    %v3228 = vsub.f32 %v3216, 1.0
    %v3229 = vsub.f32 %v3217, 1.0
    %v3230 = vmul.f32 %v3206, %v3228
    %v3231 = vmul.f32 %v3207, %v3229
    %v3232 = vmul.f32 %v3230, %v3226
    %v3233 = vmul.f32 %v3231, %v3227
    %vm3234 = vcmp.gt.f32.partialorder %v3206, 20.0
    %vm3235 = vcmp.gt.f32.partialorder %v3207, 20.0
    %v3236 = vsel %vm3234, %v3206, %v3232
    %v3237 = vsel %vm3235, %v3207, %v3233
    %3240 = vrot.lane.b32.xlu0 %v3236, 17
    %v3241 = vpop.permute.xlu0 %3240
    %3242 = vrot.lane.b32.xlu0 %v3237, 17
    %v3243 = vpop.permute.xlu0 %3242
    %v3244 = vrot.slane %v3241, 7
    %v3245 = vrot.slane %v3243, 7
    %v3246 = vsel %vm201, %v3244, %v3241
    %v3247 = vsel %vm201, %v3245, %v3243
    %s3250 = scalar_lea.vmem [#allocation3], 3
    %3251 = vst.msk [vmem:[%s3250] ss:$4 sm:$0x7] %vm2893, %v3246
    %s3252 = scalar_lea.vmem [#allocation3], 15
    %3253 = vst.msk [vmem:[%s3252] ss:$4 sm:$0x7] %vm2893, %v3247
    %s3254 = sld [smem:[#allocation16]]
    %v3255 = vstv %s3254
    %s3256 = sld [smem:[#allocation16 + $0x1]]
    %v3257 = vstv %s3256
    %s3258 = sld [smem:[#allocation16 + $0x2]]
    %v3259 = vstv %s3258
    %s3260 = sld [smem:[#allocation16 + $0x3]]
    %v3261 = vstv %s3260
    %v3262 = vld [vmem:[#allocation3] ss:$4 sm:$0x3]
    %v3263 = vld [vmem:[%s2895] ss:$4 sm:$0x3]
    %v3264 = vmul.f32 %v3262, %v231
    %v3265 = vmul.f32 %v3263, %v234
    %s3266 = sld [smem:[#allocation14]]
    %v3267 = vstv %s3266
    %v3268 = vmul.f32 %v3267, %v3264
    %v3269 = vmul.f32 %v3267, %v3265
    %v3270 = vadd.f32 %v3255, %v3268
    %v3271 = vadd.f32 %v3255, %v3269
    %s3272 = sld [smem:[#allocation14 + $0x24]]
    %v3273 = vstv %s3272
    %v3274 = vmul.f32 %v3273, %v3264
    %v3275 = vmul.f32 %v3273, %v3265
    %v3276 = vadd.f32 %v3257, %v3274
    %v3277 = vadd.f32 %v3257, %v3275
    %s3278 = sld [smem:[#allocation14 + $0x48]]
    %v3279 = vstv %s3278
    %v3280 = vmul.f32 %v3279, %v3264
    %v3281 = vmul.f32 %v3279, %v3265
    %v3282 = vadd.f32 %v3259, %v3280
    %v3283 = vadd.f32 %v3259, %v3281
    %s3284 = sld [smem:[#allocation14 + $0x6c]]
    %v3285 = vstv %s3284
    %v3286 = vmul.f32 %v3285, %v3264
    %v3287 = vmul.f32 %v3285, %v3265
    %v3288 = vadd.f32 %v3261, %v3286
    %v3289 = vadd.f32 %v3261, %v3287
    %v3290 = vld [vmem:[#allocation3] ss:$4 sm:$0x7]
    %v3291 = vld [vmem:[%s2895] ss:$4 sm:$0x7]
    %s3292 = sld [smem:[#allocation14 + $0x1]]
    %v3293 = vstv %s3292
    %v3294 = vmul.f32 %v3293, %v3290
    %v3295 = vmul.f32 %v3293, %v3291
    %3298 = vrot.lane.b32.xlu0 %v3294, 127
    %v3299 = vpop.permute.xlu0 %3298
    %3300 = vrot.lane.b32.xlu0 %v3295, 127
    %v3301 = vpop.permute.xlu0 %3300
    %v3302 = vrot.slane %v3299, 1
    %v3303 = vrot.slane %v3301, 1
    %v3304 = vsel %vm277, %v3299, %v3302
    %v3305 = vsel %vm277, %v3301, %v3303
    %v3308 = vadd.f32 %v3270, %v3304
    %v3309 = vadd.f32 %v3271, %v3305
    %s3310 = sld [smem:[#allocation14 + $0x25]]
    %v3311 = vstv %s3310
    %v3312 = vmul.f32 %v3311, %v3290
    %v3313 = vmul.f32 %v3311, %v3291
    %3316 = vrot.lane.b32.xlu0 %v3312, 127
    %v3317 = vpop.permute.xlu0 %3316
    %3318 = vrot.lane.b32.xlu0 %v3313, 127
    %v3319 = vpop.permute.xlu0 %3318
    %v3320 = vrot.slane %v3317, 1
    %v3321 = vrot.slane %v3319, 1
    %v3322 = vsel %vm277, %v3317, %v3320
    %v3323 = vsel %vm277, %v3319, %v3321
    %v3326 = vadd.f32 %v3276, %v3322
    %v3327 = vadd.f32 %v3277, %v3323
    %s3328 = sld [smem:[#allocation14 + $0x49]]
    %v3329 = vstv %s3328
    %v3330 = vmul.f32 %v3329, %v3290
    %v3331 = vmul.f32 %v3329, %v3291
    %3334 = vrot.lane.b32.xlu0 %v3330, 127
    %v3335 = vpop.permute.xlu0 %3334
    %3336 = vrot.lane.b32.xlu0 %v3331, 127
    %v3337 = vpop.permute.xlu0 %3336
    %v3338 = vrot.slane %v3335, 1
    %v3339 = vrot.slane %v3337, 1
    %v3340 = vsel %vm277, %v3335, %v3338
    %v3341 = vsel %vm277, %v3337, %v3339
    %v3344 = vadd.f32 %v3282, %v3340
    %v3345 = vadd.f32 %v3283, %v3341
    %s3346 = sld [smem:[#allocation14 + $0x6d]]
    %v3347 = vstv %s3346
    %v3348 = vmul.f32 %v3347, %v3290
    %v3349 = vmul.f32 %v3347, %v3291
    %3352 = vrot.lane.b32.xlu0 %v3348, 127
    %v3353 = vpop.permute.xlu0 %3352
    %3354 = vrot.lane.b32.xlu0 %v3349, 127
    %v3355 = vpop.permute.xlu0 %3354
    %v3356 = vrot.slane %v3353, 1
    %v3357 = vrot.slane %v3355, 1
    %v3358 = vsel %vm277, %v3353, %v3356
    %v3359 = vsel %vm277, %v3355, %v3357
    %v3362 = vadd.f32 %v3288, %v3358
    %v3363 = vadd.f32 %v3289, %v3359
    %v3364 = vmul.f32 %v3290, %v351
    %v3365 = vmul.f32 %v3291, %v352
    %s3366 = sld [smem:[#allocation14 + $0x2]]
    %v3367 = vstv %s3366
    %v3368 = vmul.f32 %v3367, %v3364
    %v3369 = vmul.f32 %v3367, %v3365
    %3372 = vrot.lane.b32.xlu0 %v3368, 126
    %v3373 = vpop.permute.xlu0 %3372
    %3374 = vrot.lane.b32.xlu0 %v3369, 126
    %v3375 = vpop.permute.xlu0 %3374
    %v3376 = vrot.slane %v3373, 1
    %v3377 = vrot.slane %v3375, 1
    %v3378 = vsel %vm369, %v3373, %v3376
    %v3379 = vsel %vm369, %v3375, %v3377
    %v3382 = vadd.f32 %v3308, %v3378
    %v3383 = vadd.f32 %v3309, %v3379
    %s3384 = sld [smem:[#allocation14 + $0x26]]
    %v3385 = vstv %s3384
    %v3386 = vmul.f32 %v3385, %v3364
    %v3387 = vmul.f32 %v3385, %v3365
    %3390 = vrot.lane.b32.xlu0 %v3386, 126
    %v3391 = vpop.permute.xlu0 %3390
    %3392 = vrot.lane.b32.xlu0 %v3387, 126
    %v3393 = vpop.permute.xlu0 %3392
    %v3394 = vrot.slane %v3391, 1
    %v3395 = vrot.slane %v3393, 1
    %v3396 = vsel %vm369, %v3391, %v3394
    %v3397 = vsel %vm369, %v3393, %v3395
    %v3400 = vadd.f32 %v3326, %v3396
    %v3401 = vadd.f32 %v3327, %v3397
    %s3402 = sld [smem:[#allocation14 + $0x4a]]
    %v3403 = vstv %s3402
    %v3404 = vmul.f32 %v3403, %v3364
    %v3405 = vmul.f32 %v3403, %v3365
    %3408 = vrot.lane.b32.xlu0 %v3404, 126
    %v3409 = vpop.permute.xlu0 %3408
    %3410 = vrot.lane.b32.xlu0 %v3405, 126
    %v3411 = vpop.permute.xlu0 %3410
    %v3412 = vrot.slane %v3409, 1
    %v3413 = vrot.slane %v3411, 1
    %v3414 = vsel %vm369, %v3409, %v3412
    %v3415 = vsel %vm369, %v3411, %v3413
    %v3418 = vadd.f32 %v3344, %v3414
    %v3419 = vadd.f32 %v3345, %v3415
    %s3420 = sld [smem:[#allocation14 + $0x6e]]
    %v3421 = vstv %s3420
    %v3422 = vmul.f32 %v3421, %v3364
    %v3423 = vmul.f32 %v3421, %v3365
    %3426 = vrot.lane.b32.xlu0 %v3422, 126
    %v3427 = vpop.permute.xlu0 %3426
    %3428 = vrot.lane.b32.xlu0 %v3423, 126
    %v3429 = vpop.permute.xlu0 %3428
    %v3430 = vrot.slane %v3427, 1
    %v3431 = vrot.slane %v3429, 1
    %v3432 = vsel %vm369, %v3427, %v3430
    %v3433 = vsel %vm369, %v3429, %v3431
    %v3436 = vadd.f32 %v3362, %v3432
    %v3437 = vadd.f32 %v3363, %v3433
    %v3438 = vmul.f32 %v3290, %v437
    %v3439 = vmul.f32 %v3291, %v438
    %s3440 = sld [smem:[#allocation14 + $0x3]]
    %v3441 = vstv %s3440
    %v3442 = vmul.f32 %v3441, %v3438
    %v3443 = vmul.f32 %v3441, %v3439
    %3446 = vrot.lane.b32.xlu0 %v3442, 112
    %v3447 = vpop.permute.xlu0 %3446
    %3448 = vrot.lane.b32.xlu0 %v3443, 112
    %v3449 = vpop.permute.xlu0 %3448
    %v3450 = vrot.slane %v3447, 1
    %v3451 = vrot.slane %v3449, 1
    %v3452 = vsel %vm455, %v3447, %v3450
    %v3453 = vsel %vm455, %v3449, %v3451
    %v3456 = vadd.f32 %v3382, %v3452
    %v3457 = vadd.f32 %v3383, %v3453
    %s3458 = sld [smem:[#allocation14 + $0x27]]
    %v3459 = vstv %s3458
    %v3460 = vmul.f32 %v3459, %v3438
    %v3461 = vmul.f32 %v3459, %v3439
    %3464 = vrot.lane.b32.xlu0 %v3460, 112
    %v3465 = vpop.permute.xlu0 %3464
    %3466 = vrot.lane.b32.xlu0 %v3461, 112
    %v3467 = vpop.permute.xlu0 %3466
    %v3468 = vrot.slane %v3465, 1
    %v3469 = vrot.slane %v3467, 1
    %v3470 = vsel %vm455, %v3465, %v3468
    %v3471 = vsel %vm455, %v3467, %v3469
    %v3474 = vadd.f32 %v3400, %v3470
    %v3475 = vadd.f32 %v3401, %v3471
    %s3476 = sld [smem:[#allocation14 + $0x4b]]
    %v3477 = vstv %s3476
    %v3478 = vmul.f32 %v3477, %v3438
    %v3479 = vmul.f32 %v3477, %v3439
    %3482 = vrot.lane.b32.xlu0 %v3478, 112
    %v3483 = vpop.permute.xlu0 %3482
    %3484 = vrot.lane.b32.xlu0 %v3479, 112
    %v3485 = vpop.permute.xlu0 %3484
    %v3486 = vrot.slane %v3483, 1
    %v3487 = vrot.slane %v3485, 1
    %v3488 = vsel %vm455, %v3483, %v3486
    %v3489 = vsel %vm455, %v3485, %v3487
    %v3492 = vadd.f32 %v3418, %v3488
    %v3493 = vadd.f32 %v3419, %v3489
    %s3494 = sld [smem:[#allocation14 + $0x6f]]
    %v3495 = vstv %s3494
    %v3496 = vmul.f32 %v3495, %v3438
    %v3497 = vmul.f32 %v3495, %v3439
    %3500 = vrot.lane.b32.xlu0 %v3496, 112
    %v3501 = vpop.permute.xlu0 %3500
    %3502 = vrot.lane.b32.xlu0 %v3497, 112
    %v3503 = vpop.permute.xlu0 %3502
    %v3504 = vrot.slane %v3501, 1
    %v3505 = vrot.slane %v3503, 1
    %v3506 = vsel %vm455, %v3501, %v3504
    %v3507 = vsel %vm455, %v3503, %v3505
    %v3510 = vadd.f32 %v3436, %v3506
    %v3511 = vadd.f32 %v3437, %v3507
    %s3512 = sld [smem:[#allocation14 + $0x4]]
    %v3513 = vstv %s3512
    %v3514 = vmul.f32 %v3513, %v3290
    %v3515 = vmul.f32 %v3513, %v3291
    %3518 = vrot.lane.b32.xlu0 %v3514, 111
    %v3519 = vpop.permute.xlu0 %3518
    %3520 = vrot.lane.b32.xlu0 %v3515, 111
    %v3521 = vpop.permute.xlu0 %3520
    %v3522 = vrot.slane %v3519, 1
    %v3523 = vrot.slane %v3521, 1
    %v3524 = vsel %vm528, %v3519, %v3522
    %v3525 = vsel %vm528, %v3521, %v3523
    %v3528 = vadd.f32 %v3456, %v3524
    %v3529 = vadd.f32 %v3457, %v3525
    %s3530 = sld [smem:[#allocation14 + $0x28]]
    %v3531 = vstv %s3530
    %v3532 = vmul.f32 %v3531, %v3290
    %v3533 = vmul.f32 %v3531, %v3291
    %3536 = vrot.lane.b32.xlu0 %v3532, 111
    %v3537 = vpop.permute.xlu0 %3536
    %3538 = vrot.lane.b32.xlu0 %v3533, 111
    %v3539 = vpop.permute.xlu0 %3538
    %v3540 = vrot.slane %v3537, 1
    %v3541 = vrot.slane %v3539, 1
    %v3542 = vsel %vm528, %v3537, %v3540
    %v3543 = vsel %vm528, %v3539, %v3541
    %v3546 = vadd.f32 %v3474, %v3542
    %v3547 = vadd.f32 %v3475, %v3543
    %s3548 = sld [smem:[#allocation14 + $0x4c]]
    %v3549 = vstv %s3548
    %v3550 = vmul.f32 %v3549, %v3290
    %v3551 = vmul.f32 %v3549, %v3291
    %3554 = vrot.lane.b32.xlu0 %v3550, 111
    %v3555 = vpop.permute.xlu0 %3554
    %3556 = vrot.lane.b32.xlu0 %v3551, 111
    %v3557 = vpop.permute.xlu0 %3556
    %v3558 = vrot.slane %v3555, 1
    %v3559 = vrot.slane %v3557, 1
    %v3560 = vsel %vm528, %v3555, %v3558
    %v3561 = vsel %vm528, %v3557, %v3559
    %v3564 = vadd.f32 %v3492, %v3560
    %v3565 = vadd.f32 %v3493, %v3561
    %s3566 = sld [smem:[#allocation14 + $0x70]]
    %v3567 = vstv %s3566
    %v3568 = vmul.f32 %v3567, %v3290
    %v3569 = vmul.f32 %v3567, %v3291
    %3572 = vrot.lane.b32.xlu0 %v3568, 111
    %v3573 = vpop.permute.xlu0 %3572
    %3574 = vrot.lane.b32.xlu0 %v3569, 111
    %v3575 = vpop.permute.xlu0 %3574
    %v3576 = vrot.slane %v3573, 1
    %v3577 = vrot.slane %v3575, 1
    %v3578 = vsel %vm528, %v3573, %v3576
    %v3579 = vsel %vm528, %v3575, %v3577
    %v3582 = vadd.f32 %v3510, %v3578
    %v3583 = vadd.f32 %v3511, %v3579
    %v3584 = vmul.f32 %v3290, %v596
    %v3585 = vmul.f32 %v3291, %v597
    %s3586 = sld [smem:[#allocation14 + $0x5]]
    %v3587 = vstv %s3586
    %v3588 = vmul.f32 %v3587, %v3584
    %v3589 = vmul.f32 %v3587, %v3585
    %3592 = vrot.lane.b32.xlu0 %v3588, 110
    %v3593 = vpop.permute.xlu0 %3592
    %3594 = vrot.lane.b32.xlu0 %v3589, 110
    %v3595 = vpop.permute.xlu0 %3594
    %v3596 = vrot.slane %v3593, 1
    %v3597 = vrot.slane %v3595, 1
    %v3598 = vsel %vm614, %v3593, %v3596
    %v3599 = vsel %vm614, %v3595, %v3597
    %v3602 = vadd.f32 %v3528, %v3598
    %v3603 = vadd.f32 %v3529, %v3599
    %s3604 = sld [smem:[#allocation14 + $0x29]]
    %v3605 = vstv %s3604
    %v3606 = vmul.f32 %v3605, %v3584
    %v3607 = vmul.f32 %v3605, %v3585
    %3610 = vrot.lane.b32.xlu0 %v3606, 110
    %v3611 = vpop.permute.xlu0 %3610
    %3612 = vrot.lane.b32.xlu0 %v3607, 110
    %v3613 = vpop.permute.xlu0 %3612
    %v3614 = vrot.slane %v3611, 1
    %v3615 = vrot.slane %v3613, 1
    %v3616 = vsel %vm614, %v3611, %v3614
    %v3617 = vsel %vm614, %v3613, %v3615
    %v3620 = vadd.f32 %v3546, %v3616
    %v3621 = vadd.f32 %v3547, %v3617
    %s3622 = sld [smem:[#allocation14 + $0x4d]]
    %v3623 = vstv %s3622
    %v3624 = vmul.f32 %v3623, %v3584
    %v3625 = vmul.f32 %v3623, %v3585
    %3628 = vrot.lane.b32.xlu0 %v3624, 110
    %v3629 = vpop.permute.xlu0 %3628
    %3630 = vrot.lane.b32.xlu0 %v3625, 110
    %v3631 = vpop.permute.xlu0 %3630
    %v3632 = vrot.slane %v3629, 1
    %v3633 = vrot.slane %v3631, 1
    %v3634 = vsel %vm614, %v3629, %v3632
    %v3635 = vsel %vm614, %v3631, %v3633
    %v3638 = vadd.f32 %v3564, %v3634
    %v3639 = vadd.f32 %v3565, %v3635
    %s3640 = sld [smem:[#allocation14 + $0x71]]
    %v3641 = vstv %s3640
    %v3642 = vmul.f32 %v3641, %v3584
    %v3643 = vmul.f32 %v3641, %v3585
    %3646 = vrot.lane.b32.xlu0 %v3642, 110
    %v3647 = vpop.permute.xlu0 %3646
    %3648 = vrot.lane.b32.xlu0 %v3643, 110
    %v3649 = vpop.permute.xlu0 %3648
    %v3650 = vrot.slane %v3647, 1
    %v3651 = vrot.slane %v3649, 1
    %v3652 = vsel %vm614, %v3647, %v3650
    %v3653 = vsel %vm614, %v3649, %v3651
    %v3656 = vadd.f32 %v3582, %v3652
    %v3657 = vadd.f32 %v3583, %v3653
    %v3658 = vmul.f32 %v3290, %v682
    %v3659 = vmul.f32 %v3291, %v683
    %s3660 = sld [smem:[#allocation14 + $0x6]]
    %v3661 = vstv %s3660
    %v3662 = vmul.f32 %v3661, %v3658
    %v3663 = vmul.f32 %v3661, %v3659
    %3666 = vrot.lane.b32.xlu0 %v3662, 96
    %v3667 = vpop.permute.xlu0 %3666
    %3668 = vrot.lane.b32.xlu0 %v3663, 96
    %v3669 = vpop.permute.xlu0 %3668
    %v3670 = vrot.slane %v3667, 1
    %v3671 = vrot.slane %v3669, 1
    %v3672 = vsel %vm700, %v3667, %v3670
    %v3673 = vsel %vm700, %v3669, %v3671
    %v3676 = vadd.f32 %v3602, %v3672
    %v3677 = vadd.f32 %v3603, %v3673
    %s3678 = sld [smem:[#allocation14 + $0x2a]]
    %v3679 = vstv %s3678
    %v3680 = vmul.f32 %v3679, %v3658
    %v3681 = vmul.f32 %v3679, %v3659
    %3684 = vrot.lane.b32.xlu0 %v3680, 96
    %v3685 = vpop.permute.xlu0 %3684
    %3686 = vrot.lane.b32.xlu0 %v3681, 96
    %v3687 = vpop.permute.xlu0 %3686
    %v3688 = vrot.slane %v3685, 1
    %v3689 = vrot.slane %v3687, 1
    %v3690 = vsel %vm700, %v3685, %v3688
    %v3691 = vsel %vm700, %v3687, %v3689
    %v3694 = vadd.f32 %v3620, %v3690
    %v3695 = vadd.f32 %v3621, %v3691
    %s3696 = sld [smem:[#allocation14 + $0x4e]]
    %v3697 = vstv %s3696
    %v3698 = vmul.f32 %v3697, %v3658
    %v3699 = vmul.f32 %v3697, %v3659
    %3702 = vrot.lane.b32.xlu0 %v3698, 96
    %v3703 = vpop.permute.xlu0 %3702
    %3704 = vrot.lane.b32.xlu0 %v3699, 96
    %v3705 = vpop.permute.xlu0 %3704
    %v3706 = vrot.slane %v3703, 1
    %v3707 = vrot.slane %v3705, 1
    %v3708 = vsel %vm700, %v3703, %v3706
    %v3709 = vsel %vm700, %v3705, %v3707
    %v3712 = vadd.f32 %v3638, %v3708
    %v3713 = vadd.f32 %v3639, %v3709
    %s3714 = sld [smem:[#allocation14 + $0x72]]
    %v3715 = vstv %s3714
    %v3716 = vmul.f32 %v3715, %v3658
    %v3717 = vmul.f32 %v3715, %v3659
    %3720 = vrot.lane.b32.xlu0 %v3716, 96
    %v3721 = vpop.permute.xlu0 %3720
    %3722 = vrot.lane.b32.xlu0 %v3717, 96
    %v3723 = vpop.permute.xlu0 %3722
    %v3724 = vrot.slane %v3721, 1
    %v3725 = vrot.slane %v3723, 1
    %v3726 = vsel %vm700, %v3721, %v3724
    %v3727 = vsel %vm700, %v3723, %v3725
    %v3730 = vadd.f32 %v3656, %v3726
    %v3731 = vadd.f32 %v3657, %v3727
    %s3732 = sld [smem:[#allocation14 + $0x7]]
    %v3733 = vstv %s3732
    %v3734 = vmul.f32 %v3733, %v3290
    %v3735 = vmul.f32 %v3733, %v3291
    %3738 = vrot.lane.b32.xlu0 %v3734, 95
    %v3739 = vpop.permute.xlu0 %3738
    %3740 = vrot.lane.b32.xlu0 %v3735, 95
    %v3741 = vpop.permute.xlu0 %3740
    %v3742 = vrot.slane %v3739, 1
    %v3743 = vrot.slane %v3741, 1
    %v3744 = vsel %vm773, %v3739, %v3742
    %v3745 = vsel %vm773, %v3741, %v3743
    %v3748 = vadd.f32 %v3676, %v3744
    %v3749 = vadd.f32 %v3677, %v3745
    %s3750 = sld [smem:[#allocation14 + $0x2b]]
    %v3751 = vstv %s3750
    %v3752 = vmul.f32 %v3751, %v3290
    %v3753 = vmul.f32 %v3751, %v3291
    %3756 = vrot.lane.b32.xlu0 %v3752, 95
    %v3757 = vpop.permute.xlu0 %3756
    %3758 = vrot.lane.b32.xlu0 %v3753, 95
    %v3759 = vpop.permute.xlu0 %3758
    %v3760 = vrot.slane %v3757, 1
    %v3761 = vrot.slane %v3759, 1
    %v3762 = vsel %vm773, %v3757, %v3760
    %v3763 = vsel %vm773, %v3759, %v3761
    %v3766 = vadd.f32 %v3694, %v3762
    %v3767 = vadd.f32 %v3695, %v3763
    %s3768 = sld [smem:[#allocation14 + $0x4f]]
    %v3769 = vstv %s3768
    %v3770 = vmul.f32 %v3769, %v3290
    %v3771 = vmul.f32 %v3769, %v3291
    %3774 = vrot.lane.b32.xlu0 %v3770, 95
    %v3775 = vpop.permute.xlu0 %3774
    %3776 = vrot.lane.b32.xlu0 %v3771, 95
    %v3777 = vpop.permute.xlu0 %3776
    %v3778 = vrot.slane %v3775, 1
    %v3779 = vrot.slane %v3777, 1
    %v3780 = vsel %vm773, %v3775, %v3778
    %v3781 = vsel %vm773, %v3777, %v3779
    %v3784 = vadd.f32 %v3712, %v3780
    %v3785 = vadd.f32 %v3713, %v3781
    %s3786 = sld [smem:[#allocation14 + $0x73]]
    %v3787 = vstv %s3786
    %v3788 = vmul.f32 %v3787, %v3290
    %v3789 = vmul.f32 %v3787, %v3291
    %3792 = vrot.lane.b32.xlu0 %v3788, 95
    %v3793 = vpop.permute.xlu0 %3792
    %3794 = vrot.lane.b32.xlu0 %v3789, 95
    %v3795 = vpop.permute.xlu0 %3794
    %v3796 = vrot.slane %v3793, 1
    %v3797 = vrot.slane %v3795, 1
    %v3798 = vsel %vm773, %v3793, %v3796
    %v3799 = vsel %vm773, %v3795, %v3797
    %v3802 = vadd.f32 %v3730, %v3798
    %v3803 = vadd.f32 %v3731, %v3799
    %v3804 = vmul.f32 %v3290, %v841
    %v3805 = vmul.f32 %v3291, %v842
    %s3806 = sld [smem:[#allocation14 + $0x8]]
    %v3807 = vstv %s3806
    %v3808 = vmul.f32 %v3807, %v3804
    %v3809 = vmul.f32 %v3807, %v3805
    %3812 = vrot.lane.b32.xlu0 %v3808, 94
    %v3813 = vpop.permute.xlu0 %3812
    %3814 = vrot.lane.b32.xlu0 %v3809, 94
    %v3815 = vpop.permute.xlu0 %3814
    %v3816 = vrot.slane %v3813, 1
    %v3817 = vrot.slane %v3815, 1
    %v3818 = vsel %vm859, %v3813, %v3816
    %v3819 = vsel %vm859, %v3815, %v3817
    %v3822 = vadd.f32 %v3748, %v3818
    %v3823 = vadd.f32 %v3749, %v3819
    %s3824 = sld [smem:[#allocation14 + $0x2c]]
    %v3825 = vstv %s3824
    %v3826 = vmul.f32 %v3825, %v3804
    %v3827 = vmul.f32 %v3825, %v3805
    %3830 = vrot.lane.b32.xlu0 %v3826, 94
    %v3831 = vpop.permute.xlu0 %3830
    %3832 = vrot.lane.b32.xlu0 %v3827, 94
    %v3833 = vpop.permute.xlu0 %3832
    %v3834 = vrot.slane %v3831, 1
    %v3835 = vrot.slane %v3833, 1
    %v3836 = vsel %vm859, %v3831, %v3834
    %v3837 = vsel %vm859, %v3833, %v3835
    %v3840 = vadd.f32 %v3766, %v3836
    %v3841 = vadd.f32 %v3767, %v3837
    %s3842 = sld [smem:[#allocation14 + $0x50]]
    %v3843 = vstv %s3842
    %v3844 = vmul.f32 %v3843, %v3804
    %v3845 = vmul.f32 %v3843, %v3805
    %3848 = vrot.lane.b32.xlu0 %v3844, 94
    %v3849 = vpop.permute.xlu0 %3848
    %3850 = vrot.lane.b32.xlu0 %v3845, 94
    %v3851 = vpop.permute.xlu0 %3850
    %v3852 = vrot.slane %v3849, 1
    %v3853 = vrot.slane %v3851, 1
    %v3854 = vsel %vm859, %v3849, %v3852
    %v3855 = vsel %vm859, %v3851, %v3853
    %v3858 = vadd.f32 %v3784, %v3854
    %v3859 = vadd.f32 %v3785, %v3855
    %s3860 = sld [smem:[#allocation14 + $0x74]]
    %v3861 = vstv %s3860
    %v3862 = vmul.f32 %v3861, %v3804
    %v3863 = vmul.f32 %v3861, %v3805
    %3866 = vrot.lane.b32.xlu0 %v3862, 94
    %v3867 = vpop.permute.xlu0 %3866
    %3868 = vrot.lane.b32.xlu0 %v3863, 94
    %v3869 = vpop.permute.xlu0 %3868
    %v3870 = vrot.slane %v3867, 1
    %v3871 = vrot.slane %v3869, 1
    %v3872 = vsel %vm859, %v3867, %v3870
    %v3873 = vsel %vm859, %v3869, %v3871
    %v3876 = vadd.f32 %v3802, %v3872
    %v3877 = vadd.f32 %v3803, %v3873
    %v3878 = vld [vmem:[%s3012] ss:$4 sm:$0x3]
    %v3879 = vld [vmem:[%s3014] ss:$4 sm:$0x3]
    %v3880 = vmul.f32 %v3878, %v231
    %v3881 = vmul.f32 %v3879, %v234
    %s3882 = sld [smem:[#allocation14 + $0x9]]
    %v3883 = vstv %s3882
    %v3884 = vmul.f32 %v3883, %v3880
    %v3885 = vmul.f32 %v3883, %v3881
    %v3886 = vadd.f32 %v3822, %v3884
    %v3887 = vadd.f32 %v3823, %v3885
    %s3888 = sld [smem:[#allocation14 + $0x2d]]
    %v3889 = vstv %s3888
    %v3890 = vmul.f32 %v3889, %v3880
    %v3891 = vmul.f32 %v3889, %v3881
    %v3892 = vadd.f32 %v3840, %v3890
    %v3893 = vadd.f32 %v3841, %v3891
    %s3894 = sld [smem:[#allocation14 + $0x51]]
    %v3895 = vstv %s3894
    %v3896 = vmul.f32 %v3895, %v3880
    %v3897 = vmul.f32 %v3895, %v3881
    %v3898 = vadd.f32 %v3858, %v3896
    %v3899 = vadd.f32 %v3859, %v3897
    %s3900 = sld [smem:[#allocation14 + $0x75]]
    %v3901 = vstv %s3900
    %v3902 = vmul.f32 %v3901, %v3880
    %v3903 = vmul.f32 %v3901, %v3881
    %v3904 = vadd.f32 %v3876, %v3902
    %v3905 = vadd.f32 %v3877, %v3903
    %v3906 = vld [vmem:[%s3012] ss:$4 sm:$0x7]
    %v3907 = vld [vmem:[%s3014] ss:$4 sm:$0x7]
    %s3908 = sld [smem:[#allocation14 + $0xa]]
    %v3909 = vstv %s3908
    %v3910 = vmul.f32 %v3909, %v3906
    %v3911 = vmul.f32 %v3909, %v3907
    %3914 = vrot.lane.b32.xlu0 %v3910, 127
    %v3915 = vpop.permute.xlu0 %3914
    %3916 = vrot.lane.b32.xlu0 %v3911, 127
    %v3917 = vpop.permute.xlu0 %3916
    %v3918 = vrot.slane %v3915, 1
    %v3919 = vrot.slane %v3917, 1
    %v3920 = vsel %vm277, %v3915, %v3918
    %v3921 = vsel %vm277, %v3917, %v3919
    %v3924 = vadd.f32 %v3886, %v3920
    %v3925 = vadd.f32 %v3887, %v3921
    %s3926 = sld [smem:[#allocation14 + $0x2e]]
    %v3927 = vstv %s3926
    %v3928 = vmul.f32 %v3927, %v3906
    %v3929 = vmul.f32 %v3927, %v3907
    %3932 = vrot.lane.b32.xlu0 %v3928, 127
    %v3933 = vpop.permute.xlu0 %3932
    %3934 = vrot.lane.b32.xlu0 %v3929, 127
    %v3935 = vpop.permute.xlu0 %3934
    %v3936 = vrot.slane %v3933, 1
    %v3937 = vrot.slane %v3935, 1
    %v3938 = vsel %vm277, %v3933, %v3936
    %v3939 = vsel %vm277, %v3935, %v3937
    %v3942 = vadd.f32 %v3892, %v3938
    %v3943 = vadd.f32 %v3893, %v3939
    %s3944 = sld [smem:[#allocation14 + $0x52]]
    %v3945 = vstv %s3944
    %v3946 = vmul.f32 %v3945, %v3906
    %v3947 = vmul.f32 %v3945, %v3907
    %3950 = vrot.lane.b32.xlu0 %v3946, 127
    %v3951 = vpop.permute.xlu0 %3950
    %3952 = vrot.lane.b32.xlu0 %v3947, 127
    %v3953 = vpop.permute.xlu0 %3952
    %v3954 = vrot.slane %v3951, 1
    %v3955 = vrot.slane %v3953, 1
    %v3956 = vsel %vm277, %v3951, %v3954
    %v3957 = vsel %vm277, %v3953, %v3955
    %v3960 = vadd.f32 %v3898, %v3956
    %v3961 = vadd.f32 %v3899, %v3957
    %s3962 = sld [smem:[#allocation14 + $0x76]]
    %v3963 = vstv %s3962
    %v3964 = vmul.f32 %v3963, %v3906
    %v3965 = vmul.f32 %v3963, %v3907
    %3968 = vrot.lane.b32.xlu0 %v3964, 127
    %v3969 = vpop.permute.xlu0 %3968
    %3970 = vrot.lane.b32.xlu0 %v3965, 127
    %v3971 = vpop.permute.xlu0 %3970
    %v3972 = vrot.slane %v3969, 1
    %v3973 = vrot.slane %v3971, 1
    %v3974 = vsel %vm277, %v3969, %v3972
    %v3975 = vsel %vm277, %v3971, %v3973
    %v3978 = vadd.f32 %v3904, %v3974
    %v3979 = vadd.f32 %v3905, %v3975
    %v3980 = vmul.f32 %v3906, %v351
    %v3981 = vmul.f32 %v3907, %v352
    %s3982 = sld [smem:[#allocation14 + $0xb]]
    %v3983 = vstv %s3982
    %v3984 = vmul.f32 %v3983, %v3980
    %v3985 = vmul.f32 %v3983, %v3981
    %3988 = vrot.lane.b32.xlu0 %v3984, 126
    %v3989 = vpop.permute.xlu0 %3988
    %3990 = vrot.lane.b32.xlu0 %v3985, 126
    %v3991 = vpop.permute.xlu0 %3990
    %v3992 = vrot.slane %v3989, 1
    %v3993 = vrot.slane %v3991, 1
    %v3994 = vsel %vm369, %v3989, %v3992
    %v3995 = vsel %vm369, %v3991, %v3993
    %v3998 = vadd.f32 %v3924, %v3994
    %v3999 = vadd.f32 %v3925, %v3995
    %s4000 = sld [smem:[#allocation14 + $0x2f]]
    %v4001 = vstv %s4000
    %v4002 = vmul.f32 %v4001, %v3980
    %v4003 = vmul.f32 %v4001, %v3981
    %4006 = vrot.lane.b32.xlu0 %v4002, 126
    %v4007 = vpop.permute.xlu0 %4006
    %4008 = vrot.lane.b32.xlu0 %v4003, 126
    %v4009 = vpop.permute.xlu0 %4008
    %v4010 = vrot.slane %v4007, 1
    %v4011 = vrot.slane %v4009, 1
    %v4012 = vsel %vm369, %v4007, %v4010
    %v4013 = vsel %vm369, %v4009, %v4011
    %v4016 = vadd.f32 %v3942, %v4012
    %v4017 = vadd.f32 %v3943, %v4013
    %s4018 = sld [smem:[#allocation14 + $0x53]]
    %v4019 = vstv %s4018
    %v4020 = vmul.f32 %v4019, %v3980
    %v4021 = vmul.f32 %v4019, %v3981
    %4024 = vrot.lane.b32.xlu0 %v4020, 126
    %v4025 = vpop.permute.xlu0 %4024
    %4026 = vrot.lane.b32.xlu0 %v4021, 126
    %v4027 = vpop.permute.xlu0 %4026
    %v4028 = vrot.slane %v4025, 1
    %v4029 = vrot.slane %v4027, 1
    %v4030 = vsel %vm369, %v4025, %v4028
    %v4031 = vsel %vm369, %v4027, %v4029
    %v4034 = vadd.f32 %v3960, %v4030
    %v4035 = vadd.f32 %v3961, %v4031
    %s4036 = sld [smem:[#allocation14 + $0x77]]
    %v4037 = vstv %s4036
    %v4038 = vmul.f32 %v4037, %v3980
    %v4039 = vmul.f32 %v4037, %v3981
    %4042 = vrot.lane.b32.xlu0 %v4038, 126
    %v4043 = vpop.permute.xlu0 %4042
    %4044 = vrot.lane.b32.xlu0 %v4039, 126
    %v4045 = vpop.permute.xlu0 %4044
    %v4046 = vrot.slane %v4043, 1
    %v4047 = vrot.slane %v4045, 1
    %v4048 = vsel %vm369, %v4043, %v4046
    %v4049 = vsel %vm369, %v4045, %v4047
    %v4052 = vadd.f32 %v3978, %v4048
    %v4053 = vadd.f32 %v3979, %v4049
    %v4054 = vmul.f32 %v3906, %v437
    %v4055 = vmul.f32 %v3907, %v438
    %s4056 = sld [smem:[#allocation14 + $0xc]]
    %v4057 = vstv %s4056
    %v4058 = vmul.f32 %v4057, %v4054
    %v4059 = vmul.f32 %v4057, %v4055
    %4062 = vrot.lane.b32.xlu0 %v4058, 112
    %v4063 = vpop.permute.xlu0 %4062
    %4064 = vrot.lane.b32.xlu0 %v4059, 112
    %v4065 = vpop.permute.xlu0 %4064
    %v4066 = vrot.slane %v4063, 1
    %v4067 = vrot.slane %v4065, 1
    %v4068 = vsel %vm455, %v4063, %v4066
    %v4069 = vsel %vm455, %v4065, %v4067
    %v4072 = vadd.f32 %v3998, %v4068
    %v4073 = vadd.f32 %v3999, %v4069
    %s4074 = sld [smem:[#allocation14 + $0x30]]
    %v4075 = vstv %s4074
    %v4076 = vmul.f32 %v4075, %v4054
    %v4077 = vmul.f32 %v4075, %v4055
    %4080 = vrot.lane.b32.xlu0 %v4076, 112
    %v4081 = vpop.permute.xlu0 %4080
    %4082 = vrot.lane.b32.xlu0 %v4077, 112
    %v4083 = vpop.permute.xlu0 %4082
    %v4084 = vrot.slane %v4081, 1
    %v4085 = vrot.slane %v4083, 1
    %v4086 = vsel %vm455, %v4081, %v4084
    %v4087 = vsel %vm455, %v4083, %v4085
    %v4090 = vadd.f32 %v4016, %v4086
    %v4091 = vadd.f32 %v4017, %v4087
    %s4092 = sld [smem:[#allocation14 + $0x54]]
    %v4093 = vstv %s4092
    %v4094 = vmul.f32 %v4093, %v4054
    %v4095 = vmul.f32 %v4093, %v4055
    %4098 = vrot.lane.b32.xlu0 %v4094, 112
    %v4099 = vpop.permute.xlu0 %4098
    %4100 = vrot.lane.b32.xlu0 %v4095, 112
    %v4101 = vpop.permute.xlu0 %4100
    %v4102 = vrot.slane %v4099, 1
    %v4103 = vrot.slane %v4101, 1
    %v4104 = vsel %vm455, %v4099, %v4102
    %v4105 = vsel %vm455, %v4101, %v4103
    %v4108 = vadd.f32 %v4034, %v4104
    %v4109 = vadd.f32 %v4035, %v4105
    %s4110 = sld [smem:[#allocation14 + $0x78]]
    %v4111 = vstv %s4110
    %v4112 = vmul.f32 %v4111, %v4054
    %v4113 = vmul.f32 %v4111, %v4055
    %4116 = vrot.lane.b32.xlu0 %v4112, 112
    %v4117 = vpop.permute.xlu0 %4116
    %4118 = vrot.lane.b32.xlu0 %v4113, 112
    %v4119 = vpop.permute.xlu0 %4118
    %v4120 = vrot.slane %v4117, 1
    %v4121 = vrot.slane %v4119, 1
    %v4122 = vsel %vm455, %v4117, %v4120
    %v4123 = vsel %vm455, %v4119, %v4121
    %v4126 = vadd.f32 %v4052, %v4122
    %v4127 = vadd.f32 %v4053, %v4123
    %s4128 = sld [smem:[#allocation14 + $0xd]]
    %v4129 = vstv %s4128
    %v4130 = vmul.f32 %v4129, %v3906
    %v4131 = vmul.f32 %v4129, %v3907
    %4134 = vrot.lane.b32.xlu0 %v4130, 111
    %v4135 = vpop.permute.xlu0 %4134
    %4136 = vrot.lane.b32.xlu0 %v4131, 111
    %v4137 = vpop.permute.xlu0 %4136
    %v4138 = vrot.slane %v4135, 1
    %v4139 = vrot.slane %v4137, 1
    %v4140 = vsel %vm528, %v4135, %v4138
    %v4141 = vsel %vm528, %v4137, %v4139
    %v4144 = vadd.f32 %v4072, %v4140
    %v4145 = vadd.f32 %v4073, %v4141
    %s4146 = sld [smem:[#allocation14 + $0x31]]
    %v4147 = vstv %s4146
    %v4148 = vmul.f32 %v4147, %v3906
    %v4149 = vmul.f32 %v4147, %v3907
    %4152 = vrot.lane.b32.xlu0 %v4148, 111
    %v4153 = vpop.permute.xlu0 %4152
    %4154 = vrot.lane.b32.xlu0 %v4149, 111
    %v4155 = vpop.permute.xlu0 %4154
    %v4156 = vrot.slane %v4153, 1
    %v4157 = vrot.slane %v4155, 1
    %v4158 = vsel %vm528, %v4153, %v4156
    %v4159 = vsel %vm528, %v4155, %v4157
    %v4162 = vadd.f32 %v4090, %v4158
    %v4163 = vadd.f32 %v4091, %v4159
    %s4164 = sld [smem:[#allocation14 + $0x55]]
    %v4165 = vstv %s4164
    %v4166 = vmul.f32 %v4165, %v3906
    %v4167 = vmul.f32 %v4165, %v3907
    %4170 = vrot.lane.b32.xlu0 %v4166, 111
    %v4171 = vpop.permute.xlu0 %4170
    %4172 = vrot.lane.b32.xlu0 %v4167, 111
    %v4173 = vpop.permute.xlu0 %4172
    %v4174 = vrot.slane %v4171, 1
    %v4175 = vrot.slane %v4173, 1
    %v4176 = vsel %vm528, %v4171, %v4174
    %v4177 = vsel %vm528, %v4173, %v4175
    %v4180 = vadd.f32 %v4108, %v4176
    %v4181 = vadd.f32 %v4109, %v4177
    %s4182 = sld [smem:[#allocation14 + $0x79]]
    %v4183 = vstv %s4182
    %v4184 = vmul.f32 %v4183, %v3906
    %v4185 = vmul.f32 %v4183, %v3907
    %4188 = vrot.lane.b32.xlu0 %v4184, 111
    %v4189 = vpop.permute.xlu0 %4188
    %4190 = vrot.lane.b32.xlu0 %v4185, 111
    %v4191 = vpop.permute.xlu0 %4190
    %v4192 = vrot.slane %v4189, 1
    %v4193 = vrot.slane %v4191, 1
    %v4194 = vsel %vm528, %v4189, %v4192
    %v4195 = vsel %vm528, %v4191, %v4193
    %v4198 = vadd.f32 %v4126, %v4194
    %v4199 = vadd.f32 %v4127, %v4195
    %v4200 = vmul.f32 %v3906, %v596
    %v4201 = vmul.f32 %v3907, %v597
    %s4202 = sld [smem:[#allocation14 + $0xe]]
    %v4203 = vstv %s4202
    %v4204 = vmul.f32 %v4203, %v4200
    %v4205 = vmul.f32 %v4203, %v4201
    %4208 = vrot.lane.b32.xlu0 %v4204, 110
    %v4209 = vpop.permute.xlu0 %4208
    %4210 = vrot.lane.b32.xlu0 %v4205, 110
    %v4211 = vpop.permute.xlu0 %4210
    %v4212 = vrot.slane %v4209, 1
    %v4213 = vrot.slane %v4211, 1
    %v4214 = vsel %vm614, %v4209, %v4212
    %v4215 = vsel %vm614, %v4211, %v4213
    %v4218 = vadd.f32 %v4144, %v4214
    %v4219 = vadd.f32 %v4145, %v4215
    %s4220 = sld [smem:[#allocation14 + $0x32]]
    %v4221 = vstv %s4220
    %v4222 = vmul.f32 %v4221, %v4200
    %v4223 = vmul.f32 %v4221, %v4201
    %4226 = vrot.lane.b32.xlu0 %v4222, 110
    %v4227 = vpop.permute.xlu0 %4226
    %4228 = vrot.lane.b32.xlu0 %v4223, 110
    %v4229 = vpop.permute.xlu0 %4228
    %v4230 = vrot.slane %v4227, 1
    %v4231 = vrot.slane %v4229, 1
    %v4232 = vsel %vm614, %v4227, %v4230
    %v4233 = vsel %vm614, %v4229, %v4231
    %v4236 = vadd.f32 %v4162, %v4232
    %v4237 = vadd.f32 %v4163, %v4233
    %s4238 = sld [smem:[#allocation14 + $0x56]]
    %v4239 = vstv %s4238
    %v4240 = vmul.f32 %v4239, %v4200
    %v4241 = vmul.f32 %v4239, %v4201
    %4244 = vrot.lane.b32.xlu0 %v4240, 110
    %v4245 = vpop.permute.xlu0 %4244
    %4246 = vrot.lane.b32.xlu0 %v4241, 110
    %v4247 = vpop.permute.xlu0 %4246
    %v4248 = vrot.slane %v4245, 1
    %v4249 = vrot.slane %v4247, 1
    %v4250 = vsel %vm614, %v4245, %v4248
    %v4251 = vsel %vm614, %v4247, %v4249
    %v4254 = vadd.f32 %v4180, %v4250
    %v4255 = vadd.f32 %v4181, %v4251
    %s4256 = sld [smem:[#allocation14 + $0x7a]]
    %v4257 = vstv %s4256
    %v4258 = vmul.f32 %v4257, %v4200
    %v4259 = vmul.f32 %v4257, %v4201
    %4262 = vrot.lane.b32.xlu0 %v4258, 110
    %v4263 = vpop.permute.xlu0 %4262
    %4264 = vrot.lane.b32.xlu0 %v4259, 110
    %v4265 = vpop.permute.xlu0 %4264
    %v4266 = vrot.slane %v4263, 1
    %v4267 = vrot.slane %v4265, 1
    %v4268 = vsel %vm614, %v4263, %v4266
    %v4269 = vsel %vm614, %v4265, %v4267
    %v4272 = vadd.f32 %v4198, %v4268
    %v4273 = vadd.f32 %v4199, %v4269
    %v4274 = vmul.f32 %v3906, %v682
    %v4275 = vmul.f32 %v3907, %v683
    %s4276 = sld [smem:[#allocation14 + $0xf]]
    %v4277 = vstv %s4276
    %v4278 = vmul.f32 %v4277, %v4274
    %v4279 = vmul.f32 %v4277, %v4275
    %4282 = vrot.lane.b32.xlu0 %v4278, 96
    %v4283 = vpop.permute.xlu0 %4282
    %4284 = vrot.lane.b32.xlu0 %v4279, 96
    %v4285 = vpop.permute.xlu0 %4284
    %v4286 = vrot.slane %v4283, 1
    %v4287 = vrot.slane %v4285, 1
    %v4288 = vsel %vm700, %v4283, %v4286
    %v4289 = vsel %vm700, %v4285, %v4287
    %v4292 = vadd.f32 %v4218, %v4288
    %v4293 = vadd.f32 %v4219, %v4289
    %s4294 = sld [smem:[#allocation14 + $0x33]]
    %v4295 = vstv %s4294
    %v4296 = vmul.f32 %v4295, %v4274
    %v4297 = vmul.f32 %v4295, %v4275
    %4300 = vrot.lane.b32.xlu0 %v4296, 96
    %v4301 = vpop.permute.xlu0 %4300
    %4302 = vrot.lane.b32.xlu0 %v4297, 96
    %v4303 = vpop.permute.xlu0 %4302
    %v4304 = vrot.slane %v4301, 1
    %v4305 = vrot.slane %v4303, 1
    %v4306 = vsel %vm700, %v4301, %v4304
    %v4307 = vsel %vm700, %v4303, %v4305
    %v4310 = vadd.f32 %v4236, %v4306
    %v4311 = vadd.f32 %v4237, %v4307
    %s4312 = sld [smem:[#allocation14 + $0x57]]
    %v4313 = vstv %s4312
    %v4314 = vmul.f32 %v4313, %v4274
    %v4315 = vmul.f32 %v4313, %v4275
    %4318 = vrot.lane.b32.xlu0 %v4314, 96
    %v4319 = vpop.permute.xlu0 %4318
    %4320 = vrot.lane.b32.xlu0 %v4315, 96
    %v4321 = vpop.permute.xlu0 %4320
    %v4322 = vrot.slane %v4319, 1
    %v4323 = vrot.slane %v4321, 1
    %v4324 = vsel %vm700, %v4319, %v4322
    %v4325 = vsel %vm700, %v4321, %v4323
    %v4328 = vadd.f32 %v4254, %v4324
    %v4329 = vadd.f32 %v4255, %v4325
    %s4330 = sld [smem:[#allocation14 + $0x7b]]
    %v4331 = vstv %s4330
    %v4332 = vmul.f32 %v4331, %v4274
    %v4333 = vmul.f32 %v4331, %v4275
    %4336 = vrot.lane.b32.xlu0 %v4332, 96
    %v4337 = vpop.permute.xlu0 %4336
    %4338 = vrot.lane.b32.xlu0 %v4333, 96
    %v4339 = vpop.permute.xlu0 %4338
    %v4340 = vrot.slane %v4337, 1
    %v4341 = vrot.slane %v4339, 1
    %v4342 = vsel %vm700, %v4337, %v4340
    %v4343 = vsel %vm700, %v4339, %v4341
    %v4346 = vadd.f32 %v4272, %v4342
    %v4347 = vadd.f32 %v4273, %v4343
    %s4348 = sld [smem:[#allocation14 + $0x10]]
    %v4349 = vstv %s4348
    %v4350 = vmul.f32 %v4349, %v3906
    %v4351 = vmul.f32 %v4349, %v3907
    %4354 = vrot.lane.b32.xlu0 %v4350, 95
    %v4355 = vpop.permute.xlu0 %4354
    %4356 = vrot.lane.b32.xlu0 %v4351, 95
    %v4357 = vpop.permute.xlu0 %4356
    %v4358 = vrot.slane %v4355, 1
    %v4359 = vrot.slane %v4357, 1
    %v4360 = vsel %vm773, %v4355, %v4358
    %v4361 = vsel %vm773, %v4357, %v4359
    %v4364 = vadd.f32 %v4292, %v4360
    %v4365 = vadd.f32 %v4293, %v4361
    %s4366 = sld [smem:[#allocation14 + $0x34]]
    %v4367 = vstv %s4366
    %v4368 = vmul.f32 %v4367, %v3906
    %v4369 = vmul.f32 %v4367, %v3907
    %4372 = vrot.lane.b32.xlu0 %v4368, 95
    %v4373 = vpop.permute.xlu0 %4372
    %4374 = vrot.lane.b32.xlu0 %v4369, 95
    %v4375 = vpop.permute.xlu0 %4374
    %v4376 = vrot.slane %v4373, 1
    %v4377 = vrot.slane %v4375, 1
    %v4378 = vsel %vm773, %v4373, %v4376
    %v4379 = vsel %vm773, %v4375, %v4377
    %v4382 = vadd.f32 %v4310, %v4378
    %v4383 = vadd.f32 %v4311, %v4379
    %s4384 = sld [smem:[#allocation14 + $0x58]]
    %v4385 = vstv %s4384
    %v4386 = vmul.f32 %v4385, %v3906
    %v4387 = vmul.f32 %v4385, %v3907
    %4390 = vrot.lane.b32.xlu0 %v4386, 95
    %v4391 = vpop.permute.xlu0 %4390
    %4392 = vrot.lane.b32.xlu0 %v4387, 95
    %v4393 = vpop.permute.xlu0 %4392
    %v4394 = vrot.slane %v4391, 1
    %v4395 = vrot.slane %v4393, 1
    %v4396 = vsel %vm773, %v4391, %v4394
    %v4397 = vsel %vm773, %v4393, %v4395
    %v4400 = vadd.f32 %v4328, %v4396
    %v4401 = vadd.f32 %v4329, %v4397
    %s4402 = sld [smem:[#allocation14 + $0x7c]]
    %v4403 = vstv %s4402
    %v4404 = vmul.f32 %v4403, %v3906
    %v4405 = vmul.f32 %v4403, %v3907
    %4408 = vrot.lane.b32.xlu0 %v4404, 95
    %v4409 = vpop.permute.xlu0 %4408
    %4410 = vrot.lane.b32.xlu0 %v4405, 95
    %v4411 = vpop.permute.xlu0 %4410
    %v4412 = vrot.slane %v4409, 1
    %v4413 = vrot.slane %v4411, 1
    %v4414 = vsel %vm773, %v4409, %v4412
    %v4415 = vsel %vm773, %v4411, %v4413
    %v4418 = vadd.f32 %v4346, %v4414
    %v4419 = vadd.f32 %v4347, %v4415
    %v4420 = vmul.f32 %v3906, %v841
    %v4421 = vmul.f32 %v3907, %v842
    %s4422 = sld [smem:[#allocation14 + $0x11]]
    %v4423 = vstv %s4422
    %v4424 = vmul.f32 %v4423, %v4420
    %v4425 = vmul.f32 %v4423, %v4421
    %4428 = vrot.lane.b32.xlu0 %v4424, 94
    %v4429 = vpop.permute.xlu0 %4428
    %4430 = vrot.lane.b32.xlu0 %v4425, 94
    %v4431 = vpop.permute.xlu0 %4430
    %v4432 = vrot.slane %v4429, 1
    %v4433 = vrot.slane %v4431, 1
    %v4434 = vsel %vm859, %v4429, %v4432
    %v4435 = vsel %vm859, %v4431, %v4433
    %v4438 = vadd.f32 %v4364, %v4434
    %v4439 = vadd.f32 %v4365, %v4435
    %s4440 = sld [smem:[#allocation14 + $0x35]]
    %v4441 = vstv %s4440
    %v4442 = vmul.f32 %v4441, %v4420
    %v4443 = vmul.f32 %v4441, %v4421
    %4446 = vrot.lane.b32.xlu0 %v4442, 94
    %v4447 = vpop.permute.xlu0 %4446
    %4448 = vrot.lane.b32.xlu0 %v4443, 94
    %v4449 = vpop.permute.xlu0 %4448
    %v4450 = vrot.slane %v4447, 1
    %v4451 = vrot.slane %v4449, 1
    %v4452 = vsel %vm859, %v4447, %v4450
    %v4453 = vsel %vm859, %v4449, %v4451
    %v4456 = vadd.f32 %v4382, %v4452
    %v4457 = vadd.f32 %v4383, %v4453
    %s4458 = sld [smem:[#allocation14 + $0x59]]
    %v4459 = vstv %s4458
    %v4460 = vmul.f32 %v4459, %v4420
    %v4461 = vmul.f32 %v4459, %v4421
    %4464 = vrot.lane.b32.xlu0 %v4460, 94
    %v4465 = vpop.permute.xlu0 %4464
    %4466 = vrot.lane.b32.xlu0 %v4461, 94
    %v4467 = vpop.permute.xlu0 %4466
    %v4468 = vrot.slane %v4465, 1
    %v4469 = vrot.slane %v4467, 1
    %v4470 = vsel %vm859, %v4465, %v4468
    %v4471 = vsel %vm859, %v4467, %v4469
    %v4474 = vadd.f32 %v4400, %v4470
    %v4475 = vadd.f32 %v4401, %v4471
    %s4476 = sld [smem:[#allocation14 + $0x7d]]
    %v4477 = vstv %s4476
    %v4478 = vmul.f32 %v4477, %v4420
    %v4479 = vmul.f32 %v4477, %v4421
    %4482 = vrot.lane.b32.xlu0 %v4478, 94
    %v4483 = vpop.permute.xlu0 %4482
    %4484 = vrot.lane.b32.xlu0 %v4479, 94
    %v4485 = vpop.permute.xlu0 %4484
    %v4486 = vrot.slane %v4483, 1
    %v4487 = vrot.slane %v4485, 1
    %v4488 = vsel %vm859, %v4483, %v4486
    %v4489 = vsel %vm859, %v4485, %v4487
    %v4492 = vadd.f32 %v4418, %v4488
    %v4493 = vadd.f32 %v4419, %v4489
    %v4494 = vld [vmem:[%s3131] ss:$4 sm:$0x3]
    %v4495 = vld [vmem:[%s3133] ss:$4 sm:$0x3]
    %v4496 = vmul.f32 %v4494, %v231
    %v4497 = vmul.f32 %v4495, %v234
    %s4498 = sld [smem:[#allocation14 + $0x12]]
    %v4499 = vstv %s4498
    %v4500 = vmul.f32 %v4499, %v4496
    %v4501 = vmul.f32 %v4499, %v4497
    %v4502 = vadd.f32 %v4438, %v4500
    %v4503 = vadd.f32 %v4439, %v4501
    %s4504 = sld [smem:[#allocation14 + $0x36]]
    %v4505 = vstv %s4504
    %v4506 = vmul.f32 %v4505, %v4496
    %v4507 = vmul.f32 %v4505, %v4497
    %v4508 = vadd.f32 %v4456, %v4506
    %v4509 = vadd.f32 %v4457, %v4507
    %s4510 = sld [smem:[#allocation14 + $0x5a]]
    %v4511 = vstv %s4510
    %v4512 = vmul.f32 %v4511, %v4496
    %v4513 = vmul.f32 %v4511, %v4497
    %v4514 = vadd.f32 %v4474, %v4512
    %v4515 = vadd.f32 %v4475, %v4513
    %s4516 = sld [smem:[#allocation14 + $0x7e]]
    %v4517 = vstv %s4516
    %v4518 = vmul.f32 %v4517, %v4496
    %v4519 = vmul.f32 %v4517, %v4497
    %v4520 = vadd.f32 %v4492, %v4518
    %v4521 = vadd.f32 %v4493, %v4519
    %v4522 = vld [vmem:[%s3131] ss:$4 sm:$0x7]
    %v4523 = vld [vmem:[%s3133] ss:$4 sm:$0x7]
    %s4524 = sld [smem:[#allocation14 + $0x13]]
    %v4525 = vstv %s4524
    %v4526 = vmul.f32 %v4525, %v4522
    %v4527 = vmul.f32 %v4525, %v4523
    %4530 = vrot.lane.b32.xlu0 %v4526, 127
    %v4531 = vpop.permute.xlu0 %4530
    %4532 = vrot.lane.b32.xlu0 %v4527, 127
    %v4533 = vpop.permute.xlu0 %4532
    %v4534 = vrot.slane %v4531, 1
    %v4535 = vrot.slane %v4533, 1
    %v4536 = vsel %vm277, %v4531, %v4534
    %v4537 = vsel %vm277, %v4533, %v4535
    %v4540 = vadd.f32 %v4502, %v4536
    %v4541 = vadd.f32 %v4503, %v4537
    %s4542 = sld [smem:[#allocation14 + $0x37]]
    %v4543 = vstv %s4542
    %v4544 = vmul.f32 %v4543, %v4522
    %v4545 = vmul.f32 %v4543, %v4523
    %4548 = vrot.lane.b32.xlu0 %v4544, 127
    %v4549 = vpop.permute.xlu0 %4548
    %4550 = vrot.lane.b32.xlu0 %v4545, 127
    %v4551 = vpop.permute.xlu0 %4550
    %v4552 = vrot.slane %v4549, 1
    %v4553 = vrot.slane %v4551, 1
    %v4554 = vsel %vm277, %v4549, %v4552
    %v4555 = vsel %vm277, %v4551, %v4553
    %v4558 = vadd.f32 %v4508, %v4554
    %v4559 = vadd.f32 %v4509, %v4555
    %s4560 = sld [smem:[#allocation14 + $0x5b]]
    %v4561 = vstv %s4560
    %v4562 = vmul.f32 %v4561, %v4522
    %v4563 = vmul.f32 %v4561, %v4523
    %4566 = vrot.lane.b32.xlu0 %v4562, 127
    %v4567 = vpop.permute.xlu0 %4566
    %4568 = vrot.lane.b32.xlu0 %v4563, 127
    %v4569 = vpop.permute.xlu0 %4568
    %v4570 = vrot.slane %v4567, 1
    %v4571 = vrot.slane %v4569, 1
    %v4572 = vsel %vm277, %v4567, %v4570
    %v4573 = vsel %vm277, %v4569, %v4571
    %v4576 = vadd.f32 %v4514, %v4572
    %v4577 = vadd.f32 %v4515, %v4573
    %s4578 = sld [smem:[#allocation14 + $0x7f]]
    %v4579 = vstv %s4578
    %v4580 = vmul.f32 %v4579, %v4522
    %v4581 = vmul.f32 %v4579, %v4523
    %4584 = vrot.lane.b32.xlu0 %v4580, 127
    %v4585 = vpop.permute.xlu0 %4584
    %4586 = vrot.lane.b32.xlu0 %v4581, 127
    %v4587 = vpop.permute.xlu0 %4586
    %v4588 = vrot.slane %v4585, 1
    %v4589 = vrot.slane %v4587, 1
    %v4590 = vsel %vm277, %v4585, %v4588
    %v4591 = vsel %vm277, %v4587, %v4589
    %v4594 = vadd.f32 %v4520, %v4590
    %v4595 = vadd.f32 %v4521, %v4591
    %v4596 = vmul.f32 %v4522, %v351
    %v4597 = vmul.f32 %v4523, %v352
    %s4598 = sld [smem:[#allocation14 + $0x14]]
    %v4599 = vstv %s4598
    %v4600 = vmul.f32 %v4599, %v4596
    %v4601 = vmul.f32 %v4599, %v4597
    %4604 = vrot.lane.b32.xlu0 %v4600, 126
    %v4605 = vpop.permute.xlu0 %4604
    %4606 = vrot.lane.b32.xlu0 %v4601, 126
    %v4607 = vpop.permute.xlu0 %4606
    %v4608 = vrot.slane %v4605, 1
    %v4609 = vrot.slane %v4607, 1
    %v4610 = vsel %vm369, %v4605, %v4608
    %v4611 = vsel %vm369, %v4607, %v4609
    %v4614 = vadd.f32 %v4540, %v4610
    %v4615 = vadd.f32 %v4541, %v4611
    %s4616 = sld [smem:[#allocation14 + $0x38]]
    %v4617 = vstv %s4616
    %v4618 = vmul.f32 %v4617, %v4596
    %v4619 = vmul.f32 %v4617, %v4597
    %4622 = vrot.lane.b32.xlu0 %v4618, 126
    %v4623 = vpop.permute.xlu0 %4622
    %4624 = vrot.lane.b32.xlu0 %v4619, 126
    %v4625 = vpop.permute.xlu0 %4624
    %v4626 = vrot.slane %v4623, 1
    %v4627 = vrot.slane %v4625, 1
    %v4628 = vsel %vm369, %v4623, %v4626
    %v4629 = vsel %vm369, %v4625, %v4627
    %v4632 = vadd.f32 %v4558, %v4628
    %v4633 = vadd.f32 %v4559, %v4629
    %s4634 = sld [smem:[#allocation14 + $0x5c]]
    %v4635 = vstv %s4634
    %v4636 = vmul.f32 %v4635, %v4596
    %v4637 = vmul.f32 %v4635, %v4597
    %4640 = vrot.lane.b32.xlu0 %v4636, 126
    %v4641 = vpop.permute.xlu0 %4640
    %4642 = vrot.lane.b32.xlu0 %v4637, 126
    %v4643 = vpop.permute.xlu0 %4642
    %v4644 = vrot.slane %v4641, 1
    %v4645 = vrot.slane %v4643, 1
    %v4646 = vsel %vm369, %v4641, %v4644
    %v4647 = vsel %vm369, %v4643, %v4645
    %v4650 = vadd.f32 %v4576, %v4646
    %v4651 = vadd.f32 %v4577, %v4647
    %s4652 = sld [smem:[#allocation14 + $0x80]]
    %v4653 = vstv %s4652
    %v4654 = vmul.f32 %v4653, %v4596
    %v4655 = vmul.f32 %v4653, %v4597
    %4658 = vrot.lane.b32.xlu0 %v4654, 126
    %v4659 = vpop.permute.xlu0 %4658
    %4660 = vrot.lane.b32.xlu0 %v4655, 126
    %v4661 = vpop.permute.xlu0 %4660
    %v4662 = vrot.slane %v4659, 1
    %v4663 = vrot.slane %v4661, 1
    %v4664 = vsel %vm369, %v4659, %v4662
    %v4665 = vsel %vm369, %v4661, %v4663
    %v4668 = vadd.f32 %v4594, %v4664
    %v4669 = vadd.f32 %v4595, %v4665
    %v4670 = vmul.f32 %v4522, %v437
    %v4671 = vmul.f32 %v4523, %v438
    %s4672 = sld [smem:[#allocation14 + $0x15]]
    %v4673 = vstv %s4672
    %v4674 = vmul.f32 %v4673, %v4670
    %v4675 = vmul.f32 %v4673, %v4671
    %4678 = vrot.lane.b32.xlu0 %v4674, 112
    %v4679 = vpop.permute.xlu0 %4678
    %4680 = vrot.lane.b32.xlu0 %v4675, 112
    %v4681 = vpop.permute.xlu0 %4680
    %v4682 = vrot.slane %v4679, 1
    %v4683 = vrot.slane %v4681, 1
    %v4684 = vsel %vm455, %v4679, %v4682
    %v4685 = vsel %vm455, %v4681, %v4683
    %v4688 = vadd.f32 %v4614, %v4684
    %v4689 = vadd.f32 %v4615, %v4685
    %s4690 = sld [smem:[#allocation14 + $0x39]]
    %v4691 = vstv %s4690
    %v4692 = vmul.f32 %v4691, %v4670
    %v4693 = vmul.f32 %v4691, %v4671
    %4696 = vrot.lane.b32.xlu0 %v4692, 112
    %v4697 = vpop.permute.xlu0 %4696
    %4698 = vrot.lane.b32.xlu0 %v4693, 112
    %v4699 = vpop.permute.xlu0 %4698
    %v4700 = vrot.slane %v4697, 1
    %v4701 = vrot.slane %v4699, 1
    %v4702 = vsel %vm455, %v4697, %v4700
    %v4703 = vsel %vm455, %v4699, %v4701
    %v4706 = vadd.f32 %v4632, %v4702
    %v4707 = vadd.f32 %v4633, %v4703
    %s4708 = sld [smem:[#allocation14 + $0x5d]]
    %v4709 = vstv %s4708
    %v4710 = vmul.f32 %v4709, %v4670
    %v4711 = vmul.f32 %v4709, %v4671
    %4714 = vrot.lane.b32.xlu0 %v4710, 112
    %v4715 = vpop.permute.xlu0 %4714
    %4716 = vrot.lane.b32.xlu0 %v4711, 112
    %v4717 = vpop.permute.xlu0 %4716
    %v4718 = vrot.slane %v4715, 1
    %v4719 = vrot.slane %v4717, 1
    %v4720 = vsel %vm455, %v4715, %v4718
    %v4721 = vsel %vm455, %v4717, %v4719
    %v4724 = vadd.f32 %v4650, %v4720
    %v4725 = vadd.f32 %v4651, %v4721
    %s4726 = sld [smem:[#allocation14 + $0x81]]
    %v4727 = vstv %s4726
    %v4728 = vmul.f32 %v4727, %v4670
    %v4729 = vmul.f32 %v4727, %v4671
    %4732 = vrot.lane.b32.xlu0 %v4728, 112
    %v4733 = vpop.permute.xlu0 %4732
    %4734 = vrot.lane.b32.xlu0 %v4729, 112
    %v4735 = vpop.permute.xlu0 %4734
    %v4736 = vrot.slane %v4733, 1
    %v4737 = vrot.slane %v4735, 1
    %v4738 = vsel %vm455, %v4733, %v4736
    %v4739 = vsel %vm455, %v4735, %v4737
    %v4742 = vadd.f32 %v4668, %v4738
    %v4743 = vadd.f32 %v4669, %v4739
    %s4744 = sld [smem:[#allocation14 + $0x16]]
    %v4745 = vstv %s4744
    %v4746 = vmul.f32 %v4745, %v4522
    %v4747 = vmul.f32 %v4745, %v4523
    %4750 = vrot.lane.b32.xlu0 %v4746, 111
    %v4751 = vpop.permute.xlu0 %4750
    %4752 = vrot.lane.b32.xlu0 %v4747, 111
    %v4753 = vpop.permute.xlu0 %4752
    %v4754 = vrot.slane %v4751, 1
    %v4755 = vrot.slane %v4753, 1
    %v4756 = vsel %vm528, %v4751, %v4754
    %v4757 = vsel %vm528, %v4753, %v4755
    %v4760 = vadd.f32 %v4688, %v4756
    %v4761 = vadd.f32 %v4689, %v4757
    %s4762 = sld [smem:[#allocation14 + $0x3a]]
    %v4763 = vstv %s4762
    %v4764 = vmul.f32 %v4763, %v4522
    %v4765 = vmul.f32 %v4763, %v4523
    %4768 = vrot.lane.b32.xlu0 %v4764, 111
    %v4769 = vpop.permute.xlu0 %4768
    %4770 = vrot.lane.b32.xlu0 %v4765, 111
    %v4771 = vpop.permute.xlu0 %4770
    %v4772 = vrot.slane %v4769, 1
    %v4773 = vrot.slane %v4771, 1
    %v4774 = vsel %vm528, %v4769, %v4772
    %v4775 = vsel %vm528, %v4771, %v4773
    %v4778 = vadd.f32 %v4706, %v4774
    %v4779 = vadd.f32 %v4707, %v4775
    %s4780 = sld [smem:[#allocation14 + $0x5e]]
    %v4781 = vstv %s4780
    %v4782 = vmul.f32 %v4781, %v4522
    %v4783 = vmul.f32 %v4781, %v4523
    %4786 = vrot.lane.b32.xlu0 %v4782, 111
    %v4787 = vpop.permute.xlu0 %4786
    %4788 = vrot.lane.b32.xlu0 %v4783, 111
    %v4789 = vpop.permute.xlu0 %4788
    %v4790 = vrot.slane %v4787, 1
    %v4791 = vrot.slane %v4789, 1
    %v4792 = vsel %vm528, %v4787, %v4790
    %v4793 = vsel %vm528, %v4789, %v4791
    %v4796 = vadd.f32 %v4724, %v4792
    %v4797 = vadd.f32 %v4725, %v4793
    %s4798 = sld [smem:[#allocation14 + $0x82]]
    %v4799 = vstv %s4798
    %v4800 = vmul.f32 %v4799, %v4522
    %v4801 = vmul.f32 %v4799, %v4523
    %4804 = vrot.lane.b32.xlu0 %v4800, 111
    %v4805 = vpop.permute.xlu0 %4804
    %4806 = vrot.lane.b32.xlu0 %v4801, 111
    %v4807 = vpop.permute.xlu0 %4806
    %v4808 = vrot.slane %v4805, 1
    %v4809 = vrot.slane %v4807, 1
    %v4810 = vsel %vm528, %v4805, %v4808
    %v4811 = vsel %vm528, %v4807, %v4809
    %v4814 = vadd.f32 %v4742, %v4810
    %v4815 = vadd.f32 %v4743, %v4811
    %v4816 = vmul.f32 %v4522, %v596
    %v4817 = vmul.f32 %v4523, %v597
    %s4818 = sld [smem:[#allocation14 + $0x17]]
    %v4819 = vstv %s4818
    %v4820 = vmul.f32 %v4819, %v4816
    %v4821 = vmul.f32 %v4819, %v4817
    %4824 = vrot.lane.b32.xlu0 %v4820, 110
    %v4825 = vpop.permute.xlu0 %4824
    %4826 = vrot.lane.b32.xlu0 %v4821, 110
    %v4827 = vpop.permute.xlu0 %4826
    %v4828 = vrot.slane %v4825, 1
    %v4829 = vrot.slane %v4827, 1
    %v4830 = vsel %vm614, %v4825, %v4828
    %v4831 = vsel %vm614, %v4827, %v4829
    %v4834 = vadd.f32 %v4760, %v4830
    %v4835 = vadd.f32 %v4761, %v4831
    %s4836 = sld [smem:[#allocation14 + $0x3b]]
    %v4837 = vstv %s4836
    %v4838 = vmul.f32 %v4837, %v4816
    %v4839 = vmul.f32 %v4837, %v4817
    %4842 = vrot.lane.b32.xlu0 %v4838, 110
    %v4843 = vpop.permute.xlu0 %4842
    %4844 = vrot.lane.b32.xlu0 %v4839, 110
    %v4845 = vpop.permute.xlu0 %4844
    %v4846 = vrot.slane %v4843, 1
    %v4847 = vrot.slane %v4845, 1
    %v4848 = vsel %vm614, %v4843, %v4846
    %v4849 = vsel %vm614, %v4845, %v4847
    %v4852 = vadd.f32 %v4778, %v4848
    %v4853 = vadd.f32 %v4779, %v4849
    %s4854 = sld [smem:[#allocation14 + $0x5f]]
    %v4855 = vstv %s4854
    %v4856 = vmul.f32 %v4855, %v4816
    %v4857 = vmul.f32 %v4855, %v4817
    %4860 = vrot.lane.b32.xlu0 %v4856, 110
    %v4861 = vpop.permute.xlu0 %4860
    %4862 = vrot.lane.b32.xlu0 %v4857, 110
    %v4863 = vpop.permute.xlu0 %4862
    %v4864 = vrot.slane %v4861, 1
    %v4865 = vrot.slane %v4863, 1
    %v4866 = vsel %vm614, %v4861, %v4864
    %v4867 = vsel %vm614, %v4863, %v4865
    %v4870 = vadd.f32 %v4796, %v4866
    %v4871 = vadd.f32 %v4797, %v4867
    %s4872 = sld [smem:[#allocation14 + $0x83]]
    %v4873 = vstv %s4872
    %v4874 = vmul.f32 %v4873, %v4816
    %v4875 = vmul.f32 %v4873, %v4817
    %4878 = vrot.lane.b32.xlu0 %v4874, 110
    %v4879 = vpop.permute.xlu0 %4878
    %4880 = vrot.lane.b32.xlu0 %v4875, 110
    %v4881 = vpop.permute.xlu0 %4880
    %v4882 = vrot.slane %v4879, 1
    %v4883 = vrot.slane %v4881, 1
    %v4884 = vsel %vm614, %v4879, %v4882
    %v4885 = vsel %vm614, %v4881, %v4883
    %v4888 = vadd.f32 %v4814, %v4884
    %v4889 = vadd.f32 %v4815, %v4885
    %v4890 = vmul.f32 %v4522, %v682
    %v4891 = vmul.f32 %v4523, %v683
    %s4892 = sld [smem:[#allocation14 + $0x18]]
    %v4893 = vstv %s4892
    %v4894 = vmul.f32 %v4893, %v4890
    %v4895 = vmul.f32 %v4893, %v4891
    %4898 = vrot.lane.b32.xlu0 %v4894, 96
    %v4899 = vpop.permute.xlu0 %4898
    %4900 = vrot.lane.b32.xlu0 %v4895, 96
    %v4901 = vpop.permute.xlu0 %4900
    %v4902 = vrot.slane %v4899, 1
    %v4903 = vrot.slane %v4901, 1
    %v4904 = vsel %vm700, %v4899, %v4902
    %v4905 = vsel %vm700, %v4901, %v4903
    %v4908 = vadd.f32 %v4834, %v4904
    %v4909 = vadd.f32 %v4835, %v4905
    %s4910 = sld [smem:[#allocation14 + $0x3c]]
    %v4911 = vstv %s4910
    %v4912 = vmul.f32 %v4911, %v4890
    %v4913 = vmul.f32 %v4911, %v4891
    %4916 = vrot.lane.b32.xlu0 %v4912, 96
    %v4917 = vpop.permute.xlu0 %4916
    %4918 = vrot.lane.b32.xlu0 %v4913, 96
    %v4919 = vpop.permute.xlu0 %4918
    %v4920 = vrot.slane %v4917, 1
    %v4921 = vrot.slane %v4919, 1
    %v4922 = vsel %vm700, %v4917, %v4920
    %v4923 = vsel %vm700, %v4919, %v4921
    %v4926 = vadd.f32 %v4852, %v4922
    %v4927 = vadd.f32 %v4853, %v4923
    %s4928 = sld [smem:[#allocation14 + $0x60]]
    %v4929 = vstv %s4928
    %v4930 = vmul.f32 %v4929, %v4890
    %v4931 = vmul.f32 %v4929, %v4891
    %4934 = vrot.lane.b32.xlu0 %v4930, 96
    %v4935 = vpop.permute.xlu0 %4934
    %4936 = vrot.lane.b32.xlu0 %v4931, 96
    %v4937 = vpop.permute.xlu0 %4936
    %v4938 = vrot.slane %v4935, 1
    %v4939 = vrot.slane %v4937, 1
    %v4940 = vsel %vm700, %v4935, %v4938
    %v4941 = vsel %vm700, %v4937, %v4939
    %v4944 = vadd.f32 %v4870, %v4940
    %v4945 = vadd.f32 %v4871, %v4941
    %s4946 = sld [smem:[#allocation14 + $0x84]]
    %v4947 = vstv %s4946
    %v4948 = vmul.f32 %v4947, %v4890
    %v4949 = vmul.f32 %v4947, %v4891
    %4952 = vrot.lane.b32.xlu0 %v4948, 96
    %v4953 = vpop.permute.xlu0 %4952
    %4954 = vrot.lane.b32.xlu0 %v4949, 96
    %v4955 = vpop.permute.xlu0 %4954
    %v4956 = vrot.slane %v4953, 1
    %v4957 = vrot.slane %v4955, 1
    %v4958 = vsel %vm700, %v4953, %v4956
    %v4959 = vsel %vm700, %v4955, %v4957
    %v4962 = vadd.f32 %v4888, %v4958
    %v4963 = vadd.f32 %v4889, %v4959
    %s4964 = sld [smem:[#allocation14 + $0x19]]
    %v4965 = vstv %s4964
    %v4966 = vmul.f32 %v4965, %v4522
    %v4967 = vmul.f32 %v4965, %v4523
    %4970 = vrot.lane.b32.xlu0 %v4966, 95
    %v4971 = vpop.permute.xlu0 %4970
    %4972 = vrot.lane.b32.xlu0 %v4967, 95
    %v4973 = vpop.permute.xlu0 %4972
    %v4974 = vrot.slane %v4971, 1
    %v4975 = vrot.slane %v4973, 1
    %v4976 = vsel %vm773, %v4971, %v4974
    %v4977 = vsel %vm773, %v4973, %v4975
    %v4980 = vadd.f32 %v4908, %v4976
    %v4981 = vadd.f32 %v4909, %v4977
    %s4982 = sld [smem:[#allocation14 + $0x3d]]
    %v4983 = vstv %s4982
    %v4984 = vmul.f32 %v4983, %v4522
    %v4985 = vmul.f32 %v4983, %v4523
    %4988 = vrot.lane.b32.xlu0 %v4984, 95
    %v4989 = vpop.permute.xlu0 %4988
    %4990 = vrot.lane.b32.xlu0 %v4985, 95
    %v4991 = vpop.permute.xlu0 %4990
    %v4992 = vrot.slane %v4989, 1
    %v4993 = vrot.slane %v4991, 1
    %v4994 = vsel %vm773, %v4989, %v4992
    %v4995 = vsel %vm773, %v4991, %v4993
    %v4998 = vadd.f32 %v4926, %v4994
    %v4999 = vadd.f32 %v4927, %v4995
    %s5000 = sld [smem:[#allocation14 + $0x61]]
    %v5001 = vstv %s5000
    %v5002 = vmul.f32 %v5001, %v4522
    %v5003 = vmul.f32 %v5001, %v4523
    %5006 = vrot.lane.b32.xlu0 %v5002, 95
    %v5007 = vpop.permute.xlu0 %5006
    %5008 = vrot.lane.b32.xlu0 %v5003, 95
    %v5009 = vpop.permute.xlu0 %5008
    %v5010 = vrot.slane %v5007, 1
    %v5011 = vrot.slane %v5009, 1
    %v5012 = vsel %vm773, %v5007, %v5010
    %v5013 = vsel %vm773, %v5009, %v5011
    %v5016 = vadd.f32 %v4944, %v5012
    %v5017 = vadd.f32 %v4945, %v5013
    %s5018 = sld [smem:[#allocation14 + $0x85]]
    %v5019 = vstv %s5018
    %v5020 = vmul.f32 %v5019, %v4522
    %v5021 = vmul.f32 %v5019, %v4523
    %5024 = vrot.lane.b32.xlu0 %v5020, 95
    %v5025 = vpop.permute.xlu0 %5024
    %5026 = vrot.lane.b32.xlu0 %v5021, 95
    %v5027 = vpop.permute.xlu0 %5026
    %v5028 = vrot.slane %v5025, 1
    %v5029 = vrot.slane %v5027, 1
    %v5030 = vsel %vm773, %v5025, %v5028
    %v5031 = vsel %vm773, %v5027, %v5029
    %v5034 = vadd.f32 %v4962, %v5030
    %v5035 = vadd.f32 %v4963, %v5031
    %v5036 = vmul.f32 %v4522, %v841
    %v5037 = vmul.f32 %v4523, %v842
    %s5038 = sld [smem:[#allocation14 + $0x1a]]
    %v5039 = vstv %s5038
    %v5040 = vmul.f32 %v5039, %v5036
    %v5041 = vmul.f32 %v5039, %v5037
    %5044 = vrot.lane.b32.xlu0 %v5040, 94
    %v5045 = vpop.permute.xlu0 %5044
    %5046 = vrot.lane.b32.xlu0 %v5041, 94
    %v5047 = vpop.permute.xlu0 %5046
    %v5048 = vrot.slane %v5045, 1
    %v5049 = vrot.slane %v5047, 1
    %v5050 = vsel %vm859, %v5045, %v5048
    %v5051 = vsel %vm859, %v5047, %v5049
    %v5054 = vadd.f32 %v4980, %v5050
    %v5055 = vadd.f32 %v4981, %v5051
    %s5056 = sld [smem:[#allocation14 + $0x3e]]
    %v5057 = vstv %s5056
    %v5058 = vmul.f32 %v5057, %v5036
    %v5059 = vmul.f32 %v5057, %v5037
    %5062 = vrot.lane.b32.xlu0 %v5058, 94
    %v5063 = vpop.permute.xlu0 %5062
    %5064 = vrot.lane.b32.xlu0 %v5059, 94
    %v5065 = vpop.permute.xlu0 %5064
    %v5066 = vrot.slane %v5063, 1
    %v5067 = vrot.slane %v5065, 1
    %v5068 = vsel %vm859, %v5063, %v5066
    %v5069 = vsel %vm859, %v5065, %v5067
    %v5072 = vadd.f32 %v4998, %v5068
    %v5073 = vadd.f32 %v4999, %v5069
    %s5074 = sld [smem:[#allocation14 + $0x62]]
    %v5075 = vstv %s5074
    %v5076 = vmul.f32 %v5075, %v5036
    %v5077 = vmul.f32 %v5075, %v5037
    %5080 = vrot.lane.b32.xlu0 %v5076, 94
    %v5081 = vpop.permute.xlu0 %5080
    %5082 = vrot.lane.b32.xlu0 %v5077, 94
    %v5083 = vpop.permute.xlu0 %5082
    %v5084 = vrot.slane %v5081, 1
    %v5085 = vrot.slane %v5083, 1
    %v5086 = vsel %vm859, %v5081, %v5084
    %v5087 = vsel %vm859, %v5083, %v5085
    %v5090 = vadd.f32 %v5016, %v5086
    %v5091 = vadd.f32 %v5017, %v5087
    %s5092 = sld [smem:[#allocation14 + $0x86]]
    %v5093 = vstv %s5092
    %v5094 = vmul.f32 %v5093, %v5036
    %v5095 = vmul.f32 %v5093, %v5037
    %5098 = vrot.lane.b32.xlu0 %v5094, 94
    %v5099 = vpop.permute.xlu0 %5098
    %5100 = vrot.lane.b32.xlu0 %v5095, 94
    %v5101 = vpop.permute.xlu0 %5100
    %v5102 = vrot.slane %v5099, 1
    %v5103 = vrot.slane %v5101, 1
    %v5104 = vsel %vm859, %v5099, %v5102
    %v5105 = vsel %vm859, %v5101, %v5103
    %v5108 = vadd.f32 %v5034, %v5104
    %v5109 = vadd.f32 %v5035, %v5105
    %v5110 = vld [vmem:[%s3250] ss:$4 sm:$0x3]
    %v5111 = vld [vmem:[%s3252] ss:$4 sm:$0x3]
    %v5112 = vmul.f32 %v5110, %v231
    %v5113 = vmul.f32 %v5111, %v234
    %s5114 = sld [smem:[#allocation14 + $0x1b]]
    %v5115 = vstv %s5114
    %v5116 = vmul.f32 %v5115, %v5112
    %v5117 = vmul.f32 %v5115, %v5113
    %v5118 = vadd.f32 %v5054, %v5116
    %v5119 = vadd.f32 %v5055, %v5117
    %s5120 = sld [smem:[#allocation14 + $0x3f]]
    %v5121 = vstv %s5120
    %v5122 = vmul.f32 %v5121, %v5112
    %v5123 = vmul.f32 %v5121, %v5113
    %v5124 = vadd.f32 %v5072, %v5122
    %v5125 = vadd.f32 %v5073, %v5123
    %s5126 = sld [smem:[#allocation14 + $0x63]]
    %v5127 = vstv %s5126
    %v5128 = vmul.f32 %v5127, %v5112
    %v5129 = vmul.f32 %v5127, %v5113
    %v5130 = vadd.f32 %v5090, %v5128
    %v5131 = vadd.f32 %v5091, %v5129
    %s5132 = sld [smem:[#allocation14 + $0x87]]
    %v5133 = vstv %s5132
    %v5134 = vmul.f32 %v5133, %v5112
    %v5135 = vmul.f32 %v5133, %v5113
    %v5136 = vadd.f32 %v5108, %v5134
    %v5137 = vadd.f32 %v5109, %v5135
    %v5138 = vld [vmem:[%s3250] ss:$4 sm:$0x7]
    %v5139 = vld [vmem:[%s3252] ss:$4 sm:$0x7]
    %s5140 = sld [smem:[#allocation14 + $0x1c]]
    %v5141 = vstv %s5140
    %v5142 = vmul.f32 %v5141, %v5138
    %v5143 = vmul.f32 %v5141, %v5139
    %5146 = vrot.lane.b32.xlu0 %v5142, 127
    %v5147 = vpop.permute.xlu0 %5146
    %5148 = vrot.lane.b32.xlu0 %v5143, 127
    %v5149 = vpop.permute.xlu0 %5148
    %v5150 = vrot.slane %v5147, 1
    %v5151 = vrot.slane %v5149, 1
    %v5152 = vsel %vm277, %v5147, %v5150
    %v5153 = vsel %vm277, %v5149, %v5151
    %v5156 = vadd.f32 %v5118, %v5152
    %v5157 = vadd.f32 %v5119, %v5153
    %s5158 = sld [smem:[#allocation14 + $0x40]]
    %v5159 = vstv %s5158
    %v5160 = vmul.f32 %v5159, %v5138
    %v5161 = vmul.f32 %v5159, %v5139
    %5164 = vrot.lane.b32.xlu0 %v5160, 127
    %v5165 = vpop.permute.xlu0 %5164
    %5166 = vrot.lane.b32.xlu0 %v5161, 127
    %v5167 = vpop.permute.xlu0 %5166
    %v5168 = vrot.slane %v5165, 1
    %v5169 = vrot.slane %v5167, 1
    %v5170 = vsel %vm277, %v5165, %v5168
    %v5171 = vsel %vm277, %v5167, %v5169
    %v5174 = vadd.f32 %v5124, %v5170
    %v5175 = vadd.f32 %v5125, %v5171
    %s5176 = sld [smem:[#allocation14 + $0x64]]
    %v5177 = vstv %s5176
    %v5178 = vmul.f32 %v5177, %v5138
    %v5179 = vmul.f32 %v5177, %v5139
    %5182 = vrot.lane.b32.xlu0 %v5178, 127
    %v5183 = vpop.permute.xlu0 %5182
    %5184 = vrot.lane.b32.xlu0 %v5179, 127
    %v5185 = vpop.permute.xlu0 %5184
    %v5186 = vrot.slane %v5183, 1
    %v5187 = vrot.slane %v5185, 1
    %v5188 = vsel %vm277, %v5183, %v5186
    %v5189 = vsel %vm277, %v5185, %v5187
    %v5192 = vadd.f32 %v5130, %v5188
    %v5193 = vadd.f32 %v5131, %v5189
    %s5194 = sld [smem:[#allocation14 + $0x88]]
    %v5195 = vstv %s5194
    %v5196 = vmul.f32 %v5195, %v5138
    %v5197 = vmul.f32 %v5195, %v5139
    %5200 = vrot.lane.b32.xlu0 %v5196, 127
    %v5201 = vpop.permute.xlu0 %5200
    %5202 = vrot.lane.b32.xlu0 %v5197, 127
    %v5203 = vpop.permute.xlu0 %5202
    %v5204 = vrot.slane %v5201, 1
    %v5205 = vrot.slane %v5203, 1
    %v5206 = vsel %vm277, %v5201, %v5204
    %v5207 = vsel %vm277, %v5203, %v5205
    %v5210 = vadd.f32 %v5136, %v5206
    %v5211 = vadd.f32 %v5137, %v5207
    %v5212 = vmul.f32 %v5138, %v351
    %v5213 = vmul.f32 %v5139, %v352
    %s5214 = sld [smem:[#allocation14 + $0x1d]]
    %v5215 = vstv %s5214
    %v5216 = vmul.f32 %v5215, %v5212
    %v5217 = vmul.f32 %v5215, %v5213
    %5220 = vrot.lane.b32.xlu0 %v5216, 126
    %v5221 = vpop.permute.xlu0 %5220
    %5222 = vrot.lane.b32.xlu0 %v5217, 126
    %v5223 = vpop.permute.xlu0 %5222
    %v5224 = vrot.slane %v5221, 1
    %v5225 = vrot.slane %v5223, 1
    %v5226 = vsel %vm369, %v5221, %v5224
    %v5227 = vsel %vm369, %v5223, %v5225
    %v5230 = vadd.f32 %v5156, %v5226
    %v5231 = vadd.f32 %v5157, %v5227
    %s5232 = sld [smem:[#allocation14 + $0x41]]
    %v5233 = vstv %s5232
    %v5234 = vmul.f32 %v5233, %v5212
    %v5235 = vmul.f32 %v5233, %v5213
    %5238 = vrot.lane.b32.xlu0 %v5234, 126
    %v5239 = vpop.permute.xlu0 %5238
    %5240 = vrot.lane.b32.xlu0 %v5235, 126
    %v5241 = vpop.permute.xlu0 %5240
    %v5242 = vrot.slane %v5239, 1
    %v5243 = vrot.slane %v5241, 1
    %v5244 = vsel %vm369, %v5239, %v5242
    %v5245 = vsel %vm369, %v5241, %v5243
    %v5248 = vadd.f32 %v5174, %v5244
    %v5249 = vadd.f32 %v5175, %v5245
    %s5250 = sld [smem:[#allocation14 + $0x65]]
    %v5251 = vstv %s5250
    %v5252 = vmul.f32 %v5251, %v5212
    %v5253 = vmul.f32 %v5251, %v5213
    %5256 = vrot.lane.b32.xlu0 %v5252, 126
    %v5257 = vpop.permute.xlu0 %5256
    %5258 = vrot.lane.b32.xlu0 %v5253, 126
    %v5259 = vpop.permute.xlu0 %5258
    %v5260 = vrot.slane %v5257, 1
    %v5261 = vrot.slane %v5259, 1
    %v5262 = vsel %vm369, %v5257, %v5260
    %v5263 = vsel %vm369, %v5259, %v5261
    %v5266 = vadd.f32 %v5192, %v5262
    %v5267 = vadd.f32 %v5193, %v5263
    %s5268 = sld [smem:[#allocation14 + $0x89]]
    %v5269 = vstv %s5268
    %v5270 = vmul.f32 %v5269, %v5212
    %v5271 = vmul.f32 %v5269, %v5213
    %5274 = vrot.lane.b32.xlu0 %v5270, 126
    %v5275 = vpop.permute.xlu0 %5274
    %5276 = vrot.lane.b32.xlu0 %v5271, 126
    %v5277 = vpop.permute.xlu0 %5276
    %v5278 = vrot.slane %v5275, 1
    %v5279 = vrot.slane %v5277, 1
    %v5280 = vsel %vm369, %v5275, %v5278
    %v5281 = vsel %vm369, %v5277, %v5279
    %v5284 = vadd.f32 %v5210, %v5280
    %v5285 = vadd.f32 %v5211, %v5281
    %v5286 = vmul.f32 %v5138, %v437
    %v5287 = vmul.f32 %v5139, %v438
    %s5288 = sld [smem:[#allocation14 + $0x1e]]
    %v5289 = vstv %s5288
    %v5290 = vmul.f32 %v5289, %v5286
    %v5291 = vmul.f32 %v5289, %v5287
    %5294 = vrot.lane.b32.xlu0 %v5290, 112
    %v5295 = vpop.permute.xlu0 %5294
    %5296 = vrot.lane.b32.xlu0 %v5291, 112
    %v5297 = vpop.permute.xlu0 %5296
    %v5298 = vrot.slane %v5295, 1
    %v5299 = vrot.slane %v5297, 1
    %v5300 = vsel %vm455, %v5295, %v5298
    %v5301 = vsel %vm455, %v5297, %v5299
    %v5304 = vadd.f32 %v5230, %v5300
    %v5305 = vadd.f32 %v5231, %v5301
    %s5306 = sld [smem:[#allocation14 + $0x42]]
    %v5307 = vstv %s5306
    %v5308 = vmul.f32 %v5307, %v5286
    %v5309 = vmul.f32 %v5307, %v5287
    %5312 = vrot.lane.b32.xlu0 %v5308, 112
    %v5313 = vpop.permute.xlu0 %5312
    %5314 = vrot.lane.b32.xlu0 %v5309, 112
    %v5315 = vpop.permute.xlu0 %5314
    %v5316 = vrot.slane %v5313, 1
    %v5317 = vrot.slane %v5315, 1
    %v5318 = vsel %vm455, %v5313, %v5316
    %v5319 = vsel %vm455, %v5315, %v5317
    %v5322 = vadd.f32 %v5248, %v5318
    %v5323 = vadd.f32 %v5249, %v5319
    %s5324 = sld [smem:[#allocation14 + $0x66]]
    %v5325 = vstv %s5324
    %v5326 = vmul.f32 %v5325, %v5286
    %v5327 = vmul.f32 %v5325, %v5287
    %5330 = vrot.lane.b32.xlu0 %v5326, 112
    %v5331 = vpop.permute.xlu0 %5330
    %5332 = vrot.lane.b32.xlu0 %v5327, 112
    %v5333 = vpop.permute.xlu0 %5332
    %v5334 = vrot.slane %v5331, 1
    %v5335 = vrot.slane %v5333, 1
    %v5336 = vsel %vm455, %v5331, %v5334
    %v5337 = vsel %vm455, %v5333, %v5335
    %v5340 = vadd.f32 %v5266, %v5336
    %v5341 = vadd.f32 %v5267, %v5337
    %s5342 = sld [smem:[#allocation14 + $0x8a]]
    %v5343 = vstv %s5342
    %v5344 = vmul.f32 %v5343, %v5286
    %v5345 = vmul.f32 %v5343, %v5287
    %5348 = vrot.lane.b32.xlu0 %v5344, 112
    %v5349 = vpop.permute.xlu0 %5348
    %5350 = vrot.lane.b32.xlu0 %v5345, 112
    %v5351 = vpop.permute.xlu0 %5350
    %v5352 = vrot.slane %v5349, 1
    %v5353 = vrot.slane %v5351, 1
    %v5354 = vsel %vm455, %v5349, %v5352
    %v5355 = vsel %vm455, %v5351, %v5353
    %v5358 = vadd.f32 %v5284, %v5354
    %v5359 = vadd.f32 %v5285, %v5355
    %s5360 = sld [smem:[#allocation14 + $0x1f]]
    %v5361 = vstv %s5360
    %v5362 = vmul.f32 %v5361, %v5138
    %v5363 = vmul.f32 %v5361, %v5139
    %5366 = vrot.lane.b32.xlu0 %v5362, 111
    %v5367 = vpop.permute.xlu0 %5366
    %5368 = vrot.lane.b32.xlu0 %v5363, 111
    %v5369 = vpop.permute.xlu0 %5368
    %v5370 = vrot.slane %v5367, 1
    %v5371 = vrot.slane %v5369, 1
    %v5372 = vsel %vm528, %v5367, %v5370
    %v5373 = vsel %vm528, %v5369, %v5371
    %v5376 = vadd.f32 %v5304, %v5372
    %v5377 = vadd.f32 %v5305, %v5373
    %s5378 = sld [smem:[#allocation14 + $0x43]]
    %v5379 = vstv %s5378
    %v5380 = vmul.f32 %v5379, %v5138
    %v5381 = vmul.f32 %v5379, %v5139
    %5384 = vrot.lane.b32.xlu0 %v5380, 111
    %v5385 = vpop.permute.xlu0 %5384
    %5386 = vrot.lane.b32.xlu0 %v5381, 111
    %v5387 = vpop.permute.xlu0 %5386
    %v5388 = vrot.slane %v5385, 1
    %v5389 = vrot.slane %v5387, 1
    %v5390 = vsel %vm528, %v5385, %v5388
    %v5391 = vsel %vm528, %v5387, %v5389
    %v5394 = vadd.f32 %v5322, %v5390
    %v5395 = vadd.f32 %v5323, %v5391
    %s5396 = sld [smem:[#allocation14 + $0x67]]
    %v5397 = vstv %s5396
    %v5398 = vmul.f32 %v5397, %v5138
    %v5399 = vmul.f32 %v5397, %v5139
    %5402 = vrot.lane.b32.xlu0 %v5398, 111
    %v5403 = vpop.permute.xlu0 %5402
    %5404 = vrot.lane.b32.xlu0 %v5399, 111
    %v5405 = vpop.permute.xlu0 %5404
    %v5406 = vrot.slane %v5403, 1
    %v5407 = vrot.slane %v5405, 1
    %v5408 = vsel %vm528, %v5403, %v5406
    %v5409 = vsel %vm528, %v5405, %v5407
    %v5412 = vadd.f32 %v5340, %v5408
    %v5413 = vadd.f32 %v5341, %v5409
    %s5414 = sld [smem:[#allocation14 + $0x8b]]
    %v5415 = vstv %s5414
    %v5416 = vmul.f32 %v5415, %v5138
    %v5417 = vmul.f32 %v5415, %v5139
    %5420 = vrot.lane.b32.xlu0 %v5416, 111
    %v5421 = vpop.permute.xlu0 %5420
    %5422 = vrot.lane.b32.xlu0 %v5417, 111
    %v5423 = vpop.permute.xlu0 %5422
    %v5424 = vrot.slane %v5421, 1
    %v5425 = vrot.slane %v5423, 1
    %v5426 = vsel %vm528, %v5421, %v5424
    %v5427 = vsel %vm528, %v5423, %v5425
    %v5430 = vadd.f32 %v5358, %v5426
    %v5431 = vadd.f32 %v5359, %v5427
    %v5432 = vmul.f32 %v5138, %v596
    %v5433 = vmul.f32 %v5139, %v597
    %s5434 = sld [smem:[#allocation14 + $0x20]]
    %v5435 = vstv %s5434
    %v5436 = vmul.f32 %v5435, %v5432
    %v5437 = vmul.f32 %v5435, %v5433
    %5440 = vrot.lane.b32.xlu0 %v5436, 110
    %v5441 = vpop.permute.xlu0 %5440
    %5442 = vrot.lane.b32.xlu0 %v5437, 110
    %v5443 = vpop.permute.xlu0 %5442
    %v5444 = vrot.slane %v5441, 1
    %v5445 = vrot.slane %v5443, 1
    %v5446 = vsel %vm614, %v5441, %v5444
    %v5447 = vsel %vm614, %v5443, %v5445
    %v5450 = vadd.f32 %v5376, %v5446
    %v5451 = vadd.f32 %v5377, %v5447
    %s5452 = sld [smem:[#allocation14 + $0x44]]
    %v5453 = vstv %s5452
    %v5454 = vmul.f32 %v5453, %v5432
    %v5455 = vmul.f32 %v5453, %v5433
    %5458 = vrot.lane.b32.xlu0 %v5454, 110
    %v5459 = vpop.permute.xlu0 %5458
    %5460 = vrot.lane.b32.xlu0 %v5455, 110
    %v5461 = vpop.permute.xlu0 %5460
    %v5462 = vrot.slane %v5459, 1
    %v5463 = vrot.slane %v5461, 1
    %v5464 = vsel %vm614, %v5459, %v5462
    %v5465 = vsel %vm614, %v5461, %v5463
    %v5468 = vadd.f32 %v5394, %v5464
    %v5469 = vadd.f32 %v5395, %v5465
    %s5470 = sld [smem:[#allocation14 + $0x68]]
    %v5471 = vstv %s5470
    %v5472 = vmul.f32 %v5471, %v5432
    %v5473 = vmul.f32 %v5471, %v5433
    %5476 = vrot.lane.b32.xlu0 %v5472, 110
    %v5477 = vpop.permute.xlu0 %5476
    %5478 = vrot.lane.b32.xlu0 %v5473, 110
    %v5479 = vpop.permute.xlu0 %5478
    %v5480 = vrot.slane %v5477, 1
    %v5481 = vrot.slane %v5479, 1
    %v5482 = vsel %vm614, %v5477, %v5480
    %v5483 = vsel %vm614, %v5479, %v5481
    %v5486 = vadd.f32 %v5412, %v5482
    %v5487 = vadd.f32 %v5413, %v5483
    %s5488 = sld [smem:[#allocation14 + $0x8c]]
    %v5489 = vstv %s5488
    %v5490 = vmul.f32 %v5489, %v5432
    %v5491 = vmul.f32 %v5489, %v5433
    %5494 = vrot.lane.b32.xlu0 %v5490, 110
    %v5495 = vpop.permute.xlu0 %5494
    %5496 = vrot.lane.b32.xlu0 %v5491, 110
    %v5497 = vpop.permute.xlu0 %5496
    %v5498 = vrot.slane %v5495, 1
    %v5499 = vrot.slane %v5497, 1
    %v5500 = vsel %vm614, %v5495, %v5498
    %v5501 = vsel %vm614, %v5497, %v5499
    %v5504 = vadd.f32 %v5430, %v5500
    %v5505 = vadd.f32 %v5431, %v5501
    %v5506 = vmul.f32 %v5138, %v682
    %v5507 = vmul.f32 %v5139, %v683
    %s5508 = sld [smem:[#allocation14 + $0x21]]
    %v5509 = vstv %s5508
    %v5510 = vmul.f32 %v5509, %v5506
    %v5511 = vmul.f32 %v5509, %v5507
    %5514 = vrot.lane.b32.xlu0 %v5510, 96
    %v5515 = vpop.permute.xlu0 %5514
    %5516 = vrot.lane.b32.xlu0 %v5511, 96
    %v5517 = vpop.permute.xlu0 %5516
    %v5518 = vrot.slane %v5515, 1
    %v5519 = vrot.slane %v5517, 1
    %v5520 = vsel %vm700, %v5515, %v5518
    %v5521 = vsel %vm700, %v5517, %v5519
    %v5524 = vadd.f32 %v5450, %v5520
    %v5525 = vadd.f32 %v5451, %v5521
    %s5526 = sld [smem:[#allocation14 + $0x45]]
    %v5527 = vstv %s5526
    %v5528 = vmul.f32 %v5527, %v5506
    %v5529 = vmul.f32 %v5527, %v5507
    %5532 = vrot.lane.b32.xlu0 %v5528, 96
    %v5533 = vpop.permute.xlu0 %5532
    %5534 = vrot.lane.b32.xlu0 %v5529, 96
    %v5535 = vpop.permute.xlu0 %5534
    %v5536 = vrot.slane %v5533, 1
    %v5537 = vrot.slane %v5535, 1
    %v5538 = vsel %vm700, %v5533, %v5536
    %v5539 = vsel %vm700, %v5535, %v5537
    %v5542 = vadd.f32 %v5468, %v5538
    %v5543 = vadd.f32 %v5469, %v5539
    %s5544 = sld [smem:[#allocation14 + $0x69]]
    %v5545 = vstv %s5544
    %v5546 = vmul.f32 %v5545, %v5506
    %v5547 = vmul.f32 %v5545, %v5507
    %5550 = vrot.lane.b32.xlu0 %v5546, 96
    %v5551 = vpop.permute.xlu0 %5550
    %5552 = vrot.lane.b32.xlu0 %v5547, 96
    %v5553 = vpop.permute.xlu0 %5552
    %v5554 = vrot.slane %v5551, 1
    %v5555 = vrot.slane %v5553, 1
    %v5556 = vsel %vm700, %v5551, %v5554
    %v5557 = vsel %vm700, %v5553, %v5555
    %v5560 = vadd.f32 %v5486, %v5556
    %v5561 = vadd.f32 %v5487, %v5557
    %s5562 = sld [smem:[#allocation14 + $0x8d]]
    %v5563 = vstv %s5562
    %v5564 = vmul.f32 %v5563, %v5506
    %v5565 = vmul.f32 %v5563, %v5507
    %5568 = vrot.lane.b32.xlu0 %v5564, 96
    %v5569 = vpop.permute.xlu0 %5568
    %5570 = vrot.lane.b32.xlu0 %v5565, 96
    %v5571 = vpop.permute.xlu0 %5570
    %v5572 = vrot.slane %v5569, 1
    %v5573 = vrot.slane %v5571, 1
    %v5574 = vsel %vm700, %v5569, %v5572
    %v5575 = vsel %vm700, %v5571, %v5573
    %v5578 = vadd.f32 %v5504, %v5574
    %v5579 = vadd.f32 %v5505, %v5575
    %s5580 = sld [smem:[#allocation14 + $0x22]]
    %v5581 = vstv %s5580
    %v5582 = vmul.f32 %v5581, %v5138
    %v5583 = vmul.f32 %v5581, %v5139
    %5586 = vrot.lane.b32.xlu0 %v5582, 95
    %v5587 = vpop.permute.xlu0 %5586
    %5588 = vrot.lane.b32.xlu0 %v5583, 95
    %v5589 = vpop.permute.xlu0 %5588
    %v5590 = vrot.slane %v5587, 1
    %v5591 = vrot.slane %v5589, 1
    %v5592 = vsel %vm773, %v5587, %v5590
    %v5593 = vsel %vm773, %v5589, %v5591
    %v5596 = vadd.f32 %v5524, %v5592
    %v5597 = vadd.f32 %v5525, %v5593
    %s5598 = sld [smem:[#allocation14 + $0x46]]
    %v5599 = vstv %s5598
    %v5600 = vmul.f32 %v5599, %v5138
    %v5601 = vmul.f32 %v5599, %v5139
    %5604 = vrot.lane.b32.xlu0 %v5600, 95
    %v5605 = vpop.permute.xlu0 %5604
    %5606 = vrot.lane.b32.xlu0 %v5601, 95
    %v5607 = vpop.permute.xlu0 %5606
    %v5608 = vrot.slane %v5605, 1
    %v5609 = vrot.slane %v5607, 1
    %v5610 = vsel %vm773, %v5605, %v5608
    %v5611 = vsel %vm773, %v5607, %v5609
    %v5614 = vadd.f32 %v5542, %v5610
    %v5615 = vadd.f32 %v5543, %v5611
    %s5616 = sld [smem:[#allocation14 + $0x6a]]
    %v5617 = vstv %s5616
    %v5618 = vmul.f32 %v5617, %v5138
    %v5619 = vmul.f32 %v5617, %v5139
    %5622 = vrot.lane.b32.xlu0 %v5618, 95
    %v5623 = vpop.permute.xlu0 %5622
    %5624 = vrot.lane.b32.xlu0 %v5619, 95
    %v5625 = vpop.permute.xlu0 %5624
    %v5626 = vrot.slane %v5623, 1
    %v5627 = vrot.slane %v5625, 1
    %v5628 = vsel %vm773, %v5623, %v5626
    %v5629 = vsel %vm773, %v5625, %v5627
    %v5632 = vadd.f32 %v5560, %v5628
    %v5633 = vadd.f32 %v5561, %v5629
    %s5634 = sld [smem:[#allocation14 + $0x8e]]
    %v5635 = vstv %s5634
    %v5636 = vmul.f32 %v5635, %v5138
    %v5637 = vmul.f32 %v5635, %v5139
    %5640 = vrot.lane.b32.xlu0 %v5636, 95
    %v5641 = vpop.permute.xlu0 %5640
    %5642 = vrot.lane.b32.xlu0 %v5637, 95
    %v5643 = vpop.permute.xlu0 %5642
    %v5644 = vrot.slane %v5641, 1
    %v5645 = vrot.slane %v5643, 1
    %v5646 = vsel %vm773, %v5641, %v5644
    %v5647 = vsel %vm773, %v5643, %v5645
    %v5650 = vadd.f32 %v5578, %v5646
    %v5651 = vadd.f32 %v5579, %v5647
    %v5652 = vmul.f32 %v5138, %v841
    %v5653 = vmul.f32 %v5139, %v842
    %s5654 = sld [smem:[#allocation14 + $0x23]]
    %v5655 = vstv %s5654
    %v5656 = vmul.f32 %v5655, %v5652
    %v5657 = vmul.f32 %v5655, %v5653
    %5660 = vrot.lane.b32.xlu0 %v5656, 94
    %v5661 = vpop.permute.xlu0 %5660
    %5662 = vrot.lane.b32.xlu0 %v5657, 94
    %v5663 = vpop.permute.xlu0 %5662
    %v5664 = vrot.slane %v5661, 1
    %v5665 = vrot.slane %v5663, 1
    %v5666 = vsel %vm859, %v5661, %v5664
    %v5667 = vsel %vm859, %v5663, %v5665
    %v5670 = vadd.f32 %v5596, %v5666
    %v5671 = vadd.f32 %v5597, %v5667
    %s5672 = sld [smem:[#allocation14 + $0x47]]
    %v5673 = vstv %s5672
    %v5674 = vmul.f32 %v5673, %v5652
    %v5675 = vmul.f32 %v5673, %v5653
    %5678 = vrot.lane.b32.xlu0 %v5674, 94
    %v5679 = vpop.permute.xlu0 %5678
    %5680 = vrot.lane.b32.xlu0 %v5675, 94
    %v5681 = vpop.permute.xlu0 %5680
    %v5682 = vrot.slane %v5679, 1
    %v5683 = vrot.slane %v5681, 1
    %v5684 = vsel %vm859, %v5679, %v5682
    %v5685 = vsel %vm859, %v5681, %v5683
    %v5688 = vadd.f32 %v5614, %v5684
    %v5689 = vadd.f32 %v5615, %v5685
    %s5690 = sld [smem:[#allocation14 + $0x6b]]
    %v5691 = vstv %s5690
    %v5692 = vmul.f32 %v5691, %v5652
    %v5693 = vmul.f32 %v5691, %v5653
    %5696 = vrot.lane.b32.xlu0 %v5692, 94
    %v5697 = vpop.permute.xlu0 %5696
    %5698 = vrot.lane.b32.xlu0 %v5693, 94
    %v5699 = vpop.permute.xlu0 %5698
    %v5700 = vrot.slane %v5697, 1
    %v5701 = vrot.slane %v5699, 1
    %v5702 = vsel %vm859, %v5697, %v5700
    %v5703 = vsel %vm859, %v5699, %v5701
    %v5706 = vadd.f32 %v5632, %v5702
    %v5707 = vadd.f32 %v5633, %v5703
    %s5708 = sld [smem:[#allocation14 + $0x8f]]
    %v5709 = vstv %s5708
    %v5710 = vmul.f32 %v5709, %v5652
    %v5711 = vmul.f32 %v5709, %v5653
    %5714 = vrot.lane.b32.xlu0 %v5710, 94
    %v5715 = vpop.permute.xlu0 %5714
    %5716 = vrot.lane.b32.xlu0 %v5711, 94
    %v5717 = vpop.permute.xlu0 %5716
    %v5718 = vrot.slane %v5715, 1
    %v5719 = vrot.slane %v5717, 1
    %v5720 = vsel %vm859, %v5715, %v5718
    %v5721 = vsel %vm859, %v5717, %v5719
    %v5724 = vadd.f32 %v5650, %v5720
    %v5725 = vadd.f32 %v5651, %v5721
    %s5726 = sld [smem:[#allocation17]]
    %s5727 = sld [smem:[#allocation19]]
    %5730 = vst [vmem:[#allocation1] ss:$9 sm:$0xff] %v5670
    %s5731 = scalar_lea.vmem [#allocation1], 1
    %5732 = vst [vmem:[%s5731] ss:$9 sm:$0xff] %v5671
    %v5733 = vld [vmem:[#allocation1] sm:$0xff]
    %v5734 = vld [vmem:[#allocation1 + $0x9] sm:$0xff]
    %v5737 = vsel %vm2785, %v5733, 0.0
    %v5738 = vsel %vm2785, %v5734, 0.0
    %v5739 = vadd.f32 %v5737, %v5738
    %5740 = vadd.xlane.f32.xlu0 %v5739
    %v5741 = vpop.xlane.xlu0 %5740
    %v5742 = vrot.slane %v5741, 4
    %v5743 = vadd.f32 %v5741, %v5742
    %v5744 = vrot.slane %v5743, 2
    %v5745 = vadd.f32 %v5743, %v5744
    %v5746 = vrot.slane %v5745, 1
    %v5747 = vadd.f32 %v5745, %v5746
    %s5748 = vtos %v5747
    %v5749 = vmul.f32 %v5670, %v5670
    %v5750 = vmul.f32 %v5671, %v5671
    %5753 = vst [vmem:[#allocation1] ss:$9 sm:$0xff] %v5749
    %s5754 = scalar_lea.vmem [#allocation1], 1
    %5755 = vst [vmem:[%s5754] ss:$9 sm:$0xff] %v5750
    %v5756 = vld [vmem:[#allocation1] sm:$0xff]
    %v5757 = vld [vmem:[#allocation1 + $0x9] sm:$0xff]
    %v5760 = vsel %vm2785, %v5756, 0.0
    %v5761 = vsel %vm2785, %v5757, 0.0
    %v5762 = vadd.f32 %v5760, %v5761
    %5763 = vadd.xlane.f32.xlu0 %v5762
    %v5764 = vpop.xlane.xlu0 %5763
    %v5765 = vrot.slane %v5764, 4
    %v5766 = vadd.f32 %v5764, %v5765
    %v5767 = vrot.slane %v5766, 2
    %v5768 = vadd.f32 %v5766, %v5767
    %v5769 = vrot.slane %v5768, 1
    %v5770 = vadd.f32 %v5768, %v5769
    %s5771 = vtos %v5770
    %s5772 = smul.f32 %s5748, 0.001953125
    %s5773 = smul.f32 %s5771, 0.001953125
    %s5774 = smul.f32 %s5772, %s5772
    %s5775 = ssub.f32 %s5773, %s5774
    %s5776 = smax.f32 %s5775, 0.0
    %s5777 = sadd.f32 %s5776, 1e-05
    %v5778 = vstv %s5777
    %v5779 = vrsqrt.pop %v5778
    %v5780 = vmul.f32 %v5779, %v5778
    %v5781 = vmul.f32 %v5780, %v5779
    %v5782 = vmul.f32 0.5, %v5781
    %v5783 = vsub.f32 1.5, %v5782
    %v5784 = vmul.f32 %v5779, %v5783
    %vm5785 = vweird.f32 %v5778
    %vm5786 = vweird.f32 %v5779
    %vm5787 = vmor %vm5785, %vm5786
    %v5788 = vsel %vm5787, %v5779, %v5784
    %s5789 = vtos %v5788
    %s5790 = smul.f32 %s5726, %s5789
    %s5791 = smul.f32 %s5772, %s5790
    %s5792 = ssub.f32 %s5727, %s5791
    %v5793 = vstv %s5790
    %v5794 = vmul.f32 %v5670, %v5793
    %v5795 = vmul.f32 %v5671, %v5793
    %v5796 = vstv %s5792
    %v5797 = vadd.f32 %v5794, %v5796
    %v5798 = vadd.f32 %v5795, %v5796
    %v5799 = vld [vmem:[#allocation4] ss:$4 sm:$0x3]
    %s5800 = scalar_lea.vmem [#allocation4], 8
    %v5801 = vld [vmem:[%s5800] ss:$4 sm:$0x3]
    %v5802 = vadd.f32 %v5797, %v5799
    %v5803 = vadd.f32 %v5798, %v5801
    %vm5804 = vcmp.ge.s32.totalorder %v2890, 0
    %vm5805 = vcmp.lt.s32.totalorder %v2890, 256
    %vm5806 = vmand %vm5804, %vm5805
    %5807 = vst.msk [vmem:[#allocation20] ss:$4 sm:$0x3] %vm5806, %v5802
    %s5808 = scalar_lea.vmem [#allocation20], 8
    %5809 = vst.msk [vmem:[%s5808] ss:$4 sm:$0x3] %vm5806, %v5803
    %s5810 = sld [smem:[#allocation17 + $0x1]]
    %s5811 = sld [smem:[#allocation19 + $0x1]]
    %5814 = vst [vmem:[#allocation1] ss:$9 sm:$0xff] %v5688
    %s5815 = scalar_lea.vmem [#allocation1], 1
    %5816 = vst [vmem:[%s5815] ss:$9 sm:$0xff] %v5689
    %v5817 = vld [vmem:[#allocation1] sm:$0xff]
    %v5818 = vld [vmem:[#allocation1 + $0x9] sm:$0xff]
    %v5821 = vsel %vm2785, %v5817, 0.0
    %v5822 = vsel %vm2785, %v5818, 0.0
    %v5823 = vadd.f32 %v5821, %v5822
    %5824 = vadd.xlane.f32.xlu0 %v5823
    %v5825 = vpop.xlane.xlu0 %5824
    %v5826 = vrot.slane %v5825, 4
    %v5827 = vadd.f32 %v5825, %v5826
    %v5828 = vrot.slane %v5827, 2
    %v5829 = vadd.f32 %v5827, %v5828
    %v5830 = vrot.slane %v5829, 1
    %v5831 = vadd.f32 %v5829, %v5830
    %s5832 = vtos %v5831
    %v5833 = vmul.f32 %v5688, %v5688
    %v5834 = vmul.f32 %v5689, %v5689
    %5837 = vst [vmem:[#allocation1] ss:$9 sm:$0xff] %v5833
    %s5838 = scalar_lea.vmem [#allocation1], 1
    %5839 = vst [vmem:[%s5838] ss:$9 sm:$0xff] %v5834
    %v5840 = vld [vmem:[#allocation1] sm:$0xff]
    %v5841 = vld [vmem:[#allocation1 + $0x9] sm:$0xff]
    %v5844 = vsel %vm2785, %v5840, 0.0
    %v5845 = vsel %vm2785, %v5841, 0.0
    %v5846 = vadd.f32 %v5844, %v5845
    %5847 = vadd.xlane.f32.xlu0 %v5846
    %v5848 = vpop.xlane.xlu0 %5847
    %v5849 = vrot.slane %v5848, 4
    %v5850 = vadd.f32 %v5848, %v5849
    %v5851 = vrot.slane %v5850, 2
    %v5852 = vadd.f32 %v5850, %v5851
    %v5853 = vrot.slane %v5852, 1
    %v5854 = vadd.f32 %v5852, %v5853
    %s5855 = vtos %v5854
    %s5856 = smul.f32 %s5832, 0.001953125
    %s5857 = smul.f32 %s5855, 0.001953125
    %s5858 = smul.f32 %s5856, %s5856
    %s5859 = ssub.f32 %s5857, %s5858
    %s5860 = smax.f32 %s5859, 0.0
    %s5861 = sadd.f32 %s5860, 1e-05
    %v5862 = vstv %s5861
    %v5863 = vrsqrt.pop %v5862
    %v5864 = vmul.f32 %v5863, %v5862
    %v5865 = vmul.f32 %v5864, %v5863
    %v5866 = vmul.f32 0.5, %v5865
    %v5867 = vsub.f32 1.5, %v5866
    %v5868 = vmul.f32 %v5863, %v5867
    %vm5869 = vweird.f32 %v5862
    %vm5870 = vweird.f32 %v5863
    %vm5871 = vmor %vm5869, %vm5870
    %v5872 = vsel %vm5871, %v5863, %v5868
    %s5873 = vtos %v5872
    %s5874 = smul.f32 %s5810, %s5873
    %s5875 = smul.f32 %s5856, %s5874
    %s5876 = ssub.f32 %s5811, %s5875
    %v5877 = vstv %s5874
    %v5878 = vmul.f32 %v5688, %v5877
    %v5879 = vmul.f32 %v5689, %v5877
    %v5880 = vstv %s5876
    %v5881 = vadd.f32 %v5878, %v5880
    %v5882 = vadd.f32 %v5879, %v5880
    %s5883 = scalar_lea.vmem [#allocation4], 1
    %v5884 = vld [vmem:[%s5883] ss:$4 sm:$0x3]
    %s5885 = scalar_lea.vmem [#allocation4], 9
    %v5886 = vld [vmem:[%s5885] ss:$4 sm:$0x3]
    %v5887 = vadd.f32 %v5881, %v5884
    %v5888 = vadd.f32 %v5882, %v5886
    %s5889 = scalar_lea.vmem [#allocation20], 1
    %5890 = vst.msk [vmem:[%s5889] ss:$4 sm:$0x3] %vm5806, %v5887
    %s5891 = scalar_lea.vmem [#allocation20], 9
    %5892 = vst.msk [vmem:[%s5891] ss:$4 sm:$0x3] %vm5806, %v5888
    %s5893 = sld [smem:[#allocation17 + $0x2]]
    %s5894 = sld [smem:[#allocation19 + $0x2]]
    %5897 = vst [vmem:[#allocation1] ss:$9 sm:$0xff] %v5706
    %s5898 = scalar_lea.vmem [#allocation1], 1
    %5899 = vst [vmem:[%s5898] ss:$9 sm:$0xff] %v5707
    %v5900 = vld [vmem:[#allocation1] sm:$0xff]
    %v5901 = vld [vmem:[#allocation1 + $0x9] sm:$0xff]
    %v5904 = vsel %vm2785, %v5900, 0.0
    %v5905 = vsel %vm2785, %v5901, 0.0
    %v5906 = vadd.f32 %v5904, %v5905
    %5907 = vadd.xlane.f32.xlu0 %v5906
    %v5908 = vpop.xlane.xlu0 %5907
    %v5909 = vrot.slane %v5908, 4
    %v5910 = vadd.f32 %v5908, %v5909
    %v5911 = vrot.slane %v5910, 2
    %v5912 = vadd.f32 %v5910, %v5911
    %v5913 = vrot.slane %v5912, 1
    %v5914 = vadd.f32 %v5912, %v5913
    %s5915 = vtos %v5914
    %v5916 = vmul.f32 %v5706, %v5706
    %v5917 = vmul.f32 %v5707, %v5707
    %5920 = vst [vmem:[#allocation1] ss:$9 sm:$0xff] %v5916
    %s5921 = scalar_lea.vmem [#allocation1], 1
    %5922 = vst [vmem:[%s5921] ss:$9 sm:$0xff] %v5917
    %v5923 = vld [vmem:[#allocation1] sm:$0xff]
    %v5924 = vld [vmem:[#allocation1 + $0x9] sm:$0xff]
    %v5927 = vsel %vm2785, %v5923, 0.0
    %v5928 = vsel %vm2785, %v5924, 0.0
    %v5929 = vadd.f32 %v5927, %v5928
    %5930 = vadd.xlane.f32.xlu0 %v5929
    %v5931 = vpop.xlane.xlu0 %5930
    %v5932 = vrot.slane %v5931, 4
    %v5933 = vadd.f32 %v5931, %v5932
    %v5934 = vrot.slane %v5933, 2
    %v5935 = vadd.f32 %v5933, %v5934
    %v5936 = vrot.slane %v5935, 1
    %v5937 = vadd.f32 %v5935, %v5936
    %s5938 = vtos %v5937
    %s5939 = smul.f32 %s5915, 0.001953125
    %s5940 = smul.f32 %s5938, 0.001953125
    %s5941 = smul.f32 %s5939, %s5939
    %s5942 = ssub.f32 %s5940, %s5941
    %s5943 = smax.f32 %s5942, 0.0
    %s5944 = sadd.f32 %s5943, 1e-05
    %v5945 = vstv %s5944
    %v5946 = vrsqrt.pop %v5945
    %v5947 = vmul.f32 %v5946, %v5945
    %v5948 = vmul.f32 %v5947, %v5946
    %v5949 = vmul.f32 0.5, %v5948
    %v5950 = vsub.f32 1.5, %v5949
    %v5951 = vmul.f32 %v5946, %v5950
    %vm5952 = vweird.f32 %v5945
    %vm5953 = vweird.f32 %v5946
    %vm5954 = vmor %vm5952, %vm5953
    %v5955 = vsel %vm5954, %v5946, %v5951
    %s5956 = vtos %v5955
    %s5957 = smul.f32 %s5893, %s5956
    %s5958 = smul.f32 %s5939, %s5957
    %s5959 = ssub.f32 %s5894, %s5958
    %v5960 = vstv %s5957
    %v5961 = vmul.f32 %v5706, %v5960
    %v5962 = vmul.f32 %v5707, %v5960
    %v5963 = vstv %s5959
    %v5964 = vadd.f32 %v5961, %v5963
    %v5965 = vadd.f32 %v5962, %v5963
    %s5966 = scalar_lea.vmem [#allocation4], 2
    %v5967 = vld [vmem:[%s5966] ss:$4 sm:$0x3]
    %s5968 = scalar_lea.vmem [#allocation4], 10
    %v5969 = vld [vmem:[%s5968] ss:$4 sm:$0x3]
    %v5970 = vadd.f32 %v5964, %v5967
    %v5971 = vadd.f32 %v5965, %v5969
    %s5972 = scalar_lea.vmem [#allocation20], 2
    %5973 = vst.msk [vmem:[%s5972] ss:$4 sm:$0x3] %vm5806, %v5970
    %s5974 = scalar_lea.vmem [#allocation20], 10
    %5975 = vst.msk [vmem:[%s5974] ss:$4 sm:$0x3] %vm5806, %v5971
    %s5976 = sld [smem:[#allocation17 + $0x3]]
    %s5977 = sld [smem:[#allocation19 + $0x3]]
    %5980 = vst [vmem:[#allocation1] ss:$9 sm:$0xff] %v5724
    %s5981 = scalar_lea.vmem [#allocation1], 1
    %5982 = vst [vmem:[%s5981] ss:$9 sm:$0xff] %v5725
    %v5983 = vld [vmem:[#allocation1] sm:$0xff]
    %v5984 = vld [vmem:[#allocation1 + $0x9] sm:$0xff]
    %v5987 = vsel %vm2785, %v5983, 0.0
    %v5988 = vsel %vm2785, %v5984, 0.0
    %v5989 = vadd.f32 %v5987, %v5988
    %5990 = vadd.xlane.f32.xlu0 %v5989
    %v5991 = vpop.xlane.xlu0 %5990
    %v5992 = vrot.slane %v5991, 4
    %v5993 = vadd.f32 %v5991, %v5992
    %v5994 = vrot.slane %v5993, 2
    %v5995 = vadd.f32 %v5993, %v5994
    %v5996 = vrot.slane %v5995, 1
    %v5997 = vadd.f32 %v5995, %v5996
    %s5998 = vtos %v5997
    %v5999 = vmul.f32 %v5724, %v5724
    %v6000 = vmul.f32 %v5725, %v5725
    %6003 = vst [vmem:[#allocation1] ss:$9 sm:$0xff] %v5999
    %s6004 = scalar_lea.vmem [#allocation1], 1
    %6005 = vst [vmem:[%s6004] ss:$9 sm:$0xff] %v6000
    %v6006 = vld [vmem:[#allocation1] sm:$0xff]
    %v6007 = vld [vmem:[#allocation1 + $0x9] sm:$0xff]
    %v6010 = vsel %vm2785, %v6006, 0.0
    %v6011 = vsel %vm2785, %v6007, 0.0
    %v6012 = vadd.f32 %v6010, %v6011
    %6013 = vadd.xlane.f32.xlu0 %v6012
    %v6014 = vpop.xlane.xlu0 %6013
    %v6015 = vrot.slane %v6014, 4
    %v6016 = vadd.f32 %v6014, %v6015
    %v6017 = vrot.slane %v6016, 2
    %v6018 = vadd.f32 %v6016, %v6017
    %v6019 = vrot.slane %v6018, 1
    %v6020 = vadd.f32 %v6018, %v6019
    %s6021 = vtos %v6020
    %s6022 = smul.f32 %s5998, 0.001953125
    %s6023 = smul.f32 %s6021, 0.001953125
    %s6024 = smul.f32 %s6022, %s6022
    %s6025 = ssub.f32 %s6023, %s6024
    %s6026 = smax.f32 %s6025, 0.0
    %s6027 = sadd.f32 %s6026, 1e-05
    %v6028 = vstv %s6027
    %v6029 = vrsqrt.pop %v6028
    %v6030 = vmul.f32 %v6029, %v6028
    %v6031 = vmul.f32 %v6030, %v6029
    %v6032 = vmul.f32 0.5, %v6031
    %v6033 = vsub.f32 1.5, %v6032
    %v6034 = vmul.f32 %v6029, %v6033
    %vm6035 = vweird.f32 %v6028
    %vm6036 = vweird.f32 %v6029
    %vm6037 = vmor %vm6035, %vm6036
    %v6038 = vsel %vm6037, %v6029, %v6034
    %s6039 = vtos %v6038
    %s6040 = smul.f32 %s5976, %s6039
    %s6041 = smul.f32 %s6022, %s6040
    %s6042 = ssub.f32 %s5977, %s6041
    %v6043 = vstv %s6040
    %v6044 = vmul.f32 %v5724, %v6043
    %v6045 = vmul.f32 %v5725, %v6043
    %v6046 = vstv %s6042
    %v6047 = vadd.f32 %v6044, %v6046
    %v6048 = vadd.f32 %v6045, %v6046
    %s6049 = scalar_lea.vmem [#allocation4], 3
    %v6050 = vld [vmem:[%s6049] ss:$4 sm:$0x3]
    %s6051 = scalar_lea.vmem [#allocation4], 11
    %v6052 = vld [vmem:[%s6051] ss:$4 sm:$0x3]
    %v6053 = vadd.f32 %v6047, %v6050
    %v6054 = vadd.f32 %v6048, %v6052
    %s6055 = scalar_lea.vmem [#allocation20], 3
    %6056 = vst.msk [vmem:[%s6055] ss:$4 sm:$0x3] %vm5806, %v6053
    %s6057 = scalar_lea.vmem [#allocation20], 11
    %6058 = vst.msk [vmem:[%s6057] ss:$4 sm:$0x3] %vm5806, %v6054
    // Predicated region
    $region74: #{tpu_custom_call.1} parent=1 // pred_check
      _
    $region75: #{tpu_custom_call.1} parent=1 // pred_check_branch
      %6060 = sbr.rel (0) target = $region77
    $region76: #{tpu_custom_call.1} parent=1 // pred_region
      %6062 = vsyncadd [#allocation6], 0
      %s6063 = sshll.u32 [#allocation20], 4
      %s6064 = int_to_ptr.vmem [resolvable:$true] %s6063
      %s6065 = sshll.u32 %s9, 4
      %s6066 = int_to_ptr.hbm [resolvable:$true] %s6065
      %6071 = dma.vmem_to_hbm [thread:$0]  %s6064, 256, %s6066, [#allocation6], 128, 128, 8
    $region77: #{tpu_custom_call.1} parent=1 // pred_fallthru
      _
    // Predicated region
    $region78: #{tpu_custom_call.1} parent=1 // pred_check
      _
    $region79: #{tpu_custom_call.1} parent=1 // pred_check_branch
      %6073 = sbr.rel (0) target = $region81
    $region80: #{tpu_custom_call.1} parent=1 // pred_region
      %6075 = dma.done [#allocation6], 256
    $region81: #{tpu_custom_call.1} parent=1 // pred_fallthru
      _
    %6076 = vsyncpa [#allocation5], 1
    %6077 = vsyncpa [#allocation6], 1
    %6078 = vsyncpa [#allocation7], 1
    %6079 = vsyncpa [#allocation12], 1
    %6080 = vsyncpa [#allocation8], 1
    %6081 = vsyncpa [#allocation15], 1
    %6082 = vsyncpa [#allocation18], 1

</llo_original>
